<compile_context>
chip_gen: v7x
topology: tpu7x:2x2x1
jax: 0.10.0
libtpu: 0.0.40
codegen_flags: <defaults>
</compile_context>

<pallas_src>
import functools

import numpy as np

import jax
import jax.numpy as jnp
from jax.experimental import pallas as pl
from jax.experimental.pallas import tpu as pltpu


_HI = jax.lax.Precision.HIGHEST


# ----------------------------------------------------------------------------
# In-kernel helpers (pure jnp, traced inside the fused Pallas kernel)
# ----------------------------------------------------------------------------
def _act(v):
    # torch.where((x>=-3)&(x<=3), Hardswish(x), clamp(x,0,6) + 0.01*clamp(x,max=0))
    hsw = v * jnp.clip(v + 3.0, 0.0, 6.0) * (1.0 / 6.0)
    alt = jnp.clip(v, 0.0, 6.0) + 0.01 * jnp.minimum(v, 0.0)
    return jnp.where((v >= -3.0) & (v <= 3.0), hsw, alt)


def _group_norm(x, gamma, beta, gmask, gmaskT, num_groups, eps=1e-5):
    # x: (C, N), gamma/beta: (C, 1)
    # gmask: (C, G) one-hot group membership, gmaskT: (G, C)
    # Per-row lane reductions (XLU) + two tiny mask matmuls (MXU, idle slot)
    # replace the old per-group sublane-reduce loop.  Exact f32 (HIGHEST).
    C, N = x.shape
    inv_n = 1.0 / float((C // num_groups) * N)
    s1 = jnp.sum(x, axis=1, keepdims=True)                      # (C, 1)
    s2 = jnp.sum(x * x, axis=1, keepdims=True)                  # (C, 1)
    g1 = jnp.dot(gmaskT, s1, preferred_element_type=jnp.float32, precision=_HI)  # (G,1)
    g2 = jnp.dot(gmaskT, s2, preferred_element_type=jnp.float32, precision=_HI)  # (G,1)
    mean = jnp.dot(gmask, g1, preferred_element_type=jnp.float32, precision=_HI) * inv_n
    m2 = jnp.dot(gmask, g2, preferred_element_type=jnp.float32, precision=_HI) * inv_n
    var = jnp.maximum(m2 - mean * mean, 0.0)                    # clamp: E[x^2]-E[x]^2 >= 0
    return (x - mean) * jax.lax.rsqrt(var + eps) * gamma + beta


# ----------------------------------------------------------------------------
# Single fused kernel: layer1+GN+act -> dilated depthwise conv -> layer2+GN+act
#                      -> (channel_shuffle folded into params) -> scSE
# ----------------------------------------------------------------------------
def fused_kernel(x_ref, w1_ref, b1_ref, gnw1_ref, gnb1_ref, gm1_ref, gm1t_ref,
                 dw_ref, bdw_ref,
                 w2_ref, b2_ref, gnw2_ref, gnb2_ref, gm2_ref, gm2t_ref,
                 fc1_ref, fc2_ref, sse_ref, o_ref,
                 *, K, stride, dilation, padding, H, W, Ho, Wo, num_groups,
                 same_path):
    HW = H * W
    HWo = Ho * Wo

    x = x_ref[...]                                                   # (C_in, HW)

    # --- stage 1: layer1 (1x1 conv) -> GroupNorm -> custom hardswish ---------
    y = jnp.dot(w1_ref[...], x, preferred_element_type=jnp.float32,
                precision=_HI) + b1_ref[...]
    y = _group_norm(y, gnw1_ref[...], gnb1_ref[...], gm1_ref[...], gm1t_ref[...],
                    num_groups)
    y = _act(y)                                                      # (C, HW)
    C = y.shape[0]

    # --- stage 2: layer3 (depthwise dilated conv), flat (C, HW) layout --------
    if same_path:
        # Lane-dense path: per tap one XLU roll + one fma against a
        # host-precomputed (mask * weight) tile dw_ref[idx] of shape (C, HW).
        acc = None
        for kh in range(K):
            for kw in range(K):
                dh = kh * dilation - padding
                dwo = kw * dilation - padding
                idx = kh * K + kw
                mtap = dw_ref[idx]                                   # (C, HW)
                s = dh * W + dwo                                     # flat source offset
                src = y if s == 0 else pltpu.roll(y, (-s) % HW, 1)   # out[i] = y[(i+s)%HW]
                term = src * mtap
                acc = term if acc is None else acc + term
        y = acc + bdw_ref[...]                                       # (C, HWo)
    else:
        # TODO(synk): stride>1 / non-"same" depthwise fallback is functionally
        # complete but untested on hardware (padded scratch + strided lax.slice).
        wdw = dw_ref[...]                                            # (C, K*K)
        Hp, Wp = H + 2 * padding, W + 2 * padding
        xp = jax.lax.dynamic_update_slice(
            jnp.zeros((C, Hp, Wp), jnp.float32), y.reshape(C, H, W),
            (0, padding, padding))
        acc = jnp.zeros((C, Ho, Wo), jnp.float32)
        for kh in range(K):
            for kw in range(K):
                h0, w0 = kh * dilation, kw * dilation
                patch = jax.lax.slice(
                    xp, (0, h0, w0),
                    (C, h0 + (Ho - 1) * stride + 1, w0 + (Wo - 1) * stride + 1),
                    (1, stride, stride))
                idx = kh * K + kw
                acc = acc + patch * wdw[:, idx:idx + 1][:, :, None]
        y = (acc + bdw_ref[...][:, :, None]).reshape(C, HWo)

    # --- stage 3: layer2 (1x1 conv) -> GroupNorm -> act ----------------------
    # channel_shuffle is folded into w2/b2/gn params + gmask2 (trace-time row
    # permutation), so y comes out directly in shuffled channel order.
    y = jnp.dot(w2_ref[...], y, preferred_element_type=jnp.float32,
                precision=_HI) + b2_ref[...]
    y = _group_norm(y, gnw2_ref[...], gnb2_ref[...], gm2_ref[...], gm2t_ref[...],
                    num_groups)
    y = _act(y)                                                      # (C, HWo)

    # --- scSE -----------------------------------------------------------------
    pooled = jnp.sum(y, axis=1, keepdims=True) * (1.0 / HWo)         # (C, 1)
    h = jnp.maximum(jnp.dot(fc1_ref[...], pooled,
                            preferred_element_type=jnp.float32, precision=_HI), 0.0)
    gate = jnp.clip(jnp.dot(fc2_ref[...], h, preferred_element_type=jnp.float32,
                            precision=_HI) * (1.0 / 6.0) + 0.5,
                    0.0, 1.0)                                        # (C, 1) hardsigmoid
    q = jnp.dot(sse_ref[...], y, preferred_element_type=jnp.float32,
                precision=_HI)                                       # (1, HWo)
    sig = 1.0 / (1.0 + jnp.exp(-q))                                  # exact sigmoid
    o_ref[...] = y * (gate + sig)                                    # U_cse + U_sse


# ----------------------------------------------------------------------------
# Wrapper
# ----------------------------------------------------------------------------
def dilated_downsample_up_forward(x, params, *, kernel, stride, padding, dilation,
                                  num_groups=4, shuffle_groups=3):
    B, C_in, H, W = x.shape
    C_out = params["w1"].shape[0]
    assert C_out % num_groups == 0, "GroupNorm requires C_out % num_groups == 0"
    HW = H * W
    Ho = (H + 2 * padding - dilation * (kernel - 1) - 1) // stride + 1
    Wo = (W + 2 * padding - dilation * (kernel - 1) - 1) // stride + 1
    HWo = Ho * Wo
    same_path = (stride == 1 and Ho == H and Wo == W)

    # channel_shuffle(groups=3) folded into stage-3 params (pure row permutation).
    if C_out % shuffle_groups == 0:
        cpg = C_out // shuffle_groups
        perm = np.array([(c % shuffle_groups) * cpg + (c // shuffle_groups)
                         for c in range(C_out)], dtype=np.int64)
    else:  # module skips the shuffle in this case
        perm = np.arange(C_out, dtype=np.int64)

    # GroupNorm membership masks (and their transposes) for the mask-matmul GN.
    grp = np.arange(C_out) // (C_out // num_groups)
    gids = np.arange(num_groups)
    gm1_np = (grp[:, None] == gids[None, :]).astype(np.float32)          # (C, G)
    gm2_np = (grp[perm][:, None] == gids[None, :]).astype(np.float32)    # shuffled
    gm1, gm1t = jnp.asarray(gm1_np), jnp.asarray(gm1_np.T)
    gm2, gm2t = jnp.asarray(gm2_np), jnp.asarray(gm2_np.T)

    w2p = params["w2"][perm]
    b2p = params["b2"][perm]
    gnw2 = params["gn_w"][perm]
    gnb2 = params["gn_b"][perm]

    # Depthwise taps folded with host-precomputed boundary masks: (K*K, C, HW).
    if same_path:
        K = kernel
        masks = np.zeros((K * K, HW), np.float32)
        hh = np.arange(H)[:, None]
        ww = np.arange(W)[None, :]
        for kh in range(K):
            for kw in range(K):
                dh = kh * dilation - padding
                dwo = kw * dilation - padding
                valid = ((hh + dh >= 0) & (hh + dh < H) &
                         (ww + dwo >= 0) & (ww + dwo < W))
                masks[kh * K + kw] = valid.astype(np.float32).reshape(-1)
        dw_in = params["wdw"].T[:, :, None] * jnp.asarray(masks)[:, None, :]
    else:
        dw_in = params["wdw"]                                            # (C, K*K)

    x_flat = x.reshape(B, C_in, HW)

    inputs = (x_flat,
              params["w1"], params["b1"], params["gn_w"], params["gn_b"], gm1, gm1t,
              dw_in, params["bdw"],
              w2p, b2p, gnw2, gnb2, gm2, gm2t,
              params["se_fc1"], params["se_fc2"], params["sse_w"])

    def full_spec(a):
        n = a.ndim
        return pl.BlockSpec(a.shape, lambda b, _n=n: (0,) * _n)

    in_specs = [pl.BlockSpec((pl.Squeezed(), C_in, HW), lambda b: (b, 0, 0))] + \
               [full_spec(a) for a in inputs[1:]]

    out = pl.pallas_call(
        functools.partial(fused_kernel, K=kernel, stride=stride, dilation=dilation,
                          padding=padding, H=H, W=W, Ho=Ho, Wo=Wo,
                          num_groups=num_groups, same_path=same_path),
        out_shape=jax.ShapeDtypeStruct((B, C_out, HWo), jnp.float32),
        grid=(B,),
        in_specs=in_specs,
        out_specs=pl.BlockSpec((pl.Squeezed(), C_out, HWo), lambda b: (b, 0, 0)),
        compiler_params=pltpu.CompilerParams(
            dimension_semantics=("parallel",)),
    )(*inputs)
    return out.reshape(B, C_out, Ho, Wo)


# ----------------------------------------------------------------------------
# Pure-JAX reference (independent of Pallas lowering) for a sanity check
# ----------------------------------------------------------------------------
def reference_forward(x, params, *, kernel, stride, padding, dilation,
                      num_groups=4, shuffle_groups=3):
    HI = jax.lax.Precision.HIGHEST
    B, C_in, H, W = x.shape
    C_out = params["w1"].shape[0]

    def act(v):
        hsw = v * jnp.clip(v + 3.0, 0.0, 6.0) / 6.0
        alt = jnp.clip(v, 0.0, 6.0) + 0.01 * jnp.minimum(v, 0.0)
        return jnp.where((v >= -3.0) & (v <= 3.0), hsw, alt)

    def gn(v):
        Bb, C, Hh, Ww = v.shape
        vg = v.reshape(Bb, num_groups, C // num_groups, Hh, Ww)
        mean = vg.mean(axis=(2, 3, 4), keepdims=True)
        var = ((vg - mean) ** 2).mean(axis=(2, 3, 4), keepdims=True)
        vn = ((vg - mean) / jnp.sqrt(var + 1e-5)).reshape(Bb, C, Hh, Ww)
        return vn * params["gn_w"].reshape(1, C, 1, 1) + params["gn_b"].reshape(1, C, 1, 1)

    y = jnp.einsum("oc,bchw->bohw", params["w1"], x, precision=HI) \
        + params["b1"].reshape(1, C_out, 1, 1)
    y = act(gn(y))

    Ho = (H + 2 * padding - dilation * (kernel - 1) - 1) // stride + 1
    Wo = (W + 2 * padding - dilation * (kernel - 1) - 1) // stride + 1
    yp = jnp.pad(y, ((0, 0), (0, 0), (padding, padding), (padding, padding)))
    acc = jnp.broadcast_to(params["bdw"].reshape(1, C_out, 1, 1), (B, C_out, Ho, Wo))
    for kh in range(kernel):
        for kw in range(kernel):
            patch = yp[:, :,
                       kh * dilation: kh * dilation + (Ho - 1) * stride + 1: stride,
                       kw * dilation: kw * dilation + (Wo - 1) * stride + 1: stride]
            acc = acc + patch * params["wdw"][:, kh * kernel + kw].reshape(1, C_out, 1, 1)
    y = acc

    y = jnp.einsum("oc,bchw->bohw", params["w2"], y, precision=HI) \
        + params["b2"].reshape(1, C_out, 1, 1)
    y = act(gn(y))

    if C_out % shuffle_groups == 0:
        cpg = C_out // shuffle_groups
        y = y.reshape(B, shuffle_groups, cpg, Ho, Wo).transpose(0, 2, 1, 3, 4)
        y = y.reshape(B, C_out, Ho, Wo)

    pooled = y.mean(axis=(2, 3))                                   # (B, C)
    h = jnp.maximum(jnp.dot(pooled, params["se_fc1"].T, precision=HI), 0.0)
    gate = jnp.clip(jnp.dot(h, params["se_fc2"].T, precision=HI) / 6.0 + 0.5, 0.0, 1.0)
    u_cse = y * gate[:, :, None, None]
    q = jnp.einsum("oc,bchw->bohw", params["sse_w"], y, precision=HI)
    q = jax.nn.sigmoid(q)
    return u_cse + q * y


# ----------------------------------------------------------------------------
# Deterministic parameter init (synthetic; shapes follow the torch __init__)
# ----------------------------------------------------------------------------
def init_params(key, C_in, C_out, kernel, reduction=3):
    ks = jax.random.split(key, 11)
    s = 0.2
    f32 = jnp.float32
    return dict(
        w1=jax.random.normal(ks[0], (C_out, C_in), f32) * s,        # Conv2d(C_in,C_out,1)
        b1=jax.random.normal(ks[1], (C_out, 1), f32) * s,
        gn_w=1.0 + jax.random.normal(ks[2], (C_out, 1), f32) * s,   # GroupNorm(4,C_out) affine
        gn_b=jax.random.normal(ks[3], (C_out, 1), f32) * s,
        wdw=jax.random.normal(ks[4], (C_out, kernel * kernel), f32) * s,  # depthwise weight
        bdw=jax.random.normal(ks[5], (C_out, 1), f32) * s,
        w2=jax.random.normal(ks[6], (C_out, C_out), f32) * s,       # Conv2d(C_out,C_out,1)
        b2=jax.random.normal(ks[7], (C_out, 1), f32) * s,
        se_fc1=jax.random.normal(ks[8], (C_out // reduction, C_out), f32) * s,
        se_fc2=jax.random.normal(ks[9], (C_out, C_out // reduction), f32) * s,
        sse_w=jax.random.normal(ks[10], (1, C_out), f32) * s,       # Conv2d(C_out,1,1,bias=False)
    )


if __name__ == "__main__":
    # Small shapes consistent with the module: C_out divisible by 4 (GroupNorm),
    # 3 (channel_shuffle + SE reduction). Dilated depthwise "same" conv keeps 16x16.
    B, C_in, C_out, H, W = 2, 8, 12, 16, 16
    kernel, stride, padding, dilation = 3, 1, 2, 2

    root = jax.random.PRNGKey(0)
    kx, kp = jax.random.split(root)
    x = jax.random.normal(kx, (B, C_in, H, W), jnp.float32)
    params = init_params(kp, C_in, C_out, kernel)

    fwd = jax.jit(functools.partial(dilated_downsample_up_forward,
                                    kernel=kernel, stride=stride,
                                    padding=padding, dilation=dilation))
    out = fwd(x, params)
    jax.block_until_ready(out)

    ref = reference_forward(x, params, kernel=kernel, stride=stride,
                            padding=padding, dilation=dilation)
    # All in-kernel matmuls run at HIGHEST precision and the sigmoid is exact,
    # so the only differences vs the reference are summation order / rsqrt ulps.
    err = float(jnp.max(jnp.abs(out - ref)))
    assert out.shape == (B, C_out, H, W), out.shape
    assert err < 2e-3, f"mismatch vs reference: max abs err = {err}"
    print("KERNEL_OK")
</pallas_src>

<mosaic_0001>
module attributes {stable_mosaic.version = 11 : i64} {
  func.func @fused_kernel(%arg0: i32, %arg1: memref<1x8x256xf32, #tpu.memory_space<vmem>>, %arg2: memref<12x8xf32, #tpu.memory_space<vmem>>, %arg3: memref<12x1xf32, #tpu.memory_space<vmem>>, %arg4: memref<12x1xf32, #tpu.memory_space<vmem>>, %arg5: memref<12x1xf32, #tpu.memory_space<vmem>>, %arg6: memref<12x4xf32, #tpu.memory_space<vmem>>, %arg7: memref<4x12xf32, #tpu.memory_space<vmem>>, %arg8: memref<9x12x256xf32, #tpu.memory_space<vmem>>, %arg9: memref<12x1xf32, #tpu.memory_space<vmem>>, %arg10: memref<12x12xf32, #tpu.memory_space<vmem>>, %arg11: memref<12x1xf32, #tpu.memory_space<vmem>>, %arg12: memref<12x1xf32, #tpu.memory_space<vmem>>, %arg13: memref<12x1xf32, #tpu.memory_space<vmem>>, %arg14: memref<12x4xf32, #tpu.memory_space<vmem>>, %arg15: memref<4x12xf32, #tpu.memory_space<vmem>>, %arg16: memref<4x12xf32, #tpu.memory_space<vmem>>, %arg17: memref<12x4xf32, #tpu.memory_space<vmem>>, %arg18: memref<1x12xf32, #tpu.memory_space<vmem>>, %arg19: memref<1x12x256xf32, #tpu.memory_space<vmem>>) attributes {dimension_semantics = [#tpu.dimension_semantics<parallel>], iteration_bounds = array<i64: 2>, scalar_prefetch = 0 : i64, scratch_operands = 0 : i64, tpu.core_type = #tpu.core_type<tc>, window_params = [{transform_indices = @transform_0, window_bounds = array<i64: 1, 8, 256>}, {pipeline_mode = #tpu.pipeline_mode<synchronous>, transform_indices = @transform_1, window_bounds = array<i64: 12, 8>}, {pipeline_mode = #tpu.pipeline_mode<synchronous>, transform_indices = @transform_2, window_bounds = array<i64: 12, 1>}, {pipeline_mode = #tpu.pipeline_mode<synchronous>, transform_indices = @transform_3, window_bounds = array<i64: 12, 1>}, {pipeline_mode = #tpu.pipeline_mode<synchronous>, transform_indices = @transform_4, window_bounds = array<i64: 12, 1>}, {pipeline_mode = #tpu.pipeline_mode<synchronous>, transform_indices = @transform_5, window_bounds = array<i64: 12, 4>}, {pipeline_mode = #tpu.pipeline_mode<synchronous>, transform_indices = @transform_6, window_bounds = array<i64: 4, 12>}, {pipeline_mode = #tpu.pipeline_mode<synchronous>, transform_indices = @transform_7, window_bounds = array<i64: 9, 12, 256>}, {pipeline_mode = #tpu.pipeline_mode<synchronous>, transform_indices = @transform_8, window_bounds = array<i64: 12, 1>}, {pipeline_mode = #tpu.pipeline_mode<synchronous>, transform_indices = @transform_9, window_bounds = array<i64: 12, 12>}, {pipeline_mode = #tpu.pipeline_mode<synchronous>, transform_indices = @transform_10, window_bounds = array<i64: 12, 1>}, {pipeline_mode = #tpu.pipeline_mode<synchronous>, transform_indices = @transform_11, window_bounds = array<i64: 12, 1>}, {pipeline_mode = #tpu.pipeline_mode<synchronous>, transform_indices = @transform_12, window_bounds = array<i64: 12, 1>}, {pipeline_mode = #tpu.pipeline_mode<synchronous>, transform_indices = @transform_13, window_bounds = array<i64: 12, 4>}, {pipeline_mode = #tpu.pipeline_mode<synchronous>, transform_indices = @transform_14, window_bounds = array<i64: 4, 12>}, {pipeline_mode = #tpu.pipeline_mode<synchronous>, transform_indices = @transform_15, window_bounds = array<i64: 4, 12>}, {pipeline_mode = #tpu.pipeline_mode<synchronous>, transform_indices = @transform_16, window_bounds = array<i64: 12, 4>}, {pipeline_mode = #tpu.pipeline_mode<synchronous>, transform_indices = @transform_17, window_bounds = array<i64: 1, 12>}, {transform_indices = @transform_18, window_bounds = array<i64: 1, 12, 256>}]} {
    %c0 = arith.constant 0 : index
    %c0_0 = arith.constant 0 : index
    %c0_1 = arith.constant 0 : index
    %0 = vector.load %arg1[%c0, %c0_0, %c0_1] : memref<1x8x256xf32, #tpu.memory_space<vmem>>, vector<1x8x256xf32>
    %1 = vector.shape_cast %0 : vector<1x8x256xf32> to vector<8x256xf32>
    %c0_2 = arith.constant 0 : index
    %c0_3 = arith.constant 0 : index
    %2 = vector.load %arg2[%c0_2, %c0_3] : memref<12x8xf32, #tpu.memory_space<vmem>>, vector<12x8xf32>
    %cst = arith.constant dense<0.000000e+00> : vector<12x256xf32>
    %3 = tpu.matmul %2, %1, %cst {dimension_numbers = #tpu.dot_dimension_numbers<[1], [0], [0], [1], [0, 0, 1, 1], [], []>, precision = #tpu.contract_precision<fp32>} : vector<12x8xf32>, vector<8x256xf32>, vector<12x256xf32> -> vector<12x256xf32>
    %c0_4 = arith.constant 0 : index
    %c0_5 = arith.constant 0 : index
    %4 = vector.load %arg3[%c0_4, %c0_5] : memref<12x1xf32, #tpu.memory_space<vmem>>, vector<12x1xf32>
    %5 = vector.broadcast %4 : vector<12x1xf32> to vector<12x256xf32>
    %6 = arith.addf %3, %5 : vector<12x256xf32>
    %c0_6 = arith.constant 0 : index
    %c0_7 = arith.constant 0 : index
    %7 = vector.load %arg4[%c0_6, %c0_7] : memref<12x1xf32, #tpu.memory_space<vmem>>, vector<12x1xf32>
    %c0_8 = arith.constant 0 : index
    %c0_9 = arith.constant 0 : index
    %8 = vector.load %arg5[%c0_8, %c0_9] : memref<12x1xf32, #tpu.memory_space<vmem>>, vector<12x1xf32>
    %c0_10 = arith.constant 0 : index
    %c0_11 = arith.constant 0 : index
    %9 = vector.load %arg6[%c0_10, %c0_11] : memref<12x4xf32, #tpu.memory_space<vmem>>, vector<12x4xf32>
    %c0_12 = arith.constant 0 : index
    %c0_13 = arith.constant 0 : index
    %10 = vector.load %arg7[%c0_12, %c0_13] : memref<4x12xf32, #tpu.memory_space<vmem>>, vector<4x12xf32>
    %cst_14 = arith.constant dense<0.000000e+00> : vector<12xf32>
    %11 = vector.multi_reduction <add>, %6, %cst_14 [1] : vector<12x256xf32> to vector<12xf32>
    %12 = vector.shape_cast %11 : vector<12xf32> to vector<12x1xf32>
    %13 = arith.mulf %6, %6 : vector<12x256xf32>
    %cst_15 = arith.constant dense<0.000000e+00> : vector<12xf32>
    %14 = vector.multi_reduction <add>, %13, %cst_15 [1] : vector<12x256xf32> to vector<12xf32>
    %15 = vector.shape_cast %14 : vector<12xf32> to vector<12x1xf32>
    %cst_16 = arith.constant dense<0.000000e+00> : vector<4x1xf32>
    %16 = tpu.matmul %10, %12, %cst_16 {dimension_numbers = #tpu.dot_dimension_numbers<[1], [0], [0], [1], [0, 0, 1, 1], [], []>, precision = #tpu.contract_precision<fp32>} : vector<4x12xf32>, vector<12x1xf32>, vector<4x1xf32> -> vector<4x1xf32>
    %cst_17 = arith.constant dense<0.000000e+00> : vector<4x1xf32>
    %17 = tpu.matmul %10, %15, %cst_17 {dimension_numbers = #tpu.dot_dimension_numbers<[1], [0], [0], [1], [0, 0, 1, 1], [], []>, precision = #tpu.contract_precision<fp32>} : vector<4x12xf32>, vector<12x1xf32>, vector<4x1xf32> -> vector<4x1xf32>
    %cst_18 = arith.constant dense<0.000000e+00> : vector<12x1xf32>
    %18 = tpu.matmul %9, %16, %cst_18 {dimension_numbers = #tpu.dot_dimension_numbers<[1], [0], [0], [1], [0, 0, 1, 1], [], []>, precision = #tpu.contract_precision<fp32>} : vector<12x4xf32>, vector<4x1xf32>, vector<12x1xf32> -> vector<12x1xf32>
    %cst_19 = arith.constant 0.00130208337 : f32
    %19 = vector.broadcast %cst_19 : f32 to vector<12x1xf32>
    %20 = arith.mulf %18, %19 : vector<12x1xf32>
    %cst_20 = arith.constant dense<0.000000e+00> : vector<12x1xf32>
    %21 = tpu.matmul %9, %17, %cst_20 {dimension_numbers = #tpu.dot_dimension_numbers<[1], [0], [0], [1], [0, 0, 1, 1], [], []>, precision = #tpu.contract_precision<fp32>} : vector<12x4xf32>, vector<4x1xf32>, vector<12x1xf32> -> vector<12x1xf32>
    %cst_21 = arith.constant 0.00130208337 : f32
    %22 = vector.broadcast %cst_21 : f32 to vector<12x1xf32>
    %23 = arith.mulf %21, %22 : vector<12x1xf32>
    %24 = arith.mulf %20, %20 : vector<12x1xf32>
    %25 = arith.subf %23, %24 : vector<12x1xf32>
    %cst_22 = arith.constant 0.000000e+00 : f32
    %26 = vector.broadcast %cst_22 : f32 to vector<12x1xf32>
    %27 = arith.maximumf %25, %26 : vector<12x1xf32>
    %28 = vector.broadcast %20 : vector<12x1xf32> to vector<12x256xf32>
    %29 = arith.subf %6, %28 : vector<12x256xf32>
    %cst_23 = arith.constant 9.99999974E-6 : f32
    %30 = vector.broadcast %cst_23 : f32 to vector<12x1xf32>
    %31 = arith.addf %27, %30 : vector<12x1xf32>
    %32 = math.rsqrt %31 : vector<12x1xf32>
    %33 = vector.broadcast %32 : vector<12x1xf32> to vector<12x256xf32>
    %34 = arith.mulf %29, %33 : vector<12x256xf32>
    %35 = vector.broadcast %7 : vector<12x1xf32> to vector<12x256xf32>
    %36 = arith.mulf %34, %35 : vector<12x256xf32>
    %37 = vector.broadcast %8 : vector<12x1xf32> to vector<12x256xf32>
    %38 = arith.addf %36, %37 : vector<12x256xf32>
    %cst_24 = arith.constant 3.000000e+00 : f32
    %39 = vector.broadcast %cst_24 : f32 to vector<12x256xf32>
    %40 = arith.addf %38, %39 : vector<12x256xf32>
    %cst_25 = arith.constant 0.000000e+00 : f32
    %cst_26 = arith.constant 6.000000e+00 : f32
    %41 = vector.broadcast %cst_25 : f32 to vector<12x256xf32>
    %42 = arith.maximumf %41, %40 : vector<12x256xf32>
    %43 = vector.broadcast %cst_26 : f32 to vector<12x256xf32>
    %44 = arith.minimumf %43, %42 : vector<12x256xf32>
    %45 = arith.mulf %38, %44 : vector<12x256xf32>
    %cst_27 = arith.constant 0.166666672 : f32
    %46 = vector.broadcast %cst_27 : f32 to vector<12x256xf32>
    %47 = arith.mulf %45, %46 : vector<12x256xf32>
    %cst_28 = arith.constant 0.000000e+00 : f32
    %cst_29 = arith.constant 6.000000e+00 : f32
    %48 = vector.broadcast %cst_28 : f32 to vector<12x256xf32>
    %49 = arith.maximumf %48, %38 : vector<12x256xf32>
    %50 = vector.broadcast %cst_29 : f32 to vector<12x256xf32>
    %51 = arith.minimumf %50, %49 : vector<12x256xf32>
    %cst_30 = arith.constant 0.000000e+00 : f32
    %52 = vector.broadcast %cst_30 : f32 to vector<12x256xf32>
    %53 = arith.minimumf %38, %52 : vector<12x256xf32>
    %cst_31 = arith.constant 0.00999999977 : f32
    %54 = vector.broadcast %cst_31 : f32 to vector<12x256xf32>
    %55 = arith.mulf %54, %53 : vector<12x256xf32>
    %56 = arith.addf %51, %55 : vector<12x256xf32>
    %cst_32 = arith.constant -3.000000e+00 : f32
    %57 = vector.broadcast %cst_32 : f32 to vector<12x256xf32>
    %58 = arith.cmpf oge, %38, %57 : vector<12x256xf32>
    %cst_33 = arith.constant 3.000000e+00 : f32
    %59 = vector.broadcast %cst_33 : f32 to vector<12x256xf32>
    %60 = arith.cmpf ole, %38, %59 : vector<12x256xf32>
    %61 = arith.andi %58, %60 : vector<12x256xi1>
    %62 = arith.select %61, %47, %56 : vector<12x256xi1>, vector<12x256xf32>
    %c0_34 = arith.constant 0 : index
    %c0_35 = arith.constant 0 : index
    %c0_36 = arith.constant 0 : index
    %63 = vector.load %arg8[%c0_34, %c0_35, %c0_36] : memref<9x12x256xf32, #tpu.memory_space<vmem>>, vector<1x12x256xf32>
    %64 = vector.shape_cast %63 : vector<1x12x256xf32> to vector<12x256xf32>
    %c34_i32 = arith.constant 34 : i32
    %65 = tpu.dynamic_rotate %62 by %c34_i32 dim 1 : vector<12x256xf32>, i32 -> vector<12x256xf32>
    %66 = arith.mulf %65, %64 : vector<12x256xf32>
    %c1 = arith.constant 1 : index
    %c0_37 = arith.constant 0 : index
    %c0_38 = arith.constant 0 : index
    %67 = vector.load %arg8[%c1, %c0_37, %c0_38] : memref<9x12x256xf32, #tpu.memory_space<vmem>>, vector<1x12x256xf32>
    %68 = vector.shape_cast %67 : vector<1x12x256xf32> to vector<12x256xf32>
    %c32_i32 = arith.constant 32 : i32
    %69 = tpu.dynamic_rotate %62 by %c32_i32 dim 1 : vector<12x256xf32>, i32 -> vector<12x256xf32>
    %70 = arith.mulf %69, %68 : vector<12x256xf32>
    %71 = arith.addf %66, %70 : vector<12x256xf32>
    %c2 = arith.constant 2 : index
    %c0_39 = arith.constant 0 : index
    %c0_40 = arith.constant 0 : index
    %72 = vector.load %arg8[%c2, %c0_39, %c0_40] : memref<9x12x256xf32, #tpu.memory_space<vmem>>, vector<1x12x256xf32>
    %73 = vector.shape_cast %72 : vector<1x12x256xf32> to vector<12x256xf32>
    %c30_i32 = arith.constant 30 : i32
    %74 = tpu.dynamic_rotate %62 by %c30_i32 dim 1 : vector<12x256xf32>, i32 -> vector<12x256xf32>
    %75 = arith.mulf %74, %73 : vector<12x256xf32>
    %76 = arith.addf %71, %75 : vector<12x256xf32>
    %c3 = arith.constant 3 : index
    %c0_41 = arith.constant 0 : index
    %c0_42 = arith.constant 0 : index
    %77 = vector.load %arg8[%c3, %c0_41, %c0_42] : memref<9x12x256xf32, #tpu.memory_space<vmem>>, vector<1x12x256xf32>
    %78 = vector.shape_cast %77 : vector<1x12x256xf32> to vector<12x256xf32>
    %c2_i32 = arith.constant 2 : i32
    %79 = tpu.dynamic_rotate %62 by %c2_i32 dim 1 : vector<12x256xf32>, i32 -> vector<12x256xf32>
    %80 = arith.mulf %79, %78 : vector<12x256xf32>
    %81 = arith.addf %76, %80 : vector<12x256xf32>
    %c4 = arith.constant 4 : index
    %c0_43 = arith.constant 0 : index
    %c0_44 = arith.constant 0 : index
    %82 = vector.load %arg8[%c4, %c0_43, %c0_44] : memref<9x12x256xf32, #tpu.memory_space<vmem>>, vector<1x12x256xf32>
    %83 = vector.shape_cast %82 : vector<1x12x256xf32> to vector<12x256xf32>
    %84 = arith.mulf %62, %83 : vector<12x256xf32>
    %85 = arith.addf %81, %84 : vector<12x256xf32>
    %c5 = arith.constant 5 : index
    %c0_45 = arith.constant 0 : index
    %c0_46 = arith.constant 0 : index
    %86 = vector.load %arg8[%c5, %c0_45, %c0_46] : memref<9x12x256xf32, #tpu.memory_space<vmem>>, vector<1x12x256xf32>
    %87 = vector.shape_cast %86 : vector<1x12x256xf32> to vector<12x256xf32>
    %c254_i32 = arith.constant 254 : i32
    %88 = tpu.dynamic_rotate %62 by %c254_i32 dim 1 : vector<12x256xf32>, i32 -> vector<12x256xf32>
    %89 = arith.mulf %88, %87 : vector<12x256xf32>
    %90 = arith.addf %85, %89 : vector<12x256xf32>
    %c6 = arith.constant 6 : index
    %c0_47 = arith.constant 0 : index
    %c0_48 = arith.constant 0 : index
    %91 = vector.load %arg8[%c6, %c0_47, %c0_48] : memref<9x12x256xf32, #tpu.memory_space<vmem>>, vector<1x12x256xf32>
    %92 = vector.shape_cast %91 : vector<1x12x256xf32> to vector<12x256xf32>
    %c226_i32 = arith.constant 226 : i32
    %93 = tpu.dynamic_rotate %62 by %c226_i32 dim 1 : vector<12x256xf32>, i32 -> vector<12x256xf32>
    %94 = arith.mulf %93, %92 : vector<12x256xf32>
    %95 = arith.addf %90, %94 : vector<12x256xf32>
    %c7 = arith.constant 7 : index
    %c0_49 = arith.constant 0 : index
    %c0_50 = arith.constant 0 : index
    %96 = vector.load %arg8[%c7, %c0_49, %c0_50] : memref<9x12x256xf32, #tpu.memory_space<vmem>>, vector<1x12x256xf32>
    %97 = vector.shape_cast %96 : vector<1x12x256xf32> to vector<12x256xf32>
    %c224_i32 = arith.constant 224 : i32
    %98 = tpu.dynamic_rotate %62 by %c224_i32 dim 1 : vector<12x256xf32>, i32 -> vector<12x256xf32>
    %99 = arith.mulf %98, %97 : vector<12x256xf32>
    %100 = arith.addf %95, %99 : vector<12x256xf32>
    %c8 = arith.constant 8 : index
    %c0_51 = arith.constant 0 : index
    %c0_52 = arith.constant 0 : index
    %101 = vector.load %arg8[%c8, %c0_51, %c0_52] : memref<9x12x256xf32, #tpu.memory_space<vmem>>, vector<1x12x256xf32>
    %102 = vector.shape_cast %101 : vector<1x12x256xf32> to vector<12x256xf32>
    %c222_i32 = arith.constant 222 : i32
    %103 = tpu.dynamic_rotate %62 by %c222_i32 dim 1 : vector<12x256xf32>, i32 -> vector<12x256xf32>
    %104 = arith.mulf %103, %102 : vector<12x256xf32>
    %105 = arith.addf %100, %104 : vector<12x256xf32>
    %c0_53 = arith.constant 0 : index
    %c0_54 = arith.constant 0 : index
    %106 = vector.load %arg9[%c0_53, %c0_54] : memref<12x1xf32, #tpu.memory_space<vmem>>, vector<12x1xf32>
    %107 = vector.broadcast %106 : vector<12x1xf32> to vector<12x256xf32>
    %108 = arith.addf %105, %107 : vector<12x256xf32>
    %c0_55 = arith.constant 0 : index
    %c0_56 = arith.constant 0 : index
    %109 = vector.load %arg10[%c0_55, %c0_56] : memref<12x12xf32, #tpu.memory_space<vmem>>, vector<12x12xf32>
    %cst_57 = arith.constant dense<0.000000e+00> : vector<12x256xf32>
    %110 = tpu.matmul %109, %108, %cst_57 {dimension_numbers = #tpu.dot_dimension_numbers<[1], [0], [0], [1], [0, 0, 1, 1], [], []>, precision = #tpu.contract_precision<fp32>} : vector<12x12xf32>, vector<12x256xf32>, vector<12x256xf32> -> vector<12x256xf32>
    %c0_58 = arith.constant 0 : index
    %c0_59 = arith.constant 0 : index
    %111 = vector.load %arg11[%c0_58, %c0_59] : memref<12x1xf32, #tpu.memory_space<vmem>>, vector<12x1xf32>
    %112 = vector.broadcast %111 : vector<12x1xf32> to vector<12x256xf32>
    %113 = arith.addf %110, %112 : vector<12x256xf32>
    %c0_60 = arith.constant 0 : index
    %c0_61 = arith.constant 0 : index
    %114 = vector.load %arg12[%c0_60, %c0_61] : memref<12x1xf32, #tpu.memory_space<vmem>>, vector<12x1xf32>
    %c0_62 = arith.constant 0 : index
    %c0_63 = arith.constant 0 : index
    %115 = vector.load %arg13[%c0_62, %c0_63] : memref<12x1xf32, #tpu.memory_space<vmem>>, vector<12x1xf32>
    %c0_64 = arith.constant 0 : index
    %c0_65 = arith.constant 0 : index
    %116 = vector.load %arg14[%c0_64, %c0_65] : memref<12x4xf32, #tpu.memory_space<vmem>>, vector<12x4xf32>
    %c0_66 = arith.constant 0 : index
    %c0_67 = arith.constant 0 : index
    %117 = vector.load %arg15[%c0_66, %c0_67] : memref<4x12xf32, #tpu.memory_space<vmem>>, vector<4x12xf32>
    %cst_68 = arith.constant dense<0.000000e+00> : vector<12xf32>
    %118 = vector.multi_reduction <add>, %113, %cst_68 [1] : vector<12x256xf32> to vector<12xf32>
    %119 = vector.shape_cast %118 : vector<12xf32> to vector<12x1xf32>
    %120 = arith.mulf %113, %113 : vector<12x256xf32>
    %cst_69 = arith.constant dense<0.000000e+00> : vector<12xf32>
    %121 = vector.multi_reduction <add>, %120, %cst_69 [1] : vector<12x256xf32> to vector<12xf32>
    %122 = vector.shape_cast %121 : vector<12xf32> to vector<12x1xf32>
    %cst_70 = arith.constant dense<0.000000e+00> : vector<4x1xf32>
    %123 = tpu.matmul %117, %119, %cst_70 {dimension_numbers = #tpu.dot_dimension_numbers<[1], [0], [0], [1], [0, 0, 1, 1], [], []>, precision = #tpu.contract_precision<fp32>} : vector<4x12xf32>, vector<12x1xf32>, vector<4x1xf32> -> vector<4x1xf32>
    %cst_71 = arith.constant dense<0.000000e+00> : vector<4x1xf32>
    %124 = tpu.matmul %117, %122, %cst_71 {dimension_numbers = #tpu.dot_dimension_numbers<[1], [0], [0], [1], [0, 0, 1, 1], [], []>, precision = #tpu.contract_precision<fp32>} : vector<4x12xf32>, vector<12x1xf32>, vector<4x1xf32> -> vector<4x1xf32>
    %cst_72 = arith.constant dense<0.000000e+00> : vector<12x1xf32>
    %125 = tpu.matmul %116, %123, %cst_72 {dimension_numbers = #tpu.dot_dimension_numbers<[1], [0], [0], [1], [0, 0, 1, 1], [], []>, precision = #tpu.contract_precision<fp32>} : vector<12x4xf32>, vector<4x1xf32>, vector<12x1xf32> -> vector<12x1xf32>
    %cst_73 = arith.constant 0.00130208337 : f32
    %126 = vector.broadcast %cst_73 : f32 to vector<12x1xf32>
    %127 = arith.mulf %125, %126 : vector<12x1xf32>
    %cst_74 = arith.constant dense<0.000000e+00> : vector<12x1xf32>
    %128 = tpu.matmul %116, %124, %cst_74 {dimension_numbers = #tpu.dot_dimension_numbers<[1], [0], [0], [1], [0, 0, 1, 1], [], []>, precision = #tpu.contract_precision<fp32>} : vector<12x4xf32>, vector<4x1xf32>, vector<12x1xf32> -> vector<12x1xf32>
    %cst_75 = arith.constant 0.00130208337 : f32
    %129 = vector.broadcast %cst_75 : f32 to vector<12x1xf32>
    %130 = arith.mulf %128, %129 : vector<12x1xf32>
    %131 = arith.mulf %127, %127 : vector<12x1xf32>
    %132 = arith.subf %130, %131 : vector<12x1xf32>
    %cst_76 = arith.constant 0.000000e+00 : f32
    %133 = vector.broadcast %cst_76 : f32 to vector<12x1xf32>
    %134 = arith.maximumf %132, %133 : vector<12x1xf32>
    %135 = vector.broadcast %127 : vector<12x1xf32> to vector<12x256xf32>
    %136 = arith.subf %113, %135 : vector<12x256xf32>
    %cst_77 = arith.constant 9.99999974E-6 : f32
    %137 = vector.broadcast %cst_77 : f32 to vector<12x1xf32>
    %138 = arith.addf %134, %137 : vector<12x1xf32>
    %139 = math.rsqrt %138 : vector<12x1xf32>
    %140 = vector.broadcast %139 : vector<12x1xf32> to vector<12x256xf32>
    %141 = arith.mulf %136, %140 : vector<12x256xf32>
    %142 = vector.broadcast %114 : vector<12x1xf32> to vector<12x256xf32>
    %143 = arith.mulf %141, %142 : vector<12x256xf32>
    %144 = vector.broadcast %115 : vector<12x1xf32> to vector<12x256xf32>
    %145 = arith.addf %143, %144 : vector<12x256xf32>
    %cst_78 = arith.constant 3.000000e+00 : f32
    %146 = vector.broadcast %cst_78 : f32 to vector<12x256xf32>
    %147 = arith.addf %145, %146 : vector<12x256xf32>
    %cst_79 = arith.constant 0.000000e+00 : f32
    %cst_80 = arith.constant 6.000000e+00 : f32
    %148 = vector.broadcast %cst_79 : f32 to vector<12x256xf32>
    %149 = arith.maximumf %148, %147 : vector<12x256xf32>
    %150 = vector.broadcast %cst_80 : f32 to vector<12x256xf32>
    %151 = arith.minimumf %150, %149 : vector<12x256xf32>
    %152 = arith.mulf %145, %151 : vector<12x256xf32>
    %cst_81 = arith.constant 0.166666672 : f32
    %153 = vector.broadcast %cst_81 : f32 to vector<12x256xf32>
    %154 = arith.mulf %152, %153 : vector<12x256xf32>
    %cst_82 = arith.constant 0.000000e+00 : f32
    %cst_83 = arith.constant 6.000000e+00 : f32
    %155 = vector.broadcast %cst_82 : f32 to vector<12x256xf32>
    %156 = arith.maximumf %155, %145 : vector<12x256xf32>
    %157 = vector.broadcast %cst_83 : f32 to vector<12x256xf32>
    %158 = arith.minimumf %157, %156 : vector<12x256xf32>
    %cst_84 = arith.constant 0.000000e+00 : f32
    %159 = vector.broadcast %cst_84 : f32 to vector<12x256xf32>
    %160 = arith.minimumf %145, %159 : vector<12x256xf32>
    %cst_85 = arith.constant 0.00999999977 : f32
    %161 = vector.broadcast %cst_85 : f32 to vector<12x256xf32>
    %162 = arith.mulf %161, %160 : vector<12x256xf32>
    %163 = arith.addf %158, %162 : vector<12x256xf32>
    %cst_86 = arith.constant -3.000000e+00 : f32
    %164 = vector.broadcast %cst_86 : f32 to vector<12x256xf32>
    %165 = arith.cmpf oge, %145, %164 : vector<12x256xf32>
    %cst_87 = arith.constant 3.000000e+00 : f32
    %166 = vector.broadcast %cst_87 : f32 to vector<12x256xf32>
    %167 = arith.cmpf ole, %145, %166 : vector<12x256xf32>
    %168 = arith.andi %165, %167 : vector<12x256xi1>
    %169 = arith.select %168, %154, %163 : vector<12x256xi1>, vector<12x256xf32>
    %cst_88 = arith.constant dense<0.000000e+00> : vector<12xf32>
    %170 = vector.multi_reduction <add>, %169, %cst_88 [1] : vector<12x256xf32> to vector<12xf32>
    %171 = vector.shape_cast %170 : vector<12xf32> to vector<12x1xf32>
    %cst_89 = arith.constant 3.906250e-03 : f32
    %172 = vector.broadcast %cst_89 : f32 to vector<12x1xf32>
    %173 = arith.mulf %171, %172 : vector<12x1xf32>
    %c0_90 = arith.constant 0 : index
    %c0_91 = arith.constant 0 : index
    %174 = vector.load %arg16[%c0_90, %c0_91] : memref<4x12xf32, #tpu.memory_space<vmem>>, vector<4x12xf32>
    %cst_92 = arith.constant dense<0.000000e+00> : vector<4x1xf32>
    %175 = tpu.matmul %174, %173, %cst_92 {dimension_numbers = #tpu.dot_dimension_numbers<[1], [0], [0], [1], [0, 0, 1, 1], [], []>, precision = #tpu.contract_precision<fp32>} : vector<4x12xf32>, vector<12x1xf32>, vector<4x1xf32> -> vector<4x1xf32>
    %cst_93 = arith.constant 0.000000e+00 : f32
    %176 = vector.broadcast %cst_93 : f32 to vector<4x1xf32>
    %177 = arith.maximumf %175, %176 : vector<4x1xf32>
    %c0_94 = arith.constant 0 : index
    %c0_95 = arith.constant 0 : index
    %178 = vector.load %arg17[%c0_94, %c0_95] : memref<12x4xf32, #tpu.memory_space<vmem>>, vector<12x4xf32>
    %cst_96 = arith.constant dense<0.000000e+00> : vector<12x1xf32>
    %179 = tpu.matmul %178, %177, %cst_96 {dimension_numbers = #tpu.dot_dimension_numbers<[1], [0], [0], [1], [0, 0, 1, 1], [], []>, precision = #tpu.contract_precision<fp32>} : vector<12x4xf32>, vector<4x1xf32>, vector<12x1xf32> -> vector<12x1xf32>
    %cst_97 = arith.constant 0.166666672 : f32
    %180 = vector.broadcast %cst_97 : f32 to vector<12x1xf32>
    %181 = arith.mulf %179, %180 : vector<12x1xf32>
    %cst_98 = arith.constant 5.000000e-01 : f32
    %182 = vector.broadcast %cst_98 : f32 to vector<12x1xf32>
    %183 = arith.addf %181, %182 : vector<12x1xf32>
    %cst_99 = arith.constant 0.000000e+00 : f32
    %cst_100 = arith.constant 1.000000e+00 : f32
    %184 = vector.broadcast %cst_99 : f32 to vector<12x1xf32>
    %185 = arith.maximumf %184, %183 : vector<12x1xf32>
    %186 = vector.broadcast %cst_100 : f32 to vector<12x1xf32>
    %187 = arith.minimumf %186, %185 : vector<12x1xf32>
    %c0_101 = arith.constant 0 : index
    %c0_102 = arith.constant 0 : index
    %188 = vector.load %arg18[%c0_101, %c0_102] : memref<1x12xf32, #tpu.memory_space<vmem>>, vector<1x12xf32>
    %cst_103 = arith.constant dense<0.000000e+00> : vector<1x256xf32>
    %189 = tpu.matmul %188, %169, %cst_103 {dimension_numbers = #tpu.dot_dimension_numbers<[1], [0], [0], [1], [0, 0, 1, 1], [], []>, precision = #tpu.contract_precision<fp32>} : vector<1x12xf32>, vector<12x256xf32>, vector<1x256xf32> -> vector<1x256xf32>
    %cst_104 = arith.constant 0.000000e+00 : f32
    %190 = vector.broadcast %cst_104 : f32 to vector<1x256xf32>
    %191 = arith.subf %190, %189 : vector<1x256xf32>
    %192 = math.exp %191 : vector<1x256xf32>
    %cst_105 = arith.constant 1.000000e+00 : f32
    %193 = vector.broadcast %cst_105 : f32 to vector<1x256xf32>
    %194 = arith.addf %193, %192 : vector<1x256xf32>
    %cst_106 = arith.constant 1.000000e+00 : f32
    %195 = vector.broadcast %cst_106 : f32 to vector<1x256xf32>
    %196 = arith.divf %195, %194 : vector<1x256xf32>
    %197 = vector.broadcast %187 : vector<12x1xf32> to vector<12x256xf32>
    %198 = vector.broadcast %196 : vector<1x256xf32> to vector<12x256xf32>
    %199 = arith.addf %197, %198 : vector<12x256xf32>
    %200 = arith.mulf %169, %199 : vector<12x256xf32>
    %c0_107 = arith.constant 0 : index
    %c0_108 = arith.constant 0 : index
    %c0_109 = arith.constant 0 : index
    %201 = vector.load %arg19[%c0_107, %c0_108, %c0_109] : memref<1x12x256xf32, #tpu.memory_space<vmem>>, vector<1x12x256xf32>
    %202 = vector.shape_cast %201 : vector<1x12x256xf32> to vector<12x256xf32>
    %203 = vector.shape_cast %200 : vector<12x256xf32> to vector<1x12x256xf32>
    tpu.vector_store %arg19[%c0_107, %c0_108, %c0_109], %203 {strides = array<i32>} : memref<1x12x256xf32, #tpu.memory_space<vmem>>, vector<1x12x256xf32>,
    return
  }
  func.func @transform_0(%arg0: i32) -> (i32, i32, i32) {
    %c0_i32 = arith.constant 0 : i32
    %c0_i32_0 = arith.constant 0 : i32
    %c0_i32_1 = arith.constant 0 : i32
    return %arg0, %c0_i32, %c0_i32_0 : i32, i32, i32
  }
  func.func @transform_1(%arg0: i32) -> (i32, i32) {
    %c0_i32 = arith.constant 0 : i32
    %c0_i32_0 = arith.constant 0 : i32
    %c0_i32_1 = arith.constant 0 : i32
    return %c0_i32, %c0_i32_0 : i32, i32
  }
  func.func @transform_2(%arg0: i32) -> (i32, i32) {
    %c0_i32 = arith.constant 0 : i32
    %c0_i32_0 = arith.constant 0 : i32
    %c0_i32_1 = arith.constant 0 : i32
    return %c0_i32, %c0_i32_0 : i32, i32
  }
  func.func @transform_3(%arg0: i32) -> (i32, i32) {
    %c0_i32 = arith.constant 0 : i32
    %c0_i32_0 = arith.constant 0 : i32
    %c0_i32_1 = arith.constant 0 : i32
    return %c0_i32, %c0_i32_0 : i32, i32
  }
  func.func @transform_4(%arg0: i32) -> (i32, i32) {
    %c0_i32 = arith.constant 0 : i32
    %c0_i32_0 = arith.constant 0 : i32
    %c0_i32_1 = arith.constant 0 : i32
    return %c0_i32, %c0_i32_0 : i32, i32
  }
  func.func @transform_5(%arg0: i32) -> (i32, i32) {
    %c0_i32 = arith.constant 0 : i32
    %c0_i32_0 = arith.constant 0 : i32
    %c0_i32_1 = arith.constant 0 : i32
    return %c0_i32, %c0_i32_0 : i32, i32
  }
  func.func @transform_6(%arg0: i32) -> (i32, i32) {
    %c0_i32 = arith.constant 0 : i32
    %c0_i32_0 = arith.constant 0 : i32
    %c0_i32_1 = arith.constant 0 : i32
    return %c0_i32, %c0_i32_0 : i32, i32
  }
  func.func @transform_7(%arg0: i32) -> (i32, i32, i32) {
    %c0_i32 = arith.constant 0 : i32
    %c0_i32_0 = arith.constant 0 : i32
    %c0_i32_1 = arith.constant 0 : i32
    %c0_i32_2 = arith.constant 0 : i32
    return %c0_i32, %c0_i32_0, %c0_i32_1 : i32, i32, i32
  }
  func.func @transform_8(%arg0: i32) -> (i32, i32) {
    %c0_i32 = arith.constant 0 : i32
    %c0_i32_0 = arith.constant 0 : i32
    %c0_i32_1 = arith.constant 0 : i32
    return %c0_i32, %c0_i32_0 : i32, i32
  }
  func.func @transform_9(%arg0: i32) -> (i32, i32) {
    %c0_i32 = arith.constant 0 : i32
    %c0_i32_0 = arith.constant 0 : i32
    %c0_i32_1 = arith.constant 0 : i32
    return %c0_i32, %c0_i32_0 : i32, i32
  }
  func.func @transform_10(%arg0: i32) -> (i32, i32) {
    %c0_i32 = arith.constant 0 : i32
    %c0_i32_0 = arith.constant 0 : i32
    %c0_i32_1 = arith.constant 0 : i32
    return %c0_i32, %c0_i32_0 : i32, i32
  }
  func.func @transform_11(%arg0: i32) -> (i32, i32) {
    %c0_i32 = arith.constant 0 : i32
    %c0_i32_0 = arith.constant 0 : i32
    %c0_i32_1 = arith.constant 0 : i32
    return %c0_i32, %c0_i32_0 : i32, i32
  }
  func.func @transform_12(%arg0: i32) -> (i32, i32) {
    %c0_i32 = arith.constant 0 : i32
    %c0_i32_0 = arith.constant 0 : i32
    %c0_i32_1 = arith.constant 0 : i32
    return %c0_i32, %c0_i32_0 : i32, i32
  }
  func.func @transform_13(%arg0: i32) -> (i32, i32) {
    %c0_i32 = arith.constant 0 : i32
    %c0_i32_0 = arith.constant 0 : i32
    %c0_i32_1 = arith.constant 0 : i32
    return %c0_i32, %c0_i32_0 : i32, i32
  }
  func.func @transform_14(%arg0: i32) -> (i32, i32) {
    %c0_i32 = arith.constant 0 : i32
    %c0_i32_0 = arith.constant 0 : i32
    %c0_i32_1 = arith.constant 0 : i32
    return %c0_i32, %c0_i32_0 : i32, i32
  }
  func.func @transform_15(%arg0: i32) -> (i32, i32) {
    %c0_i32 = arith.constant 0 : i32
    %c0_i32_0 = arith.constant 0 : i32
    %c0_i32_1 = arith.constant 0 : i32
    return %c0_i32, %c0_i32_0 : i32, i32
  }
  func.func @transform_16(%arg0: i32) -> (i32, i32) {
    %c0_i32 = arith.constant 0 : i32
    %c0_i32_0 = arith.constant 0 : i32
    %c0_i32_1 = arith.constant 0 : i32
    return %c0_i32, %c0_i32_0 : i32, i32
  }
  func.func @transform_17(%arg0: i32) -> (i32, i32) {
    %c0_i32 = arith.constant 0 : i32
    %c0_i32_0 = arith.constant 0 : i32
    %c0_i32_1 = arith.constant 0 : i32
    return %c0_i32, %c0_i32_0 : i32, i32
  }
  func.func @transform_18(%arg0: i32) -> (i32, i32, i32) {
    %c0_i32 = arith.constant 0 : i32
    %c0_i32_0 = arith.constant 0 : i32
    %c0_i32_1 = arith.constant 0 : i32
    return %arg0, %c0_i32, %c0_i32_0 : i32, i32, i32
  }
}

</mosaic_0001>

<llo_original>
// kernel: dilated_downsample_up_forward.1
$region0: #{dilated_downsample_up_forward.1}
  #allocation0 [shape = 'u32[]', space=smem, size = 0x4, offset = 0x4, fixed_abs, tag = 'smem constant byte address 0x4 - core index']
  #allocation1 [shape = 'u32[144,128]{1,0:T(1,128)}', space=vmem, size = 0x12000, scoped, tag = 'internal scratch']
  %s0 = inlined_call_operand.vmem [shape: f32[2,8,256], index: 0, kind: input, shape index: {}]
  %s1 = inlined_call_operand.vmem [shape: f32[12,8], index: 1, kind: input, shape index: {}]
  %s2 = inlined_call_operand.vmem [shape: f32[12,1], index: 2, kind: input, shape index: {}]
  %s3 = inlined_call_operand.vmem [shape: f32[12,1], index: 3, kind: input, shape index: {}]
  %s4 = inlined_call_operand.vmem [shape: f32[12,1], index: 4, kind: input, shape index: {}]
  %s5 = inlined_call_operand.vmem [shape: f32[12,4], index: 5, kind: input, shape index: {}]
  %s6 = inlined_call_operand.vmem [shape: f32[4,12], index: 6, kind: input, shape index: {}]
  %s7 = inlined_call_operand.vmem [shape: f32[9,12,256], index: 7, kind: input, shape index: {}]
  %s8 = inlined_call_operand.vmem [shape: f32[12,1], index: 8, kind: input, shape index: {}]
  %s9 = inlined_call_operand.vmem [shape: f32[12,12], index: 9, kind: input, shape index: {}]
  %s10 = inlined_call_operand.vmem [shape: f32[12,1], index: 10, kind: input, shape index: {}]
  %s11 = inlined_call_operand.vmem [shape: f32[12,1], index: 11, kind: input, shape index: {}]
  %s12 = inlined_call_operand.vmem [shape: f32[12,1], index: 12, kind: input, shape index: {}]
  %s13 = inlined_call_operand.vmem [shape: f32[12,4], index: 13, kind: input, shape index: {}]
  %s14 = inlined_call_operand.vmem [shape: f32[4,12], index: 14, kind: input, shape index: {}]
  %s15 = inlined_call_operand.vmem [shape: f32[4,12], index: 15, kind: input, shape index: {}]
  %s16 = inlined_call_operand.vmem [shape: f32[12,4], index: 16, kind: input, shape index: {}]
  %s17 = inlined_call_operand.vmem [shape: f32[1,12], index: 17, kind: input, shape index: {}]
  %s18 = inlined_call_operand.vmem [shape: f32[2,12,256], index: 18, kind: output, shape index: {}]
  %s19 = sld [smem:[#allocation0]]
  $region105: #{dilated_downsample_up_forward.1} parent=0
    _
  %s21 = ssub.s32 1, %s19
  %s22 = scalar_select 0, %s21, %s19
  loop: start=0, step=1, limit=4
  $region2: #{dilated_downsample_up_forward.1} parent=0 // loop_pre_header
    _
  $region3: #{dilated_downsample_up_forward.1} parent=0 // loop_header
    %s24 = sphi 0, %s28
    %p25 = scmp.ge.s32.totalorder %s24, 4
    %s34 = sphi 0, %s36
    %s37 = sphi 0, %s34
    %s38 = sphi 0, %s37
    %s54 = sphi 0, %s38
    %s58 = sphi 0, %s58
    %s60 = sphi 0, %s58
    %s61 = sphi 0, %s60
    %s75 = sphi 0, %s61
    %s79 = sphi 0, %s79
    %s81 = sphi 0, %s79
    %s82 = sphi 0, %s81
    %s96 = sphi 0, %s82
    %s100 = sphi 0, %s100
    %s102 = sphi 0, %s100
    %s103 = sphi 0, %s102
    %s117 = sphi 0, %s103
    %s121 = sphi 0, %s121
    %s123 = sphi 0, %s121
    %s124 = sphi 0, %s123
    %s138 = sphi 0, %s124
    %s142 = sphi 0, %s142
    %s144 = sphi 0, %s142
    %s145 = sphi 0, %s144
    %s159 = sphi 0, %s145
    %s163 = sphi 0, %s163
    %s165 = sphi 0, %s163
    %s166 = sphi 0, %s165
    %s180 = sphi 0, %s166
    %s184 = sphi 0, %s184
    %s186 = sphi 0, %s184
    %s187 = sphi 0, %s186
    %s201 = sphi 0, %s187
    %s205 = sphi 0, %s205
    %s207 = sphi 0, %s205
    %s208 = sphi 0, %s207
    %s222 = sphi 0, %s208
    %s226 = sphi 0, %s226
    %s228 = sphi 0, %s226
    %s229 = sphi 0, %s228
    %s243 = sphi 0, %s229
    %s247 = sphi 0, %s247
    %s249 = sphi 0, %s247
    %s250 = sphi 0, %s249
    %s264 = sphi 0, %s250
    %s268 = sphi 0, %s268
    %s270 = sphi 0, %s268
    %s271 = sphi 0, %s270
    %s285 = sphi 0, %s271
    %s289 = sphi 0, %s289
    %s291 = sphi 0, %s289
    %s292 = sphi 0, %s291
    %s306 = sphi 0, %s292
    %s310 = sphi 0, %s310
    %s312 = sphi 0, %s310
    %s313 = sphi 0, %s312
    %s327 = sphi 0, %s313
    %s331 = sphi 0, %s331
    %s333 = sphi 0, %s331
    %s334 = sphi 0, %s333
    %s348 = sphi 0, %s334
    %s352 = sphi 0, %s352
    %s354 = sphi 0, %s352
    %s355 = sphi 0, %s354
    %s369 = sphi 0, %s355
    %s373 = sphi 0, %s373
    %s375 = sphi 0, %s373
    %s376 = sphi 0, %s375
    %s390 = sphi 0, %s376
    %s394 = sphi 0, %s394
    %s396 = sphi 0, %s394
    %s397 = sphi 0, %s396
    %s411 = sphi 0, %s397
    %s417 = sphi 0, %s419
    %s420 = sphi 0, %s417
    %s421 = sphi 0, %s420
    %s437 = sphi 0, %s421
  $region4: #{dilated_downsample_up_forward.1} parent=0 // loop_header_branch
    %27 = sbr.rel (%p25) target = $region8
  $region5: #{dilated_downsample_up_forward.1} parent=0 // loop_body
    %s29 = ssub.s32 %s24, 1
    %s30 = ssub.s32 %s24, 2
    %s31 = sadd.s32 %s24, 1
    %s32 = ssub.s32 %s24, %s31
    %p33 = scmp.eq.s32.totalorder %s32, 0
    %s35 = sadd.s32 %s34, 1
    %s36 = scalar_select %p33, %s34, %s35
    %p39 = pneg %p33
    %p40 = scmp.eq.s32.totalorder %s24, 1
    %p41 = por %p39, %p40
    %p42 = scmp.ne.s32.totalorder %s34, %s37
    %p43 = scmp.eq.s32.totalorder %s24, 0
    %p44 = por %p42, %p43
    %p45 = scmp.ne.s32.totalorder %s34, %s37
    %p46 = scmp.eq.s32.totalorder %s29, 1
    %p47 = por %p45, %p46
    %p48 = scmp.ne.s32.totalorder %s37, %s38
    %p49 = scmp.eq.s32.totalorder %s29, 0
    %p50 = por %p48, %p49
    %p51 = scmp.ne.s32.totalorder %s37, %s38
    %p52 = scmp.eq.s32.totalorder %s30, 1
    %p53 = por %p51, %p52
    %p55 = scmp.ne.s32.totalorder %s38, %s54
    %p56 = scmp.eq.s32.totalorder %s30, 0
    %p57 = por %p55, %p56
    %s59 = sadd.s32 %s58, 1
    %p62 = scmp.eq.s32.totalorder %s24, 1
    %p63 = scmp.ne.s32.totalorder %s58, %s60
    %p64 = scmp.eq.s32.totalorder %s24, 0
    %p65 = por %p63, %p64
    %p66 = scmp.ne.s32.totalorder %s58, %s60
    %p67 = scmp.eq.s32.totalorder %s29, 1
    %p68 = por %p66, %p67
    %p69 = scmp.ne.s32.totalorder %s60, %s61
    %p70 = scmp.eq.s32.totalorder %s29, 0
    %p71 = por %p69, %p70
    %p72 = scmp.ne.s32.totalorder %s60, %s61
    %p73 = scmp.eq.s32.totalorder %s30, 1
    %p74 = por %p72, %p73
    %p76 = scmp.ne.s32.totalorder %s61, %s75
    %p77 = scmp.eq.s32.totalorder %s30, 0
    %p78 = por %p76, %p77
    %s80 = sadd.s32 %s79, 1
    %p83 = scmp.eq.s32.totalorder %s24, 1
    %p84 = scmp.ne.s32.totalorder %s79, %s81
    %p85 = scmp.eq.s32.totalorder %s24, 0
    %p86 = por %p84, %p85
    %p87 = scmp.ne.s32.totalorder %s79, %s81
    %p88 = scmp.eq.s32.totalorder %s29, 1
    %p89 = por %p87, %p88
    %p90 = scmp.ne.s32.totalorder %s81, %s82
    %p91 = scmp.eq.s32.totalorder %s29, 0
    %p92 = por %p90, %p91
    %p93 = scmp.ne.s32.totalorder %s81, %s82
    %p94 = scmp.eq.s32.totalorder %s30, 1
    %p95 = por %p93, %p94
    %p97 = scmp.ne.s32.totalorder %s82, %s96
    %p98 = scmp.eq.s32.totalorder %s30, 0
    %p99 = por %p97, %p98
    %s101 = sadd.s32 %s100, 1
    %p104 = scmp.eq.s32.totalorder %s24, 1
    %p105 = scmp.ne.s32.totalorder %s100, %s102
    %p106 = scmp.eq.s32.totalorder %s24, 0
    %p107 = por %p105, %p106
    %p108 = scmp.ne.s32.totalorder %s100, %s102
    %p109 = scmp.eq.s32.totalorder %s29, 1
    %p110 = por %p108, %p109
    %p111 = scmp.ne.s32.totalorder %s102, %s103
    %p112 = scmp.eq.s32.totalorder %s29, 0
    %p113 = por %p111, %p112
    %p114 = scmp.ne.s32.totalorder %s102, %s103
    %p115 = scmp.eq.s32.totalorder %s30, 1
    %p116 = por %p114, %p115
    %p118 = scmp.ne.s32.totalorder %s103, %s117
    %p119 = scmp.eq.s32.totalorder %s30, 0
    %p120 = por %p118, %p119
    %s122 = sadd.s32 %s121, 1
    %p125 = scmp.eq.s32.totalorder %s24, 1
    %p126 = scmp.ne.s32.totalorder %s121, %s123
    %p127 = scmp.eq.s32.totalorder %s24, 0
    %p128 = por %p126, %p127
    %p129 = scmp.ne.s32.totalorder %s121, %s123
    %p130 = scmp.eq.s32.totalorder %s29, 1
    %p131 = por %p129, %p130
    %p132 = scmp.ne.s32.totalorder %s123, %s124
    %p133 = scmp.eq.s32.totalorder %s29, 0
    %p134 = por %p132, %p133
    %p135 = scmp.ne.s32.totalorder %s123, %s124
    %p136 = scmp.eq.s32.totalorder %s30, 1
    %p137 = por %p135, %p136
    %p139 = scmp.ne.s32.totalorder %s124, %s138
    %p140 = scmp.eq.s32.totalorder %s30, 0
    %p141 = por %p139, %p140
    %s143 = sadd.s32 %s142, 1
    %p146 = scmp.eq.s32.totalorder %s24, 1
    %p147 = scmp.ne.s32.totalorder %s142, %s144
    %p148 = scmp.eq.s32.totalorder %s24, 0
    %p149 = por %p147, %p148
    %p150 = scmp.ne.s32.totalorder %s142, %s144
    %p151 = scmp.eq.s32.totalorder %s29, 1
    %p152 = por %p150, %p151
    %p153 = scmp.ne.s32.totalorder %s144, %s145
    %p154 = scmp.eq.s32.totalorder %s29, 0
    %p155 = por %p153, %p154
    %p156 = scmp.ne.s32.totalorder %s144, %s145
    %p157 = scmp.eq.s32.totalorder %s30, 1
    %p158 = por %p156, %p157
    %p160 = scmp.ne.s32.totalorder %s145, %s159
    %p161 = scmp.eq.s32.totalorder %s30, 0
    %p162 = por %p160, %p161
    %s164 = sadd.s32 %s163, 1
    %p167 = scmp.eq.s32.totalorder %s24, 1
    %p168 = scmp.ne.s32.totalorder %s163, %s165
    %p169 = scmp.eq.s32.totalorder %s24, 0
    %p170 = por %p168, %p169
    %p171 = scmp.ne.s32.totalorder %s163, %s165
    %p172 = scmp.eq.s32.totalorder %s29, 1
    %p173 = por %p171, %p172
    %p174 = scmp.ne.s32.totalorder %s165, %s166
    %p175 = scmp.eq.s32.totalorder %s29, 0
    %p176 = por %p174, %p175
    %p177 = scmp.ne.s32.totalorder %s165, %s166
    %p178 = scmp.eq.s32.totalorder %s30, 1
    %p179 = por %p177, %p178
    %p181 = scmp.ne.s32.totalorder %s166, %s180
    %p182 = scmp.eq.s32.totalorder %s30, 0
    %p183 = por %p181, %p182
    %s185 = sadd.s32 %s184, 1
    %p188 = scmp.eq.s32.totalorder %s24, 1
    %p189 = scmp.ne.s32.totalorder %s184, %s186
    %p190 = scmp.eq.s32.totalorder %s24, 0
    %p191 = por %p189, %p190
    %p192 = scmp.ne.s32.totalorder %s184, %s186
    %p193 = scmp.eq.s32.totalorder %s29, 1
    %p194 = por %p192, %p193
    %p195 = scmp.ne.s32.totalorder %s186, %s187
    %p196 = scmp.eq.s32.totalorder %s29, 0
    %p197 = por %p195, %p196
    %p198 = scmp.ne.s32.totalorder %s186, %s187
    %p199 = scmp.eq.s32.totalorder %s30, 1
    %p200 = por %p198, %p199
    %p202 = scmp.ne.s32.totalorder %s187, %s201
    %p203 = scmp.eq.s32.totalorder %s30, 0
    %p204 = por %p202, %p203
    %s206 = sadd.s32 %s205, 1
    %p209 = scmp.eq.s32.totalorder %s24, 1
    %p210 = scmp.ne.s32.totalorder %s205, %s207
    %p211 = scmp.eq.s32.totalorder %s24, 0
    %p212 = por %p210, %p211
    %p213 = scmp.ne.s32.totalorder %s205, %s207
    %p214 = scmp.eq.s32.totalorder %s29, 1
    %p215 = por %p213, %p214
    %p216 = scmp.ne.s32.totalorder %s207, %s208
    %p217 = scmp.eq.s32.totalorder %s29, 0
    %p218 = por %p216, %p217
    %p219 = scmp.ne.s32.totalorder %s207, %s208
    %p220 = scmp.eq.s32.totalorder %s30, 1
    %p221 = por %p219, %p220
    %p223 = scmp.ne.s32.totalorder %s208, %s222
    %p224 = scmp.eq.s32.totalorder %s30, 0
    %p225 = por %p223, %p224
    %s227 = sadd.s32 %s226, 1
    %p230 = scmp.eq.s32.totalorder %s24, 1
    %p231 = scmp.ne.s32.totalorder %s226, %s228
    %p232 = scmp.eq.s32.totalorder %s24, 0
    %p233 = por %p231, %p232
    %p234 = scmp.ne.s32.totalorder %s226, %s228
    %p235 = scmp.eq.s32.totalorder %s29, 1
    %p236 = por %p234, %p235
    %p237 = scmp.ne.s32.totalorder %s228, %s229
    %p238 = scmp.eq.s32.totalorder %s29, 0
    %p239 = por %p237, %p238
    %p240 = scmp.ne.s32.totalorder %s228, %s229
    %p241 = scmp.eq.s32.totalorder %s30, 1
    %p242 = por %p240, %p241
    %p244 = scmp.ne.s32.totalorder %s229, %s243
    %p245 = scmp.eq.s32.totalorder %s30, 0
    %p246 = por %p244, %p245
    %s248 = sadd.s32 %s247, 1
    %p251 = scmp.eq.s32.totalorder %s24, 1
    %p252 = scmp.ne.s32.totalorder %s247, %s249
    %p253 = scmp.eq.s32.totalorder %s24, 0
    %p254 = por %p252, %p253
    %p255 = scmp.ne.s32.totalorder %s247, %s249
    %p256 = scmp.eq.s32.totalorder %s29, 1
    %p257 = por %p255, %p256
    %p258 = scmp.ne.s32.totalorder %s249, %s250
    %p259 = scmp.eq.s32.totalorder %s29, 0
    %p260 = por %p258, %p259
    %p261 = scmp.ne.s32.totalorder %s249, %s250
    %p262 = scmp.eq.s32.totalorder %s30, 1
    %p263 = por %p261, %p262
    %p265 = scmp.ne.s32.totalorder %s250, %s264
    %p266 = scmp.eq.s32.totalorder %s30, 0
    %p267 = por %p265, %p266
    %s269 = sadd.s32 %s268, 1
    %p272 = scmp.eq.s32.totalorder %s24, 1
    %p273 = scmp.ne.s32.totalorder %s268, %s270
    %p274 = scmp.eq.s32.totalorder %s24, 0
    %p275 = por %p273, %p274
    %p276 = scmp.ne.s32.totalorder %s268, %s270
    %p277 = scmp.eq.s32.totalorder %s29, 1
    %p278 = por %p276, %p277
    %p279 = scmp.ne.s32.totalorder %s270, %s271
    %p280 = scmp.eq.s32.totalorder %s29, 0
    %p281 = por %p279, %p280
    %p282 = scmp.ne.s32.totalorder %s270, %s271
    %p283 = scmp.eq.s32.totalorder %s30, 1
    %p284 = por %p282, %p283
    %p286 = scmp.ne.s32.totalorder %s271, %s285
    %p287 = scmp.eq.s32.totalorder %s30, 0
    %p288 = por %p286, %p287
    %s290 = sadd.s32 %s289, 1
    %p293 = scmp.eq.s32.totalorder %s24, 1
    %p294 = scmp.ne.s32.totalorder %s289, %s291
    %p295 = scmp.eq.s32.totalorder %s24, 0
    %p296 = por %p294, %p295
    %p297 = scmp.ne.s32.totalorder %s289, %s291
    %p298 = scmp.eq.s32.totalorder %s29, 1
    %p299 = por %p297, %p298
    %p300 = scmp.ne.s32.totalorder %s291, %s292
    %p301 = scmp.eq.s32.totalorder %s29, 0
    %p302 = por %p300, %p301
    %p303 = scmp.ne.s32.totalorder %s291, %s292
    %p304 = scmp.eq.s32.totalorder %s30, 1
    %p305 = por %p303, %p304
    %p307 = scmp.ne.s32.totalorder %s292, %s306
    %p308 = scmp.eq.s32.totalorder %s30, 0
    %p309 = por %p307, %p308
    %s311 = sadd.s32 %s310, 1
    %p314 = scmp.eq.s32.totalorder %s24, 1
    %p315 = scmp.ne.s32.totalorder %s310, %s312
    %p316 = scmp.eq.s32.totalorder %s24, 0
    %p317 = por %p315, %p316
    %p318 = scmp.ne.s32.totalorder %s310, %s312
    %p319 = scmp.eq.s32.totalorder %s29, 1
    %p320 = por %p318, %p319
    %p321 = scmp.ne.s32.totalorder %s312, %s313
    %p322 = scmp.eq.s32.totalorder %s29, 0
    %p323 = por %p321, %p322
    %p324 = scmp.ne.s32.totalorder %s312, %s313
    %p325 = scmp.eq.s32.totalorder %s30, 1
    %p326 = por %p324, %p325
    %p328 = scmp.ne.s32.totalorder %s313, %s327
    %p329 = scmp.eq.s32.totalorder %s30, 0
    %p330 = por %p328, %p329
    %s332 = sadd.s32 %s331, 1
    %p335 = scmp.eq.s32.totalorder %s24, 1
    %p336 = scmp.ne.s32.totalorder %s331, %s333
    %p337 = scmp.eq.s32.totalorder %s24, 0
    %p338 = por %p336, %p337
    %p339 = scmp.ne.s32.totalorder %s331, %s333
    %p340 = scmp.eq.s32.totalorder %s29, 1
    %p341 = por %p339, %p340
    %p342 = scmp.ne.s32.totalorder %s333, %s334
    %p343 = scmp.eq.s32.totalorder %s29, 0
    %p344 = por %p342, %p343
    %p345 = scmp.ne.s32.totalorder %s333, %s334
    %p346 = scmp.eq.s32.totalorder %s30, 1
    %p347 = por %p345, %p346
    %p349 = scmp.ne.s32.totalorder %s334, %s348
    %p350 = scmp.eq.s32.totalorder %s30, 0
    %p351 = por %p349, %p350
    %s353 = sadd.s32 %s352, 1
    %p356 = scmp.eq.s32.totalorder %s24, 1
    %p357 = scmp.ne.s32.totalorder %s352, %s354
    %p358 = scmp.eq.s32.totalorder %s24, 0
    %p359 = por %p357, %p358
    %p360 = scmp.ne.s32.totalorder %s352, %s354
    %p361 = scmp.eq.s32.totalorder %s29, 1
    %p362 = por %p360, %p361
    %p363 = scmp.ne.s32.totalorder %s354, %s355
    %p364 = scmp.eq.s32.totalorder %s29, 0
    %p365 = por %p363, %p364
    %p366 = scmp.ne.s32.totalorder %s354, %s355
    %p367 = scmp.eq.s32.totalorder %s30, 1
    %p368 = por %p366, %p367
    %p370 = scmp.ne.s32.totalorder %s355, %s369
    %p371 = scmp.eq.s32.totalorder %s30, 0
    %p372 = por %p370, %p371
    %s374 = sadd.s32 %s373, 1
    %p377 = scmp.eq.s32.totalorder %s24, 1
    %p378 = scmp.ne.s32.totalorder %s373, %s375
    %p379 = scmp.eq.s32.totalorder %s24, 0
    %p380 = por %p378, %p379
    %p381 = scmp.ne.s32.totalorder %s373, %s375
    %p382 = scmp.eq.s32.totalorder %s29, 1
    %p383 = por %p381, %p382
    %p384 = scmp.ne.s32.totalorder %s375, %s376
    %p385 = scmp.eq.s32.totalorder %s29, 0
    %p386 = por %p384, %p385
    %p387 = scmp.ne.s32.totalorder %s375, %s376
    %p388 = scmp.eq.s32.totalorder %s30, 1
    %p389 = por %p387, %p388
    %p391 = scmp.ne.s32.totalorder %s376, %s390
    %p392 = scmp.eq.s32.totalorder %s30, 0
    %p393 = por %p391, %p392
    %s395 = sadd.s32 %s394, 1
    %p398 = scmp.eq.s32.totalorder %s24, 1
    %p399 = scmp.ne.s32.totalorder %s394, %s396
    %p400 = scmp.eq.s32.totalorder %s24, 0
    %p401 = por %p399, %p400
    %p402 = scmp.ne.s32.totalorder %s394, %s396
    %p403 = scmp.eq.s32.totalorder %s29, 1
    %p404 = por %p402, %p403
    %p405 = scmp.ne.s32.totalorder %s396, %s397
    %p406 = scmp.eq.s32.totalorder %s29, 0
    %p407 = por %p405, %p406
    %p408 = scmp.ne.s32.totalorder %s396, %s397
    %p409 = scmp.eq.s32.totalorder %s30, 1
    %p410 = por %p408, %p409
    %p412 = scmp.ne.s32.totalorder %s397, %s411
    %p413 = scmp.eq.s32.totalorder %s30, 0
    %p414 = por %p412, %p413
    %s415 = ssub.s32 %s24, %s31
    %p416 = scmp.eq.s32.totalorder %s415, 0
    %s418 = sadd.s32 %s417, 1
    %s419 = scalar_select %p416, %s417, %s418
    %p422 = pneg %p416
    %p423 = scmp.eq.s32.totalorder %s24, 1
    %p424 = por %p422, %p423
    %p425 = scmp.ne.s32.totalorder %s417, %s420
    %p426 = scmp.eq.s32.totalorder %s24, 0
    %p427 = por %p425, %p426
    %p428 = scmp.ne.s32.totalorder %s417, %s420
    %p429 = scmp.eq.s32.totalorder %s29, 1
    %p430 = por %p428, %p429
    %p431 = scmp.ne.s32.totalorder %s420, %s421
    %p432 = scmp.eq.s32.totalorder %s29, 0
    %p433 = por %p431, %p432
    %p434 = scmp.ne.s32.totalorder %s420, %s421
    %p435 = scmp.eq.s32.totalorder %s30, 1
    %p436 = por %p434, %p435
    %p438 = scmp.ne.s32.totalorder %s421, %s437
    %p439 = scmp.eq.s32.totalorder %s30, 0
    %p440 = por %p438, %p439
    %p441 = scmp.le.s32.totalorder 1, %s24
    %p442 = scmp.lt.s32.totalorder %s24, 3
    %p443 = pnand %p441, %p442
    %p444 = pneg %p443
    // Predicated region
    $region9: #{dilated_downsample_up_forward.1} parent=5 // pred_check
      _
    $region10: #{dilated_downsample_up_forward.1} parent=5 // pred_check_branch
      %446 = sbr.rel (%p443) target = $region12
    $region11: #{dilated_downsample_up_forward.1} parent=5 // pred_region
      %s447 = ssub.s32 %s24, 1
      // Predicated region
      $region13: #{dilated_downsample_up_forward.1} parent=11 // pred_check
        %p448 = pneg %p71
      $region14: #{dilated_downsample_up_forward.1} parent=11 // pred_check_branch
        %450 = sbr.rel (%p448) target = $region16
      $region15: #{dilated_downsample_up_forward.1} parent=11 // pred_region
        _
      $region16: #{dilated_downsample_up_forward.1} parent=11 // pred_fallthru
        _
      // Predicated region
      $region17: #{dilated_downsample_up_forward.1} parent=11 // pred_check
        %p451 = pneg %p92
      $region18: #{dilated_downsample_up_forward.1} parent=11 // pred_check_branch
        %453 = sbr.rel (%p451) target = $region20
      $region19: #{dilated_downsample_up_forward.1} parent=11 // pred_region
        _
      $region20: #{dilated_downsample_up_forward.1} parent=11 // pred_fallthru
        _
      // Predicated region
      $region21: #{dilated_downsample_up_forward.1} parent=11 // pred_check
        %p454 = pneg %p113
      $region22: #{dilated_downsample_up_forward.1} parent=11 // pred_check_branch
        %456 = sbr.rel (%p454) target = $region24
      $region23: #{dilated_downsample_up_forward.1} parent=11 // pred_region
        _
      $region24: #{dilated_downsample_up_forward.1} parent=11 // pred_fallthru
        _
      // Predicated region
      $region25: #{dilated_downsample_up_forward.1} parent=11 // pred_check
        %p457 = pneg %p134
      $region26: #{dilated_downsample_up_forward.1} parent=11 // pred_check_branch
        %459 = sbr.rel (%p457) target = $region28
      $region27: #{dilated_downsample_up_forward.1} parent=11 // pred_region
        _
      $region28: #{dilated_downsample_up_forward.1} parent=11 // pred_fallthru
        _
      // Predicated region
      $region29: #{dilated_downsample_up_forward.1} parent=11 // pred_check
        %p460 = pneg %p155
      $region30: #{dilated_downsample_up_forward.1} parent=11 // pred_check_branch
        %462 = sbr.rel (%p460) target = $region32
      $region31: #{dilated_downsample_up_forward.1} parent=11 // pred_region
        _
      $region32: #{dilated_downsample_up_forward.1} parent=11 // pred_fallthru
        _
      // Predicated region
      $region33: #{dilated_downsample_up_forward.1} parent=11 // pred_check
        %p463 = pneg %p176
      $region34: #{dilated_downsample_up_forward.1} parent=11 // pred_check_branch
        %465 = sbr.rel (%p463) target = $region36
      $region35: #{dilated_downsample_up_forward.1} parent=11 // pred_region
        _
      $region36: #{dilated_downsample_up_forward.1} parent=11 // pred_fallthru
        _
      // Predicated region
      $region37: #{dilated_downsample_up_forward.1} parent=11 // pred_check
        %p466 = pneg %p197
      $region38: #{dilated_downsample_up_forward.1} parent=11 // pred_check_branch
        %468 = sbr.rel (%p466) target = $region40
      $region39: #{dilated_downsample_up_forward.1} parent=11 // pred_region
        _
      $region40: #{dilated_downsample_up_forward.1} parent=11 // pred_fallthru
        _
      // Predicated region
      $region41: #{dilated_downsample_up_forward.1} parent=11 // pred_check
        %p469 = pneg %p218
      $region42: #{dilated_downsample_up_forward.1} parent=11 // pred_check_branch
        %471 = sbr.rel (%p469) target = $region44
      $region43: #{dilated_downsample_up_forward.1} parent=11 // pred_region
        _
      $region44: #{dilated_downsample_up_forward.1} parent=11 // pred_fallthru
        _
      // Predicated region
      $region45: #{dilated_downsample_up_forward.1} parent=11 // pred_check
        %p472 = pneg %p239
      $region46: #{dilated_downsample_up_forward.1} parent=11 // pred_check_branch
        %474 = sbr.rel (%p472) target = $region48
      $region47: #{dilated_downsample_up_forward.1} parent=11 // pred_region
        _
      $region48: #{dilated_downsample_up_forward.1} parent=11 // pred_fallthru
        _
      // Predicated region
      $region49: #{dilated_downsample_up_forward.1} parent=11 // pred_check
        %p475 = pneg %p260
      $region50: #{dilated_downsample_up_forward.1} parent=11 // pred_check_branch
        %477 = sbr.rel (%p475) target = $region52
      $region51: #{dilated_downsample_up_forward.1} parent=11 // pred_region
        _
      $region52: #{dilated_downsample_up_forward.1} parent=11 // pred_fallthru
        _
      // Predicated region
      $region53: #{dilated_downsample_up_forward.1} parent=11 // pred_check
        %p478 = pneg %p281
      $region54: #{dilated_downsample_up_forward.1} parent=11 // pred_check_branch
        %480 = sbr.rel (%p478) target = $region56
      $region55: #{dilated_downsample_up_forward.1} parent=11 // pred_region
        _
      $region56: #{dilated_downsample_up_forward.1} parent=11 // pred_fallthru
        _
      // Predicated region
      $region57: #{dilated_downsample_up_forward.1} parent=11 // pred_check
        %p481 = pneg %p302
      $region58: #{dilated_downsample_up_forward.1} parent=11 // pred_check_branch
        %483 = sbr.rel (%p481) target = $region60
      $region59: #{dilated_downsample_up_forward.1} parent=11 // pred_region
        _
      $region60: #{dilated_downsample_up_forward.1} parent=11 // pred_fallthru
        _
      // Predicated region
      $region61: #{dilated_downsample_up_forward.1} parent=11 // pred_check
        %p484 = pneg %p323
      $region62: #{dilated_downsample_up_forward.1} parent=11 // pred_check_branch
        %486 = sbr.rel (%p484) target = $region64
      $region63: #{dilated_downsample_up_forward.1} parent=11 // pred_region
        _
      $region64: #{dilated_downsample_up_forward.1} parent=11 // pred_fallthru
        _
      // Predicated region
      $region65: #{dilated_downsample_up_forward.1} parent=11 // pred_check
        %p487 = pneg %p344
      $region66: #{dilated_downsample_up_forward.1} parent=11 // pred_check_branch
        %489 = sbr.rel (%p487) target = $region68
      $region67: #{dilated_downsample_up_forward.1} parent=11 // pred_region
        _
      $region68: #{dilated_downsample_up_forward.1} parent=11 // pred_fallthru
        _
      // Predicated region
      $region69: #{dilated_downsample_up_forward.1} parent=11 // pred_check
        %p490 = pneg %p365
      $region70: #{dilated_downsample_up_forward.1} parent=11 // pred_check_branch
        %492 = sbr.rel (%p490) target = $region72
      $region71: #{dilated_downsample_up_forward.1} parent=11 // pred_region
        _
      $region72: #{dilated_downsample_up_forward.1} parent=11 // pred_fallthru
        _
      // Predicated region
      $region73: #{dilated_downsample_up_forward.1} parent=11 // pred_check
        %p493 = pneg %p386
      $region74: #{dilated_downsample_up_forward.1} parent=11 // pred_check_branch
        %495 = sbr.rel (%p493) target = $region76
      $region75: #{dilated_downsample_up_forward.1} parent=11 // pred_region
        _
      $region76: #{dilated_downsample_up_forward.1} parent=11 // pred_fallthru
        _
      // Predicated region
      $region77: #{dilated_downsample_up_forward.1} parent=11 // pred_check
        %p496 = pneg %p407
      $region78: #{dilated_downsample_up_forward.1} parent=11 // pred_check_branch
        %498 = sbr.rel (%p496) target = $region80
      $region79: #{dilated_downsample_up_forward.1} parent=11 // pred_region
        _
      $region80: #{dilated_downsample_up_forward.1} parent=11 // pred_fallthru
        _
    $region12: #{dilated_downsample_up_forward.1} parent=5 // pred_fallthru
      _
    %p499 = scmp.lt.s32.totalorder %s24, 2
    // Predicated region
    $region81: #{dilated_downsample_up_forward.1} parent=5 // pred_check
      %p500 = pneg %p499
    $region82: #{dilated_downsample_up_forward.1} parent=5 // pred_check_branch
      %502 = sbr.rel (%p500) target = $region84
    $region83: #{dilated_downsample_up_forward.1} parent=5 // pred_region
      // Predicated region
      $region85: #{dilated_downsample_up_forward.1} parent=83 // pred_check
        %p503 = pneg %p44
      $region86: #{dilated_downsample_up_forward.1} parent=83 // pred_check_branch
        %505 = sbr.rel (%p503) target = $region88
      $region87: #{dilated_downsample_up_forward.1} parent=83 // pred_region
        %p506 = scmp.lt.s32.totalorder %s24, 1
        %s507 = scalar_select %p506, %s24, 1
        %s508 = smul.addr %s507, 2
        %s509 = smul.addr %s508, 8
        %s510 = scalar_lea.vmem %s0, %s509
      $region88: #{dilated_downsample_up_forward.1} parent=83 // pred_fallthru
        _
    $region84: #{dilated_downsample_up_forward.1} parent=5 // pred_fallthru
      _
    %p511 = scmp.le.s32.totalorder 1, %s24
    %p512 = scmp.lt.s32.totalorder %s24, 3
    %p513 = pnand %p511, %p512
    %p514 = pneg %p513
    // Predicated region
    $region89: #{dilated_downsample_up_forward.1} parent=5 // pred_check
      _
    $region90: #{dilated_downsample_up_forward.1} parent=5 // pred_check_branch
      %516 = sbr.rel (%p513) target = $region92
    $region91: #{dilated_downsample_up_forward.1} parent=5 // pred_region
      %s517 = ssub.s32 %s24, 1
      %p518 = scmp.lt.s32.totalorder %s29, 1
      %s519 = scalar_select %p518, %s29, 1
      %s520 = smul.addr %s519, 2
      %s521 = smul.addr %s520, 8
      %s522 = scalar_lea.vmem %s0, %s521
      %p523 = pneg %p50
      %p524 = pneg %p47
      %p525 = pneg %p71
      %p526 = pneg %p68
      %p527 = pneg %p92
      %p528 = pneg %p89
      %p529 = pneg %p113
      %p530 = pneg %p110
      %p531 = pneg %p134
      %p532 = pneg %p131
      %p533 = pneg %p155
      %p534 = pneg %p152
      %p535 = pneg %p176
      %p536 = pneg %p173
      %p537 = pneg %p197
      %p538 = pneg %p194
      %p539 = pneg %p218
      %p540 = pneg %p215
      %p541 = pneg %p239
      %p542 = pneg %p236
      %p543 = pneg %p260
      %p544 = pneg %p257
      %p545 = pneg %p281
      %p546 = pneg %p278
      %p547 = pneg %p302
      %p548 = pneg %p299
      %p549 = pneg %p323
      %p550 = pneg %p320
      %p551 = pneg %p344
      %p552 = pneg %p341
      %p553 = pneg %p365
      %p554 = pneg %p362
      %p555 = pneg %p386
      %p556 = pneg %p383
      %p557 = pneg %p407
      %p558 = pneg %p404
      %p559 = pneg %p433
      %p560 = pneg %p430
      %p561 = scmp.lt.s32.totalorder %s29, 1
      %s562 = scalar_select %p561, %s29, 1
      %s563 = smul.addr %s562, 4
      %s564 = smul.addr %s563, 8
      %s565 = scalar_lea.vmem %s18, %s564
      %p566 = scmp.lt.s32.totalorder %s29, 1
      %s567 = scalar_select %p566, %s29, 1
      %s568 = smul.addr %s567, 2
      %s569 = smul.addr %s568, 8
      %s570 = scalar_lea.vmem %s0, %s569
      %p571 = scmp.lt.s32.totalorder %s29, 1
      %s572 = scalar_select %p571, %s29, 1
      %s573 = smul.addr %s572, 4
      %s574 = smul.addr %s573, 8
      %s575 = scalar_lea.vmem %s18, %s574
      %v576 = vld [vmem:[%s570] sm:$0xff]
      %v577 = vld [vmem:[%s570 + $0x8] sm:$0xff]
      %v578 = vld [vmem:[%s1] sm:$0xff]
      %v579 = vld [vmem:[%s1 + $0x8] sm:$0xf]
      %v580 = vld [vmem:[%s2] sm:$0xff]
      %v581 = vld [vmem:[%s2 + $0x8] sm:$0xf]
      %583 = vset.pattern.permute.xlu0 0
      %584 = vperm.xlu0 %583, %v580
      %v585 = vpop.permute.xlu0 %584
      %588 = vset.pattern.permute.xlu0 0
      %589 = vperm.xlu0 %588, %v581
      %v590 = vpop.permute.xlu0 %589
      %vm592 = vcmask 64512
      %v594 = vsel %vm592, %v578, 0
      %v597 = vsel %vm592, %v579, 0
      %v599 = vand.u32 %v577, 4294901760
      %600 = vmatprep.subr.mxu0 %v599
      %v601 = vand.u32 %v576, 4294901760
      %602 = vmatpush1.msra.mxu0 %v601
      %603 = vmatprep.subr.mxu0 0.0
      %604 = vmatpush1.msra.mxu0 0.0
      %605 = vmatprep.subr.mxu0 0.0
      %606 = vmatpush1.msra.mxu0 0.0
      %607 = vmatprep.subr.mxu0 0.0
      %608 = vmatpush1.msra.mxu0 0.0
      %609 = vmatprep.subr.mxu0 0.0
      %610 = vmatpush1.msra.mxu0 0.0
      %611 = vmatprep.subr.mxu0 0.0
      %612 = vmatpush1.msra.mxu0 0.0
      %613 = vmatprep.subr.mxu0 0.0
      %614 = vmatpush1.msra.mxu0 0.0
      %615 = vmatprep.subr.mxu0 0.0
      %616 = vmatpush1.msra.mxu0 0.0
      %617 = vmatprep.subr.mxu0 0.0
      %618 = vmatpush1.msra.mxu0 0.0
      %619 = vmatprep.subr.mxu0 0.0
      %620 = vmatpush1.msra.mxu0 0.0
      %621 = vmatprep.subr.mxu0 0.0
      %622 = vmatpush1.msra.mxu0 0.0
      %623 = vmatprep.subr.mxu0 0.0
      %624 = vmatpush1.msra.mxu0 0.0
      %625 = vmatprep.subr.mxu0 0.0
      %626 = vmatpush1.msra.mxu0 0.0
      %627 = vmatprep.subr.mxu0 0.0
      %628 = vmatpush1.msra.mxu0 0.0
      %629 = vmatprep.subr.mxu0 0.0
      %630 = vmatpush1.msra.mxu0 0.0
      %631 = vmatprep.subr.mxu0 0.0
      %632 = vmatpush1.msra.mxu0 0.0
      %633 = vmatprep.subr.mxu0 0.0
      %634 = vmatpush1.msra.mxu0 0.0
      %635 = vmatprep.subr.mxu0 0.0
      %636 = vmatpush1.msra.mxu0 0.0
      %637 = vmatprep.subr.mxu0 0.0
      %638 = vmatpush1.msra.mxu0 0.0
      %639 = vmatprep.subr.mxu0 0.0
      %640 = vmatpush1.msra.mxu0 0.0
      %641 = vmatprep.subr.mxu0 0.0
      %642 = vmatpush1.msra.mxu0 0.0
      %643 = vmatprep.subr.mxu0 0.0
      %644 = vmatpush1.msra.mxu0 0.0
      %645 = vmatprep.subr.mxu0 0.0
      %646 = vmatpush1.msra.mxu0 0.0
      %647 = vmatprep.subr.mxu0 0.0
      %648 = vmatpush1.msra.mxu0 0.0
      %649 = vmatprep.subr.mxu0 0.0
      %650 = vmatpush1.msra.mxu0 0.0
      %651 = vmatprep.subr.mxu0 0.0
      %652 = vmatpush1.msra.mxu0 0.0
      %653 = vmatprep.subr.mxu0 0.0
      %654 = vmatpush1.msra.mxu0 0.0
      %655 = vmatprep.subr.mxu0 0.0
      %656 = vmatpush1.msra.mxu0 0.0
      %657 = vmatprep.subr.mxu0 0.0
      %658 = vmatpush1.msra.mxu0 0.0
      %659 = vmatprep.subr.mxu0 0.0
      %660 = vmatpush1.msra.mxu0 0.0
      %661 = vmatprep.subr.mxu0 0.0
      %662 = vmatpush1.msra.mxu0 0.0
      %663 = vmatprep.subr.mxu0 0.0
      %664 = vmatpush1.msra.mxu0 0.0
      %665 = vmatprep.mubr.f32.mxu0 0.0
      %v666 = vand.u32 %v594, 4294901760
      %v667 = vsub.f32 %v594, %v666
      %v668 = vand.u32 %v667, 4294901760
      %v669 = vsub.f32 %v667, %v668
      %v670 = vand.u32 %v669, 4294901760
      %671 = vmatmul.mubr.f32.gmra.mrb[0].mxu0 %v670
      %v672 = vpop.f32.mrb[0].mxu0
      %v673 = vadd.f32 %v585, %v672
      %v674 = vpop.f32.mrb[0].mxu0
      %v675 = vadd.f32 %v585, %v674
      %676 = vmatprep.mubr.f32.mxu0 0.0
      %v677 = vand.u32 %v597, 4294901760
      %v678 = vsub.f32 %v597, %v677
      %v679 = vand.u32 %v678, 4294901760
      %v680 = vsub.f32 %v678, %v679
      %v681 = vand.u32 %v680, 4294901760
      %682 = vmatmul.mubr.f32.gmra.mrb[0].mxu0 %v681
      %v683 = vpop.f32.mrb[0].mxu0
      %v684 = vadd.f32 %v590, %v683
      %v685 = vpop.f32.mrb[0].mxu0
      %v686 = vadd.f32 %v590, %v685
      %687 = vdwg.mxu0
      %v688 = vand.u32 %v577, 4294901760
      %v689 = vsub.f32 %v577, %v688
      %v690 = vand.u32 %v689, 4294901760
      %v691 = vsub.f32 %v689, %v690
      %v692 = vand.u32 %v691, 4294901760
      %693 = vmatprep.subr.mxu0 %v692
      %v694 = vand.u32 %v576, 4294901760
      %v695 = vsub.f32 %v576, %v694
      %v696 = vand.u32 %v695, 4294901760
      %v697 = vsub.f32 %v695, %v696
      %v698 = vand.u32 %v697, 4294901760
      %699 = vmatpush1.msra.mxu0 %v698
      %700 = vmatprep.subr.mxu0 0.0
      %701 = vmatpush1.msra.mxu0 0.0
      %702 = vmatprep.subr.mxu0 0.0
      %703 = vmatpush1.msra.mxu0 0.0
      %704 = vmatprep.subr.mxu0 0.0
      %705 = vmatpush1.msra.mxu0 0.0
      %706 = vmatprep.subr.mxu0 0.0
      %707 = vmatpush1.msra.mxu0 0.0
      %708 = vmatprep.subr.mxu0 0.0
      %709 = vmatpush1.msra.mxu0 0.0
      %710 = vmatprep.subr.mxu0 0.0
      %711 = vmatpush1.msra.mxu0 0.0
      %712 = vmatprep.subr.mxu0 0.0
      %713 = vmatpush1.msra.mxu0 0.0
      %714 = vmatprep.subr.mxu0 0.0
      %715 = vmatpush1.msra.mxu0 0.0
      %716 = vmatprep.subr.mxu0 0.0
      %717 = vmatpush1.msra.mxu0 0.0
      %718 = vmatprep.subr.mxu0 0.0
      %719 = vmatpush1.msra.mxu0 0.0
      %720 = vmatprep.subr.mxu0 0.0
      %721 = vmatpush1.msra.mxu0 0.0
      %722 = vmatprep.subr.mxu0 0.0
      %723 = vmatpush1.msra.mxu0 0.0
      %724 = vmatprep.subr.mxu0 0.0
      %725 = vmatpush1.msra.mxu0 0.0
      %726 = vmatprep.subr.mxu0 0.0
      %727 = vmatpush1.msra.mxu0 0.0
      %728 = vmatprep.subr.mxu0 0.0
      %729 = vmatpush1.msra.mxu0 0.0
      %730 = vmatprep.subr.mxu0 0.0
      %731 = vmatpush1.msra.mxu0 0.0
      %732 = vmatprep.subr.mxu0 0.0
      %733 = vmatpush1.msra.mxu0 0.0
      %734 = vmatprep.subr.mxu0 0.0
      %735 = vmatpush1.msra.mxu0 0.0
      %736 = vmatprep.subr.mxu0 0.0
      %737 = vmatpush1.msra.mxu0 0.0
      %738 = vmatprep.subr.mxu0 0.0
      %739 = vmatpush1.msra.mxu0 0.0
      %740 = vmatprep.subr.mxu0 0.0
      %741 = vmatpush1.msra.mxu0 0.0
      %742 = vmatprep.subr.mxu0 0.0
      %743 = vmatpush1.msra.mxu0 0.0
      %744 = vmatprep.subr.mxu0 0.0
      %745 = vmatpush1.msra.mxu0 0.0
      %746 = vmatprep.subr.mxu0 0.0
      %747 = vmatpush1.msra.mxu0 0.0
      %748 = vmatprep.subr.mxu0 0.0
      %749 = vmatpush1.msra.mxu0 0.0
      %750 = vmatprep.subr.mxu0 0.0
      %751 = vmatpush1.msra.mxu0 0.0
      %752 = vmatprep.subr.mxu0 0.0
      %753 = vmatpush1.msra.mxu0 0.0
      %754 = vmatprep.subr.mxu0 0.0
      %755 = vmatpush1.msra.mxu0 0.0
      %756 = vmatprep.subr.mxu0 0.0
      %757 = vmatpush1.msra.mxu0 0.0
      %758 = vmatprep.subr.mxu0 0.0
      %759 = vmatpush1.msra.mxu0 0.0
      %760 = vmatprep.subr.mxu0 0.0
      %761 = vmatpush1.msra.mxu0 0.0
      %762 = vmatprep.mubr.f32.mxu0 0.0
      %v763 = vand.u32 %v594, 4294901760
      %764 = vmatmul.mubr.f32.gmra.mrb[0].mxu0 %v763
      %v765 = vpop.f32.mrb[0].mxu0
      %v766 = vadd.f32 %v673, %v765
      %v767 = vpop.f32.mrb[0].mxu0
      %v768 = vadd.f32 %v675, %v767
      %769 = vmatprep.mubr.f32.mxu0 0.0
      %v770 = vand.u32 %v597, 4294901760
      %771 = vmatmul.mubr.f32.gmra.mrb[0].mxu0 %v770
      %v772 = vpop.f32.mrb[0].mxu0
      %v773 = vadd.f32 %v684, %v772
      %v774 = vpop.f32.mrb[0].mxu0
      %v775 = vadd.f32 %v686, %v774
      %776 = vdwg.mxu0
      %v777 = vand.u32 %v577, 4294901760
      %v778 = vsub.f32 %v577, %v777
      %779 = vmatprep.subr.mxu0 %v778
      %v780 = vand.u32 %v576, 4294901760
      %v781 = vsub.f32 %v576, %v780
      %782 = vmatpush1.msra.mxu0 %v781
      %783 = vmatprep.subr.mxu0 0.0
      %784 = vmatpush1.msra.mxu0 0.0
      %785 = vmatprep.subr.mxu0 0.0
      %786 = vmatpush1.msra.mxu0 0.0
      %787 = vmatprep.subr.mxu0 0.0
      %788 = vmatpush1.msra.mxu0 0.0
      %789 = vmatprep.subr.mxu0 0.0
      %790 = vmatpush1.msra.mxu0 0.0
      %791 = vmatprep.subr.mxu0 0.0
      %792 = vmatpush1.msra.mxu0 0.0
      %793 = vmatprep.subr.mxu0 0.0
      %794 = vmatpush1.msra.mxu0 0.0
      %795 = vmatprep.subr.mxu0 0.0
      %796 = vmatpush1.msra.mxu0 0.0
      %797 = vmatprep.subr.mxu0 0.0
      %798 = vmatpush1.msra.mxu0 0.0
      %799 = vmatprep.subr.mxu0 0.0
      %800 = vmatpush1.msra.mxu0 0.0
      %801 = vmatprep.subr.mxu0 0.0
      %802 = vmatpush1.msra.mxu0 0.0
      %803 = vmatprep.subr.mxu0 0.0
      %804 = vmatpush1.msra.mxu0 0.0
      %805 = vmatprep.subr.mxu0 0.0
      %806 = vmatpush1.msra.mxu0 0.0
      %807 = vmatprep.subr.mxu0 0.0
      %808 = vmatpush1.msra.mxu0 0.0
      %809 = vmatprep.subr.mxu0 0.0
      %810 = vmatpush1.msra.mxu0 0.0
      %811 = vmatprep.subr.mxu0 0.0
      %812 = vmatpush1.msra.mxu0 0.0
      %813 = vmatprep.subr.mxu0 0.0
      %814 = vmatpush1.msra.mxu0 0.0
      %815 = vmatprep.subr.mxu0 0.0
      %816 = vmatpush1.msra.mxu0 0.0
      %817 = vmatprep.subr.mxu0 0.0
      %818 = vmatpush1.msra.mxu0 0.0
      %819 = vmatprep.subr.mxu0 0.0
      %820 = vmatpush1.msra.mxu0 0.0
      %821 = vmatprep.subr.mxu0 0.0
      %822 = vmatpush1.msra.mxu0 0.0
      %823 = vmatprep.subr.mxu0 0.0
      %824 = vmatpush1.msra.mxu0 0.0
      %825 = vmatprep.subr.mxu0 0.0
      %826 = vmatpush1.msra.mxu0 0.0
      %827 = vmatprep.subr.mxu0 0.0
      %828 = vmatpush1.msra.mxu0 0.0
      %829 = vmatprep.subr.mxu0 0.0
      %830 = vmatpush1.msra.mxu0 0.0
      %831 = vmatprep.subr.mxu0 0.0
      %832 = vmatpush1.msra.mxu0 0.0
      %833 = vmatprep.subr.mxu0 0.0
      %834 = vmatpush1.msra.mxu0 0.0
      %835 = vmatprep.subr.mxu0 0.0
      %836 = vmatpush1.msra.mxu0 0.0
      %837 = vmatprep.subr.mxu0 0.0
      %838 = vmatpush1.msra.mxu0 0.0
      %839 = vmatprep.subr.mxu0 0.0
      %840 = vmatpush1.msra.mxu0 0.0
      %841 = vmatprep.subr.mxu0 0.0
      %842 = vmatpush1.msra.mxu0 0.0
      %843 = vmatprep.subr.mxu0 0.0
      %844 = vmatpush1.msra.mxu0 0.0
      %845 = vmatprep.mubr.f32.mxu0 0.0
      %v846 = vand.u32 %v594, 4294901760
      %v847 = vsub.f32 %v594, %v846
      %848 = vmatmul.mubr.f32.gmra.mrb[0].mxu0 %v847
      %v849 = vpop.f32.mrb[0].mxu0
      %v850 = vadd.f32 %v766, %v849
      %v851 = vpop.f32.mrb[0].mxu0
      %v852 = vadd.f32 %v768, %v851
      %853 = vmatprep.mubr.f32.mxu0 0.0
      %v854 = vand.u32 %v597, 4294901760
      %v855 = vsub.f32 %v597, %v854
      %856 = vmatmul.mubr.f32.gmra.mrb[0].mxu0 %v855
      %v857 = vpop.f32.mrb[0].mxu0
      %v858 = vadd.f32 %v773, %v857
      %v859 = vpop.f32.mrb[0].mxu0
      %v860 = vadd.f32 %v775, %v859
      %861 = vdwg.mxu0
      %v862 = vand.u32 %v577, 4294901760
      %863 = vmatprep.subr.mxu0 %v862
      %v864 = vand.u32 %v576, 4294901760
      %865 = vmatpush1.msra.mxu0 %v864
      %866 = vmatprep.subr.mxu0 0.0
      %867 = vmatpush1.msra.mxu0 0.0
      %868 = vmatprep.subr.mxu0 0.0
      %869 = vmatpush1.msra.mxu0 0.0
      %870 = vmatprep.subr.mxu0 0.0
      %871 = vmatpush1.msra.mxu0 0.0
      %872 = vmatprep.subr.mxu0 0.0
      %873 = vmatpush1.msra.mxu0 0.0
      %874 = vmatprep.subr.mxu0 0.0
      %875 = vmatpush1.msra.mxu0 0.0
      %876 = vmatprep.subr.mxu0 0.0
      %877 = vmatpush1.msra.mxu0 0.0
      %878 = vmatprep.subr.mxu0 0.0
      %879 = vmatpush1.msra.mxu0 0.0
      %880 = vmatprep.subr.mxu0 0.0
      %881 = vmatpush1.msra.mxu0 0.0
      %882 = vmatprep.subr.mxu0 0.0
      %883 = vmatpush1.msra.mxu0 0.0
      %884 = vmatprep.subr.mxu0 0.0
      %885 = vmatpush1.msra.mxu0 0.0
      %886 = vmatprep.subr.mxu0 0.0
      %887 = vmatpush1.msra.mxu0 0.0
      %888 = vmatprep.subr.mxu0 0.0
      %889 = vmatpush1.msra.mxu0 0.0
      %890 = vmatprep.subr.mxu0 0.0
      %891 = vmatpush1.msra.mxu0 0.0
      %892 = vmatprep.subr.mxu0 0.0
      %893 = vmatpush1.msra.mxu0 0.0
      %894 = vmatprep.subr.mxu0 0.0
      %895 = vmatpush1.msra.mxu0 0.0
      %896 = vmatprep.subr.mxu0 0.0
      %897 = vmatpush1.msra.mxu0 0.0
      %898 = vmatprep.subr.mxu0 0.0
      %899 = vmatpush1.msra.mxu0 0.0
      %900 = vmatprep.subr.mxu0 0.0
      %901 = vmatpush1.msra.mxu0 0.0
      %902 = vmatprep.subr.mxu0 0.0
      %903 = vmatpush1.msra.mxu0 0.0
      %904 = vmatprep.subr.mxu0 0.0
      %905 = vmatpush1.msra.mxu0 0.0
      %906 = vmatprep.subr.mxu0 0.0
      %907 = vmatpush1.msra.mxu0 0.0
      %908 = vmatprep.subr.mxu0 0.0
      %909 = vmatpush1.msra.mxu0 0.0
      %910 = vmatprep.subr.mxu0 0.0
      %911 = vmatpush1.msra.mxu0 0.0
      %912 = vmatprep.subr.mxu0 0.0
      %913 = vmatpush1.msra.mxu0 0.0
      %914 = vmatprep.subr.mxu0 0.0
      %915 = vmatpush1.msra.mxu0 0.0
      %916 = vmatprep.subr.mxu0 0.0
      %917 = vmatpush1.msra.mxu0 0.0
      %918 = vmatprep.subr.mxu0 0.0
      %919 = vmatpush1.msra.mxu0 0.0
      %920 = vmatprep.subr.mxu0 0.0
      %921 = vmatpush1.msra.mxu0 0.0
      %922 = vmatprep.subr.mxu0 0.0
      %923 = vmatpush1.msra.mxu0 0.0
      %924 = vmatprep.subr.mxu0 0.0
      %925 = vmatpush1.msra.mxu0 0.0
      %926 = vmatprep.subr.mxu0 0.0
      %927 = vmatpush1.msra.mxu0 0.0
      %928 = vmatprep.mubr.f32.mxu0 0.0
      %v929 = vand.u32 %v594, 4294901760
      %v930 = vsub.f32 %v594, %v929
      %v931 = vand.u32 %v930, 4294901760
      %932 = vmatmul.mubr.f32.gmra.mrb[0].mxu0 %v931
      %v933 = vpop.f32.mrb[0].mxu0
      %v934 = vadd.f32 %v850, %v933
      %v935 = vpop.f32.mrb[0].mxu0
      %v936 = vadd.f32 %v852, %v935
      %937 = vmatprep.mubr.f32.mxu0 0.0
      %v938 = vand.u32 %v597, 4294901760
      %v939 = vsub.f32 %v597, %v938
      %v940 = vand.u32 %v939, 4294901760
      %941 = vmatmul.mubr.f32.gmra.mrb[0].mxu0 %v940
      %v942 = vpop.f32.mrb[0].mxu0
      %v943 = vadd.f32 %v858, %v942
      %v944 = vpop.f32.mrb[0].mxu0
      %v945 = vadd.f32 %v860, %v944
      %946 = vdwg.mxu0
      %v947 = vand.u32 %v577, 4294901760
      %v948 = vsub.f32 %v577, %v947
      %v949 = vand.u32 %v948, 4294901760
      %950 = vmatprep.subr.mxu0 %v949
      %v951 = vand.u32 %v576, 4294901760
      %v952 = vsub.f32 %v576, %v951
      %v953 = vand.u32 %v952, 4294901760
      %954 = vmatpush1.msra.mxu0 %v953
      %955 = vmatprep.subr.mxu0 0.0
      %956 = vmatpush1.msra.mxu0 0.0
      %957 = vmatprep.subr.mxu0 0.0
      %958 = vmatpush1.msra.mxu0 0.0
      %959 = vmatprep.subr.mxu0 0.0
      %960 = vmatpush1.msra.mxu0 0.0
      %961 = vmatprep.subr.mxu0 0.0
      %962 = vmatpush1.msra.mxu0 0.0
      %963 = vmatprep.subr.mxu0 0.0
      %964 = vmatpush1.msra.mxu0 0.0
      %965 = vmatprep.subr.mxu0 0.0
      %966 = vmatpush1.msra.mxu0 0.0
      %967 = vmatprep.subr.mxu0 0.0
      %968 = vmatpush1.msra.mxu0 0.0
      %969 = vmatprep.subr.mxu0 0.0
      %970 = vmatpush1.msra.mxu0 0.0
      %971 = vmatprep.subr.mxu0 0.0
      %972 = vmatpush1.msra.mxu0 0.0
      %973 = vmatprep.subr.mxu0 0.0
      %974 = vmatpush1.msra.mxu0 0.0
      %975 = vmatprep.subr.mxu0 0.0
      %976 = vmatpush1.msra.mxu0 0.0
      %977 = vmatprep.subr.mxu0 0.0
      %978 = vmatpush1.msra.mxu0 0.0
      %979 = vmatprep.subr.mxu0 0.0
      %980 = vmatpush1.msra.mxu0 0.0
      %981 = vmatprep.subr.mxu0 0.0
      %982 = vmatpush1.msra.mxu0 0.0
      %983 = vmatprep.subr.mxu0 0.0
      %984 = vmatpush1.msra.mxu0 0.0
      %985 = vmatprep.subr.mxu0 0.0
      %986 = vmatpush1.msra.mxu0 0.0
      %987 = vmatprep.subr.mxu0 0.0
      %988 = vmatpush1.msra.mxu0 0.0
      %989 = vmatprep.subr.mxu0 0.0
      %990 = vmatpush1.msra.mxu0 0.0
      %991 = vmatprep.subr.mxu0 0.0
      %992 = vmatpush1.msra.mxu0 0.0
      %993 = vmatprep.subr.mxu0 0.0
      %994 = vmatpush1.msra.mxu0 0.0
      %995 = vmatprep.subr.mxu0 0.0
      %996 = vmatpush1.msra.mxu0 0.0
      %997 = vmatprep.subr.mxu0 0.0
      %998 = vmatpush1.msra.mxu0 0.0
      %999 = vmatprep.subr.mxu0 0.0
      %1000 = vmatpush1.msra.mxu0 0.0
      %1001 = vmatprep.subr.mxu0 0.0
      %1002 = vmatpush1.msra.mxu0 0.0
      %1003 = vmatprep.subr.mxu0 0.0
      %1004 = vmatpush1.msra.mxu0 0.0
      %1005 = vmatprep.subr.mxu0 0.0
      %1006 = vmatpush1.msra.mxu0 0.0
      %1007 = vmatprep.subr.mxu0 0.0
      %1008 = vmatpush1.msra.mxu0 0.0
      %1009 = vmatprep.subr.mxu0 0.0
      %1010 = vmatpush1.msra.mxu0 0.0
      %1011 = vmatprep.subr.mxu0 0.0
      %1012 = vmatpush1.msra.mxu0 0.0
      %1013 = vmatprep.subr.mxu0 0.0
      %1014 = vmatpush1.msra.mxu0 0.0
      %1015 = vmatprep.subr.mxu0 0.0
      %1016 = vmatpush1.msra.mxu0 0.0
      %1017 = vmatprep.mubr.f32.mxu0 0.0
      %v1018 = vand.u32 %v594, 4294901760
      %1019 = vmatmul.mubr.f32.gmra.mrb[0].mxu0 %v1018
      %v1020 = vpop.f32.mrb[0].mxu0
      %v1021 = vadd.f32 %v934, %v1020
      %v1022 = vpop.f32.mrb[0].mxu0
      %v1023 = vadd.f32 %v936, %v1022
      %1024 = vmatprep.mubr.f32.mxu0 0.0
      %v1025 = vand.u32 %v597, 4294901760
      %1026 = vmatmul.mubr.f32.gmra.mrb[0].mxu0 %v1025
      %v1027 = vpop.f32.mrb[0].mxu0
      %v1028 = vadd.f32 %v943, %v1027
      %v1029 = vpop.f32.mrb[0].mxu0
      %v1030 = vadd.f32 %v945, %v1029
      %1031 = vdwg.mxu0
      %v1032 = vand.u32 %v577, 4294901760
      %1033 = vmatprep.subr.mxu0 %v1032
      %v1034 = vand.u32 %v576, 4294901760
      %1035 = vmatpush1.msra.mxu0 %v1034
      %1036 = vmatprep.subr.mxu0 0.0
      %1037 = vmatpush1.msra.mxu0 0.0
      %1038 = vmatprep.subr.mxu0 0.0
      %1039 = vmatpush1.msra.mxu0 0.0
      %1040 = vmatprep.subr.mxu0 0.0
      %1041 = vmatpush1.msra.mxu0 0.0
      %1042 = vmatprep.subr.mxu0 0.0
      %1043 = vmatpush1.msra.mxu0 0.0
      %1044 = vmatprep.subr.mxu0 0.0
      %1045 = vmatpush1.msra.mxu0 0.0
      %1046 = vmatprep.subr.mxu0 0.0
      %1047 = vmatpush1.msra.mxu0 0.0
      %1048 = vmatprep.subr.mxu0 0.0
      %1049 = vmatpush1.msra.mxu0 0.0
      %1050 = vmatprep.subr.mxu0 0.0
      %1051 = vmatpush1.msra.mxu0 0.0
      %1052 = vmatprep.subr.mxu0 0.0
      %1053 = vmatpush1.msra.mxu0 0.0
      %1054 = vmatprep.subr.mxu0 0.0
      %1055 = vmatpush1.msra.mxu0 0.0
      %1056 = vmatprep.subr.mxu0 0.0
      %1057 = vmatpush1.msra.mxu0 0.0
      %1058 = vmatprep.subr.mxu0 0.0
      %1059 = vmatpush1.msra.mxu0 0.0
      %1060 = vmatprep.subr.mxu0 0.0
      %1061 = vmatpush1.msra.mxu0 0.0
      %1062 = vmatprep.subr.mxu0 0.0
      %1063 = vmatpush1.msra.mxu0 0.0
      %1064 = vmatprep.subr.mxu0 0.0
      %1065 = vmatpush1.msra.mxu0 0.0
      %1066 = vmatprep.subr.mxu0 0.0
      %1067 = vmatpush1.msra.mxu0 0.0
      %1068 = vmatprep.subr.mxu0 0.0
      %1069 = vmatpush1.msra.mxu0 0.0
      %1070 = vmatprep.subr.mxu0 0.0
      %1071 = vmatpush1.msra.mxu0 0.0
      %1072 = vmatprep.subr.mxu0 0.0
      %1073 = vmatpush1.msra.mxu0 0.0
      %1074 = vmatprep.subr.mxu0 0.0
      %1075 = vmatpush1.msra.mxu0 0.0
      %1076 = vmatprep.subr.mxu0 0.0
      %1077 = vmatpush1.msra.mxu0 0.0
      %1078 = vmatprep.subr.mxu0 0.0
      %1079 = vmatpush1.msra.mxu0 0.0
      %1080 = vmatprep.subr.mxu0 0.0
      %1081 = vmatpush1.msra.mxu0 0.0
      %1082 = vmatprep.subr.mxu0 0.0
      %1083 = vmatpush1.msra.mxu0 0.0
      %1084 = vmatprep.subr.mxu0 0.0
      %1085 = vmatpush1.msra.mxu0 0.0
      %1086 = vmatprep.subr.mxu0 0.0
      %1087 = vmatpush1.msra.mxu0 0.0
      %1088 = vmatprep.subr.mxu0 0.0
      %1089 = vmatpush1.msra.mxu0 0.0
      %1090 = vmatprep.subr.mxu0 0.0
      %1091 = vmatpush1.msra.mxu0 0.0
      %1092 = vmatprep.subr.mxu0 0.0
      %1093 = vmatpush1.msra.mxu0 0.0
      %1094 = vmatprep.subr.mxu0 0.0
      %1095 = vmatpush1.msra.mxu0 0.0
      %1096 = vmatprep.subr.mxu0 0.0
      %1097 = vmatpush1.msra.mxu0 0.0
      %1098 = vmatprep.mubr.f32.mxu0 0.0
      %v1099 = vand.u32 %v594, 4294901760
      %1100 = vmatmul.mubr.f32.gmra.mrb[0].mxu0 %v1099
      %v1101 = vpop.f32.mrb[0].mxu0
      %v1102 = vadd.f32 %v1021, %v1101
      %v1103 = vpop.f32.mrb[0].mxu0
      %v1104 = vadd.f32 %v1023, %v1103
      %1105 = vmatprep.mubr.f32.mxu0 0.0
      %v1106 = vand.u32 %v597, 4294901760
      %1107 = vmatmul.mubr.f32.gmra.mrb[0].mxu0 %v1106
      %v1108 = vpop.f32.mrb[0].mxu0
      %v1109 = vadd.f32 %v1028, %v1108
      %v1110 = vpop.f32.mrb[0].mxu0
      %v1111 = vadd.f32 %v1030, %v1110
      %1112 = vdwg.mxu0
      %v1113 = vld [vmem:[%s3] sm:$0xff]
      %v1114 = vld [vmem:[%s3 + $0x8] sm:$0xf]
      %v1115 = vld [vmem:[%s4] sm:$0xff]
      %v1116 = vld [vmem:[%s4 + $0x8] sm:$0xf]
      %v1117 = vld [vmem:[%s5] sm:$0xff]
      %v1118 = vld [vmem:[%s5 + $0x8] sm:$0xf]
      %v1119 = vld [vmem:[%s6] sm:$0xf]
      %v1120 = vadd.f32 %v1102, %v1104
      %1121 = vadd.xlane.f32.xlu0 %v1120
      %v1122 = vpop.xlane.xlu0 %1121
      %vm1123 = vcmask 1043456
      %v1124 = vsel %vm1123, %v1109, 0.0
      %v1125 = vsel %vm1123, %v1111, 0.0
      %v1126 = vadd.f32 %v1124, %v1125
      %1127 = vadd.xlane.f32.xlu0 %v1126
      %v1128 = vpop.xlane.xlu0 %1127
      %v1129 = vmul.f32 %v1102, %v1102
      %v1130 = vmul.f32 %v1104, %v1104
      %v1131 = vmul.f32 %v1109, %v1109
      %v1132 = vmul.f32 %v1111, %v1111
      %v1133 = vadd.f32 %v1129, %v1130
      %1134 = vadd.xlane.f32.xlu0 %v1133
      %v1135 = vpop.xlane.xlu0 %1134
      %v1136 = vsel %vm1123, %v1131, 0.0
      %v1137 = vsel %vm1123, %v1132, 0.0
      %v1138 = vadd.f32 %v1136, %v1137
      %1139 = vadd.xlane.f32.xlu0 %v1138
      %v1140 = vpop.xlane.xlu0 %1139
      %vm1141 = vcmask 97280
      %v1143 = vsel %vm1141, %v1119, 0
      %v1146 = vsel %vm1123, %v1128, 0
      %1148 = vmatprep.subr.mxu0 0.0
      %v1149 = vand.u32 %v1122, 4294901760
      %1150 = vmatpush1.msra.mxu0 %v1149
      %1151 = vmatprep.subr.mxu0 0.0
      %v1152 = vand.u32 %v1146, 4294901760
      %1153 = vmatpush1.msra.mxu0 %v1152
      %1154 = vmatprep.subr.mxu0 0.0
      %1155 = vmatpush1.msra.mxu0 0.0
      %1156 = vmatprep.subr.mxu0 0.0
      %1157 = vmatpush1.msra.mxu0 0.0
      %1158 = vmatprep.subr.mxu0 0.0
      %1159 = vmatpush1.msra.mxu0 0.0
      %1160 = vmatprep.subr.mxu0 0.0
      %1161 = vmatpush1.msra.mxu0 0.0
      %1162 = vmatprep.subr.mxu0 0.0
      %1163 = vmatpush1.msra.mxu0 0.0
      %1164 = vmatprep.subr.mxu0 0.0
      %1165 = vmatpush1.msra.mxu0 0.0
      %1166 = vmatprep.subr.mxu0 0.0
      %1167 = vmatpush1.msra.mxu0 0.0
      %1168 = vmatprep.subr.mxu0 0.0
      %1169 = vmatpush1.msra.mxu0 0.0
      %1170 = vmatprep.subr.mxu0 0.0
      %1171 = vmatpush1.msra.mxu0 0.0
      %1172 = vmatprep.subr.mxu0 0.0
      %1173 = vmatpush1.msra.mxu0 0.0
      %1174 = vmatprep.subr.mxu0 0.0
      %1175 = vmatpush1.msra.mxu0 0.0
      %1176 = vmatprep.subr.mxu0 0.0
      %1177 = vmatpush1.msra.mxu0 0.0
      %1178 = vmatprep.subr.mxu0 0.0
      %1179 = vmatpush1.msra.mxu0 0.0
      %1180 = vmatprep.subr.mxu0 0.0
      %1181 = vmatpush1.msra.mxu0 0.0
      %1182 = vmatprep.subr.mxu0 0.0
      %1183 = vmatpush1.msra.mxu0 0.0
      %1184 = vmatprep.subr.mxu0 0.0
      %1185 = vmatpush1.msra.mxu0 0.0
      %1186 = vmatprep.subr.mxu0 0.0
      %1187 = vmatpush1.msra.mxu0 0.0
      %1188 = vmatprep.subr.mxu0 0.0
      %1189 = vmatpush1.msra.mxu0 0.0
      %1190 = vmatprep.subr.mxu0 0.0
      %1191 = vmatpush1.msra.mxu0 0.0
      %1192 = vmatprep.subr.mxu0 0.0
      %1193 = vmatpush1.msra.mxu0 0.0
      %1194 = vmatprep.subr.mxu0 0.0
      %1195 = vmatpush1.msra.mxu0 0.0
      %1196 = vmatprep.subr.mxu0 0.0
      %1197 = vmatpush1.msra.mxu0 0.0
      %1198 = vmatprep.subr.mxu0 0.0
      %1199 = vmatpush1.msra.mxu0 0.0
      %1200 = vmatprep.subr.mxu0 0.0
      %1201 = vmatpush1.msra.mxu0 0.0
      %1202 = vmatprep.subr.mxu0 0.0
      %1203 = vmatpush1.msra.mxu0 0.0
      %1204 = vmatprep.subr.mxu0 0.0
      %1205 = vmatpush1.msra.mxu0 0.0
      %1206 = vmatprep.subr.mxu0 0.0
      %1207 = vmatpush1.msra.mxu0 0.0
      %1208 = vmatprep.subr.mxu0 0.0
      %1209 = vmatpush1.msra.mxu0 0.0
      %1210 = vmatprep.subr.mxu0 0.0
      %1211 = vmatpush1.msra.mxu0 0.0
      %1212 = vmatprep.subr.mxu0 0.0
      %1213 = vmatpush1.msra.mxu0 0.0
      %1214 = vmatprep.mubr.f32.mxu0 0.0
      %v1215 = vand.u32 %v1143, 4294901760
      %v1216 = vsub.f32 %v1143, %v1215
      %v1217 = vand.u32 %v1216, 4294901760
      %v1218 = vsub.f32 %v1216, %v1217
      %v1219 = vand.u32 %v1218, 4294901760
      %1220 = vmatmul.mubr.f32.gmra.mrb[0].mxu0 %v1219
      %v1221 = vpop.f32.mrb[0].mxu0
      %v1222 = vadd.f32 0.0, %v1221
      %v1223 = vpop.f32.mrb[0].mxu0
      %1224 = vdwg.mxu0
      %1225 = vmatprep.subr.mxu0 0.0
      %v1226 = vand.u32 %v1122, 4294901760
      %v1227 = vsub.f32 %v1122, %v1226
      %v1228 = vand.u32 %v1227, 4294901760
      %v1229 = vsub.f32 %v1227, %v1228
      %v1230 = vand.u32 %v1229, 4294901760
      %1231 = vmatpush1.msra.mxu0 %v1230
      %1232 = vmatprep.subr.mxu0 0.0
      %v1233 = vand.u32 %v1146, 4294901760
      %v1234 = vsub.f32 %v1146, %v1233
      %v1235 = vand.u32 %v1234, 4294901760
      %v1236 = vsub.f32 %v1234, %v1235
      %v1237 = vand.u32 %v1236, 4294901760
      %1238 = vmatpush1.msra.mxu0 %v1237
      %1239 = vmatprep.subr.mxu0 0.0
      %1240 = vmatpush1.msra.mxu0 0.0
      %1241 = vmatprep.subr.mxu0 0.0
      %1242 = vmatpush1.msra.mxu0 0.0
      %1243 = vmatprep.subr.mxu0 0.0
      %1244 = vmatpush1.msra.mxu0 0.0
      %1245 = vmatprep.subr.mxu0 0.0
      %1246 = vmatpush1.msra.mxu0 0.0
      %1247 = vmatprep.subr.mxu0 0.0
      %1248 = vmatpush1.msra.mxu0 0.0
      %1249 = vmatprep.subr.mxu0 0.0
      %1250 = vmatpush1.msra.mxu0 0.0
      %1251 = vmatprep.subr.mxu0 0.0
      %1252 = vmatpush1.msra.mxu0 0.0
      %1253 = vmatprep.subr.mxu0 0.0
      %1254 = vmatpush1.msra.mxu0 0.0
      %1255 = vmatprep.subr.mxu0 0.0
      %1256 = vmatpush1.msra.mxu0 0.0
      %1257 = vmatprep.subr.mxu0 0.0
      %1258 = vmatpush1.msra.mxu0 0.0
      %1259 = vmatprep.subr.mxu0 0.0
      %1260 = vmatpush1.msra.mxu0 0.0
      %1261 = vmatprep.subr.mxu0 0.0
      %1262 = vmatpush1.msra.mxu0 0.0
      %1263 = vmatprep.subr.mxu0 0.0
      %1264 = vmatpush1.msra.mxu0 0.0
      %1265 = vmatprep.subr.mxu0 0.0
      %1266 = vmatpush1.msra.mxu0 0.0
      %1267 = vmatprep.subr.mxu0 0.0
      %1268 = vmatpush1.msra.mxu0 0.0
      %1269 = vmatprep.subr.mxu0 0.0
      %1270 = vmatpush1.msra.mxu0 0.0
      %1271 = vmatprep.subr.mxu0 0.0
      %1272 = vmatpush1.msra.mxu0 0.0
      %1273 = vmatprep.subr.mxu0 0.0
      %1274 = vmatpush1.msra.mxu0 0.0
      %1275 = vmatprep.subr.mxu0 0.0
      %1276 = vmatpush1.msra.mxu0 0.0
      %1277 = vmatprep.subr.mxu0 0.0
      %1278 = vmatpush1.msra.mxu0 0.0
      %1279 = vmatprep.subr.mxu0 0.0
      %1280 = vmatpush1.msra.mxu0 0.0
      %1281 = vmatprep.subr.mxu0 0.0
      %1282 = vmatpush1.msra.mxu0 0.0
      %1283 = vmatprep.subr.mxu0 0.0
      %1284 = vmatpush1.msra.mxu0 0.0
      %1285 = vmatprep.subr.mxu0 0.0
      %1286 = vmatpush1.msra.mxu0 0.0
      %1287 = vmatprep.subr.mxu0 0.0
      %1288 = vmatpush1.msra.mxu0 0.0
      %1289 = vmatprep.subr.mxu0 0.0
      %1290 = vmatpush1.msra.mxu0 0.0
      %1291 = vmatprep.subr.mxu0 0.0
      %1292 = vmatpush1.msra.mxu0 0.0
      %1293 = vmatprep.subr.mxu0 0.0
      %1294 = vmatpush1.msra.mxu0 0.0
      %1295 = vmatprep.subr.mxu0 0.0
      %1296 = vmatpush1.msra.mxu0 0.0
      %1297 = vmatprep.subr.mxu0 0.0
      %1298 = vmatpush1.msra.mxu0 0.0
      %1299 = vmatprep.mubr.f32.mxu0 0.0
      %v1300 = vand.u32 %v1143, 4294901760
      %1301 = vmatmul.mubr.f32.gmra.mrb[0].mxu0 %v1300
      %v1302 = vpop.f32.mrb[0].mxu0
      %v1303 = vadd.f32 %v1222, %v1302
      %v1304 = vpop.f32.mrb[0].mxu0
      %1305 = vdwg.mxu0
      %1306 = vmatprep.subr.mxu0 0.0
      %v1307 = vand.u32 %v1122, 4294901760
      %v1308 = vsub.f32 %v1122, %v1307
      %1309 = vmatpush1.msra.mxu0 %v1308
      %1310 = vmatprep.subr.mxu0 0.0
      %v1311 = vand.u32 %v1146, 4294901760
      %v1312 = vsub.f32 %v1146, %v1311
      %1313 = vmatpush1.msra.mxu0 %v1312
      %1314 = vmatprep.subr.mxu0 0.0
      %1315 = vmatpush1.msra.mxu0 0.0
      %1316 = vmatprep.subr.mxu0 0.0
      %1317 = vmatpush1.msra.mxu0 0.0
      %1318 = vmatprep.subr.mxu0 0.0
      %1319 = vmatpush1.msra.mxu0 0.0
      %1320 = vmatprep.subr.mxu0 0.0
      %1321 = vmatpush1.msra.mxu0 0.0
      %1322 = vmatprep.subr.mxu0 0.0
      %1323 = vmatpush1.msra.mxu0 0.0
      %1324 = vmatprep.subr.mxu0 0.0
      %1325 = vmatpush1.msra.mxu0 0.0
      %1326 = vmatprep.subr.mxu0 0.0
      %1327 = vmatpush1.msra.mxu0 0.0
      %1328 = vmatprep.subr.mxu0 0.0
      %1329 = vmatpush1.msra.mxu0 0.0
      %1330 = vmatprep.subr.mxu0 0.0
      %1331 = vmatpush1.msra.mxu0 0.0
      %1332 = vmatprep.subr.mxu0 0.0
      %1333 = vmatpush1.msra.mxu0 0.0
      %1334 = vmatprep.subr.mxu0 0.0
      %1335 = vmatpush1.msra.mxu0 0.0
      %1336 = vmatprep.subr.mxu0 0.0
      %1337 = vmatpush1.msra.mxu0 0.0
      %1338 = vmatprep.subr.mxu0 0.0
      %1339 = vmatpush1.msra.mxu0 0.0
      %1340 = vmatprep.subr.mxu0 0.0
      %1341 = vmatpush1.msra.mxu0 0.0
      %1342 = vmatprep.subr.mxu0 0.0
      %1343 = vmatpush1.msra.mxu0 0.0
      %1344 = vmatprep.subr.mxu0 0.0
      %1345 = vmatpush1.msra.mxu0 0.0
      %1346 = vmatprep.subr.mxu0 0.0
      %1347 = vmatpush1.msra.mxu0 0.0
      %1348 = vmatprep.subr.mxu0 0.0
      %1349 = vmatpush1.msra.mxu0 0.0
      %1350 = vmatprep.subr.mxu0 0.0
      %1351 = vmatpush1.msra.mxu0 0.0
      %1352 = vmatprep.subr.mxu0 0.0
      %1353 = vmatpush1.msra.mxu0 0.0
      %1354 = vmatprep.subr.mxu0 0.0
      %1355 = vmatpush1.msra.mxu0 0.0
      %1356 = vmatprep.subr.mxu0 0.0
      %1357 = vmatpush1.msra.mxu0 0.0
      %1358 = vmatprep.subr.mxu0 0.0
      %1359 = vmatpush1.msra.mxu0 0.0
      %1360 = vmatprep.subr.mxu0 0.0
      %1361 = vmatpush1.msra.mxu0 0.0
      %1362 = vmatprep.subr.mxu0 0.0
      %1363 = vmatpush1.msra.mxu0 0.0
      %1364 = vmatprep.subr.mxu0 0.0
      %1365 = vmatpush1.msra.mxu0 0.0
      %1366 = vmatprep.subr.mxu0 0.0
      %1367 = vmatpush1.msra.mxu0 0.0
      %1368 = vmatprep.subr.mxu0 0.0
      %1369 = vmatpush1.msra.mxu0 0.0
      %1370 = vmatprep.subr.mxu0 0.0
      %1371 = vmatpush1.msra.mxu0 0.0
      %1372 = vmatprep.subr.mxu0 0.0
      %1373 = vmatpush1.msra.mxu0 0.0
      %1374 = vmatprep.mubr.f32.mxu0 0.0
      %v1375 = vand.u32 %v1143, 4294901760
      %v1376 = vsub.f32 %v1143, %v1375
      %1377 = vmatmul.mubr.f32.gmra.mrb[0].mxu0 %v1376
      %v1378 = vpop.f32.mrb[0].mxu0
      %v1379 = vadd.f32 %v1303, %v1378
      %v1380 = vpop.f32.mrb[0].mxu0
      %1381 = vdwg.mxu0
      %1382 = vmatprep.subr.mxu0 0.0
      %v1383 = vand.u32 %v1122, 4294901760
      %1384 = vmatpush1.msra.mxu0 %v1383
      %1385 = vmatprep.subr.mxu0 0.0
      %v1386 = vand.u32 %v1146, 4294901760
      %1387 = vmatpush1.msra.mxu0 %v1386
      %1388 = vmatprep.subr.mxu0 0.0
      %1389 = vmatpush1.msra.mxu0 0.0
      %1390 = vmatprep.subr.mxu0 0.0
      %1391 = vmatpush1.msra.mxu0 0.0
      %1392 = vmatprep.subr.mxu0 0.0
      %1393 = vmatpush1.msra.mxu0 0.0
      %1394 = vmatprep.subr.mxu0 0.0
      %1395 = vmatpush1.msra.mxu0 0.0
      %1396 = vmatprep.subr.mxu0 0.0
      %1397 = vmatpush1.msra.mxu0 0.0
      %1398 = vmatprep.subr.mxu0 0.0
      %1399 = vmatpush1.msra.mxu0 0.0
      %1400 = vmatprep.subr.mxu0 0.0
      %1401 = vmatpush1.msra.mxu0 0.0
      %1402 = vmatprep.subr.mxu0 0.0
      %1403 = vmatpush1.msra.mxu0 0.0
      %1404 = vmatprep.subr.mxu0 0.0
      %1405 = vmatpush1.msra.mxu0 0.0
      %1406 = vmatprep.subr.mxu0 0.0
      %1407 = vmatpush1.msra.mxu0 0.0
      %1408 = vmatprep.subr.mxu0 0.0
      %1409 = vmatpush1.msra.mxu0 0.0
      %1410 = vmatprep.subr.mxu0 0.0
      %1411 = vmatpush1.msra.mxu0 0.0
      %1412 = vmatprep.subr.mxu0 0.0
      %1413 = vmatpush1.msra.mxu0 0.0
      %1414 = vmatprep.subr.mxu0 0.0
      %1415 = vmatpush1.msra.mxu0 0.0
      %1416 = vmatprep.subr.mxu0 0.0
      %1417 = vmatpush1.msra.mxu0 0.0
      %1418 = vmatprep.subr.mxu0 0.0
      %1419 = vmatpush1.msra.mxu0 0.0
      %1420 = vmatprep.subr.mxu0 0.0
      %1421 = vmatpush1.msra.mxu0 0.0
      %1422 = vmatprep.subr.mxu0 0.0
      %1423 = vmatpush1.msra.mxu0 0.0
      %1424 = vmatprep.subr.mxu0 0.0
      %1425 = vmatpush1.msra.mxu0 0.0
      %1426 = vmatprep.subr.mxu0 0.0
      %1427 = vmatpush1.msra.mxu0 0.0
      %1428 = vmatprep.subr.mxu0 0.0
      %1429 = vmatpush1.msra.mxu0 0.0
      %1430 = vmatprep.subr.mxu0 0.0
      %1431 = vmatpush1.msra.mxu0 0.0
      %1432 = vmatprep.subr.mxu0 0.0
      %1433 = vmatpush1.msra.mxu0 0.0
      %1434 = vmatprep.subr.mxu0 0.0
      %1435 = vmatpush1.msra.mxu0 0.0
      %1436 = vmatprep.subr.mxu0 0.0
      %1437 = vmatpush1.msra.mxu0 0.0
      %1438 = vmatprep.subr.mxu0 0.0
      %1439 = vmatpush1.msra.mxu0 0.0
      %1440 = vmatprep.subr.mxu0 0.0
      %1441 = vmatpush1.msra.mxu0 0.0
      %1442 = vmatprep.subr.mxu0 0.0
      %1443 = vmatpush1.msra.mxu0 0.0
      %1444 = vmatprep.subr.mxu0 0.0
      %1445 = vmatpush1.msra.mxu0 0.0
      %1446 = vmatprep.subr.mxu0 0.0
      %1447 = vmatpush1.msra.mxu0 0.0
      %1448 = vmatprep.mubr.f32.mxu0 0.0
      %v1449 = vand.u32 %v1143, 4294901760
      %v1450 = vsub.f32 %v1143, %v1449
      %v1451 = vand.u32 %v1450, 4294901760
      %1452 = vmatmul.mubr.f32.gmra.mrb[0].mxu0 %v1451
      %v1453 = vpop.f32.mrb[0].mxu0
      %v1454 = vadd.f32 %v1379, %v1453
      %v1455 = vpop.f32.mrb[0].mxu0
      %1456 = vdwg.mxu0
      %1457 = vmatprep.subr.mxu0 0.0
      %v1458 = vand.u32 %v1122, 4294901760
      %v1459 = vsub.f32 %v1122, %v1458
      %v1460 = vand.u32 %v1459, 4294901760
      %1461 = vmatpush1.msra.mxu0 %v1460
      %1462 = vmatprep.subr.mxu0 0.0
      %v1463 = vand.u32 %v1146, 4294901760
      %v1464 = vsub.f32 %v1146, %v1463
      %v1465 = vand.u32 %v1464, 4294901760
      %1466 = vmatpush1.msra.mxu0 %v1465
      %1467 = vmatprep.subr.mxu0 0.0
      %1468 = vmatpush1.msra.mxu0 0.0
      %1469 = vmatprep.subr.mxu0 0.0
      %1470 = vmatpush1.msra.mxu0 0.0
      %1471 = vmatprep.subr.mxu0 0.0
      %1472 = vmatpush1.msra.mxu0 0.0
      %1473 = vmatprep.subr.mxu0 0.0
      %1474 = vmatpush1.msra.mxu0 0.0
      %1475 = vmatprep.subr.mxu0 0.0
      %1476 = vmatpush1.msra.mxu0 0.0
      %1477 = vmatprep.subr.mxu0 0.0
      %1478 = vmatpush1.msra.mxu0 0.0
      %1479 = vmatprep.subr.mxu0 0.0
      %1480 = vmatpush1.msra.mxu0 0.0
      %1481 = vmatprep.subr.mxu0 0.0
      %1482 = vmatpush1.msra.mxu0 0.0
      %1483 = vmatprep.subr.mxu0 0.0
      %1484 = vmatpush1.msra.mxu0 0.0
      %1485 = vmatprep.subr.mxu0 0.0
      %1486 = vmatpush1.msra.mxu0 0.0
      %1487 = vmatprep.subr.mxu0 0.0
      %1488 = vmatpush1.msra.mxu0 0.0
      %1489 = vmatprep.subr.mxu0 0.0
      %1490 = vmatpush1.msra.mxu0 0.0
      %1491 = vmatprep.subr.mxu0 0.0
      %1492 = vmatpush1.msra.mxu0 0.0
      %1493 = vmatprep.subr.mxu0 0.0
      %1494 = vmatpush1.msra.mxu0 0.0
      %1495 = vmatprep.subr.mxu0 0.0
      %1496 = vmatpush1.msra.mxu0 0.0
      %1497 = vmatprep.subr.mxu0 0.0
      %1498 = vmatpush1.msra.mxu0 0.0
      %1499 = vmatprep.subr.mxu0 0.0
      %1500 = vmatpush1.msra.mxu0 0.0
      %1501 = vmatprep.subr.mxu0 0.0
      %1502 = vmatpush1.msra.mxu0 0.0
      %1503 = vmatprep.subr.mxu0 0.0
      %1504 = vmatpush1.msra.mxu0 0.0
      %1505 = vmatprep.subr.mxu0 0.0
      %1506 = vmatpush1.msra.mxu0 0.0
      %1507 = vmatprep.subr.mxu0 0.0
      %1508 = vmatpush1.msra.mxu0 0.0
      %1509 = vmatprep.subr.mxu0 0.0
      %1510 = vmatpush1.msra.mxu0 0.0
      %1511 = vmatprep.subr.mxu0 0.0
      %1512 = vmatpush1.msra.mxu0 0.0
      %1513 = vmatprep.subr.mxu0 0.0
      %1514 = vmatpush1.msra.mxu0 0.0
      %1515 = vmatprep.subr.mxu0 0.0
      %1516 = vmatpush1.msra.mxu0 0.0
      %1517 = vmatprep.subr.mxu0 0.0
      %1518 = vmatpush1.msra.mxu0 0.0
      %1519 = vmatprep.subr.mxu0 0.0
      %1520 = vmatpush1.msra.mxu0 0.0
      %1521 = vmatprep.subr.mxu0 0.0
      %1522 = vmatpush1.msra.mxu0 0.0
      %1523 = vmatprep.subr.mxu0 0.0
      %1524 = vmatpush1.msra.mxu0 0.0
      %1525 = vmatprep.subr.mxu0 0.0
      %1526 = vmatpush1.msra.mxu0 0.0
      %1527 = vmatprep.mubr.f32.mxu0 0.0
      %v1528 = vand.u32 %v1143, 4294901760
      %1529 = vmatmul.mubr.f32.gmra.mrb[0].mxu0 %v1528
      %v1530 = vpop.f32.mrb[0].mxu0
      %v1531 = vadd.f32 %v1454, %v1530
      %v1532 = vpop.f32.mrb[0].mxu0
      %1533 = vdwg.mxu0
      %1534 = vmatprep.subr.mxu0 0.0
      %v1535 = vand.u32 %v1122, 4294901760
      %1536 = vmatpush1.msra.mxu0 %v1535
      %1537 = vmatprep.subr.mxu0 0.0
      %v1538 = vand.u32 %v1146, 4294901760
      %1539 = vmatpush1.msra.mxu0 %v1538
      %1540 = vmatprep.subr.mxu0 0.0
      %1541 = vmatpush1.msra.mxu0 0.0
      %1542 = vmatprep.subr.mxu0 0.0
      %1543 = vmatpush1.msra.mxu0 0.0
      %1544 = vmatprep.subr.mxu0 0.0
      %1545 = vmatpush1.msra.mxu0 0.0
      %1546 = vmatprep.subr.mxu0 0.0
      %1547 = vmatpush1.msra.mxu0 0.0
      %1548 = vmatprep.subr.mxu0 0.0
      %1549 = vmatpush1.msra.mxu0 0.0
      %1550 = vmatprep.subr.mxu0 0.0
      %1551 = vmatpush1.msra.mxu0 0.0
      %1552 = vmatprep.subr.mxu0 0.0
      %1553 = vmatpush1.msra.mxu0 0.0
      %1554 = vmatprep.subr.mxu0 0.0
      %1555 = vmatpush1.msra.mxu0 0.0
      %1556 = vmatprep.subr.mxu0 0.0
      %1557 = vmatpush1.msra.mxu0 0.0
      %1558 = vmatprep.subr.mxu0 0.0
      %1559 = vmatpush1.msra.mxu0 0.0
      %1560 = vmatprep.subr.mxu0 0.0
      %1561 = vmatpush1.msra.mxu0 0.0
      %1562 = vmatprep.subr.mxu0 0.0
      %1563 = vmatpush1.msra.mxu0 0.0
      %1564 = vmatprep.subr.mxu0 0.0
      %1565 = vmatpush1.msra.mxu0 0.0
      %1566 = vmatprep.subr.mxu0 0.0
      %1567 = vmatpush1.msra.mxu0 0.0
      %1568 = vmatprep.subr.mxu0 0.0
      %1569 = vmatpush1.msra.mxu0 0.0
      %1570 = vmatprep.subr.mxu0 0.0
      %1571 = vmatpush1.msra.mxu0 0.0
      %1572 = vmatprep.subr.mxu0 0.0
      %1573 = vmatpush1.msra.mxu0 0.0
      %1574 = vmatprep.subr.mxu0 0.0
      %1575 = vmatpush1.msra.mxu0 0.0
      %1576 = vmatprep.subr.mxu0 0.0
      %1577 = vmatpush1.msra.mxu0 0.0
      %1578 = vmatprep.subr.mxu0 0.0
      %1579 = vmatpush1.msra.mxu0 0.0
      %1580 = vmatprep.subr.mxu0 0.0
      %1581 = vmatpush1.msra.mxu0 0.0
      %1582 = vmatprep.subr.mxu0 0.0
      %1583 = vmatpush1.msra.mxu0 0.0
      %1584 = vmatprep.subr.mxu0 0.0
      %1585 = vmatpush1.msra.mxu0 0.0
      %1586 = vmatprep.subr.mxu0 0.0
      %1587 = vmatpush1.msra.mxu0 0.0
      %1588 = vmatprep.subr.mxu0 0.0
      %1589 = vmatpush1.msra.mxu0 0.0
      %1590 = vmatprep.subr.mxu0 0.0
      %1591 = vmatpush1.msra.mxu0 0.0
      %1592 = vmatprep.subr.mxu0 0.0
      %1593 = vmatpush1.msra.mxu0 0.0
      %1594 = vmatprep.subr.mxu0 0.0
      %1595 = vmatpush1.msra.mxu0 0.0
      %1596 = vmatprep.subr.mxu0 0.0
      %1597 = vmatpush1.msra.mxu0 0.0
      %1598 = vmatprep.subr.mxu0 0.0
      %1599 = vmatpush1.msra.mxu0 0.0
      %1600 = vmatprep.mubr.f32.mxu0 0.0
      %v1601 = vand.u32 %v1143, 4294901760
      %1602 = vmatmul.mubr.f32.gmra.mrb[0].mxu0 %v1601
      %v1603 = vpop.f32.mrb[0].mxu0
      %v1604 = vadd.f32 %v1531, %v1603
      %v1605 = vpop.f32.mrb[0].mxu0
      %1606 = vdwg.mxu0
      %v1608 = vsel %vm1123, %v1140, 0
      %1610 = vmatprep.subr.mxu0 0.0
      %v1611 = vand.u32 %v1135, 4294901760
      %1612 = vmatpush1.msra.mxu0 %v1611
      %1613 = vmatprep.subr.mxu0 0.0
      %v1614 = vand.u32 %v1608, 4294901760
      %1615 = vmatpush1.msra.mxu0 %v1614
      %1616 = vmatprep.subr.mxu0 0.0
      %1617 = vmatpush1.msra.mxu0 0.0
      %1618 = vmatprep.subr.mxu0 0.0
      %1619 = vmatpush1.msra.mxu0 0.0
      %1620 = vmatprep.subr.mxu0 0.0
      %1621 = vmatpush1.msra.mxu0 0.0
      %1622 = vmatprep.subr.mxu0 0.0
      %1623 = vmatpush1.msra.mxu0 0.0
      %1624 = vmatprep.subr.mxu0 0.0
      %1625 = vmatpush1.msra.mxu0 0.0
      %1626 = vmatprep.subr.mxu0 0.0
      %1627 = vmatpush1.msra.mxu0 0.0
      %1628 = vmatprep.subr.mxu0 0.0
      %1629 = vmatpush1.msra.mxu0 0.0
      %1630 = vmatprep.subr.mxu0 0.0
      %1631 = vmatpush1.msra.mxu0 0.0
      %1632 = vmatprep.subr.mxu0 0.0
      %1633 = vmatpush1.msra.mxu0 0.0
      %1634 = vmatprep.subr.mxu0 0.0
      %1635 = vmatpush1.msra.mxu0 0.0
      %1636 = vmatprep.subr.mxu0 0.0
      %1637 = vmatpush1.msra.mxu0 0.0
      %1638 = vmatprep.subr.mxu0 0.0
      %1639 = vmatpush1.msra.mxu0 0.0
      %1640 = vmatprep.subr.mxu0 0.0
      %1641 = vmatpush1.msra.mxu0 0.0
      %1642 = vmatprep.subr.mxu0 0.0
      %1643 = vmatpush1.msra.mxu0 0.0
      %1644 = vmatprep.subr.mxu0 0.0
      %1645 = vmatpush1.msra.mxu0 0.0
      %1646 = vmatprep.subr.mxu0 0.0
      %1647 = vmatpush1.msra.mxu0 0.0
      %1648 = vmatprep.subr.mxu0 0.0
      %1649 = vmatpush1.msra.mxu0 0.0
      %1650 = vmatprep.subr.mxu0 0.0
      %1651 = vmatpush1.msra.mxu0 0.0
      %1652 = vmatprep.subr.mxu0 0.0
      %1653 = vmatpush1.msra.mxu0 0.0
      %1654 = vmatprep.subr.mxu0 0.0
      %1655 = vmatpush1.msra.mxu0 0.0
      %1656 = vmatprep.subr.mxu0 0.0
      %1657 = vmatpush1.msra.mxu0 0.0
      %1658 = vmatprep.subr.mxu0 0.0
      %1659 = vmatpush1.msra.mxu0 0.0
      %1660 = vmatprep.subr.mxu0 0.0
      %1661 = vmatpush1.msra.mxu0 0.0
      %1662 = vmatprep.subr.mxu0 0.0
      %1663 = vmatpush1.msra.mxu0 0.0
      %1664 = vmatprep.subr.mxu0 0.0
      %1665 = vmatpush1.msra.mxu0 0.0
      %1666 = vmatprep.subr.mxu0 0.0
      %1667 = vmatpush1.msra.mxu0 0.0
      %1668 = vmatprep.subr.mxu0 0.0
      %1669 = vmatpush1.msra.mxu0 0.0
      %1670 = vmatprep.subr.mxu0 0.0
      %1671 = vmatpush1.msra.mxu0 0.0
      %1672 = vmatprep.subr.mxu0 0.0
      %1673 = vmatpush1.msra.mxu0 0.0
      %1674 = vmatprep.subr.mxu0 0.0
      %1675 = vmatpush1.msra.mxu0 0.0
      %1676 = vmatprep.mubr.f32.mxu0 0.0
      %v1677 = vand.u32 %v1143, 4294901760
      %v1678 = vsub.f32 %v1143, %v1677
      %v1679 = vand.u32 %v1678, 4294901760
      %v1680 = vsub.f32 %v1678, %v1679
      %v1681 = vand.u32 %v1680, 4294901760
      %1682 = vmatmul.mubr.f32.gmra.mrb[0].mxu0 %v1681
      %v1683 = vpop.f32.mrb[0].mxu0
      %v1684 = vadd.f32 0.0, %v1683
      %v1685 = vpop.f32.mrb[0].mxu0
      %1686 = vdwg.mxu0
      %1687 = vmatprep.subr.mxu0 0.0
      %v1688 = vand.u32 %v1135, 4294901760
      %v1689 = vsub.f32 %v1135, %v1688
      %v1690 = vand.u32 %v1689, 4294901760
      %v1691 = vsub.f32 %v1689, %v1690
      %v1692 = vand.u32 %v1691, 4294901760
      %1693 = vmatpush1.msra.mxu0 %v1692
      %1694 = vmatprep.subr.mxu0 0.0
      %v1695 = vand.u32 %v1608, 4294901760
      %v1696 = vsub.f32 %v1608, %v1695
      %v1697 = vand.u32 %v1696, 4294901760
      %v1698 = vsub.f32 %v1696, %v1697
      %v1699 = vand.u32 %v1698, 4294901760
      %1700 = vmatpush1.msra.mxu0 %v1699
      %1701 = vmatprep.subr.mxu0 0.0
      %1702 = vmatpush1.msra.mxu0 0.0
      %1703 = vmatprep.subr.mxu0 0.0
      %1704 = vmatpush1.msra.mxu0 0.0
      %1705 = vmatprep.subr.mxu0 0.0
      %1706 = vmatpush1.msra.mxu0 0.0
      %1707 = vmatprep.subr.mxu0 0.0
      %1708 = vmatpush1.msra.mxu0 0.0
      %1709 = vmatprep.subr.mxu0 0.0
      %1710 = vmatpush1.msra.mxu0 0.0
      %1711 = vmatprep.subr.mxu0 0.0
      %1712 = vmatpush1.msra.mxu0 0.0
      %1713 = vmatprep.subr.mxu0 0.0
      %1714 = vmatpush1.msra.mxu0 0.0
      %1715 = vmatprep.subr.mxu0 0.0
      %1716 = vmatpush1.msra.mxu0 0.0
      %1717 = vmatprep.subr.mxu0 0.0
      %1718 = vmatpush1.msra.mxu0 0.0
      %1719 = vmatprep.subr.mxu0 0.0
      %1720 = vmatpush1.msra.mxu0 0.0
      %1721 = vmatprep.subr.mxu0 0.0
      %1722 = vmatpush1.msra.mxu0 0.0
      %1723 = vmatprep.subr.mxu0 0.0
      %1724 = vmatpush1.msra.mxu0 0.0
      %1725 = vmatprep.subr.mxu0 0.0
      %1726 = vmatpush1.msra.mxu0 0.0
      %1727 = vmatprep.subr.mxu0 0.0
      %1728 = vmatpush1.msra.mxu0 0.0
      %1729 = vmatprep.subr.mxu0 0.0
      %1730 = vmatpush1.msra.mxu0 0.0
      %1731 = vmatprep.subr.mxu0 0.0
      %1732 = vmatpush1.msra.mxu0 0.0
      %1733 = vmatprep.subr.mxu0 0.0
      %1734 = vmatpush1.msra.mxu0 0.0
      %1735 = vmatprep.subr.mxu0 0.0
      %1736 = vmatpush1.msra.mxu0 0.0
      %1737 = vmatprep.subr.mxu0 0.0
      %1738 = vmatpush1.msra.mxu0 0.0
      %1739 = vmatprep.subr.mxu0 0.0
      %1740 = vmatpush1.msra.mxu0 0.0
      %1741 = vmatprep.subr.mxu0 0.0
      %1742 = vmatpush1.msra.mxu0 0.0
      %1743 = vmatprep.subr.mxu0 0.0
      %1744 = vmatpush1.msra.mxu0 0.0
      %1745 = vmatprep.subr.mxu0 0.0
      %1746 = vmatpush1.msra.mxu0 0.0
      %1747 = vmatprep.subr.mxu0 0.0
      %1748 = vmatpush1.msra.mxu0 0.0
      %1749 = vmatprep.subr.mxu0 0.0
      %1750 = vmatpush1.msra.mxu0 0.0
      %1751 = vmatprep.subr.mxu0 0.0
      %1752 = vmatpush1.msra.mxu0 0.0
      %1753 = vmatprep.subr.mxu0 0.0
      %1754 = vmatpush1.msra.mxu0 0.0
      %1755 = vmatprep.subr.mxu0 0.0
      %1756 = vmatpush1.msra.mxu0 0.0
      %1757 = vmatprep.subr.mxu0 0.0
      %1758 = vmatpush1.msra.mxu0 0.0
      %1759 = vmatprep.subr.mxu0 0.0
      %1760 = vmatpush1.msra.mxu0 0.0
      %1761 = vmatprep.mubr.f32.mxu0 0.0
      %v1762 = vand.u32 %v1143, 4294901760
      %1763 = vmatmul.mubr.f32.gmra.mrb[0].mxu0 %v1762
      %v1764 = vpop.f32.mrb[0].mxu0
      %v1765 = vadd.f32 %v1684, %v1764
      %v1766 = vpop.f32.mrb[0].mxu0
      %1767 = vdwg.mxu0
      %1768 = vmatprep.subr.mxu0 0.0
      %v1769 = vand.u32 %v1135, 4294901760
      %v1770 = vsub.f32 %v1135, %v1769
      %1771 = vmatpush1.msra.mxu0 %v1770
      %1772 = vmatprep.subr.mxu0 0.0
      %v1773 = vand.u32 %v1608, 4294901760
      %v1774 = vsub.f32 %v1608, %v1773
      %1775 = vmatpush1.msra.mxu0 %v1774
      %1776 = vmatprep.subr.mxu0 0.0
      %1777 = vmatpush1.msra.mxu0 0.0
      %1778 = vmatprep.subr.mxu0 0.0
      %1779 = vmatpush1.msra.mxu0 0.0
      %1780 = vmatprep.subr.mxu0 0.0
      %1781 = vmatpush1.msra.mxu0 0.0
      %1782 = vmatprep.subr.mxu0 0.0
      %1783 = vmatpush1.msra.mxu0 0.0
      %1784 = vmatprep.subr.mxu0 0.0
      %1785 = vmatpush1.msra.mxu0 0.0
      %1786 = vmatprep.subr.mxu0 0.0
      %1787 = vmatpush1.msra.mxu0 0.0
      %1788 = vmatprep.subr.mxu0 0.0
      %1789 = vmatpush1.msra.mxu0 0.0
      %1790 = vmatprep.subr.mxu0 0.0
      %1791 = vmatpush1.msra.mxu0 0.0
      %1792 = vmatprep.subr.mxu0 0.0
      %1793 = vmatpush1.msra.mxu0 0.0
      %1794 = vmatprep.subr.mxu0 0.0
      %1795 = vmatpush1.msra.mxu0 0.0
      %1796 = vmatprep.subr.mxu0 0.0
      %1797 = vmatpush1.msra.mxu0 0.0
      %1798 = vmatprep.subr.mxu0 0.0
      %1799 = vmatpush1.msra.mxu0 0.0
      %1800 = vmatprep.subr.mxu0 0.0
      %1801 = vmatpush1.msra.mxu0 0.0
      %1802 = vmatprep.subr.mxu0 0.0
      %1803 = vmatpush1.msra.mxu0 0.0
      %1804 = vmatprep.subr.mxu0 0.0
      %1805 = vmatpush1.msra.mxu0 0.0
      %1806 = vmatprep.subr.mxu0 0.0
      %1807 = vmatpush1.msra.mxu0 0.0
      %1808 = vmatprep.subr.mxu0 0.0
      %1809 = vmatpush1.msra.mxu0 0.0
      %1810 = vmatprep.subr.mxu0 0.0
      %1811 = vmatpush1.msra.mxu0 0.0
      %1812 = vmatprep.subr.mxu0 0.0
      %1813 = vmatpush1.msra.mxu0 0.0
      %1814 = vmatprep.subr.mxu0 0.0
      %1815 = vmatpush1.msra.mxu0 0.0
      %1816 = vmatprep.subr.mxu0 0.0
      %1817 = vmatpush1.msra.mxu0 0.0
      %1818 = vmatprep.subr.mxu0 0.0
      %1819 = vmatpush1.msra.mxu0 0.0
      %1820 = vmatprep.subr.mxu0 0.0
      %1821 = vmatpush1.msra.mxu0 0.0
      %1822 = vmatprep.subr.mxu0 0.0
      %1823 = vmatpush1.msra.mxu0 0.0
      %1824 = vmatprep.subr.mxu0 0.0
      %1825 = vmatpush1.msra.mxu0 0.0
      %1826 = vmatprep.subr.mxu0 0.0
      %1827 = vmatpush1.msra.mxu0 0.0
      %1828 = vmatprep.subr.mxu0 0.0
      %1829 = vmatpush1.msra.mxu0 0.0
      %1830 = vmatprep.subr.mxu0 0.0
      %1831 = vmatpush1.msra.mxu0 0.0
      %1832 = vmatprep.subr.mxu0 0.0
      %1833 = vmatpush1.msra.mxu0 0.0
      %1834 = vmatprep.subr.mxu0 0.0
      %1835 = vmatpush1.msra.mxu0 0.0
      %1836 = vmatprep.mubr.f32.mxu0 0.0
      %v1837 = vand.u32 %v1143, 4294901760
      %v1838 = vsub.f32 %v1143, %v1837
      %1839 = vmatmul.mubr.f32.gmra.mrb[0].mxu0 %v1838
      %v1840 = vpop.f32.mrb[0].mxu0
      %v1841 = vadd.f32 %v1765, %v1840
      %v1842 = vpop.f32.mrb[0].mxu0
      %1843 = vdwg.mxu0
      %1844 = vmatprep.subr.mxu0 0.0
      %v1845 = vand.u32 %v1135, 4294901760
      %1846 = vmatpush1.msra.mxu0 %v1845
      %1847 = vmatprep.subr.mxu0 0.0
      %v1848 = vand.u32 %v1608, 4294901760
      %1849 = vmatpush1.msra.mxu0 %v1848
      %1850 = vmatprep.subr.mxu0 0.0
      %1851 = vmatpush1.msra.mxu0 0.0
      %1852 = vmatprep.subr.mxu0 0.0
      %1853 = vmatpush1.msra.mxu0 0.0
      %1854 = vmatprep.subr.mxu0 0.0
      %1855 = vmatpush1.msra.mxu0 0.0
      %1856 = vmatprep.subr.mxu0 0.0
      %1857 = vmatpush1.msra.mxu0 0.0
      %1858 = vmatprep.subr.mxu0 0.0
      %1859 = vmatpush1.msra.mxu0 0.0
      %1860 = vmatprep.subr.mxu0 0.0
      %1861 = vmatpush1.msra.mxu0 0.0
      %1862 = vmatprep.subr.mxu0 0.0
      %1863 = vmatpush1.msra.mxu0 0.0
      %1864 = vmatprep.subr.mxu0 0.0
      %1865 = vmatpush1.msra.mxu0 0.0
      %1866 = vmatprep.subr.mxu0 0.0
      %1867 = vmatpush1.msra.mxu0 0.0
      %1868 = vmatprep.subr.mxu0 0.0
      %1869 = vmatpush1.msra.mxu0 0.0
      %1870 = vmatprep.subr.mxu0 0.0
      %1871 = vmatpush1.msra.mxu0 0.0
      %1872 = vmatprep.subr.mxu0 0.0
      %1873 = vmatpush1.msra.mxu0 0.0
      %1874 = vmatprep.subr.mxu0 0.0
      %1875 = vmatpush1.msra.mxu0 0.0
      %1876 = vmatprep.subr.mxu0 0.0
      %1877 = vmatpush1.msra.mxu0 0.0
      %1878 = vmatprep.subr.mxu0 0.0
      %1879 = vmatpush1.msra.mxu0 0.0
      %1880 = vmatprep.subr.mxu0 0.0
      %1881 = vmatpush1.msra.mxu0 0.0
      %1882 = vmatprep.subr.mxu0 0.0
      %1883 = vmatpush1.msra.mxu0 0.0
      %1884 = vmatprep.subr.mxu0 0.0
      %1885 = vmatpush1.msra.mxu0 0.0
      %1886 = vmatprep.subr.mxu0 0.0
      %1887 = vmatpush1.msra.mxu0 0.0
      %1888 = vmatprep.subr.mxu0 0.0
      %1889 = vmatpush1.msra.mxu0 0.0
      %1890 = vmatprep.subr.mxu0 0.0
      %1891 = vmatpush1.msra.mxu0 0.0
      %1892 = vmatprep.subr.mxu0 0.0
      %1893 = vmatpush1.msra.mxu0 0.0
      %1894 = vmatprep.subr.mxu0 0.0
      %1895 = vmatpush1.msra.mxu0 0.0
      %1896 = vmatprep.subr.mxu0 0.0
      %1897 = vmatpush1.msra.mxu0 0.0
      %1898 = vmatprep.subr.mxu0 0.0
      %1899 = vmatpush1.msra.mxu0 0.0
      %1900 = vmatprep.subr.mxu0 0.0
      %1901 = vmatpush1.msra.mxu0 0.0
      %1902 = vmatprep.subr.mxu0 0.0
      %1903 = vmatpush1.msra.mxu0 0.0
      %1904 = vmatprep.subr.mxu0 0.0
      %1905 = vmatpush1.msra.mxu0 0.0
      %1906 = vmatprep.subr.mxu0 0.0
      %1907 = vmatpush1.msra.mxu0 0.0
      %1908 = vmatprep.subr.mxu0 0.0
      %1909 = vmatpush1.msra.mxu0 0.0
      %1910 = vmatprep.mubr.f32.mxu0 0.0
      %v1911 = vand.u32 %v1143, 4294901760
      %v1912 = vsub.f32 %v1143, %v1911
      %v1913 = vand.u32 %v1912, 4294901760
      %1914 = vmatmul.mubr.f32.gmra.mrb[0].mxu0 %v1913
      %v1915 = vpop.f32.mrb[0].mxu0
      %v1916 = vadd.f32 %v1841, %v1915
      %v1917 = vpop.f32.mrb[0].mxu0
      %1918 = vdwg.mxu0
      %1919 = vmatprep.subr.mxu0 0.0
      %v1920 = vand.u32 %v1135, 4294901760
      %v1921 = vsub.f32 %v1135, %v1920
      %v1922 = vand.u32 %v1921, 4294901760
      %1923 = vmatpush1.msra.mxu0 %v1922
      %1924 = vmatprep.subr.mxu0 0.0
      %v1925 = vand.u32 %v1608, 4294901760
      %v1926 = vsub.f32 %v1608, %v1925
      %v1927 = vand.u32 %v1926, 4294901760
      %1928 = vmatpush1.msra.mxu0 %v1927
      %1929 = vmatprep.subr.mxu0 0.0
      %1930 = vmatpush1.msra.mxu0 0.0
      %1931 = vmatprep.subr.mxu0 0.0
      %1932 = vmatpush1.msra.mxu0 0.0
      %1933 = vmatprep.subr.mxu0 0.0
      %1934 = vmatpush1.msra.mxu0 0.0
      %1935 = vmatprep.subr.mxu0 0.0
      %1936 = vmatpush1.msra.mxu0 0.0
      %1937 = vmatprep.subr.mxu0 0.0
      %1938 = vmatpush1.msra.mxu0 0.0
      %1939 = vmatprep.subr.mxu0 0.0
      %1940 = vmatpush1.msra.mxu0 0.0
      %1941 = vmatprep.subr.mxu0 0.0
      %1942 = vmatpush1.msra.mxu0 0.0
      %1943 = vmatprep.subr.mxu0 0.0
      %1944 = vmatpush1.msra.mxu0 0.0
      %1945 = vmatprep.subr.mxu0 0.0
      %1946 = vmatpush1.msra.mxu0 0.0
      %1947 = vmatprep.subr.mxu0 0.0
      %1948 = vmatpush1.msra.mxu0 0.0
      %1949 = vmatprep.subr.mxu0 0.0
      %1950 = vmatpush1.msra.mxu0 0.0
      %1951 = vmatprep.subr.mxu0 0.0
      %1952 = vmatpush1.msra.mxu0 0.0
      %1953 = vmatprep.subr.mxu0 0.0
      %1954 = vmatpush1.msra.mxu0 0.0
      %1955 = vmatprep.subr.mxu0 0.0
      %1956 = vmatpush1.msra.mxu0 0.0
      %1957 = vmatprep.subr.mxu0 0.0
      %1958 = vmatpush1.msra.mxu0 0.0
      %1959 = vmatprep.subr.mxu0 0.0
      %1960 = vmatpush1.msra.mxu0 0.0
      %1961 = vmatprep.subr.mxu0 0.0
      %1962 = vmatpush1.msra.mxu0 0.0
      %1963 = vmatprep.subr.mxu0 0.0
      %1964 = vmatpush1.msra.mxu0 0.0
      %1965 = vmatprep.subr.mxu0 0.0
      %1966 = vmatpush1.msra.mxu0 0.0
      %1967 = vmatprep.subr.mxu0 0.0
      %1968 = vmatpush1.msra.mxu0 0.0
      %1969 = vmatprep.subr.mxu0 0.0
      %1970 = vmatpush1.msra.mxu0 0.0
      %1971 = vmatprep.subr.mxu0 0.0
      %1972 = vmatpush1.msra.mxu0 0.0
      %1973 = vmatprep.subr.mxu0 0.0
      %1974 = vmatpush1.msra.mxu0 0.0
      %1975 = vmatprep.subr.mxu0 0.0
      %1976 = vmatpush1.msra.mxu0 0.0
      %1977 = vmatprep.subr.mxu0 0.0
      %1978 = vmatpush1.msra.mxu0 0.0
      %1979 = vmatprep.subr.mxu0 0.0
      %1980 = vmatpush1.msra.mxu0 0.0
      %1981 = vmatprep.subr.mxu0 0.0
      %1982 = vmatpush1.msra.mxu0 0.0
      %1983 = vmatprep.subr.mxu0 0.0
      %1984 = vmatpush1.msra.mxu0 0.0
      %1985 = vmatprep.subr.mxu0 0.0
      %1986 = vmatpush1.msra.mxu0 0.0
      %1987 = vmatprep.subr.mxu0 0.0
      %1988 = vmatpush1.msra.mxu0 0.0
      %1989 = vmatprep.mubr.f32.mxu0 0.0
      %v1990 = vand.u32 %v1143, 4294901760
      %1991 = vmatmul.mubr.f32.gmra.mrb[0].mxu0 %v1990
      %v1992 = vpop.f32.mrb[0].mxu0
      %v1993 = vadd.f32 %v1916, %v1992
      %v1994 = vpop.f32.mrb[0].mxu0
      %1995 = vdwg.mxu0
      %1996 = vmatprep.subr.mxu0 0.0
      %v1997 = vand.u32 %v1135, 4294901760
      %1998 = vmatpush1.msra.mxu0 %v1997
      %1999 = vmatprep.subr.mxu0 0.0
      %v2000 = vand.u32 %v1608, 4294901760
      %2001 = vmatpush1.msra.mxu0 %v2000
      %2002 = vmatprep.subr.mxu0 0.0
      %2003 = vmatpush1.msra.mxu0 0.0
      %2004 = vmatprep.subr.mxu0 0.0
      %2005 = vmatpush1.msra.mxu0 0.0
      %2006 = vmatprep.subr.mxu0 0.0
      %2007 = vmatpush1.msra.mxu0 0.0
      %2008 = vmatprep.subr.mxu0 0.0
      %2009 = vmatpush1.msra.mxu0 0.0
      %2010 = vmatprep.subr.mxu0 0.0
      %2011 = vmatpush1.msra.mxu0 0.0
      %2012 = vmatprep.subr.mxu0 0.0
      %2013 = vmatpush1.msra.mxu0 0.0
      %2014 = vmatprep.subr.mxu0 0.0
      %2015 = vmatpush1.msra.mxu0 0.0
      %2016 = vmatprep.subr.mxu0 0.0
      %2017 = vmatpush1.msra.mxu0 0.0
      %2018 = vmatprep.subr.mxu0 0.0
      %2019 = vmatpush1.msra.mxu0 0.0
      %2020 = vmatprep.subr.mxu0 0.0
      %2021 = vmatpush1.msra.mxu0 0.0
      %2022 = vmatprep.subr.mxu0 0.0
      %2023 = vmatpush1.msra.mxu0 0.0
      %2024 = vmatprep.subr.mxu0 0.0
      %2025 = vmatpush1.msra.mxu0 0.0
      %2026 = vmatprep.subr.mxu0 0.0
      %2027 = vmatpush1.msra.mxu0 0.0
      %2028 = vmatprep.subr.mxu0 0.0
      %2029 = vmatpush1.msra.mxu0 0.0
      %2030 = vmatprep.subr.mxu0 0.0
      %2031 = vmatpush1.msra.mxu0 0.0
      %2032 = vmatprep.subr.mxu0 0.0
      %2033 = vmatpush1.msra.mxu0 0.0
      %2034 = vmatprep.subr.mxu0 0.0
      %2035 = vmatpush1.msra.mxu0 0.0
      %2036 = vmatprep.subr.mxu0 0.0
      %2037 = vmatpush1.msra.mxu0 0.0
      %2038 = vmatprep.subr.mxu0 0.0
      %2039 = vmatpush1.msra.mxu0 0.0
      %2040 = vmatprep.subr.mxu0 0.0
      %2041 = vmatpush1.msra.mxu0 0.0
      %2042 = vmatprep.subr.mxu0 0.0
      %2043 = vmatpush1.msra.mxu0 0.0
      %2044 = vmatprep.subr.mxu0 0.0
      %2045 = vmatpush1.msra.mxu0 0.0
      %2046 = vmatprep.subr.mxu0 0.0
      %2047 = vmatpush1.msra.mxu0 0.0
      %2048 = vmatprep.subr.mxu0 0.0
      %2049 = vmatpush1.msra.mxu0 0.0
      %2050 = vmatprep.subr.mxu0 0.0
      %2051 = vmatpush1.msra.mxu0 0.0
      %2052 = vmatprep.subr.mxu0 0.0
      %2053 = vmatpush1.msra.mxu0 0.0
      %2054 = vmatprep.subr.mxu0 0.0
      %2055 = vmatpush1.msra.mxu0 0.0
      %2056 = vmatprep.subr.mxu0 0.0
      %2057 = vmatpush1.msra.mxu0 0.0
      %2058 = vmatprep.subr.mxu0 0.0
      %2059 = vmatpush1.msra.mxu0 0.0
      %2060 = vmatprep.subr.mxu0 0.0
      %2061 = vmatpush1.msra.mxu0 0.0
      %2062 = vmatprep.mubr.f32.mxu0 0.0
      %v2063 = vand.u32 %v1143, 4294901760
      %2064 = vmatmul.mubr.f32.gmra.mrb[0].mxu0 %v2063
      %v2065 = vpop.f32.mrb[0].mxu0
      %v2066 = vadd.f32 %v1993, %v2065
      %v2067 = vpop.f32.mrb[0].mxu0
      %2068 = vdwg.mxu0
      %vm2069 = vcmask 31744
      %v2071 = vsel %vm2069, %v1117, 0
      %v2074 = vsel %vm2069, %v1118, 0
      %v2077 = vsel %vm1123, %v1604, 0
      %2079 = vmatprep.subr.mxu0 0.0
      %v2080 = vand.u32 %v2077, 4294901760
      %2081 = vmatpush1.msra.mxu0 %v2080
      %2082 = vmatprep.subr.mxu0 0.0
      %2083 = vmatpush1.msra.mxu0 0.0
      %2084 = vmatprep.subr.mxu0 0.0
      %2085 = vmatpush1.msra.mxu0 0.0
      %2086 = vmatprep.subr.mxu0 0.0
      %2087 = vmatpush1.msra.mxu0 0.0
      %2088 = vmatprep.subr.mxu0 0.0
      %2089 = vmatpush1.msra.mxu0 0.0
      %2090 = vmatprep.subr.mxu0 0.0
      %2091 = vmatpush1.msra.mxu0 0.0
      %2092 = vmatprep.subr.mxu0 0.0
      %2093 = vmatpush1.msra.mxu0 0.0
      %2094 = vmatprep.subr.mxu0 0.0
      %2095 = vmatpush1.msra.mxu0 0.0
      %2096 = vmatprep.subr.mxu0 0.0
      %2097 = vmatpush1.msra.mxu0 0.0
      %2098 = vmatprep.subr.mxu0 0.0
      %2099 = vmatpush1.msra.mxu0 0.0
      %2100 = vmatprep.subr.mxu0 0.0
      %2101 = vmatpush1.msra.mxu0 0.0
      %2102 = vmatprep.subr.mxu0 0.0
      %2103 = vmatpush1.msra.mxu0 0.0
      %2104 = vmatprep.subr.mxu0 0.0
      %2105 = vmatpush1.msra.mxu0 0.0
      %2106 = vmatprep.subr.mxu0 0.0
      %2107 = vmatpush1.msra.mxu0 0.0
      %2108 = vmatprep.subr.mxu0 0.0
      %2109 = vmatpush1.msra.mxu0 0.0
      %2110 = vmatprep.subr.mxu0 0.0
      %2111 = vmatpush1.msra.mxu0 0.0
      %2112 = vmatprep.subr.mxu0 0.0
      %2113 = vmatpush1.msra.mxu0 0.0
      %2114 = vmatprep.subr.mxu0 0.0
      %2115 = vmatpush1.msra.mxu0 0.0
      %2116 = vmatprep.subr.mxu0 0.0
      %2117 = vmatpush1.msra.mxu0 0.0
      %2118 = vmatprep.subr.mxu0 0.0
      %2119 = vmatpush1.msra.mxu0 0.0
      %2120 = vmatprep.subr.mxu0 0.0
      %2121 = vmatpush1.msra.mxu0 0.0
      %2122 = vmatprep.subr.mxu0 0.0
      %2123 = vmatpush1.msra.mxu0 0.0
      %2124 = vmatprep.subr.mxu0 0.0
      %2125 = vmatpush1.msra.mxu0 0.0
      %2126 = vmatprep.subr.mxu0 0.0
      %2127 = vmatpush1.msra.mxu0 0.0
      %2128 = vmatprep.subr.mxu0 0.0
      %2129 = vmatpush1.msra.mxu0 0.0
      %2130 = vmatprep.subr.mxu0 0.0
      %2131 = vmatpush1.msra.mxu0 0.0
      %2132 = vmatprep.subr.mxu0 0.0
      %2133 = vmatpush1.msra.mxu0 0.0
      %2134 = vmatprep.subr.mxu0 0.0
      %2135 = vmatpush1.msra.mxu0 0.0
      %2136 = vmatprep.subr.mxu0 0.0
      %2137 = vmatpush1.msra.mxu0 0.0
      %2138 = vmatprep.subr.mxu0 0.0
      %2139 = vmatpush1.msra.mxu0 0.0
      %2140 = vmatprep.subr.mxu0 0.0
      %2141 = vmatpush1.msra.mxu0 0.0
      %2142 = vmatprep.subr.mxu0 0.0
      %2143 = vmatpush1.msra.mxu0 0.0
      %2144 = vmatprep.mubr.f32.mxu0 0.0
      %v2145 = vand.u32 %v2071, 4294901760
      %v2146 = vsub.f32 %v2071, %v2145
      %v2147 = vand.u32 %v2146, 4294901760
      %v2148 = vsub.f32 %v2146, %v2147
      %v2149 = vand.u32 %v2148, 4294901760
      %2150 = vmatmul.mubr.f32.gmra.mrb[0].mxu0 %v2149
      %v2151 = vpop.f32.mrb[0].mxu0
      %v2152 = vadd.f32 0.0, %v2151
      %v2153 = vpop.f32.mrb[0].mxu0
      %2154 = vmatprep.mubr.f32.mxu0 0.0
      %v2155 = vand.u32 %v2074, 4294901760
      %v2156 = vsub.f32 %v2074, %v2155
      %v2157 = vand.u32 %v2156, 4294901760
      %v2158 = vsub.f32 %v2156, %v2157
      %v2159 = vand.u32 %v2158, 4294901760
      %2160 = vmatmul.mubr.f32.gmra.mrb[0].mxu0 %v2159
      %v2161 = vpop.f32.mrb[0].mxu0
      %v2162 = vadd.f32 0.0, %v2161
      %v2163 = vpop.f32.mrb[0].mxu0
      %2164 = vdwg.mxu0
      %2165 = vmatprep.subr.mxu0 0.0
      %v2166 = vand.u32 %v2077, 4294901760
      %v2167 = vsub.f32 %v2077, %v2166
      %v2168 = vand.u32 %v2167, 4294901760
      %v2169 = vsub.f32 %v2167, %v2168
      %v2170 = vand.u32 %v2169, 4294901760
      %2171 = vmatpush1.msra.mxu0 %v2170
      %2172 = vmatprep.subr.mxu0 0.0
      %2173 = vmatpush1.msra.mxu0 0.0
      %2174 = vmatprep.subr.mxu0 0.0
      %2175 = vmatpush1.msra.mxu0 0.0
      %2176 = vmatprep.subr.mxu0 0.0
      %2177 = vmatpush1.msra.mxu0 0.0
      %2178 = vmatprep.subr.mxu0 0.0
      %2179 = vmatpush1.msra.mxu0 0.0
      %2180 = vmatprep.subr.mxu0 0.0
      %2181 = vmatpush1.msra.mxu0 0.0
      %2182 = vmatprep.subr.mxu0 0.0
      %2183 = vmatpush1.msra.mxu0 0.0
      %2184 = vmatprep.subr.mxu0 0.0
      %2185 = vmatpush1.msra.mxu0 0.0
      %2186 = vmatprep.subr.mxu0 0.0
      %2187 = vmatpush1.msra.mxu0 0.0
      %2188 = vmatprep.subr.mxu0 0.0
      %2189 = vmatpush1.msra.mxu0 0.0
      %2190 = vmatprep.subr.mxu0 0.0
      %2191 = vmatpush1.msra.mxu0 0.0
      %2192 = vmatprep.subr.mxu0 0.0
      %2193 = vmatpush1.msra.mxu0 0.0
      %2194 = vmatprep.subr.mxu0 0.0
      %2195 = vmatpush1.msra.mxu0 0.0
      %2196 = vmatprep.subr.mxu0 0.0
      %2197 = vmatpush1.msra.mxu0 0.0
      %2198 = vmatprep.subr.mxu0 0.0
      %2199 = vmatpush1.msra.mxu0 0.0
      %2200 = vmatprep.subr.mxu0 0.0
      %2201 = vmatpush1.msra.mxu0 0.0
      %2202 = vmatprep.subr.mxu0 0.0
      %2203 = vmatpush1.msra.mxu0 0.0
      %2204 = vmatprep.subr.mxu0 0.0
      %2205 = vmatpush1.msra.mxu0 0.0
      %2206 = vmatprep.subr.mxu0 0.0
      %2207 = vmatpush1.msra.mxu0 0.0
      %2208 = vmatprep.subr.mxu0 0.0
      %2209 = vmatpush1.msra.mxu0 0.0
      %2210 = vmatprep.subr.mxu0 0.0
      %2211 = vmatpush1.msra.mxu0 0.0
      %2212 = vmatprep.subr.mxu0 0.0
      %2213 = vmatpush1.msra.mxu0 0.0
      %2214 = vmatprep.subr.mxu0 0.0
      %2215 = vmatpush1.msra.mxu0 0.0
      %2216 = vmatprep.subr.mxu0 0.0
      %2217 = vmatpush1.msra.mxu0 0.0
      %2218 = vmatprep.subr.mxu0 0.0
      %2219 = vmatpush1.msra.mxu0 0.0
      %2220 = vmatprep.subr.mxu0 0.0
      %2221 = vmatpush1.msra.mxu0 0.0
      %2222 = vmatprep.subr.mxu0 0.0
      %2223 = vmatpush1.msra.mxu0 0.0
      %2224 = vmatprep.subr.mxu0 0.0
      %2225 = vmatpush1.msra.mxu0 0.0
      %2226 = vmatprep.subr.mxu0 0.0
      %2227 = vmatpush1.msra.mxu0 0.0
      %2228 = vmatprep.subr.mxu0 0.0
      %2229 = vmatpush1.msra.mxu0 0.0
      %2230 = vmatprep.subr.mxu0 0.0
      %2231 = vmatpush1.msra.mxu0 0.0
      %2232 = vmatprep.subr.mxu0 0.0
      %2233 = vmatpush1.msra.mxu0 0.0
      %2234 = vmatprep.mubr.f32.mxu0 0.0
      %v2235 = vand.u32 %v2071, 4294901760
      %2236 = vmatmul.mubr.f32.gmra.mrb[0].mxu0 %v2235
      %v2237 = vpop.f32.mrb[0].mxu0
      %v2238 = vadd.f32 %v2152, %v2237
      %v2239 = vpop.f32.mrb[0].mxu0
      %2240 = vmatprep.mubr.f32.mxu0 0.0
      %v2241 = vand.u32 %v2074, 4294901760
      %2242 = vmatmul.mubr.f32.gmra.mrb[0].mxu0 %v2241
      %v2243 = vpop.f32.mrb[0].mxu0
      %v2244 = vadd.f32 %v2162, %v2243
      %v2245 = vpop.f32.mrb[0].mxu0
      %2246 = vdwg.mxu0
      %2247 = vmatprep.subr.mxu0 0.0
      %v2248 = vand.u32 %v2077, 4294901760
      %v2249 = vsub.f32 %v2077, %v2248
      %2250 = vmatpush1.msra.mxu0 %v2249
      %2251 = vmatprep.subr.mxu0 0.0
      %2252 = vmatpush1.msra.mxu0 0.0
      %2253 = vmatprep.subr.mxu0 0.0
      %2254 = vmatpush1.msra.mxu0 0.0
      %2255 = vmatprep.subr.mxu0 0.0
      %2256 = vmatpush1.msra.mxu0 0.0
      %2257 = vmatprep.subr.mxu0 0.0
      %2258 = vmatpush1.msra.mxu0 0.0
      %2259 = vmatprep.subr.mxu0 0.0
      %2260 = vmatpush1.msra.mxu0 0.0
      %2261 = vmatprep.subr.mxu0 0.0
      %2262 = vmatpush1.msra.mxu0 0.0
      %2263 = vmatprep.subr.mxu0 0.0
      %2264 = vmatpush1.msra.mxu0 0.0
      %2265 = vmatprep.subr.mxu0 0.0
      %2266 = vmatpush1.msra.mxu0 0.0
      %2267 = vmatprep.subr.mxu0 0.0
      %2268 = vmatpush1.msra.mxu0 0.0
      %2269 = vmatprep.subr.mxu0 0.0
      %2270 = vmatpush1.msra.mxu0 0.0
      %2271 = vmatprep.subr.mxu0 0.0
      %2272 = vmatpush1.msra.mxu0 0.0
      %2273 = vmatprep.subr.mxu0 0.0
      %2274 = vmatpush1.msra.mxu0 0.0
      %2275 = vmatprep.subr.mxu0 0.0
      %2276 = vmatpush1.msra.mxu0 0.0
      %2277 = vmatprep.subr.mxu0 0.0
      %2278 = vmatpush1.msra.mxu0 0.0
      %2279 = vmatprep.subr.mxu0 0.0
      %2280 = vmatpush1.msra.mxu0 0.0
      %2281 = vmatprep.subr.mxu0 0.0
      %2282 = vmatpush1.msra.mxu0 0.0
      %2283 = vmatprep.subr.mxu0 0.0
      %2284 = vmatpush1.msra.mxu0 0.0
      %2285 = vmatprep.subr.mxu0 0.0
      %2286 = vmatpush1.msra.mxu0 0.0
      %2287 = vmatprep.subr.mxu0 0.0
      %2288 = vmatpush1.msra.mxu0 0.0
      %2289 = vmatprep.subr.mxu0 0.0
      %2290 = vmatpush1.msra.mxu0 0.0
      %2291 = vmatprep.subr.mxu0 0.0
      %2292 = vmatpush1.msra.mxu0 0.0
      %2293 = vmatprep.subr.mxu0 0.0
      %2294 = vmatpush1.msra.mxu0 0.0
      %2295 = vmatprep.subr.mxu0 0.0
      %2296 = vmatpush1.msra.mxu0 0.0
      %2297 = vmatprep.subr.mxu0 0.0
      %2298 = vmatpush1.msra.mxu0 0.0
      %2299 = vmatprep.subr.mxu0 0.0
      %2300 = vmatpush1.msra.mxu0 0.0
      %2301 = vmatprep.subr.mxu0 0.0
      %2302 = vmatpush1.msra.mxu0 0.0
      %2303 = vmatprep.subr.mxu0 0.0
      %2304 = vmatpush1.msra.mxu0 0.0
      %2305 = vmatprep.subr.mxu0 0.0
      %2306 = vmatpush1.msra.mxu0 0.0
      %2307 = vmatprep.subr.mxu0 0.0
      %2308 = vmatpush1.msra.mxu0 0.0
      %2309 = vmatprep.subr.mxu0 0.0
      %2310 = vmatpush1.msra.mxu0 0.0
      %2311 = vmatprep.subr.mxu0 0.0
      %2312 = vmatpush1.msra.mxu0 0.0
      %2313 = vmatprep.mubr.f32.mxu0 0.0
      %v2314 = vand.u32 %v2071, 4294901760
      %v2315 = vsub.f32 %v2071, %v2314
      %2316 = vmatmul.mubr.f32.gmra.mrb[0].mxu0 %v2315
      %v2317 = vpop.f32.mrb[0].mxu0
      %v2318 = vadd.f32 %v2238, %v2317
      %v2319 = vpop.f32.mrb[0].mxu0
      %2320 = vmatprep.mubr.f32.mxu0 0.0
      %v2321 = vand.u32 %v2074, 4294901760
      %v2322 = vsub.f32 %v2074, %v2321
      %2323 = vmatmul.mubr.f32.gmra.mrb[0].mxu0 %v2322
      %v2324 = vpop.f32.mrb[0].mxu0
      %v2325 = vadd.f32 %v2244, %v2324
      %v2326 = vpop.f32.mrb[0].mxu0
      %2327 = vdwg.mxu0
      %2328 = vmatprep.subr.mxu0 0.0
      %v2329 = vand.u32 %v2077, 4294901760
      %2330 = vmatpush1.msra.mxu0 %v2329
      %2331 = vmatprep.subr.mxu0 0.0
      %2332 = vmatpush1.msra.mxu0 0.0
      %2333 = vmatprep.subr.mxu0 0.0
      %2334 = vmatpush1.msra.mxu0 0.0
      %2335 = vmatprep.subr.mxu0 0.0
      %2336 = vmatpush1.msra.mxu0 0.0
      %2337 = vmatprep.subr.mxu0 0.0
      %2338 = vmatpush1.msra.mxu0 0.0
      %2339 = vmatprep.subr.mxu0 0.0
      %2340 = vmatpush1.msra.mxu0 0.0
      %2341 = vmatprep.subr.mxu0 0.0
      %2342 = vmatpush1.msra.mxu0 0.0
      %2343 = vmatprep.subr.mxu0 0.0
      %2344 = vmatpush1.msra.mxu0 0.0
      %2345 = vmatprep.subr.mxu0 0.0
      %2346 = vmatpush1.msra.mxu0 0.0
      %2347 = vmatprep.subr.mxu0 0.0
      %2348 = vmatpush1.msra.mxu0 0.0
      %2349 = vmatprep.subr.mxu0 0.0
      %2350 = vmatpush1.msra.mxu0 0.0
      %2351 = vmatprep.subr.mxu0 0.0
      %2352 = vmatpush1.msra.mxu0 0.0
      %2353 = vmatprep.subr.mxu0 0.0
      %2354 = vmatpush1.msra.mxu0 0.0
      %2355 = vmatprep.subr.mxu0 0.0
      %2356 = vmatpush1.msra.mxu0 0.0
      %2357 = vmatprep.subr.mxu0 0.0
      %2358 = vmatpush1.msra.mxu0 0.0
      %2359 = vmatprep.subr.mxu0 0.0
      %2360 = vmatpush1.msra.mxu0 0.0
      %2361 = vmatprep.subr.mxu0 0.0
      %2362 = vmatpush1.msra.mxu0 0.0
      %2363 = vmatprep.subr.mxu0 0.0
      %2364 = vmatpush1.msra.mxu0 0.0
      %2365 = vmatprep.subr.mxu0 0.0
      %2366 = vmatpush1.msra.mxu0 0.0
      %2367 = vmatprep.subr.mxu0 0.0
      %2368 = vmatpush1.msra.mxu0 0.0
      %2369 = vmatprep.subr.mxu0 0.0
      %2370 = vmatpush1.msra.mxu0 0.0
      %2371 = vmatprep.subr.mxu0 0.0
      %2372 = vmatpush1.msra.mxu0 0.0
      %2373 = vmatprep.subr.mxu0 0.0
      %2374 = vmatpush1.msra.mxu0 0.0
      %2375 = vmatprep.subr.mxu0 0.0
      %2376 = vmatpush1.msra.mxu0 0.0
      %2377 = vmatprep.subr.mxu0 0.0
      %2378 = vmatpush1.msra.mxu0 0.0
      %2379 = vmatprep.subr.mxu0 0.0
      %2380 = vmatpush1.msra.mxu0 0.0
      %2381 = vmatprep.subr.mxu0 0.0
      %2382 = vmatpush1.msra.mxu0 0.0
      %2383 = vmatprep.subr.mxu0 0.0
      %2384 = vmatpush1.msra.mxu0 0.0
      %2385 = vmatprep.subr.mxu0 0.0
      %2386 = vmatpush1.msra.mxu0 0.0
      %2387 = vmatprep.subr.mxu0 0.0
      %2388 = vmatpush1.msra.mxu0 0.0
      %2389 = vmatprep.subr.mxu0 0.0
      %2390 = vmatpush1.msra.mxu0 0.0
      %2391 = vmatprep.subr.mxu0 0.0
      %2392 = vmatpush1.msra.mxu0 0.0
      %2393 = vmatprep.mubr.f32.mxu0 0.0
      %v2394 = vand.u32 %v2071, 4294901760
      %v2395 = vsub.f32 %v2071, %v2394
      %v2396 = vand.u32 %v2395, 4294901760
      %2397 = vmatmul.mubr.f32.gmra.mrb[0].mxu0 %v2396
      %v2398 = vpop.f32.mrb[0].mxu0
      %v2399 = vadd.f32 %v2318, %v2398
      %v2400 = vpop.f32.mrb[0].mxu0
      %2401 = vmatprep.mubr.f32.mxu0 0.0
      %v2402 = vand.u32 %v2074, 4294901760
      %v2403 = vsub.f32 %v2074, %v2402
      %v2404 = vand.u32 %v2403, 4294901760
      %2405 = vmatmul.mubr.f32.gmra.mrb[0].mxu0 %v2404
      %v2406 = vpop.f32.mrb[0].mxu0
      %v2407 = vadd.f32 %v2325, %v2406
      %v2408 = vpop.f32.mrb[0].mxu0
      %2409 = vdwg.mxu0
      %2410 = vmatprep.subr.mxu0 0.0
      %v2411 = vand.u32 %v2077, 4294901760
      %v2412 = vsub.f32 %v2077, %v2411
      %v2413 = vand.u32 %v2412, 4294901760
      %2414 = vmatpush1.msra.mxu0 %v2413
      %2415 = vmatprep.subr.mxu0 0.0
      %2416 = vmatpush1.msra.mxu0 0.0
      %2417 = vmatprep.subr.mxu0 0.0
      %2418 = vmatpush1.msra.mxu0 0.0
      %2419 = vmatprep.subr.mxu0 0.0
      %2420 = vmatpush1.msra.mxu0 0.0
      %2421 = vmatprep.subr.mxu0 0.0
      %2422 = vmatpush1.msra.mxu0 0.0
      %2423 = vmatprep.subr.mxu0 0.0
      %2424 = vmatpush1.msra.mxu0 0.0
      %2425 = vmatprep.subr.mxu0 0.0
      %2426 = vmatpush1.msra.mxu0 0.0
      %2427 = vmatprep.subr.mxu0 0.0
      %2428 = vmatpush1.msra.mxu0 0.0
      %2429 = vmatprep.subr.mxu0 0.0
      %2430 = vmatpush1.msra.mxu0 0.0
      %2431 = vmatprep.subr.mxu0 0.0
      %2432 = vmatpush1.msra.mxu0 0.0
      %2433 = vmatprep.subr.mxu0 0.0
      %2434 = vmatpush1.msra.mxu0 0.0
      %2435 = vmatprep.subr.mxu0 0.0
      %2436 = vmatpush1.msra.mxu0 0.0
      %2437 = vmatprep.subr.mxu0 0.0
      %2438 = vmatpush1.msra.mxu0 0.0
      %2439 = vmatprep.subr.mxu0 0.0
      %2440 = vmatpush1.msra.mxu0 0.0
      %2441 = vmatprep.subr.mxu0 0.0
      %2442 = vmatpush1.msra.mxu0 0.0
      %2443 = vmatprep.subr.mxu0 0.0
      %2444 = vmatpush1.msra.mxu0 0.0
      %2445 = vmatprep.subr.mxu0 0.0
      %2446 = vmatpush1.msra.mxu0 0.0
      %2447 = vmatprep.subr.mxu0 0.0
      %2448 = vmatpush1.msra.mxu0 0.0
      %2449 = vmatprep.subr.mxu0 0.0
      %2450 = vmatpush1.msra.mxu0 0.0
      %2451 = vmatprep.subr.mxu0 0.0
      %2452 = vmatpush1.msra.mxu0 0.0
      %2453 = vmatprep.subr.mxu0 0.0
      %2454 = vmatpush1.msra.mxu0 0.0
      %2455 = vmatprep.subr.mxu0 0.0
      %2456 = vmatpush1.msra.mxu0 0.0
      %2457 = vmatprep.subr.mxu0 0.0
      %2458 = vmatpush1.msra.mxu0 0.0
      %2459 = vmatprep.subr.mxu0 0.0
      %2460 = vmatpush1.msra.mxu0 0.0
      %2461 = vmatprep.subr.mxu0 0.0
      %2462 = vmatpush1.msra.mxu0 0.0
      %2463 = vmatprep.subr.mxu0 0.0
      %2464 = vmatpush1.msra.mxu0 0.0
      %2465 = vmatprep.subr.mxu0 0.0
      %2466 = vmatpush1.msra.mxu0 0.0
      %2467 = vmatprep.subr.mxu0 0.0
      %2468 = vmatpush1.msra.mxu0 0.0
      %2469 = vmatprep.subr.mxu0 0.0
      %2470 = vmatpush1.msra.mxu0 0.0
      %2471 = vmatprep.subr.mxu0 0.0
      %2472 = vmatpush1.msra.mxu0 0.0
      %2473 = vmatprep.subr.mxu0 0.0
      %2474 = vmatpush1.msra.mxu0 0.0
      %2475 = vmatprep.subr.mxu0 0.0
      %2476 = vmatpush1.msra.mxu0 0.0
      %2477 = vmatprep.mubr.f32.mxu0 0.0
      %v2478 = vand.u32 %v2071, 4294901760
      %2479 = vmatmul.mubr.f32.gmra.mrb[0].mxu0 %v2478
      %v2480 = vpop.f32.mrb[0].mxu0
      %v2481 = vadd.f32 %v2399, %v2480
      %v2482 = vpop.f32.mrb[0].mxu0
      %2483 = vmatprep.mubr.f32.mxu0 0.0
      %v2484 = vand.u32 %v2074, 4294901760
      %2485 = vmatmul.mubr.f32.gmra.mrb[0].mxu0 %v2484
      %v2486 = vpop.f32.mrb[0].mxu0
      %v2487 = vadd.f32 %v2407, %v2486
      %v2488 = vpop.f32.mrb[0].mxu0
      %2489 = vdwg.mxu0
      %2490 = vmatprep.subr.mxu0 0.0
      %v2491 = vand.u32 %v2077, 4294901760
      %2492 = vmatpush1.msra.mxu0 %v2491
      %2493 = vmatprep.subr.mxu0 0.0
      %2494 = vmatpush1.msra.mxu0 0.0
      %2495 = vmatprep.subr.mxu0 0.0
      %2496 = vmatpush1.msra.mxu0 0.0
      %2497 = vmatprep.subr.mxu0 0.0
      %2498 = vmatpush1.msra.mxu0 0.0
      %2499 = vmatprep.subr.mxu0 0.0
      %2500 = vmatpush1.msra.mxu0 0.0
      %2501 = vmatprep.subr.mxu0 0.0
      %2502 = vmatpush1.msra.mxu0 0.0
      %2503 = vmatprep.subr.mxu0 0.0
      %2504 = vmatpush1.msra.mxu0 0.0
      %2505 = vmatprep.subr.mxu0 0.0
      %2506 = vmatpush1.msra.mxu0 0.0
      %2507 = vmatprep.subr.mxu0 0.0
      %2508 = vmatpush1.msra.mxu0 0.0
      %2509 = vmatprep.subr.mxu0 0.0
      %2510 = vmatpush1.msra.mxu0 0.0
      %2511 = vmatprep.subr.mxu0 0.0
      %2512 = vmatpush1.msra.mxu0 0.0
      %2513 = vmatprep.subr.mxu0 0.0
      %2514 = vmatpush1.msra.mxu0 0.0
      %2515 = vmatprep.subr.mxu0 0.0
      %2516 = vmatpush1.msra.mxu0 0.0
      %2517 = vmatprep.subr.mxu0 0.0
      %2518 = vmatpush1.msra.mxu0 0.0
      %2519 = vmatprep.subr.mxu0 0.0
      %2520 = vmatpush1.msra.mxu0 0.0
      %2521 = vmatprep.subr.mxu0 0.0
      %2522 = vmatpush1.msra.mxu0 0.0
      %2523 = vmatprep.subr.mxu0 0.0
      %2524 = vmatpush1.msra.mxu0 0.0
      %2525 = vmatprep.subr.mxu0 0.0
      %2526 = vmatpush1.msra.mxu0 0.0
      %2527 = vmatprep.subr.mxu0 0.0
      %2528 = vmatpush1.msra.mxu0 0.0
      %2529 = vmatprep.subr.mxu0 0.0
      %2530 = vmatpush1.msra.mxu0 0.0
      %2531 = vmatprep.subr.mxu0 0.0
      %2532 = vmatpush1.msra.mxu0 0.0
      %2533 = vmatprep.subr.mxu0 0.0
      %2534 = vmatpush1.msra.mxu0 0.0
      %2535 = vmatprep.subr.mxu0 0.0
      %2536 = vmatpush1.msra.mxu0 0.0
      %2537 = vmatprep.subr.mxu0 0.0
      %2538 = vmatpush1.msra.mxu0 0.0
      %2539 = vmatprep.subr.mxu0 0.0
      %2540 = vmatpush1.msra.mxu0 0.0
      %2541 = vmatprep.subr.mxu0 0.0
      %2542 = vmatpush1.msra.mxu0 0.0
      %2543 = vmatprep.subr.mxu0 0.0
      %2544 = vmatpush1.msra.mxu0 0.0
      %2545 = vmatprep.subr.mxu0 0.0
      %2546 = vmatpush1.msra.mxu0 0.0
      %2547 = vmatprep.subr.mxu0 0.0
      %2548 = vmatpush1.msra.mxu0 0.0
      %2549 = vmatprep.subr.mxu0 0.0
      %2550 = vmatpush1.msra.mxu0 0.0
      %2551 = vmatprep.subr.mxu0 0.0
      %2552 = vmatpush1.msra.mxu0 0.0
      %2553 = vmatprep.subr.mxu0 0.0
      %2554 = vmatpush1.msra.mxu0 0.0
      %2555 = vmatprep.mubr.f32.mxu0 0.0
      %v2556 = vand.u32 %v2071, 4294901760
      %2557 = vmatmul.mubr.f32.gmra.mrb[0].mxu0 %v2556
      %v2558 = vpop.f32.mrb[0].mxu0
      %v2559 = vadd.f32 %v2481, %v2558
      %v2560 = vpop.f32.mrb[0].mxu0
      %2561 = vmatprep.mubr.f32.mxu0 0.0
      %v2562 = vand.u32 %v2074, 4294901760
      %2563 = vmatmul.mubr.f32.gmra.mrb[0].mxu0 %v2562
      %v2564 = vpop.f32.mrb[0].mxu0
      %v2565 = vadd.f32 %v2487, %v2564
      %v2566 = vpop.f32.mrb[0].mxu0
      %2567 = vdwg.mxu0
      %v2568 = vmul.f32 %v2559, 0.0013020834
      %v2569 = vmul.f32 %v2565, 0.0013020834
      %v2571 = vsel %vm1123, %v2066, 0
      %2573 = vmatprep.subr.mxu0 0.0
      %v2574 = vand.u32 %v2571, 4294901760
      %2575 = vmatpush1.msra.mxu0 %v2574
      %2576 = vmatprep.subr.mxu0 0.0
      %2577 = vmatpush1.msra.mxu0 0.0
      %2578 = vmatprep.subr.mxu0 0.0
      %2579 = vmatpush1.msra.mxu0 0.0
      %2580 = vmatprep.subr.mxu0 0.0
      %2581 = vmatpush1.msra.mxu0 0.0
      %2582 = vmatprep.subr.mxu0 0.0
      %2583 = vmatpush1.msra.mxu0 0.0
      %2584 = vmatprep.subr.mxu0 0.0
      %2585 = vmatpush1.msra.mxu0 0.0
      %2586 = vmatprep.subr.mxu0 0.0
      %2587 = vmatpush1.msra.mxu0 0.0
      %2588 = vmatprep.subr.mxu0 0.0
      %2589 = vmatpush1.msra.mxu0 0.0
      %2590 = vmatprep.subr.mxu0 0.0
      %2591 = vmatpush1.msra.mxu0 0.0
      %2592 = vmatprep.subr.mxu0 0.0
      %2593 = vmatpush1.msra.mxu0 0.0
      %2594 = vmatprep.subr.mxu0 0.0
      %2595 = vmatpush1.msra.mxu0 0.0
      %2596 = vmatprep.subr.mxu0 0.0
      %2597 = vmatpush1.msra.mxu0 0.0
      %2598 = vmatprep.subr.mxu0 0.0
      %2599 = vmatpush1.msra.mxu0 0.0
      %2600 = vmatprep.subr.mxu0 0.0
      %2601 = vmatpush1.msra.mxu0 0.0
      %2602 = vmatprep.subr.mxu0 0.0
      %2603 = vmatpush1.msra.mxu0 0.0
      %2604 = vmatprep.subr.mxu0 0.0
      %2605 = vmatpush1.msra.mxu0 0.0
      %2606 = vmatprep.subr.mxu0 0.0
      %2607 = vmatpush1.msra.mxu0 0.0
      %2608 = vmatprep.subr.mxu0 0.0
      %2609 = vmatpush1.msra.mxu0 0.0
      %2610 = vmatprep.subr.mxu0 0.0
      %2611 = vmatpush1.msra.mxu0 0.0
      %2612 = vmatprep.subr.mxu0 0.0
      %2613 = vmatpush1.msra.mxu0 0.0
      %2614 = vmatprep.subr.mxu0 0.0
      %2615 = vmatpush1.msra.mxu0 0.0
      %2616 = vmatprep.subr.mxu0 0.0
      %2617 = vmatpush1.msra.mxu0 0.0
      %2618 = vmatprep.subr.mxu0 0.0
      %2619 = vmatpush1.msra.mxu0 0.0
      %2620 = vmatprep.subr.mxu0 0.0
      %2621 = vmatpush1.msra.mxu0 0.0
      %2622 = vmatprep.subr.mxu0 0.0
      %2623 = vmatpush1.msra.mxu0 0.0
      %2624 = vmatprep.subr.mxu0 0.0
      %2625 = vmatpush1.msra.mxu0 0.0
      %2626 = vmatprep.subr.mxu0 0.0
      %2627 = vmatpush1.msra.mxu0 0.0
      %2628 = vmatprep.subr.mxu0 0.0
      %2629 = vmatpush1.msra.mxu0 0.0
      %2630 = vmatprep.subr.mxu0 0.0
      %2631 = vmatpush1.msra.mxu0 0.0
      %2632 = vmatprep.subr.mxu0 0.0
      %2633 = vmatpush1.msra.mxu0 0.0
      %2634 = vmatprep.subr.mxu0 0.0
      %2635 = vmatpush1.msra.mxu0 0.0
      %2636 = vmatprep.subr.mxu0 0.0
      %2637 = vmatpush1.msra.mxu0 0.0
      %2638 = vmatprep.mubr.f32.mxu0 0.0
      %v2639 = vand.u32 %v2071, 4294901760
      %v2640 = vsub.f32 %v2071, %v2639
      %v2641 = vand.u32 %v2640, 4294901760
      %v2642 = vsub.f32 %v2640, %v2641
      %v2643 = vand.u32 %v2642, 4294901760
      %2644 = vmatmul.mubr.f32.gmra.mrb[0].mxu0 %v2643
      %v2645 = vpop.f32.mrb[0].mxu0
      %v2646 = vadd.f32 0.0, %v2645
      %v2647 = vpop.f32.mrb[0].mxu0
      %2648 = vmatprep.mubr.f32.mxu0 0.0
      %v2649 = vand.u32 %v2074, 4294901760
      %v2650 = vsub.f32 %v2074, %v2649
      %v2651 = vand.u32 %v2650, 4294901760
      %v2652 = vsub.f32 %v2650, %v2651
      %v2653 = vand.u32 %v2652, 4294901760
      %2654 = vmatmul.mubr.f32.gmra.mrb[0].mxu0 %v2653
      %v2655 = vpop.f32.mrb[0].mxu0
      %v2656 = vadd.f32 0.0, %v2655
      %v2657 = vpop.f32.mrb[0].mxu0
      %2658 = vdwg.mxu0
      %2659 = vmatprep.subr.mxu0 0.0
      %v2660 = vand.u32 %v2571, 4294901760
      %v2661 = vsub.f32 %v2571, %v2660
      %v2662 = vand.u32 %v2661, 4294901760
      %v2663 = vsub.f32 %v2661, %v2662
      %v2664 = vand.u32 %v2663, 4294901760
      %2665 = vmatpush1.msra.mxu0 %v2664
      %2666 = vmatprep.subr.mxu0 0.0
      %2667 = vmatpush1.msra.mxu0 0.0
      %2668 = vmatprep.subr.mxu0 0.0
      %2669 = vmatpush1.msra.mxu0 0.0
      %2670 = vmatprep.subr.mxu0 0.0
      %2671 = vmatpush1.msra.mxu0 0.0
      %2672 = vmatprep.subr.mxu0 0.0
      %2673 = vmatpush1.msra.mxu0 0.0
      %2674 = vmatprep.subr.mxu0 0.0
      %2675 = vmatpush1.msra.mxu0 0.0
      %2676 = vmatprep.subr.mxu0 0.0
      %2677 = vmatpush1.msra.mxu0 0.0
      %2678 = vmatprep.subr.mxu0 0.0
      %2679 = vmatpush1.msra.mxu0 0.0
      %2680 = vmatprep.subr.mxu0 0.0
      %2681 = vmatpush1.msra.mxu0 0.0
      %2682 = vmatprep.subr.mxu0 0.0
      %2683 = vmatpush1.msra.mxu0 0.0
      %2684 = vmatprep.subr.mxu0 0.0
      %2685 = vmatpush1.msra.mxu0 0.0
      %2686 = vmatprep.subr.mxu0 0.0
      %2687 = vmatpush1.msra.mxu0 0.0
      %2688 = vmatprep.subr.mxu0 0.0
      %2689 = vmatpush1.msra.mxu0 0.0
      %2690 = vmatprep.subr.mxu0 0.0
      %2691 = vmatpush1.msra.mxu0 0.0
      %2692 = vmatprep.subr.mxu0 0.0
      %2693 = vmatpush1.msra.mxu0 0.0
      %2694 = vmatprep.subr.mxu0 0.0
      %2695 = vmatpush1.msra.mxu0 0.0
      %2696 = vmatprep.subr.mxu0 0.0
      %2697 = vmatpush1.msra.mxu0 0.0
      %2698 = vmatprep.subr.mxu0 0.0
      %2699 = vmatpush1.msra.mxu0 0.0
      %2700 = vmatprep.subr.mxu0 0.0
      %2701 = vmatpush1.msra.mxu0 0.0
      %2702 = vmatprep.subr.mxu0 0.0
      %2703 = vmatpush1.msra.mxu0 0.0
      %2704 = vmatprep.subr.mxu0 0.0
      %2705 = vmatpush1.msra.mxu0 0.0
      %2706 = vmatprep.subr.mxu0 0.0
      %2707 = vmatpush1.msra.mxu0 0.0
      %2708 = vmatprep.subr.mxu0 0.0
      %2709 = vmatpush1.msra.mxu0 0.0
      %2710 = vmatprep.subr.mxu0 0.0
      %2711 = vmatpush1.msra.mxu0 0.0
      %2712 = vmatprep.subr.mxu0 0.0
      %2713 = vmatpush1.msra.mxu0 0.0
      %2714 = vmatprep.subr.mxu0 0.0
      %2715 = vmatpush1.msra.mxu0 0.0
      %2716 = vmatprep.subr.mxu0 0.0
      %2717 = vmatpush1.msra.mxu0 0.0
      %2718 = vmatprep.subr.mxu0 0.0
      %2719 = vmatpush1.msra.mxu0 0.0
      %2720 = vmatprep.subr.mxu0 0.0
      %2721 = vmatpush1.msra.mxu0 0.0
      %2722 = vmatprep.subr.mxu0 0.0
      %2723 = vmatpush1.msra.mxu0 0.0
      %2724 = vmatprep.subr.mxu0 0.0
      %2725 = vmatpush1.msra.mxu0 0.0
      %2726 = vmatprep.subr.mxu0 0.0
      %2727 = vmatpush1.msra.mxu0 0.0
      %2728 = vmatprep.mubr.f32.mxu0 0.0
      %v2729 = vand.u32 %v2071, 4294901760
      %2730 = vmatmul.mubr.f32.gmra.mrb[0].mxu0 %v2729
      %v2731 = vpop.f32.mrb[0].mxu0
      %v2732 = vadd.f32 %v2646, %v2731
      %v2733 = vpop.f32.mrb[0].mxu0
      %2734 = vmatprep.mubr.f32.mxu0 0.0
      %v2735 = vand.u32 %v2074, 4294901760
      %2736 = vmatmul.mubr.f32.gmra.mrb[0].mxu0 %v2735
      %v2737 = vpop.f32.mrb[0].mxu0
      %v2738 = vadd.f32 %v2656, %v2737
      %v2739 = vpop.f32.mrb[0].mxu0
      %2740 = vdwg.mxu0
      %2741 = vmatprep.subr.mxu0 0.0
      %v2742 = vand.u32 %v2571, 4294901760
      %v2743 = vsub.f32 %v2571, %v2742
      %2744 = vmatpush1.msra.mxu0 %v2743
      %2745 = vmatprep.subr.mxu0 0.0
      %2746 = vmatpush1.msra.mxu0 0.0
      %2747 = vmatprep.subr.mxu0 0.0
      %2748 = vmatpush1.msra.mxu0 0.0
      %2749 = vmatprep.subr.mxu0 0.0
      %2750 = vmatpush1.msra.mxu0 0.0
      %2751 = vmatprep.subr.mxu0 0.0
      %2752 = vmatpush1.msra.mxu0 0.0
      %2753 = vmatprep.subr.mxu0 0.0
      %2754 = vmatpush1.msra.mxu0 0.0
      %2755 = vmatprep.subr.mxu0 0.0
      %2756 = vmatpush1.msra.mxu0 0.0
      %2757 = vmatprep.subr.mxu0 0.0
      %2758 = vmatpush1.msra.mxu0 0.0
      %2759 = vmatprep.subr.mxu0 0.0
      %2760 = vmatpush1.msra.mxu0 0.0
      %2761 = vmatprep.subr.mxu0 0.0
      %2762 = vmatpush1.msra.mxu0 0.0
      %2763 = vmatprep.subr.mxu0 0.0
      %2764 = vmatpush1.msra.mxu0 0.0
      %2765 = vmatprep.subr.mxu0 0.0
      %2766 = vmatpush1.msra.mxu0 0.0
      %2767 = vmatprep.subr.mxu0 0.0
      %2768 = vmatpush1.msra.mxu0 0.0
      %2769 = vmatprep.subr.mxu0 0.0
      %2770 = vmatpush1.msra.mxu0 0.0
      %2771 = vmatprep.subr.mxu0 0.0
      %2772 = vmatpush1.msra.mxu0 0.0
      %2773 = vmatprep.subr.mxu0 0.0
      %2774 = vmatpush1.msra.mxu0 0.0
      %2775 = vmatprep.subr.mxu0 0.0
      %2776 = vmatpush1.msra.mxu0 0.0
      %2777 = vmatprep.subr.mxu0 0.0
      %2778 = vmatpush1.msra.mxu0 0.0
      %2779 = vmatprep.subr.mxu0 0.0
      %2780 = vmatpush1.msra.mxu0 0.0
      %2781 = vmatprep.subr.mxu0 0.0
      %2782 = vmatpush1.msra.mxu0 0.0
      %2783 = vmatprep.subr.mxu0 0.0
      %2784 = vmatpush1.msra.mxu0 0.0
      %2785 = vmatprep.subr.mxu0 0.0
      %2786 = vmatpush1.msra.mxu0 0.0
      %2787 = vmatprep.subr.mxu0 0.0
      %2788 = vmatpush1.msra.mxu0 0.0
      %2789 = vmatprep.subr.mxu0 0.0
      %2790 = vmatpush1.msra.mxu0 0.0
      %2791 = vmatprep.subr.mxu0 0.0
      %2792 = vmatpush1.msra.mxu0 0.0
      %2793 = vmatprep.subr.mxu0 0.0
      %2794 = vmatpush1.msra.mxu0 0.0
      %2795 = vmatprep.subr.mxu0 0.0
      %2796 = vmatpush1.msra.mxu0 0.0
      %2797 = vmatprep.subr.mxu0 0.0
      %2798 = vmatpush1.msra.mxu0 0.0
      %2799 = vmatprep.subr.mxu0 0.0
      %2800 = vmatpush1.msra.mxu0 0.0
      %2801 = vmatprep.subr.mxu0 0.0
      %2802 = vmatpush1.msra.mxu0 0.0
      %2803 = vmatprep.subr.mxu0 0.0
      %2804 = vmatpush1.msra.mxu0 0.0
      %2805 = vmatprep.subr.mxu0 0.0
      %2806 = vmatpush1.msra.mxu0 0.0
      %2807 = vmatprep.mubr.f32.mxu0 0.0
      %v2808 = vand.u32 %v2071, 4294901760
      %v2809 = vsub.f32 %v2071, %v2808
      %2810 = vmatmul.mubr.f32.gmra.mrb[0].mxu0 %v2809
      %v2811 = vpop.f32.mrb[0].mxu0
      %v2812 = vadd.f32 %v2732, %v2811
      %v2813 = vpop.f32.mrb[0].mxu0
      %2814 = vmatprep.mubr.f32.mxu0 0.0
      %v2815 = vand.u32 %v2074, 4294901760
      %v2816 = vsub.f32 %v2074, %v2815
      %2817 = vmatmul.mubr.f32.gmra.mrb[0].mxu0 %v2816
      %v2818 = vpop.f32.mrb[0].mxu0
      %v2819 = vadd.f32 %v2738, %v2818
      %v2820 = vpop.f32.mrb[0].mxu0
      %2821 = vdwg.mxu0
      %2822 = vmatprep.subr.mxu0 0.0
      %v2823 = vand.u32 %v2571, 4294901760
      %2824 = vmatpush1.msra.mxu0 %v2823
      %2825 = vmatprep.subr.mxu0 0.0
      %2826 = vmatpush1.msra.mxu0 0.0
      %2827 = vmatprep.subr.mxu0 0.0
      %2828 = vmatpush1.msra.mxu0 0.0
      %2829 = vmatprep.subr.mxu0 0.0
      %2830 = vmatpush1.msra.mxu0 0.0
      %2831 = vmatprep.subr.mxu0 0.0
      %2832 = vmatpush1.msra.mxu0 0.0
      %2833 = vmatprep.subr.mxu0 0.0
      %2834 = vmatpush1.msra.mxu0 0.0
      %2835 = vmatprep.subr.mxu0 0.0
      %2836 = vmatpush1.msra.mxu0 0.0
      %2837 = vmatprep.subr.mxu0 0.0
      %2838 = vmatpush1.msra.mxu0 0.0
      %2839 = vmatprep.subr.mxu0 0.0
      %2840 = vmatpush1.msra.mxu0 0.0
      %2841 = vmatprep.subr.mxu0 0.0
      %2842 = vmatpush1.msra.mxu0 0.0
      %2843 = vmatprep.subr.mxu0 0.0
      %2844 = vmatpush1.msra.mxu0 0.0
      %2845 = vmatprep.subr.mxu0 0.0
      %2846 = vmatpush1.msra.mxu0 0.0
      %2847 = vmatprep.subr.mxu0 0.0
      %2848 = vmatpush1.msra.mxu0 0.0
      %2849 = vmatprep.subr.mxu0 0.0
      %2850 = vmatpush1.msra.mxu0 0.0
      %2851 = vmatprep.subr.mxu0 0.0
      %2852 = vmatpush1.msra.mxu0 0.0
      %2853 = vmatprep.subr.mxu0 0.0
      %2854 = vmatpush1.msra.mxu0 0.0
      %2855 = vmatprep.subr.mxu0 0.0
      %2856 = vmatpush1.msra.mxu0 0.0
      %2857 = vmatprep.subr.mxu0 0.0
      %2858 = vmatpush1.msra.mxu0 0.0
      %2859 = vmatprep.subr.mxu0 0.0
      %2860 = vmatpush1.msra.mxu0 0.0
      %2861 = vmatprep.subr.mxu0 0.0
      %2862 = vmatpush1.msra.mxu0 0.0
      %2863 = vmatprep.subr.mxu0 0.0
      %2864 = vmatpush1.msra.mxu0 0.0
      %2865 = vmatprep.subr.mxu0 0.0
      %2866 = vmatpush1.msra.mxu0 0.0
      %2867 = vmatprep.subr.mxu0 0.0
      %2868 = vmatpush1.msra.mxu0 0.0
      %2869 = vmatprep.subr.mxu0 0.0
      %2870 = vmatpush1.msra.mxu0 0.0
      %2871 = vmatprep.subr.mxu0 0.0
      %2872 = vmatpush1.msra.mxu0 0.0
      %2873 = vmatprep.subr.mxu0 0.0
      %2874 = vmatpush1.msra.mxu0 0.0
      %2875 = vmatprep.subr.mxu0 0.0
      %2876 = vmatpush1.msra.mxu0 0.0
      %2877 = vmatprep.subr.mxu0 0.0
      %2878 = vmatpush1.msra.mxu0 0.0
      %2879 = vmatprep.subr.mxu0 0.0
      %2880 = vmatpush1.msra.mxu0 0.0
      %2881 = vmatprep.subr.mxu0 0.0
      %2882 = vmatpush1.msra.mxu0 0.0
      %2883 = vmatprep.subr.mxu0 0.0
      %2884 = vmatpush1.msra.mxu0 0.0
      %2885 = vmatprep.subr.mxu0 0.0
      %2886 = vmatpush1.msra.mxu0 0.0
      %2887 = vmatprep.mubr.f32.mxu0 0.0
      %v2888 = vand.u32 %v2071, 4294901760
      %v2889 = vsub.f32 %v2071, %v2888
      %v2890 = vand.u32 %v2889, 4294901760
      %2891 = vmatmul.mubr.f32.gmra.mrb[0].mxu0 %v2890
      %v2892 = vpop.f32.mrb[0].mxu0
      %v2893 = vadd.f32 %v2812, %v2892
      %v2894 = vpop.f32.mrb[0].mxu0
      %2895 = vmatprep.mubr.f32.mxu0 0.0
      %v2896 = vand.u32 %v2074, 4294901760
      %v2897 = vsub.f32 %v2074, %v2896
      %v2898 = vand.u32 %v2897, 4294901760
      %2899 = vmatmul.mubr.f32.gmra.mrb[0].mxu0 %v2898
      %v2900 = vpop.f32.mrb[0].mxu0
      %v2901 = vadd.f32 %v2819, %v2900
      %v2902 = vpop.f32.mrb[0].mxu0
      %2903 = vdwg.mxu0
      %2904 = vmatprep.subr.mxu0 0.0
      %v2905 = vand.u32 %v2571, 4294901760
      %v2906 = vsub.f32 %v2571, %v2905
      %v2907 = vand.u32 %v2906, 4294901760
      %2908 = vmatpush1.msra.mxu0 %v2907
      %2909 = vmatprep.subr.mxu0 0.0
      %2910 = vmatpush1.msra.mxu0 0.0
      %2911 = vmatprep.subr.mxu0 0.0
      %2912 = vmatpush1.msra.mxu0 0.0
      %2913 = vmatprep.subr.mxu0 0.0
      %2914 = vmatpush1.msra.mxu0 0.0
      %2915 = vmatprep.subr.mxu0 0.0
      %2916 = vmatpush1.msra.mxu0 0.0
      %2917 = vmatprep.subr.mxu0 0.0
      %2918 = vmatpush1.msra.mxu0 0.0
      %2919 = vmatprep.subr.mxu0 0.0
      %2920 = vmatpush1.msra.mxu0 0.0
      %2921 = vmatprep.subr.mxu0 0.0
      %2922 = vmatpush1.msra.mxu0 0.0
      %2923 = vmatprep.subr.mxu0 0.0
      %2924 = vmatpush1.msra.mxu0 0.0
      %2925 = vmatprep.subr.mxu0 0.0
      %2926 = vmatpush1.msra.mxu0 0.0
      %2927 = vmatprep.subr.mxu0 0.0
      %2928 = vmatpush1.msra.mxu0 0.0
      %2929 = vmatprep.subr.mxu0 0.0
      %2930 = vmatpush1.msra.mxu0 0.0
      %2931 = vmatprep.subr.mxu0 0.0
      %2932 = vmatpush1.msra.mxu0 0.0
      %2933 = vmatprep.subr.mxu0 0.0
      %2934 = vmatpush1.msra.mxu0 0.0
      %2935 = vmatprep.subr.mxu0 0.0
      %2936 = vmatpush1.msra.mxu0 0.0
      %2937 = vmatprep.subr.mxu0 0.0
      %2938 = vmatpush1.msra.mxu0 0.0
      %2939 = vmatprep.subr.mxu0 0.0
      %2940 = vmatpush1.msra.mxu0 0.0
      %2941 = vmatprep.subr.mxu0 0.0
      %2942 = vmatpush1.msra.mxu0 0.0
      %2943 = vmatprep.subr.mxu0 0.0
      %2944 = vmatpush1.msra.mxu0 0.0
      %2945 = vmatprep.subr.mxu0 0.0
      %2946 = vmatpush1.msra.mxu0 0.0
      %2947 = vmatprep.subr.mxu0 0.0
      %2948 = vmatpush1.msra.mxu0 0.0
      %2949 = vmatprep.subr.mxu0 0.0
      %2950 = vmatpush1.msra.mxu0 0.0
      %2951 = vmatprep.subr.mxu0 0.0
      %2952 = vmatpush1.msra.mxu0 0.0
      %2953 = vmatprep.subr.mxu0 0.0
      %2954 = vmatpush1.msra.mxu0 0.0
      %2955 = vmatprep.subr.mxu0 0.0
      %2956 = vmatpush1.msra.mxu0 0.0
      %2957 = vmatprep.subr.mxu0 0.0
      %2958 = vmatpush1.msra.mxu0 0.0
      %2959 = vmatprep.subr.mxu0 0.0
      %2960 = vmatpush1.msra.mxu0 0.0
      %2961 = vmatprep.subr.mxu0 0.0
      %2962 = vmatpush1.msra.mxu0 0.0
      %2963 = vmatprep.subr.mxu0 0.0
      %2964 = vmatpush1.msra.mxu0 0.0
      %2965 = vmatprep.subr.mxu0 0.0
      %2966 = vmatpush1.msra.mxu0 0.0
      %2967 = vmatprep.subr.mxu0 0.0
      %2968 = vmatpush1.msra.mxu0 0.0
      %2969 = vmatprep.subr.mxu0 0.0
      %2970 = vmatpush1.msra.mxu0 0.0
      %2971 = vmatprep.mubr.f32.mxu0 0.0
      %v2972 = vand.u32 %v2071, 4294901760
      %2973 = vmatmul.mubr.f32.gmra.mrb[0].mxu0 %v2972
      %v2974 = vpop.f32.mrb[0].mxu0
      %v2975 = vadd.f32 %v2893, %v2974
      %v2976 = vpop.f32.mrb[0].mxu0
      %2977 = vmatprep.mubr.f32.mxu0 0.0
      %v2978 = vand.u32 %v2074, 4294901760
      %2979 = vmatmul.mubr.f32.gmra.mrb[0].mxu0 %v2978
      %v2980 = vpop.f32.mrb[0].mxu0
      %v2981 = vadd.f32 %v2901, %v2980
      %v2982 = vpop.f32.mrb[0].mxu0
      %2983 = vdwg.mxu0
      %2984 = vmatprep.subr.mxu0 0.0
      %v2985 = vand.u32 %v2571, 4294901760
      %2986 = vmatpush1.msra.mxu0 %v2985
      %2987 = vmatprep.subr.mxu0 0.0
      %2988 = vmatpush1.msra.mxu0 0.0
      %2989 = vmatprep.subr.mxu0 0.0
      %2990 = vmatpush1.msra.mxu0 0.0
      %2991 = vmatprep.subr.mxu0 0.0
      %2992 = vmatpush1.msra.mxu0 0.0
      %2993 = vmatprep.subr.mxu0 0.0
      %2994 = vmatpush1.msra.mxu0 0.0
      %2995 = vmatprep.subr.mxu0 0.0
      %2996 = vmatpush1.msra.mxu0 0.0
      %2997 = vmatprep.subr.mxu0 0.0
      %2998 = vmatpush1.msra.mxu0 0.0
      %2999 = vmatprep.subr.mxu0 0.0
      %3000 = vmatpush1.msra.mxu0 0.0
      %3001 = vmatprep.subr.mxu0 0.0
      %3002 = vmatpush1.msra.mxu0 0.0
      %3003 = vmatprep.subr.mxu0 0.0
      %3004 = vmatpush1.msra.mxu0 0.0
      %3005 = vmatprep.subr.mxu0 0.0
      %3006 = vmatpush1.msra.mxu0 0.0
      %3007 = vmatprep.subr.mxu0 0.0
      %3008 = vmatpush1.msra.mxu0 0.0
      %3009 = vmatprep.subr.mxu0 0.0
      %3010 = vmatpush1.msra.mxu0 0.0
      %3011 = vmatprep.subr.mxu0 0.0
      %3012 = vmatpush1.msra.mxu0 0.0
      %3013 = vmatprep.subr.mxu0 0.0
      %3014 = vmatpush1.msra.mxu0 0.0
      %3015 = vmatprep.subr.mxu0 0.0
      %3016 = vmatpush1.msra.mxu0 0.0
      %3017 = vmatprep.subr.mxu0 0.0
      %3018 = vmatpush1.msra.mxu0 0.0
      %3019 = vmatprep.subr.mxu0 0.0
      %3020 = vmatpush1.msra.mxu0 0.0
      %3021 = vmatprep.subr.mxu0 0.0
      %3022 = vmatpush1.msra.mxu0 0.0
      %3023 = vmatprep.subr.mxu0 0.0
      %3024 = vmatpush1.msra.mxu0 0.0
      %3025 = vmatprep.subr.mxu0 0.0
      %3026 = vmatpush1.msra.mxu0 0.0
      %3027 = vmatprep.subr.mxu0 0.0
      %3028 = vmatpush1.msra.mxu0 0.0
      %3029 = vmatprep.subr.mxu0 0.0
      %3030 = vmatpush1.msra.mxu0 0.0
      %3031 = vmatprep.subr.mxu0 0.0
      %3032 = vmatpush1.msra.mxu0 0.0
      %3033 = vmatprep.subr.mxu0 0.0
      %3034 = vmatpush1.msra.mxu0 0.0
      %3035 = vmatprep.subr.mxu0 0.0
      %3036 = vmatpush1.msra.mxu0 0.0
      %3037 = vmatprep.subr.mxu0 0.0
      %3038 = vmatpush1.msra.mxu0 0.0
      %3039 = vmatprep.subr.mxu0 0.0
      %3040 = vmatpush1.msra.mxu0 0.0
      %3041 = vmatprep.subr.mxu0 0.0
      %3042 = vmatpush1.msra.mxu0 0.0
      %3043 = vmatprep.subr.mxu0 0.0
      %3044 = vmatpush1.msra.mxu0 0.0
      %3045 = vmatprep.subr.mxu0 0.0
      %3046 = vmatpush1.msra.mxu0 0.0
      %3047 = vmatprep.subr.mxu0 0.0
      %3048 = vmatpush1.msra.mxu0 0.0
      %3049 = vmatprep.mubr.f32.mxu0 0.0
      %v3050 = vand.u32 %v2071, 4294901760
      %3051 = vmatmul.mubr.f32.gmra.mrb[0].mxu0 %v3050
      %v3052 = vpop.f32.mrb[0].mxu0
      %v3053 = vadd.f32 %v2975, %v3052
      %v3054 = vpop.f32.mrb[0].mxu0
      %3055 = vmatprep.mubr.f32.mxu0 0.0
      %v3056 = vand.u32 %v2074, 4294901760
      %3057 = vmatmul.mubr.f32.gmra.mrb[0].mxu0 %v3056
      %v3058 = vpop.f32.mrb[0].mxu0
      %v3059 = vadd.f32 %v2981, %v3058
      %v3060 = vpop.f32.mrb[0].mxu0
      %3061 = vdwg.mxu0
      %v3062 = vmul.f32 %v3053, 0.0013020834
      %v3063 = vmul.f32 %v3059, 0.0013020834
      %v3064 = vmul.f32 %v2568, %v2568
      %v3065 = vmul.f32 %v2569, %v2569
      %v3066 = vsub.f32 %v3062, %v3064
      %v3067 = vsub.f32 %v3063, %v3065
      %v3068 = vmax.f32 %v3066, 0.0
      %v3069 = vmax.f32 %v3067, 0.0
      %3071 = vset.pattern.permute.xlu0 0
      %3072 = vperm.xlu0 %3071, %v2568
      %v3073 = vpop.permute.xlu0 %3072
      %3076 = vset.pattern.permute.xlu0 0
      %3077 = vperm.xlu0 %3076, %v2569
      %v3078 = vpop.permute.xlu0 %3077
      %v3080 = vsub.f32 %v1102, %v3073
      %v3081 = vsub.f32 %v1104, %v3073
      %v3082 = vsub.f32 %v1109, %v3078
      %v3083 = vsub.f32 %v1111, %v3078
      %v3084 = vadd.f32 %v3068, 1e-05
      %v3085 = vadd.f32 %v3069, 1e-05
      %v3086 = vrsqrt.pop %v3084
      %v3087 = vrsqrt.pop %v3085
      %3089 = vset.pattern.permute.xlu0 0
      %3090 = vperm.xlu0 %3089, %v3086
      %v3091 = vpop.permute.xlu0 %3090
      %3094 = vset.pattern.permute.xlu0 0
      %3095 = vperm.xlu0 %3094, %v3087
      %v3096 = vpop.permute.xlu0 %3095
      %v3098 = vmul.f32 %v3080, %v3091
      %v3099 = vmul.f32 %v3081, %v3091
      %v3100 = vmul.f32 %v3082, %v3096
      %v3101 = vmul.f32 %v3083, %v3096
      %3103 = vset.pattern.permute.xlu0 0
      %3104 = vperm.xlu0 %3103, %v1113
      %v3105 = vpop.permute.xlu0 %3104
      %3108 = vset.pattern.permute.xlu0 0
      %3109 = vperm.xlu0 %3108, %v1114
      %v3110 = vpop.permute.xlu0 %3109
      %v3112 = vmul.f32 %v3098, %v3105
      %v3113 = vmul.f32 %v3099, %v3105
      %v3114 = vmul.f32 %v3100, %v3110
      %v3115 = vmul.f32 %v3101, %v3110
      %3117 = vset.pattern.permute.xlu0 0
      %3118 = vperm.xlu0 %3117, %v1115
      %v3119 = vpop.permute.xlu0 %3118
      %3122 = vset.pattern.permute.xlu0 0
      %3123 = vperm.xlu0 %3122, %v1116
      %v3124 = vpop.permute.xlu0 %3123
      %v3126 = vadd.f32 %v3112, %v3119
      %v3127 = vadd.f32 %v3113, %v3119
      %v3128 = vadd.f32 %v3114, %v3124
      %v3129 = vadd.f32 %v3115, %v3124
      %v3130 = vadd.f32 %v3126, 3.0
      %v3131 = vadd.f32 %v3127, 3.0
      %v3132 = vadd.f32 %v3128, 3.0
      %v3133 = vadd.f32 %v3129, 3.0
      %v3134 = vmax.f32 %v3130, 0.0
      %v3135 = vmax.f32 %v3131, 0.0
      %v3136 = vmax.f32 %v3132, 0.0
      %v3137 = vmax.f32 %v3133, 0.0
      %v3138 = vmin.f32 %v3134, 6.0
      %v3139 = vmin.f32 %v3135, 6.0
      %v3140 = vmin.f32 %v3136, 6.0
      %v3141 = vmin.f32 %v3137, 6.0
      %v3142 = vmul.f32 %v3126, %v3138
      %v3143 = vmul.f32 %v3127, %v3139
      %v3144 = vmul.f32 %v3128, %v3140
      %v3145 = vmul.f32 %v3129, %v3141
      %v3146 = vmul.f32 %v3142, 0.16666667
      %v3147 = vmul.f32 %v3143, 0.16666667
      %v3148 = vmul.f32 %v3144, 0.16666667
      %v3149 = vmul.f32 %v3145, 0.16666667
      %v3150 = vmax.f32 %v3126, 0.0
      %v3151 = vmax.f32 %v3127, 0.0
      %v3152 = vmax.f32 %v3128, 0.0
      %v3153 = vmax.f32 %v3129, 0.0
      %v3154 = vmin.f32 %v3150, 6.0
      %v3155 = vmin.f32 %v3151, 6.0
      %v3156 = vmin.f32 %v3152, 6.0
      %v3157 = vmin.f32 %v3153, 6.0
      %v3158 = vmin.f32 %v3126, 0.0
      %v3159 = vmin.f32 %v3127, 0.0
      %v3160 = vmin.f32 %v3128, 0.0
      %v3161 = vmin.f32 %v3129, 0.0
      %v3162 = vmul.f32 %v3158, 0.01
      %v3163 = vmul.f32 %v3159, 0.01
      %v3164 = vmul.f32 %v3160, 0.01
      %v3165 = vmul.f32 %v3161, 0.01
      %v3166 = vadd.f32 %v3154, %v3162
      %v3167 = vadd.f32 %v3155, %v3163
      %v3168 = vadd.f32 %v3156, %v3164
      %v3169 = vadd.f32 %v3157, %v3165
      %vm3170 = vcmp.ge.f32.partialorder %v3126, -3.0
      %vm3171 = vcmp.ge.f32.partialorder %v3127, -3.0
      %vm3172 = vcmp.ge.f32.partialorder %v3128, -3.0
      %vm3173 = vcmp.ge.f32.partialorder %v3129, -3.0
      %vm3174 = vcmp.le.f32.partialorder %v3126, 3.0
      %vm3175 = vcmp.le.f32.partialorder %v3127, 3.0
      %vm3176 = vcmp.le.f32.partialorder %v3128, 3.0
      %vm3177 = vcmp.le.f32.partialorder %v3129, 3.0
      %vm3178 = vmand %vm3170, %vm3174
      %vm3179 = vmand %vm3171, %vm3175
      %vm3180 = vmand %vm3172, %vm3176
      %vm3181 = vmand %vm3173, %vm3177
      %v3182 = vsel %vm3178, %v3146, %v3166
      %v3183 = vsel %vm3179, %v3147, %v3167
      %v3184 = vsel %vm3180, %v3148, %v3168
      %v3185 = vsel %vm3181, %v3149, %v3169
      %v3186 = vld [vmem:[%s7] sm:$0xff]
      %v3187 = vld [vmem:[%s7 + $0x8] sm:$0xff]
      %v3188 = vld [vmem:[%s7 + $0x10] sm:$0xf]
      %v3189 = vld [vmem:[%s7 + $0x18] sm:$0xf]
      %3190 = vrot.lane.b32.xlu0 %v3182, 34
      %v3191 = vpop.permute.xlu0 %3190
      %3192 = vrot.lane.b32.xlu0 %v3184, 34
      %v3193 = vpop.permute.xlu0 %3192
      %3194 = vrot.lane.b32.xlu0 %v3183, 34
      %v3195 = vpop.permute.xlu0 %3194
      %3196 = vrot.lane.b32.xlu0 %v3185, 34
      %v3197 = vpop.permute.xlu0 %3196
      %v3198 = vlaneseq
      %v3199 = vand.u32 %v3198, 127
      %vm3200 = vcmp.lt.s32.totalorder %v3199, 34
      %v3201 = vsel %vm3200, %v3191, %v3195
      %v3202 = vsel %vm3200, %v3193, %v3197
      %v3203 = vsel %vm3200, %v3195, %v3191
      %v3204 = vsel %vm3200, %v3197, %v3193
      %v3205 = vmul.f32 %v3203, %v3186
      %v3206 = vmul.f32 %v3201, %v3187
      %v3207 = vmul.f32 %v3204, %v3188
      %v3208 = vmul.f32 %v3202, %v3189
      %s3209 = scalar_lea.vmem %s7, 32
      %v3210 = vld [vmem:[%s3209] sm:$0xff]
      %v3211 = vld [vmem:[%s3209 + $0x8] sm:$0xff]
      %v3212 = vld [vmem:[%s3209 + $0x10] sm:$0xf]
      %v3213 = vld [vmem:[%s3209 + $0x18] sm:$0xf]
      %3214 = vrot.lane.b32.xlu0 %v3182, 32
      %v3215 = vpop.permute.xlu0 %3214
      %3216 = vrot.lane.b32.xlu0 %v3184, 32
      %v3217 = vpop.permute.xlu0 %3216
      %3218 = vrot.lane.b32.xlu0 %v3183, 32
      %v3219 = vpop.permute.xlu0 %3218
      %3220 = vrot.lane.b32.xlu0 %v3185, 32
      %v3221 = vpop.permute.xlu0 %3220
      %vm3222 = vcmp.lt.s32.totalorder %v3199, 32
      %v3223 = vsel %vm3222, %v3215, %v3219
      %v3224 = vsel %vm3222, %v3217, %v3221
      %v3225 = vsel %vm3222, %v3219, %v3215
      %v3226 = vsel %vm3222, %v3221, %v3217
      %v3227 = vmul.f32 %v3225, %v3210
      %v3228 = vmul.f32 %v3223, %v3211
      %v3229 = vmul.f32 %v3226, %v3212
      %v3230 = vmul.f32 %v3224, %v3213
      %v3231 = vadd.f32 %v3205, %v3227
      %v3232 = vadd.f32 %v3206, %v3228
      %v3233 = vadd.f32 %v3207, %v3229
      %v3234 = vadd.f32 %v3208, %v3230
      %s3235 = scalar_lea.vmem %s7, 64
      %v3236 = vld [vmem:[%s3235] sm:$0xff]
      %v3237 = vld [vmem:[%s3235 + $0x8] sm:$0xff]
      %v3238 = vld [vmem:[%s3235 + $0x10] sm:$0xf]
      %v3239 = vld [vmem:[%s3235 + $0x18] sm:$0xf]
      %3240 = vrot.lane.b32.xlu0 %v3182, 30
      %v3241 = vpop.permute.xlu0 %3240
      %3242 = vrot.lane.b32.xlu0 %v3184, 30
      %v3243 = vpop.permute.xlu0 %3242
      %3244 = vrot.lane.b32.xlu0 %v3183, 30
      %v3245 = vpop.permute.xlu0 %3244
      %3246 = vrot.lane.b32.xlu0 %v3185, 30
      %v3247 = vpop.permute.xlu0 %3246
      %vm3248 = vcmp.lt.s32.totalorder %v3199, 30
      %v3249 = vsel %vm3248, %v3241, %v3245
      %v3250 = vsel %vm3248, %v3243, %v3247
      %v3251 = vsel %vm3248, %v3245, %v3241
      %v3252 = vsel %vm3248, %v3247, %v3243
      %v3253 = vmul.f32 %v3251, %v3236
      %v3254 = vmul.f32 %v3249, %v3237
      %v3255 = vmul.f32 %v3252, %v3238
      %v3256 = vmul.f32 %v3250, %v3239
      %v3257 = vadd.f32 %v3231, %v3253
      %v3258 = vadd.f32 %v3232, %v3254
      %v3259 = vadd.f32 %v3233, %v3255
      %v3260 = vadd.f32 %v3234, %v3256
      %s3261 = scalar_lea.vmem %s7, 96
      %v3262 = vld [vmem:[%s3261] sm:$0xff]
      %v3263 = vld [vmem:[%s3261 + $0x8] sm:$0xff]
      %v3264 = vld [vmem:[%s3261 + $0x10] sm:$0xf]
      %v3265 = vld [vmem:[%s3261 + $0x18] sm:$0xf]
      %3266 = vrot.lane.b32.xlu0 %v3182, 2
      %v3267 = vpop.permute.xlu0 %3266
      %3268 = vrot.lane.b32.xlu0 %v3184, 2
      %v3269 = vpop.permute.xlu0 %3268
      %3270 = vrot.lane.b32.xlu0 %v3183, 2
      %v3271 = vpop.permute.xlu0 %3270
      %3272 = vrot.lane.b32.xlu0 %v3185, 2
      %v3273 = vpop.permute.xlu0 %3272
      %vm3274 = vcmp.lt.s32.totalorder %v3199, 2
      %v3275 = vsel %vm3274, %v3267, %v3271
      %v3276 = vsel %vm3274, %v3269, %v3273
      %v3277 = vsel %vm3274, %v3271, %v3267
      %v3278 = vsel %vm3274, %v3273, %v3269
      %v3279 = vmul.f32 %v3277, %v3262
      %v3280 = vmul.f32 %v3275, %v3263
      %v3281 = vmul.f32 %v3278, %v3264
      %v3282 = vmul.f32 %v3276, %v3265
      %v3283 = vadd.f32 %v3257, %v3279
      %v3284 = vadd.f32 %v3258, %v3280
      %v3285 = vadd.f32 %v3259, %v3281
      %v3286 = vadd.f32 %v3260, %v3282
      %s3287 = scalar_lea.vmem %s7, 128
      %v3288 = vld [vmem:[%s3287] sm:$0xff]
      %v3289 = vld [vmem:[%s3287 + $0x8] sm:$0xff]
      %v3290 = vld [vmem:[%s3287 + $0x10] sm:$0xf]
      %v3291 = vld [vmem:[%s3287 + $0x18] sm:$0xf]
      %v3292 = vmul.f32 %v3182, %v3288
      %v3293 = vmul.f32 %v3183, %v3289
      %v3294 = vmul.f32 %v3184, %v3290
      %v3295 = vmul.f32 %v3185, %v3291
      %v3296 = vadd.f32 %v3283, %v3292
      %v3297 = vadd.f32 %v3284, %v3293
      %v3298 = vadd.f32 %v3285, %v3294
      %v3299 = vadd.f32 %v3286, %v3295
      %s3300 = scalar_lea.vmem %s7, 160
      %v3301 = vld [vmem:[%s3300] sm:$0xff]
      %v3302 = vld [vmem:[%s3300 + $0x8] sm:$0xff]
      %v3303 = vld [vmem:[%s3300 + $0x10] sm:$0xf]
      %v3304 = vld [vmem:[%s3300 + $0x18] sm:$0xf]
      %3305 = vrot.lane.b32.xlu0 %v3182, 126
      %v3306 = vpop.permute.xlu0 %3305
      %3307 = vrot.lane.b32.xlu0 %v3184, 126
      %v3308 = vpop.permute.xlu0 %3307
      %3309 = vrot.lane.b32.xlu0 %v3183, 126
      %v3310 = vpop.permute.xlu0 %3309
      %3311 = vrot.lane.b32.xlu0 %v3185, 126
      %v3312 = vpop.permute.xlu0 %3311
      %vm3313 = vcmp.lt.s32.totalorder %v3199, 126
      %v3314 = vsel %vm3313, %v3306, %v3310
      %v3315 = vsel %vm3313, %v3308, %v3312
      %v3316 = vsel %vm3313, %v3310, %v3306
      %v3317 = vsel %vm3313, %v3312, %v3308
      %v3318 = vmul.f32 %v3314, %v3301
      %v3319 = vmul.f32 %v3316, %v3302
      %v3320 = vmul.f32 %v3315, %v3303
      %v3321 = vmul.f32 %v3317, %v3304
      %v3322 = vadd.f32 %v3296, %v3318
      %v3323 = vadd.f32 %v3297, %v3319
      %v3324 = vadd.f32 %v3298, %v3320
      %v3325 = vadd.f32 %v3299, %v3321
      %s3326 = scalar_lea.vmem %s7, 192
      %v3327 = vld [vmem:[%s3326] sm:$0xff]
      %v3328 = vld [vmem:[%s3326 + $0x8] sm:$0xff]
      %v3329 = vld [vmem:[%s3326 + $0x10] sm:$0xf]
      %v3330 = vld [vmem:[%s3326 + $0x18] sm:$0xf]
      %3331 = vrot.lane.b32.xlu0 %v3182, 98
      %v3332 = vpop.permute.xlu0 %3331
      %3333 = vrot.lane.b32.xlu0 %v3184, 98
      %v3334 = vpop.permute.xlu0 %3333
      %3335 = vrot.lane.b32.xlu0 %v3183, 98
      %v3336 = vpop.permute.xlu0 %3335
      %3337 = vrot.lane.b32.xlu0 %v3185, 98
      %v3338 = vpop.permute.xlu0 %3337
      %vm3339 = vcmp.lt.s32.totalorder %v3199, 98
      %v3340 = vsel %vm3339, %v3332, %v3336
      %v3341 = vsel %vm3339, %v3334, %v3338
      %v3342 = vsel %vm3339, %v3336, %v3332
      %v3343 = vsel %vm3339, %v3338, %v3334
      %v3344 = vmul.f32 %v3340, %v3327
      %v3345 = vmul.f32 %v3342, %v3328
      %v3346 = vmul.f32 %v3341, %v3329
      %v3347 = vmul.f32 %v3343, %v3330
      %v3348 = vadd.f32 %v3322, %v3344
      %v3349 = vadd.f32 %v3323, %v3345
      %v3350 = vadd.f32 %v3324, %v3346
      %v3351 = vadd.f32 %v3325, %v3347
      %s3352 = scalar_lea.vmem %s7, 224
      %v3353 = vld [vmem:[%s3352] sm:$0xff]
      %v3354 = vld [vmem:[%s3352 + $0x8] sm:$0xff]
      %v3355 = vld [vmem:[%s3352 + $0x10] sm:$0xf]
      %v3356 = vld [vmem:[%s3352 + $0x18] sm:$0xf]
      %3357 = vrot.lane.b32.xlu0 %v3182, 96
      %v3358 = vpop.permute.xlu0 %3357
      %3359 = vrot.lane.b32.xlu0 %v3184, 96
      %v3360 = vpop.permute.xlu0 %3359
      %3361 = vrot.lane.b32.xlu0 %v3183, 96
      %v3362 = vpop.permute.xlu0 %3361
      %3363 = vrot.lane.b32.xlu0 %v3185, 96
      %v3364 = vpop.permute.xlu0 %3363
      %vm3365 = vcmp.lt.s32.totalorder %v3199, 96
      %v3366 = vsel %vm3365, %v3358, %v3362
      %v3367 = vsel %vm3365, %v3360, %v3364
      %v3368 = vsel %vm3365, %v3362, %v3358
      %v3369 = vsel %vm3365, %v3364, %v3360
      %v3370 = vmul.f32 %v3366, %v3353
      %v3371 = vmul.f32 %v3368, %v3354
      %v3372 = vmul.f32 %v3367, %v3355
      %v3373 = vmul.f32 %v3369, %v3356
      %v3374 = vadd.f32 %v3348, %v3370
      %v3375 = vadd.f32 %v3349, %v3371
      %v3376 = vadd.f32 %v3350, %v3372
      %v3377 = vadd.f32 %v3351, %v3373
      %s3378 = scalar_lea.vmem %s7, 256
      %v3379 = vld [vmem:[%s3378] sm:$0xff]
      %v3380 = vld [vmem:[%s3378 + $0x8] sm:$0xff]
      %v3381 = vld [vmem:[%s3378 + $0x10] sm:$0xf]
      %v3382 = vld [vmem:[%s3378 + $0x18] sm:$0xf]
      %3383 = vrot.lane.b32.xlu0 %v3182, 94
      %v3384 = vpop.permute.xlu0 %3383
      %3385 = vrot.lane.b32.xlu0 %v3184, 94
      %v3386 = vpop.permute.xlu0 %3385
      %3387 = vrot.lane.b32.xlu0 %v3183, 94
      %v3388 = vpop.permute.xlu0 %3387
      %3389 = vrot.lane.b32.xlu0 %v3185, 94
      %v3390 = vpop.permute.xlu0 %3389
      %vm3391 = vcmp.lt.s32.totalorder %v3199, 94
      %v3392 = vsel %vm3391, %v3384, %v3388
      %v3393 = vsel %vm3391, %v3386, %v3390
      %v3394 = vsel %vm3391, %v3388, %v3384
      %v3395 = vsel %vm3391, %v3390, %v3386
      %v3396 = vmul.f32 %v3392, %v3379
      %v3397 = vmul.f32 %v3394, %v3380
      %v3398 = vmul.f32 %v3393, %v3381
      %v3399 = vmul.f32 %v3395, %v3382
      %v3400 = vadd.f32 %v3374, %v3396
      %v3401 = vadd.f32 %v3375, %v3397
      %v3402 = vadd.f32 %v3376, %v3398
      %v3403 = vadd.f32 %v3377, %v3399
      %v3404 = vld [vmem:[%s8] sm:$0xff]
      %v3405 = vld [vmem:[%s8 + $0x8] sm:$0xf]
      %3407 = vset.pattern.permute.xlu0 0
      %3408 = vperm.xlu0 %3407, %v3404
      %v3409 = vpop.permute.xlu0 %3408
      %3412 = vset.pattern.permute.xlu0 0
      %3413 = vperm.xlu0 %3412, %v3405
      %v3414 = vpop.permute.xlu0 %3413
      %v3416 = vadd.f32 %v3400, %v3409
      %v3417 = vadd.f32 %v3401, %v3409
      %v3418 = vadd.f32 %v3402, %v3414
      %v3419 = vadd.f32 %v3403, %v3414
      %v3420 = vld [vmem:[%s9] sm:$0xff]
      %v3421 = vld [vmem:[%s9 + $0x8] sm:$0xf]
      %v3422 = vld [vmem:[%s10] sm:$0xff]
      %v3423 = vld [vmem:[%s10 + $0x8] sm:$0xf]
      %3425 = vset.pattern.permute.xlu0 0
      %3426 = vperm.xlu0 %3425, %v3422
      %v3427 = vpop.permute.xlu0 %3426
      %3430 = vset.pattern.permute.xlu0 0
      %3431 = vperm.xlu0 %3430, %v3423
      %v3432 = vpop.permute.xlu0 %3431
      %v3435 = vsel %vm1141, %v3420, 0
      %v3438 = vsel %vm1141, %v3421, 0
      %v3441 = vsel %vm1123, %v3418, 0
      %v3444 = vsel %vm1123, %v3419, 0
      %v3446 = vand.u32 %v3417, 4294901760
      %3447 = vmatprep.subr.mxu0 %v3446
      %v3448 = vand.u32 %v3416, 4294901760
      %3449 = vmatpush1.msra.mxu0 %v3448
      %v3450 = vand.u32 %v3444, 4294901760
      %3451 = vmatprep.subr.mxu0 %v3450
      %v3452 = vand.u32 %v3441, 4294901760
      %3453 = vmatpush1.msra.mxu0 %v3452
      %3454 = vmatprep.subr.mxu0 0.0
      %3455 = vmatpush1.msra.mxu0 0.0
      %3456 = vmatprep.subr.mxu0 0.0
      %3457 = vmatpush1.msra.mxu0 0.0
      %3458 = vmatprep.subr.mxu0 0.0
      %3459 = vmatpush1.msra.mxu0 0.0
      %3460 = vmatprep.subr.mxu0 0.0
      %3461 = vmatpush1.msra.mxu0 0.0
      %3462 = vmatprep.subr.mxu0 0.0
      %3463 = vmatpush1.msra.mxu0 0.0
      %3464 = vmatprep.subr.mxu0 0.0
      %3465 = vmatpush1.msra.mxu0 0.0
      %3466 = vmatprep.subr.mxu0 0.0
      %3467 = vmatpush1.msra.mxu0 0.0
      %3468 = vmatprep.subr.mxu0 0.0
      %3469 = vmatpush1.msra.mxu0 0.0
      %3470 = vmatprep.subr.mxu0 0.0
      %3471 = vmatpush1.msra.mxu0 0.0
      %3472 = vmatprep.subr.mxu0 0.0
      %3473 = vmatpush1.msra.mxu0 0.0
      %3474 = vmatprep.subr.mxu0 0.0
      %3475 = vmatpush1.msra.mxu0 0.0
      %3476 = vmatprep.subr.mxu0 0.0
      %3477 = vmatpush1.msra.mxu0 0.0
      %3478 = vmatprep.subr.mxu0 0.0
      %3479 = vmatpush1.msra.mxu0 0.0
      %3480 = vmatprep.subr.mxu0 0.0
      %3481 = vmatpush1.msra.mxu0 0.0
      %3482 = vmatprep.subr.mxu0 0.0
      %3483 = vmatpush1.msra.mxu0 0.0
      %3484 = vmatprep.subr.mxu0 0.0
      %3485 = vmatpush1.msra.mxu0 0.0
      %3486 = vmatprep.subr.mxu0 0.0
      %3487 = vmatpush1.msra.mxu0 0.0
      %3488 = vmatprep.subr.mxu0 0.0
      %3489 = vmatpush1.msra.mxu0 0.0
      %3490 = vmatprep.subr.mxu0 0.0
      %3491 = vmatpush1.msra.mxu0 0.0
      %3492 = vmatprep.subr.mxu0 0.0
      %3493 = vmatpush1.msra.mxu0 0.0
      %3494 = vmatprep.subr.mxu0 0.0
      %3495 = vmatpush1.msra.mxu0 0.0
      %3496 = vmatprep.subr.mxu0 0.0
      %3497 = vmatpush1.msra.mxu0 0.0
      %3498 = vmatprep.subr.mxu0 0.0
      %3499 = vmatpush1.msra.mxu0 0.0
      %3500 = vmatprep.subr.mxu0 0.0
      %3501 = vmatpush1.msra.mxu0 0.0
      %3502 = vmatprep.subr.mxu0 0.0
      %3503 = vmatpush1.msra.mxu0 0.0
      %3504 = vmatprep.subr.mxu0 0.0
      %3505 = vmatpush1.msra.mxu0 0.0
      %3506 = vmatprep.subr.mxu0 0.0
      %3507 = vmatpush1.msra.mxu0 0.0
      %3508 = vmatprep.subr.mxu0 0.0
      %3509 = vmatpush1.msra.mxu0 0.0
      %3510 = vmatprep.subr.mxu0 0.0
      %3511 = vmatpush1.msra.mxu0 0.0
      %3512 = vmatprep.subr.mxu0 0.0
      %3513 = vmatpush1.msra.mxu0 0.0
      %3514 = vmatprep.mubr.f32.mxu0 0.0
      %v3515 = vand.u32 %v3435, 4294901760
      %v3516 = vsub.f32 %v3435, %v3515
      %v3517 = vand.u32 %v3516, 4294901760
      %v3518 = vsub.f32 %v3516, %v3517
      %v3519 = vand.u32 %v3518, 4294901760
      %3520 = vmatmul.mubr.f32.gmra.mrb[0].mxu0 %v3519
      %v3521 = vpop.f32.mrb[0].mxu0
      %v3522 = vadd.f32 %v3427, %v3521
      %v3523 = vpop.f32.mrb[0].mxu0
      %v3524 = vadd.f32 %v3427, %v3523
      %3525 = vmatprep.mubr.f32.mxu0 0.0
      %v3526 = vand.u32 %v3438, 4294901760
      %v3527 = vsub.f32 %v3438, %v3526
      %v3528 = vand.u32 %v3527, 4294901760
      %v3529 = vsub.f32 %v3527, %v3528
      %v3530 = vand.u32 %v3529, 4294901760
      %3531 = vmatmul.mubr.f32.gmra.mrb[0].mxu0 %v3530
      %v3532 = vpop.f32.mrb[0].mxu0
      %v3533 = vadd.f32 %v3432, %v3532
      %v3534 = vpop.f32.mrb[0].mxu0
      %v3535 = vadd.f32 %v3432, %v3534
      %3536 = vdwg.mxu0
      %v3537 = vand.u32 %v3417, 4294901760
      %v3538 = vsub.f32 %v3417, %v3537
      %v3539 = vand.u32 %v3538, 4294901760
      %v3540 = vsub.f32 %v3538, %v3539
      %v3541 = vand.u32 %v3540, 4294901760
      %3542 = vmatprep.subr.mxu0 %v3541
      %v3543 = vand.u32 %v3416, 4294901760
      %v3544 = vsub.f32 %v3416, %v3543
      %v3545 = vand.u32 %v3544, 4294901760
      %v3546 = vsub.f32 %v3544, %v3545
      %v3547 = vand.u32 %v3546, 4294901760
      %3548 = vmatpush1.msra.mxu0 %v3547
      %v3549 = vand.u32 %v3444, 4294901760
      %v3550 = vsub.f32 %v3444, %v3549
      %v3551 = vand.u32 %v3550, 4294901760
      %v3552 = vsub.f32 %v3550, %v3551
      %v3553 = vand.u32 %v3552, 4294901760
      %3554 = vmatprep.subr.mxu0 %v3553
      %v3555 = vand.u32 %v3441, 4294901760
      %v3556 = vsub.f32 %v3441, %v3555
      %v3557 = vand.u32 %v3556, 4294901760
      %v3558 = vsub.f32 %v3556, %v3557
      %v3559 = vand.u32 %v3558, 4294901760
      %3560 = vmatpush1.msra.mxu0 %v3559
      %3561 = vmatprep.subr.mxu0 0.0
      %3562 = vmatpush1.msra.mxu0 0.0
      %3563 = vmatprep.subr.mxu0 0.0
      %3564 = vmatpush1.msra.mxu0 0.0
      %3565 = vmatprep.subr.mxu0 0.0
      %3566 = vmatpush1.msra.mxu0 0.0
      %3567 = vmatprep.subr.mxu0 0.0
      %3568 = vmatpush1.msra.mxu0 0.0
      %3569 = vmatprep.subr.mxu0 0.0
      %3570 = vmatpush1.msra.mxu0 0.0
      %3571 = vmatprep.subr.mxu0 0.0
      %3572 = vmatpush1.msra.mxu0 0.0
      %3573 = vmatprep.subr.mxu0 0.0
      %3574 = vmatpush1.msra.mxu0 0.0
      %3575 = vmatprep.subr.mxu0 0.0
      %3576 = vmatpush1.msra.mxu0 0.0
      %3577 = vmatprep.subr.mxu0 0.0
      %3578 = vmatpush1.msra.mxu0 0.0
      %3579 = vmatprep.subr.mxu0 0.0
      %3580 = vmatpush1.msra.mxu0 0.0
      %3581 = vmatprep.subr.mxu0 0.0
      %3582 = vmatpush1.msra.mxu0 0.0
      %3583 = vmatprep.subr.mxu0 0.0
      %3584 = vmatpush1.msra.mxu0 0.0
      %3585 = vmatprep.subr.mxu0 0.0
      %3586 = vmatpush1.msra.mxu0 0.0
      %3587 = vmatprep.subr.mxu0 0.0
      %3588 = vmatpush1.msra.mxu0 0.0
      %3589 = vmatprep.subr.mxu0 0.0
      %3590 = vmatpush1.msra.mxu0 0.0
      %3591 = vmatprep.subr.mxu0 0.0
      %3592 = vmatpush1.msra.mxu0 0.0
      %3593 = vmatprep.subr.mxu0 0.0
      %3594 = vmatpush1.msra.mxu0 0.0
      %3595 = vmatprep.subr.mxu0 0.0
      %3596 = vmatpush1.msra.mxu0 0.0
      %3597 = vmatprep.subr.mxu0 0.0
      %3598 = vmatpush1.msra.mxu0 0.0
      %3599 = vmatprep.subr.mxu0 0.0
      %3600 = vmatpush1.msra.mxu0 0.0
      %3601 = vmatprep.subr.mxu0 0.0
      %3602 = vmatpush1.msra.mxu0 0.0
      %3603 = vmatprep.subr.mxu0 0.0
      %3604 = vmatpush1.msra.mxu0 0.0
      %3605 = vmatprep.subr.mxu0 0.0
      %3606 = vmatpush1.msra.mxu0 0.0
      %3607 = vmatprep.subr.mxu0 0.0
      %3608 = vmatpush1.msra.mxu0 0.0
      %3609 = vmatprep.subr.mxu0 0.0
      %3610 = vmatpush1.msra.mxu0 0.0
      %3611 = vmatprep.subr.mxu0 0.0
      %3612 = vmatpush1.msra.mxu0 0.0
      %3613 = vmatprep.subr.mxu0 0.0
      %3614 = vmatpush1.msra.mxu0 0.0
      %3615 = vmatprep.subr.mxu0 0.0
      %3616 = vmatpush1.msra.mxu0 0.0
      %3617 = vmatprep.subr.mxu0 0.0
      %3618 = vmatpush1.msra.mxu0 0.0
      %3619 = vmatprep.subr.mxu0 0.0
      %3620 = vmatpush1.msra.mxu0 0.0
      %3621 = vmatprep.mubr.f32.mxu0 0.0
      %v3622 = vand.u32 %v3435, 4294901760
      %3623 = vmatmul.mubr.f32.gmra.mrb[0].mxu0 %v3622
      %v3624 = vpop.f32.mrb[0].mxu0
      %v3625 = vadd.f32 %v3522, %v3624
      %v3626 = vpop.f32.mrb[0].mxu0
      %v3627 = vadd.f32 %v3524, %v3626
      %3628 = vmatprep.mubr.f32.mxu0 0.0
      %v3629 = vand.u32 %v3438, 4294901760
      %3630 = vmatmul.mubr.f32.gmra.mrb[0].mxu0 %v3629
      %v3631 = vpop.f32.mrb[0].mxu0
      %v3632 = vadd.f32 %v3533, %v3631
      %v3633 = vpop.f32.mrb[0].mxu0
      %v3634 = vadd.f32 %v3535, %v3633
      %3635 = vdwg.mxu0
      %v3636 = vand.u32 %v3417, 4294901760
      %v3637 = vsub.f32 %v3417, %v3636
      %3638 = vmatprep.subr.mxu0 %v3637
      %v3639 = vand.u32 %v3416, 4294901760
      %v3640 = vsub.f32 %v3416, %v3639
      %3641 = vmatpush1.msra.mxu0 %v3640
      %v3642 = vand.u32 %v3444, 4294901760
      %v3643 = vsub.f32 %v3444, %v3642
      %3644 = vmatprep.subr.mxu0 %v3643
      %v3645 = vand.u32 %v3441, 4294901760
      %v3646 = vsub.f32 %v3441, %v3645
      %3647 = vmatpush1.msra.mxu0 %v3646
      %3648 = vmatprep.subr.mxu0 0.0
      %3649 = vmatpush1.msra.mxu0 0.0
      %3650 = vmatprep.subr.mxu0 0.0
      %3651 = vmatpush1.msra.mxu0 0.0
      %3652 = vmatprep.subr.mxu0 0.0
      %3653 = vmatpush1.msra.mxu0 0.0
      %3654 = vmatprep.subr.mxu0 0.0
      %3655 = vmatpush1.msra.mxu0 0.0
      %3656 = vmatprep.subr.mxu0 0.0
      %3657 = vmatpush1.msra.mxu0 0.0
      %3658 = vmatprep.subr.mxu0 0.0
      %3659 = vmatpush1.msra.mxu0 0.0
      %3660 = vmatprep.subr.mxu0 0.0
      %3661 = vmatpush1.msra.mxu0 0.0
      %3662 = vmatprep.subr.mxu0 0.0
      %3663 = vmatpush1.msra.mxu0 0.0
      %3664 = vmatprep.subr.mxu0 0.0
      %3665 = vmatpush1.msra.mxu0 0.0
      %3666 = vmatprep.subr.mxu0 0.0
      %3667 = vmatpush1.msra.mxu0 0.0
      %3668 = vmatprep.subr.mxu0 0.0
      %3669 = vmatpush1.msra.mxu0 0.0
      %3670 = vmatprep.subr.mxu0 0.0
      %3671 = vmatpush1.msra.mxu0 0.0
      %3672 = vmatprep.subr.mxu0 0.0
      %3673 = vmatpush1.msra.mxu0 0.0
      %3674 = vmatprep.subr.mxu0 0.0
      %3675 = vmatpush1.msra.mxu0 0.0
      %3676 = vmatprep.subr.mxu0 0.0
      %3677 = vmatpush1.msra.mxu0 0.0
      %3678 = vmatprep.subr.mxu0 0.0
      %3679 = vmatpush1.msra.mxu0 0.0
      %3680 = vmatprep.subr.mxu0 0.0
      %3681 = vmatpush1.msra.mxu0 0.0
      %3682 = vmatprep.subr.mxu0 0.0
      %3683 = vmatpush1.msra.mxu0 0.0
      %3684 = vmatprep.subr.mxu0 0.0
      %3685 = vmatpush1.msra.mxu0 0.0
      %3686 = vmatprep.subr.mxu0 0.0
      %3687 = vmatpush1.msra.mxu0 0.0
      %3688 = vmatprep.subr.mxu0 0.0
      %3689 = vmatpush1.msra.mxu0 0.0
      %3690 = vmatprep.subr.mxu0 0.0
      %3691 = vmatpush1.msra.mxu0 0.0
      %3692 = vmatprep.subr.mxu0 0.0
      %3693 = vmatpush1.msra.mxu0 0.0
      %3694 = vmatprep.subr.mxu0 0.0
      %3695 = vmatpush1.msra.mxu0 0.0
      %3696 = vmatprep.subr.mxu0 0.0
      %3697 = vmatpush1.msra.mxu0 0.0
      %3698 = vmatprep.subr.mxu0 0.0
      %3699 = vmatpush1.msra.mxu0 0.0
      %3700 = vmatprep.subr.mxu0 0.0
      %3701 = vmatpush1.msra.mxu0 0.0
      %3702 = vmatprep.subr.mxu0 0.0
      %3703 = vmatpush1.msra.mxu0 0.0
      %3704 = vmatprep.subr.mxu0 0.0
      %3705 = vmatpush1.msra.mxu0 0.0
      %3706 = vmatprep.subr.mxu0 0.0
      %3707 = vmatpush1.msra.mxu0 0.0
      %3708 = vmatprep.mubr.f32.mxu0 0.0
      %v3709 = vand.u32 %v3435, 4294901760
      %v3710 = vsub.f32 %v3435, %v3709
      %3711 = vmatmul.mubr.f32.gmra.mrb[0].mxu0 %v3710
      %v3712 = vpop.f32.mrb[0].mxu0
      %v3713 = vadd.f32 %v3625, %v3712
      %v3714 = vpop.f32.mrb[0].mxu0
      %v3715 = vadd.f32 %v3627, %v3714
      %3716 = vmatprep.mubr.f32.mxu0 0.0
      %v3717 = vand.u32 %v3438, 4294901760
      %v3718 = vsub.f32 %v3438, %v3717
      %3719 = vmatmul.mubr.f32.gmra.mrb[0].mxu0 %v3718
      %v3720 = vpop.f32.mrb[0].mxu0
      %v3721 = vadd.f32 %v3632, %v3720
      %v3722 = vpop.f32.mrb[0].mxu0
      %v3723 = vadd.f32 %v3634, %v3722
      %3724 = vdwg.mxu0
      %v3725 = vand.u32 %v3417, 4294901760
      %3726 = vmatprep.subr.mxu0 %v3725
      %v3727 = vand.u32 %v3416, 4294901760
      %3728 = vmatpush1.msra.mxu0 %v3727
      %v3729 = vand.u32 %v3444, 4294901760
      %3730 = vmatprep.subr.mxu0 %v3729
      %v3731 = vand.u32 %v3441, 4294901760
      %3732 = vmatpush1.msra.mxu0 %v3731
      %3733 = vmatprep.subr.mxu0 0.0
      %3734 = vmatpush1.msra.mxu0 0.0
      %3735 = vmatprep.subr.mxu0 0.0
      %3736 = vmatpush1.msra.mxu0 0.0
      %3737 = vmatprep.subr.mxu0 0.0
      %3738 = vmatpush1.msra.mxu0 0.0
      %3739 = vmatprep.subr.mxu0 0.0
      %3740 = vmatpush1.msra.mxu0 0.0
      %3741 = vmatprep.subr.mxu0 0.0
      %3742 = vmatpush1.msra.mxu0 0.0
      %3743 = vmatprep.subr.mxu0 0.0
      %3744 = vmatpush1.msra.mxu0 0.0
      %3745 = vmatprep.subr.mxu0 0.0
      %3746 = vmatpush1.msra.mxu0 0.0
      %3747 = vmatprep.subr.mxu0 0.0
      %3748 = vmatpush1.msra.mxu0 0.0
      %3749 = vmatprep.subr.mxu0 0.0
      %3750 = vmatpush1.msra.mxu0 0.0
      %3751 = vmatprep.subr.mxu0 0.0
      %3752 = vmatpush1.msra.mxu0 0.0
      %3753 = vmatprep.subr.mxu0 0.0
      %3754 = vmatpush1.msra.mxu0 0.0
      %3755 = vmatprep.subr.mxu0 0.0
      %3756 = vmatpush1.msra.mxu0 0.0
      %3757 = vmatprep.subr.mxu0 0.0
      %3758 = vmatpush1.msra.mxu0 0.0
      %3759 = vmatprep.subr.mxu0 0.0
      %3760 = vmatpush1.msra.mxu0 0.0
      %3761 = vmatprep.subr.mxu0 0.0
      %3762 = vmatpush1.msra.mxu0 0.0
      %3763 = vmatprep.subr.mxu0 0.0
      %3764 = vmatpush1.msra.mxu0 0.0
      %3765 = vmatprep.subr.mxu0 0.0
      %3766 = vmatpush1.msra.mxu0 0.0
      %3767 = vmatprep.subr.mxu0 0.0
      %3768 = vmatpush1.msra.mxu0 0.0
      %3769 = vmatprep.subr.mxu0 0.0
      %3770 = vmatpush1.msra.mxu0 0.0
      %3771 = vmatprep.subr.mxu0 0.0
      %3772 = vmatpush1.msra.mxu0 0.0
      %3773 = vmatprep.subr.mxu0 0.0
      %3774 = vmatpush1.msra.mxu0 0.0
      %3775 = vmatprep.subr.mxu0 0.0
      %3776 = vmatpush1.msra.mxu0 0.0
      %3777 = vmatprep.subr.mxu0 0.0
      %3778 = vmatpush1.msra.mxu0 0.0
      %3779 = vmatprep.subr.mxu0 0.0
      %3780 = vmatpush1.msra.mxu0 0.0
      %3781 = vmatprep.subr.mxu0 0.0
      %3782 = vmatpush1.msra.mxu0 0.0
      %3783 = vmatprep.subr.mxu0 0.0
      %3784 = vmatpush1.msra.mxu0 0.0
      %3785 = vmatprep.subr.mxu0 0.0
      %3786 = vmatpush1.msra.mxu0 0.0
      %3787 = vmatprep.subr.mxu0 0.0
      %3788 = vmatpush1.msra.mxu0 0.0
      %3789 = vmatprep.subr.mxu0 0.0
      %3790 = vmatpush1.msra.mxu0 0.0
      %3791 = vmatprep.subr.mxu0 0.0
      %3792 = vmatpush1.msra.mxu0 0.0
      %3793 = vmatprep.mubr.f32.mxu0 0.0
      %v3794 = vand.u32 %v3435, 4294901760
      %v3795 = vsub.f32 %v3435, %v3794
      %v3796 = vand.u32 %v3795, 4294901760
      %3797 = vmatmul.mubr.f32.gmra.mrb[0].mxu0 %v3796
      %v3798 = vpop.f32.mrb[0].mxu0
      %v3799 = vadd.f32 %v3713, %v3798
      %v3800 = vpop.f32.mrb[0].mxu0
      %v3801 = vadd.f32 %v3715, %v3800
      %3802 = vmatprep.mubr.f32.mxu0 0.0
      %v3803 = vand.u32 %v3438, 4294901760
      %v3804 = vsub.f32 %v3438, %v3803
      %v3805 = vand.u32 %v3804, 4294901760
      %3806 = vmatmul.mubr.f32.gmra.mrb[0].mxu0 %v3805
      %v3807 = vpop.f32.mrb[0].mxu0
      %v3808 = vadd.f32 %v3721, %v3807
      %v3809 = vpop.f32.mrb[0].mxu0
      %v3810 = vadd.f32 %v3723, %v3809
      %3811 = vdwg.mxu0
      %v3812 = vand.u32 %v3417, 4294901760
      %v3813 = vsub.f32 %v3417, %v3812
      %v3814 = vand.u32 %v3813, 4294901760
      %3815 = vmatprep.subr.mxu0 %v3814
      %v3816 = vand.u32 %v3416, 4294901760
      %v3817 = vsub.f32 %v3416, %v3816
      %v3818 = vand.u32 %v3817, 4294901760
      %3819 = vmatpush1.msra.mxu0 %v3818
      %v3820 = vand.u32 %v3444, 4294901760
      %v3821 = vsub.f32 %v3444, %v3820
      %v3822 = vand.u32 %v3821, 4294901760
      %3823 = vmatprep.subr.mxu0 %v3822
      %v3824 = vand.u32 %v3441, 4294901760
      %v3825 = vsub.f32 %v3441, %v3824
      %v3826 = vand.u32 %v3825, 4294901760
      %3827 = vmatpush1.msra.mxu0 %v3826
      %3828 = vmatprep.subr.mxu0 0.0
      %3829 = vmatpush1.msra.mxu0 0.0
      %3830 = vmatprep.subr.mxu0 0.0
      %3831 = vmatpush1.msra.mxu0 0.0
      %3832 = vmatprep.subr.mxu0 0.0
      %3833 = vmatpush1.msra.mxu0 0.0
      %3834 = vmatprep.subr.mxu0 0.0
      %3835 = vmatpush1.msra.mxu0 0.0
      %3836 = vmatprep.subr.mxu0 0.0
      %3837 = vmatpush1.msra.mxu0 0.0
      %3838 = vmatprep.subr.mxu0 0.0
      %3839 = vmatpush1.msra.mxu0 0.0
      %3840 = vmatprep.subr.mxu0 0.0
      %3841 = vmatpush1.msra.mxu0 0.0
      %3842 = vmatprep.subr.mxu0 0.0
      %3843 = vmatpush1.msra.mxu0 0.0
      %3844 = vmatprep.subr.mxu0 0.0
      %3845 = vmatpush1.msra.mxu0 0.0
      %3846 = vmatprep.subr.mxu0 0.0
      %3847 = vmatpush1.msra.mxu0 0.0
      %3848 = vmatprep.subr.mxu0 0.0
      %3849 = vmatpush1.msra.mxu0 0.0
      %3850 = vmatprep.subr.mxu0 0.0
      %3851 = vmatpush1.msra.mxu0 0.0
      %3852 = vmatprep.subr.mxu0 0.0
      %3853 = vmatpush1.msra.mxu0 0.0
      %3854 = vmatprep.subr.mxu0 0.0
      %3855 = vmatpush1.msra.mxu0 0.0
      %3856 = vmatprep.subr.mxu0 0.0
      %3857 = vmatpush1.msra.mxu0 0.0
      %3858 = vmatprep.subr.mxu0 0.0
      %3859 = vmatpush1.msra.mxu0 0.0
      %3860 = vmatprep.subr.mxu0 0.0
      %3861 = vmatpush1.msra.mxu0 0.0
      %3862 = vmatprep.subr.mxu0 0.0
      %3863 = vmatpush1.msra.mxu0 0.0
      %3864 = vmatprep.subr.mxu0 0.0
      %3865 = vmatpush1.msra.mxu0 0.0
      %3866 = vmatprep.subr.mxu0 0.0
      %3867 = vmatpush1.msra.mxu0 0.0
      %3868 = vmatprep.subr.mxu0 0.0
      %3869 = vmatpush1.msra.mxu0 0.0
      %3870 = vmatprep.subr.mxu0 0.0
      %3871 = vmatpush1.msra.mxu0 0.0
      %3872 = vmatprep.subr.mxu0 0.0
      %3873 = vmatpush1.msra.mxu0 0.0
      %3874 = vmatprep.subr.mxu0 0.0
      %3875 = vmatpush1.msra.mxu0 0.0
      %3876 = vmatprep.subr.mxu0 0.0
      %3877 = vmatpush1.msra.mxu0 0.0
      %3878 = vmatprep.subr.mxu0 0.0
      %3879 = vmatpush1.msra.mxu0 0.0
      %3880 = vmatprep.subr.mxu0 0.0
      %3881 = vmatpush1.msra.mxu0 0.0
      %3882 = vmatprep.subr.mxu0 0.0
      %3883 = vmatpush1.msra.mxu0 0.0
      %3884 = vmatprep.subr.mxu0 0.0
      %3885 = vmatpush1.msra.mxu0 0.0
      %3886 = vmatprep.subr.mxu0 0.0
      %3887 = vmatpush1.msra.mxu0 0.0
      %3888 = vmatprep.mubr.f32.mxu0 0.0
      %v3889 = vand.u32 %v3435, 4294901760
      %3890 = vmatmul.mubr.f32.gmra.mrb[0].mxu0 %v3889
      %v3891 = vpop.f32.mrb[0].mxu0
      %v3892 = vadd.f32 %v3799, %v3891
      %v3893 = vpop.f32.mrb[0].mxu0
      %v3894 = vadd.f32 %v3801, %v3893
      %3895 = vmatprep.mubr.f32.mxu0 0.0
      %v3896 = vand.u32 %v3438, 4294901760
      %3897 = vmatmul.mubr.f32.gmra.mrb[0].mxu0 %v3896
      %v3898 = vpop.f32.mrb[0].mxu0
      %v3899 = vadd.f32 %v3808, %v3898
      %v3900 = vpop.f32.mrb[0].mxu0
      %v3901 = vadd.f32 %v3810, %v3900
      %3902 = vdwg.mxu0
      %v3903 = vand.u32 %v3417, 4294901760
      %3904 = vmatprep.subr.mxu0 %v3903
      %v3905 = vand.u32 %v3416, 4294901760
      %3906 = vmatpush1.msra.mxu0 %v3905
      %v3907 = vand.u32 %v3444, 4294901760
      %3908 = vmatprep.subr.mxu0 %v3907
      %v3909 = vand.u32 %v3441, 4294901760
      %3910 = vmatpush1.msra.mxu0 %v3909
      %3911 = vmatprep.subr.mxu0 0.0
      %3912 = vmatpush1.msra.mxu0 0.0
      %3913 = vmatprep.subr.mxu0 0.0
      %3914 = vmatpush1.msra.mxu0 0.0
      %3915 = vmatprep.subr.mxu0 0.0
      %3916 = vmatpush1.msra.mxu0 0.0
      %3917 = vmatprep.subr.mxu0 0.0
      %3918 = vmatpush1.msra.mxu0 0.0
      %3919 = vmatprep.subr.mxu0 0.0
      %3920 = vmatpush1.msra.mxu0 0.0
      %3921 = vmatprep.subr.mxu0 0.0
      %3922 = vmatpush1.msra.mxu0 0.0
      %3923 = vmatprep.subr.mxu0 0.0
      %3924 = vmatpush1.msra.mxu0 0.0
      %3925 = vmatprep.subr.mxu0 0.0
      %3926 = vmatpush1.msra.mxu0 0.0
      %3927 = vmatprep.subr.mxu0 0.0
      %3928 = vmatpush1.msra.mxu0 0.0
      %3929 = vmatprep.subr.mxu0 0.0
      %3930 = vmatpush1.msra.mxu0 0.0
      %3931 = vmatprep.subr.mxu0 0.0
      %3932 = vmatpush1.msra.mxu0 0.0
      %3933 = vmatprep.subr.mxu0 0.0
      %3934 = vmatpush1.msra.mxu0 0.0
      %3935 = vmatprep.subr.mxu0 0.0
      %3936 = vmatpush1.msra.mxu0 0.0
      %3937 = vmatprep.subr.mxu0 0.0
      %3938 = vmatpush1.msra.mxu0 0.0
      %3939 = vmatprep.subr.mxu0 0.0
      %3940 = vmatpush1.msra.mxu0 0.0
      %3941 = vmatprep.subr.mxu0 0.0
      %3942 = vmatpush1.msra.mxu0 0.0
      %3943 = vmatprep.subr.mxu0 0.0
      %3944 = vmatpush1.msra.mxu0 0.0
      %3945 = vmatprep.subr.mxu0 0.0
      %3946 = vmatpush1.msra.mxu0 0.0
      %3947 = vmatprep.subr.mxu0 0.0
      %3948 = vmatpush1.msra.mxu0 0.0
      %3949 = vmatprep.subr.mxu0 0.0
      %3950 = vmatpush1.msra.mxu0 0.0
      %3951 = vmatprep.subr.mxu0 0.0
      %3952 = vmatpush1.msra.mxu0 0.0
      %3953 = vmatprep.subr.mxu0 0.0
      %3954 = vmatpush1.msra.mxu0 0.0
      %3955 = vmatprep.subr.mxu0 0.0
      %3956 = vmatpush1.msra.mxu0 0.0
      %3957 = vmatprep.subr.mxu0 0.0
      %3958 = vmatpush1.msra.mxu0 0.0
      %3959 = vmatprep.subr.mxu0 0.0
      %3960 = vmatpush1.msra.mxu0 0.0
      %3961 = vmatprep.subr.mxu0 0.0
      %3962 = vmatpush1.msra.mxu0 0.0
      %3963 = vmatprep.subr.mxu0 0.0
      %3964 = vmatpush1.msra.mxu0 0.0
      %3965 = vmatprep.subr.mxu0 0.0
      %3966 = vmatpush1.msra.mxu0 0.0
      %3967 = vmatprep.subr.mxu0 0.0
      %3968 = vmatpush1.msra.mxu0 0.0
      %3969 = vmatprep.subr.mxu0 0.0
      %3970 = vmatpush1.msra.mxu0 0.0
      %3971 = vmatprep.mubr.f32.mxu0 0.0
      %v3972 = vand.u32 %v3435, 4294901760
      %3973 = vmatmul.mubr.f32.gmra.mrb[0].mxu0 %v3972
      %v3974 = vpop.f32.mrb[0].mxu0
      %v3975 = vadd.f32 %v3892, %v3974
      %v3976 = vpop.f32.mrb[0].mxu0
      %v3977 = vadd.f32 %v3894, %v3976
      %3978 = vmatprep.mubr.f32.mxu0 0.0
      %v3979 = vand.u32 %v3438, 4294901760
      %3980 = vmatmul.mubr.f32.gmra.mrb[0].mxu0 %v3979
      %v3981 = vpop.f32.mrb[0].mxu0
      %v3982 = vadd.f32 %v3899, %v3981
      %v3983 = vpop.f32.mrb[0].mxu0
      %v3984 = vadd.f32 %v3901, %v3983
      %3985 = vdwg.mxu0
      %v3986 = vld [vmem:[%s11] sm:$0xff]
      %v3987 = vld [vmem:[%s11 + $0x8] sm:$0xf]
      %v3988 = vld [vmem:[%s12] sm:$0xff]
      %v3989 = vld [vmem:[%s12 + $0x8] sm:$0xf]
      %v3990 = vld [vmem:[%s13] sm:$0xff]
      %v3991 = vld [vmem:[%s13 + $0x8] sm:$0xf]
      %v3992 = vld [vmem:[%s14] sm:$0xf]
      %v3993 = vadd.f32 %v3975, %v3977
      %3994 = vadd.xlane.f32.xlu0 %v3993
      %v3995 = vpop.xlane.xlu0 %3994
      %v3996 = vsel %vm1123, %v3982, 0.0
      %v3997 = vsel %vm1123, %v3984, 0.0
      %v3998 = vadd.f32 %v3996, %v3997
      %3999 = vadd.xlane.f32.xlu0 %v3998
      %v4000 = vpop.xlane.xlu0 %3999
      %v4001 = vmul.f32 %v3975, %v3975
      %v4002 = vmul.f32 %v3977, %v3977
      %v4003 = vmul.f32 %v3982, %v3982
      %v4004 = vmul.f32 %v3984, %v3984
      %v4005 = vadd.f32 %v4001, %v4002
      %4006 = vadd.xlane.f32.xlu0 %v4005
      %v4007 = vpop.xlane.xlu0 %4006
      %v4008 = vsel %vm1123, %v4003, 0.0
      %v4009 = vsel %vm1123, %v4004, 0.0
      %v4010 = vadd.f32 %v4008, %v4009
      %4011 = vadd.xlane.f32.xlu0 %v4010
      %v4012 = vpop.xlane.xlu0 %4011
      %v4014 = vsel %vm1141, %v3992, 0
      %v4017 = vsel %vm1123, %v4000, 0
      %4019 = vmatprep.subr.mxu0 0.0
      %v4020 = vand.u32 %v3995, 4294901760
      %4021 = vmatpush1.msra.mxu0 %v4020
      %4022 = vmatprep.subr.mxu0 0.0
      %v4023 = vand.u32 %v4017, 4294901760
      %4024 = vmatpush1.msra.mxu0 %v4023
      %4025 = vmatprep.subr.mxu0 0.0
      %4026 = vmatpush1.msra.mxu0 0.0
      %4027 = vmatprep.subr.mxu0 0.0
      %4028 = vmatpush1.msra.mxu0 0.0
      %4029 = vmatprep.subr.mxu0 0.0
      %4030 = vmatpush1.msra.mxu0 0.0
      %4031 = vmatprep.subr.mxu0 0.0
      %4032 = vmatpush1.msra.mxu0 0.0
      %4033 = vmatprep.subr.mxu0 0.0
      %4034 = vmatpush1.msra.mxu0 0.0
      %4035 = vmatprep.subr.mxu0 0.0
      %4036 = vmatpush1.msra.mxu0 0.0
      %4037 = vmatprep.subr.mxu0 0.0
      %4038 = vmatpush1.msra.mxu0 0.0
      %4039 = vmatprep.subr.mxu0 0.0
      %4040 = vmatpush1.msra.mxu0 0.0
      %4041 = vmatprep.subr.mxu0 0.0
      %4042 = vmatpush1.msra.mxu0 0.0
      %4043 = vmatprep.subr.mxu0 0.0
      %4044 = vmatpush1.msra.mxu0 0.0
      %4045 = vmatprep.subr.mxu0 0.0
      %4046 = vmatpush1.msra.mxu0 0.0
      %4047 = vmatprep.subr.mxu0 0.0
      %4048 = vmatpush1.msra.mxu0 0.0
      %4049 = vmatprep.subr.mxu0 0.0
      %4050 = vmatpush1.msra.mxu0 0.0
      %4051 = vmatprep.subr.mxu0 0.0
      %4052 = vmatpush1.msra.mxu0 0.0
      %4053 = vmatprep.subr.mxu0 0.0
      %4054 = vmatpush1.msra.mxu0 0.0
      %4055 = vmatprep.subr.mxu0 0.0
      %4056 = vmatpush1.msra.mxu0 0.0
      %4057 = vmatprep.subr.mxu0 0.0
      %4058 = vmatpush1.msra.mxu0 0.0
      %4059 = vmatprep.subr.mxu0 0.0
      %4060 = vmatpush1.msra.mxu0 0.0
      %4061 = vmatprep.subr.mxu0 0.0
      %4062 = vmatpush1.msra.mxu0 0.0
      %4063 = vmatprep.subr.mxu0 0.0
      %4064 = vmatpush1.msra.mxu0 0.0
      %4065 = vmatprep.subr.mxu0 0.0
      %4066 = vmatpush1.msra.mxu0 0.0
      %4067 = vmatprep.subr.mxu0 0.0
      %4068 = vmatpush1.msra.mxu0 0.0
      %4069 = vmatprep.subr.mxu0 0.0
      %4070 = vmatpush1.msra.mxu0 0.0
      %4071 = vmatprep.subr.mxu0 0.0
      %4072 = vmatpush1.msra.mxu0 0.0
      %4073 = vmatprep.subr.mxu0 0.0
      %4074 = vmatpush1.msra.mxu0 0.0
      %4075 = vmatprep.subr.mxu0 0.0
      %4076 = vmatpush1.msra.mxu0 0.0
      %4077 = vmatprep.subr.mxu0 0.0
      %4078 = vmatpush1.msra.mxu0 0.0
      %4079 = vmatprep.subr.mxu0 0.0
      %4080 = vmatpush1.msra.mxu0 0.0
      %4081 = vmatprep.subr.mxu0 0.0
      %4082 = vmatpush1.msra.mxu0 0.0
      %4083 = vmatprep.subr.mxu0 0.0
      %4084 = vmatpush1.msra.mxu0 0.0
      %4085 = vmatprep.mubr.f32.mxu0 0.0
      %v4086 = vand.u32 %v4014, 4294901760
      %v4087 = vsub.f32 %v4014, %v4086
      %v4088 = vand.u32 %v4087, 4294901760
      %v4089 = vsub.f32 %v4087, %v4088
      %v4090 = vand.u32 %v4089, 4294901760
      %4091 = vmatmul.mubr.f32.gmra.mrb[0].mxu0 %v4090
      %v4092 = vpop.f32.mrb[0].mxu0
      %v4093 = vadd.f32 0.0, %v4092
      %v4094 = vpop.f32.mrb[0].mxu0
      %4095 = vdwg.mxu0
      %4096 = vmatprep.subr.mxu0 0.0
      %v4097 = vand.u32 %v3995, 4294901760
      %v4098 = vsub.f32 %v3995, %v4097
      %v4099 = vand.u32 %v4098, 4294901760
      %v4100 = vsub.f32 %v4098, %v4099
      %v4101 = vand.u32 %v4100, 4294901760
      %4102 = vmatpush1.msra.mxu0 %v4101
      %4103 = vmatprep.subr.mxu0 0.0
      %v4104 = vand.u32 %v4017, 4294901760
      %v4105 = vsub.f32 %v4017, %v4104
      %v4106 = vand.u32 %v4105, 4294901760
      %v4107 = vsub.f32 %v4105, %v4106
      %v4108 = vand.u32 %v4107, 4294901760
      %4109 = vmatpush1.msra.mxu0 %v4108
      %4110 = vmatprep.subr.mxu0 0.0
      %4111 = vmatpush1.msra.mxu0 0.0
      %4112 = vmatprep.subr.mxu0 0.0
      %4113 = vmatpush1.msra.mxu0 0.0
      %4114 = vmatprep.subr.mxu0 0.0
      %4115 = vmatpush1.msra.mxu0 0.0
      %4116 = vmatprep.subr.mxu0 0.0
      %4117 = vmatpush1.msra.mxu0 0.0
      %4118 = vmatprep.subr.mxu0 0.0
      %4119 = vmatpush1.msra.mxu0 0.0
      %4120 = vmatprep.subr.mxu0 0.0
      %4121 = vmatpush1.msra.mxu0 0.0
      %4122 = vmatprep.subr.mxu0 0.0
      %4123 = vmatpush1.msra.mxu0 0.0
      %4124 = vmatprep.subr.mxu0 0.0
      %4125 = vmatpush1.msra.mxu0 0.0
      %4126 = vmatprep.subr.mxu0 0.0
      %4127 = vmatpush1.msra.mxu0 0.0
      %4128 = vmatprep.subr.mxu0 0.0
      %4129 = vmatpush1.msra.mxu0 0.0
      %4130 = vmatprep.subr.mxu0 0.0
      %4131 = vmatpush1.msra.mxu0 0.0
      %4132 = vmatprep.subr.mxu0 0.0
      %4133 = vmatpush1.msra.mxu0 0.0
      %4134 = vmatprep.subr.mxu0 0.0
      %4135 = vmatpush1.msra.mxu0 0.0
      %4136 = vmatprep.subr.mxu0 0.0
      %4137 = vmatpush1.msra.mxu0 0.0
      %4138 = vmatprep.subr.mxu0 0.0
      %4139 = vmatpush1.msra.mxu0 0.0
      %4140 = vmatprep.subr.mxu0 0.0
      %4141 = vmatpush1.msra.mxu0 0.0
      %4142 = vmatprep.subr.mxu0 0.0
      %4143 = vmatpush1.msra.mxu0 0.0
      %4144 = vmatprep.subr.mxu0 0.0
      %4145 = vmatpush1.msra.mxu0 0.0
      %4146 = vmatprep.subr.mxu0 0.0
      %4147 = vmatpush1.msra.mxu0 0.0
      %4148 = vmatprep.subr.mxu0 0.0
      %4149 = vmatpush1.msra.mxu0 0.0
      %4150 = vmatprep.subr.mxu0 0.0
      %4151 = vmatpush1.msra.mxu0 0.0
      %4152 = vmatprep.subr.mxu0 0.0
      %4153 = vmatpush1.msra.mxu0 0.0
      %4154 = vmatprep.subr.mxu0 0.0
      %4155 = vmatpush1.msra.mxu0 0.0
      %4156 = vmatprep.subr.mxu0 0.0
      %4157 = vmatpush1.msra.mxu0 0.0
      %4158 = vmatprep.subr.mxu0 0.0
      %4159 = vmatpush1.msra.mxu0 0.0
      %4160 = vmatprep.subr.mxu0 0.0
      %4161 = vmatpush1.msra.mxu0 0.0
      %4162 = vmatprep.subr.mxu0 0.0
      %4163 = vmatpush1.msra.mxu0 0.0
      %4164 = vmatprep.subr.mxu0 0.0
      %4165 = vmatpush1.msra.mxu0 0.0
      %4166 = vmatprep.subr.mxu0 0.0
      %4167 = vmatpush1.msra.mxu0 0.0
      %4168 = vmatprep.subr.mxu0 0.0
      %4169 = vmatpush1.msra.mxu0 0.0
      %4170 = vmatprep.mubr.f32.mxu0 0.0
      %v4171 = vand.u32 %v4014, 4294901760
      %4172 = vmatmul.mubr.f32.gmra.mrb[0].mxu0 %v4171
      %v4173 = vpop.f32.mrb[0].mxu0
      %v4174 = vadd.f32 %v4093, %v4173
      %v4175 = vpop.f32.mrb[0].mxu0
      %4176 = vdwg.mxu0
      %4177 = vmatprep.subr.mxu0 0.0
      %v4178 = vand.u32 %v3995, 4294901760
      %v4179 = vsub.f32 %v3995, %v4178
      %4180 = vmatpush1.msra.mxu0 %v4179
      %4181 = vmatprep.subr.mxu0 0.0
      %v4182 = vand.u32 %v4017, 4294901760
      %v4183 = vsub.f32 %v4017, %v4182
      %4184 = vmatpush1.msra.mxu0 %v4183
      %4185 = vmatprep.subr.mxu0 0.0
      %4186 = vmatpush1.msra.mxu0 0.0
      %4187 = vmatprep.subr.mxu0 0.0
      %4188 = vmatpush1.msra.mxu0 0.0
      %4189 = vmatprep.subr.mxu0 0.0
      %4190 = vmatpush1.msra.mxu0 0.0
      %4191 = vmatprep.subr.mxu0 0.0
      %4192 = vmatpush1.msra.mxu0 0.0
      %4193 = vmatprep.subr.mxu0 0.0
      %4194 = vmatpush1.msra.mxu0 0.0
      %4195 = vmatprep.subr.mxu0 0.0
      %4196 = vmatpush1.msra.mxu0 0.0
      %4197 = vmatprep.subr.mxu0 0.0
      %4198 = vmatpush1.msra.mxu0 0.0
      %4199 = vmatprep.subr.mxu0 0.0
      %4200 = vmatpush1.msra.mxu0 0.0
      %4201 = vmatprep.subr.mxu0 0.0
      %4202 = vmatpush1.msra.mxu0 0.0
      %4203 = vmatprep.subr.mxu0 0.0
      %4204 = vmatpush1.msra.mxu0 0.0
      %4205 = vmatprep.subr.mxu0 0.0
      %4206 = vmatpush1.msra.mxu0 0.0
      %4207 = vmatprep.subr.mxu0 0.0
      %4208 = vmatpush1.msra.mxu0 0.0
      %4209 = vmatprep.subr.mxu0 0.0
      %4210 = vmatpush1.msra.mxu0 0.0
      %4211 = vmatprep.subr.mxu0 0.0
      %4212 = vmatpush1.msra.mxu0 0.0
      %4213 = vmatprep.subr.mxu0 0.0
      %4214 = vmatpush1.msra.mxu0 0.0
      %4215 = vmatprep.subr.mxu0 0.0
      %4216 = vmatpush1.msra.mxu0 0.0
      %4217 = vmatprep.subr.mxu0 0.0
      %4218 = vmatpush1.msra.mxu0 0.0
      %4219 = vmatprep.subr.mxu0 0.0
      %4220 = vmatpush1.msra.mxu0 0.0
      %4221 = vmatprep.subr.mxu0 0.0
      %4222 = vmatpush1.msra.mxu0 0.0
      %4223 = vmatprep.subr.mxu0 0.0
      %4224 = vmatpush1.msra.mxu0 0.0
      %4225 = vmatprep.subr.mxu0 0.0
      %4226 = vmatpush1.msra.mxu0 0.0
      %4227 = vmatprep.subr.mxu0 0.0
      %4228 = vmatpush1.msra.mxu0 0.0
      %4229 = vmatprep.subr.mxu0 0.0
      %4230 = vmatpush1.msra.mxu0 0.0
      %4231 = vmatprep.subr.mxu0 0.0
      %4232 = vmatpush1.msra.mxu0 0.0
      %4233 = vmatprep.subr.mxu0 0.0
      %4234 = vmatpush1.msra.mxu0 0.0
      %4235 = vmatprep.subr.mxu0 0.0
      %4236 = vmatpush1.msra.mxu0 0.0
      %4237 = vmatprep.subr.mxu0 0.0
      %4238 = vmatpush1.msra.mxu0 0.0
      %4239 = vmatprep.subr.mxu0 0.0
      %4240 = vmatpush1.msra.mxu0 0.0
      %4241 = vmatprep.subr.mxu0 0.0
      %4242 = vmatpush1.msra.mxu0 0.0
      %4243 = vmatprep.subr.mxu0 0.0
      %4244 = vmatpush1.msra.mxu0 0.0
      %4245 = vmatprep.mubr.f32.mxu0 0.0
      %v4246 = vand.u32 %v4014, 4294901760
      %v4247 = vsub.f32 %v4014, %v4246
      %4248 = vmatmul.mubr.f32.gmra.mrb[0].mxu0 %v4247
      %v4249 = vpop.f32.mrb[0].mxu0
      %v4250 = vadd.f32 %v4174, %v4249
      %v4251 = vpop.f32.mrb[0].mxu0
      %4252 = vdwg.mxu0
      %4253 = vmatprep.subr.mxu0 0.0
      %v4254 = vand.u32 %v3995, 4294901760
      %4255 = vmatpush1.msra.mxu0 %v4254
      %4256 = vmatprep.subr.mxu0 0.0
      %v4257 = vand.u32 %v4017, 4294901760
      %4258 = vmatpush1.msra.mxu0 %v4257
      %4259 = vmatprep.subr.mxu0 0.0
      %4260 = vmatpush1.msra.mxu0 0.0
      %4261 = vmatprep.subr.mxu0 0.0
      %4262 = vmatpush1.msra.mxu0 0.0
      %4263 = vmatprep.subr.mxu0 0.0
      %4264 = vmatpush1.msra.mxu0 0.0
      %4265 = vmatprep.subr.mxu0 0.0
      %4266 = vmatpush1.msra.mxu0 0.0
      %4267 = vmatprep.subr.mxu0 0.0
      %4268 = vmatpush1.msra.mxu0 0.0
      %4269 = vmatprep.subr.mxu0 0.0
      %4270 = vmatpush1.msra.mxu0 0.0
      %4271 = vmatprep.subr.mxu0 0.0
      %4272 = vmatpush1.msra.mxu0 0.0
      %4273 = vmatprep.subr.mxu0 0.0
      %4274 = vmatpush1.msra.mxu0 0.0
      %4275 = vmatprep.subr.mxu0 0.0
      %4276 = vmatpush1.msra.mxu0 0.0
      %4277 = vmatprep.subr.mxu0 0.0
      %4278 = vmatpush1.msra.mxu0 0.0
      %4279 = vmatprep.subr.mxu0 0.0
      %4280 = vmatpush1.msra.mxu0 0.0
      %4281 = vmatprep.subr.mxu0 0.0
      %4282 = vmatpush1.msra.mxu0 0.0
      %4283 = vmatprep.subr.mxu0 0.0
      %4284 = vmatpush1.msra.mxu0 0.0
      %4285 = vmatprep.subr.mxu0 0.0
      %4286 = vmatpush1.msra.mxu0 0.0
      %4287 = vmatprep.subr.mxu0 0.0
      %4288 = vmatpush1.msra.mxu0 0.0
      %4289 = vmatprep.subr.mxu0 0.0
      %4290 = vmatpush1.msra.mxu0 0.0
      %4291 = vmatprep.subr.mxu0 0.0
      %4292 = vmatpush1.msra.mxu0 0.0
      %4293 = vmatprep.subr.mxu0 0.0
      %4294 = vmatpush1.msra.mxu0 0.0
      %4295 = vmatprep.subr.mxu0 0.0
      %4296 = vmatpush1.msra.mxu0 0.0
      %4297 = vmatprep.subr.mxu0 0.0
      %4298 = vmatpush1.msra.mxu0 0.0
      %4299 = vmatprep.subr.mxu0 0.0
      %4300 = vmatpush1.msra.mxu0 0.0
      %4301 = vmatprep.subr.mxu0 0.0
      %4302 = vmatpush1.msra.mxu0 0.0
      %4303 = vmatprep.subr.mxu0 0.0
      %4304 = vmatpush1.msra.mxu0 0.0
      %4305 = vmatprep.subr.mxu0 0.0
      %4306 = vmatpush1.msra.mxu0 0.0
      %4307 = vmatprep.subr.mxu0 0.0
      %4308 = vmatpush1.msra.mxu0 0.0
      %4309 = vmatprep.subr.mxu0 0.0
      %4310 = vmatpush1.msra.mxu0 0.0
      %4311 = vmatprep.subr.mxu0 0.0
      %4312 = vmatpush1.msra.mxu0 0.0
      %4313 = vmatprep.subr.mxu0 0.0
      %4314 = vmatpush1.msra.mxu0 0.0
      %4315 = vmatprep.subr.mxu0 0.0
      %4316 = vmatpush1.msra.mxu0 0.0
      %4317 = vmatprep.subr.mxu0 0.0
      %4318 = vmatpush1.msra.mxu0 0.0
      %4319 = vmatprep.mubr.f32.mxu0 0.0
      %v4320 = vand.u32 %v4014, 4294901760
      %v4321 = vsub.f32 %v4014, %v4320
      %v4322 = vand.u32 %v4321, 4294901760
      %4323 = vmatmul.mubr.f32.gmra.mrb[0].mxu0 %v4322
      %v4324 = vpop.f32.mrb[0].mxu0
      %v4325 = vadd.f32 %v4250, %v4324
      %v4326 = vpop.f32.mrb[0].mxu0
      %4327 = vdwg.mxu0
      %4328 = vmatprep.subr.mxu0 0.0
      %v4329 = vand.u32 %v3995, 4294901760
      %v4330 = vsub.f32 %v3995, %v4329
      %v4331 = vand.u32 %v4330, 4294901760
      %4332 = vmatpush1.msra.mxu0 %v4331
      %4333 = vmatprep.subr.mxu0 0.0
      %v4334 = vand.u32 %v4017, 4294901760
      %v4335 = vsub.f32 %v4017, %v4334
      %v4336 = vand.u32 %v4335, 4294901760
      %4337 = vmatpush1.msra.mxu0 %v4336
      %4338 = vmatprep.subr.mxu0 0.0
      %4339 = vmatpush1.msra.mxu0 0.0
      %4340 = vmatprep.subr.mxu0 0.0
      %4341 = vmatpush1.msra.mxu0 0.0
      %4342 = vmatprep.subr.mxu0 0.0
      %4343 = vmatpush1.msra.mxu0 0.0
      %4344 = vmatprep.subr.mxu0 0.0
      %4345 = vmatpush1.msra.mxu0 0.0
      %4346 = vmatprep.subr.mxu0 0.0
      %4347 = vmatpush1.msra.mxu0 0.0
      %4348 = vmatprep.subr.mxu0 0.0
      %4349 = vmatpush1.msra.mxu0 0.0
      %4350 = vmatprep.subr.mxu0 0.0
      %4351 = vmatpush1.msra.mxu0 0.0
      %4352 = vmatprep.subr.mxu0 0.0
      %4353 = vmatpush1.msra.mxu0 0.0
      %4354 = vmatprep.subr.mxu0 0.0
      %4355 = vmatpush1.msra.mxu0 0.0
      %4356 = vmatprep.subr.mxu0 0.0
      %4357 = vmatpush1.msra.mxu0 0.0
      %4358 = vmatprep.subr.mxu0 0.0
      %4359 = vmatpush1.msra.mxu0 0.0
      %4360 = vmatprep.subr.mxu0 0.0
      %4361 = vmatpush1.msra.mxu0 0.0
      %4362 = vmatprep.subr.mxu0 0.0
      %4363 = vmatpush1.msra.mxu0 0.0
      %4364 = vmatprep.subr.mxu0 0.0
      %4365 = vmatpush1.msra.mxu0 0.0
      %4366 = vmatprep.subr.mxu0 0.0
      %4367 = vmatpush1.msra.mxu0 0.0
      %4368 = vmatprep.subr.mxu0 0.0
      %4369 = vmatpush1.msra.mxu0 0.0
      %4370 = vmatprep.subr.mxu0 0.0
      %4371 = vmatpush1.msra.mxu0 0.0
      %4372 = vmatprep.subr.mxu0 0.0
      %4373 = vmatpush1.msra.mxu0 0.0
      %4374 = vmatprep.subr.mxu0 0.0
      %4375 = vmatpush1.msra.mxu0 0.0
      %4376 = vmatprep.subr.mxu0 0.0
      %4377 = vmatpush1.msra.mxu0 0.0
      %4378 = vmatprep.subr.mxu0 0.0
      %4379 = vmatpush1.msra.mxu0 0.0
      %4380 = vmatprep.subr.mxu0 0.0
      %4381 = vmatpush1.msra.mxu0 0.0
      %4382 = vmatprep.subr.mxu0 0.0
      %4383 = vmatpush1.msra.mxu0 0.0
      %4384 = vmatprep.subr.mxu0 0.0
      %4385 = vmatpush1.msra.mxu0 0.0
      %4386 = vmatprep.subr.mxu0 0.0
      %4387 = vmatpush1.msra.mxu0 0.0
      %4388 = vmatprep.subr.mxu0 0.0
      %4389 = vmatpush1.msra.mxu0 0.0
      %4390 = vmatprep.subr.mxu0 0.0
      %4391 = vmatpush1.msra.mxu0 0.0
      %4392 = vmatprep.subr.mxu0 0.0
      %4393 = vmatpush1.msra.mxu0 0.0
      %4394 = vmatprep.subr.mxu0 0.0
      %4395 = vmatpush1.msra.mxu0 0.0
      %4396 = vmatprep.subr.mxu0 0.0
      %4397 = vmatpush1.msra.mxu0 0.0
      %4398 = vmatprep.mubr.f32.mxu0 0.0
      %v4399 = vand.u32 %v4014, 4294901760
      %4400 = vmatmul.mubr.f32.gmra.mrb[0].mxu0 %v4399
      %v4401 = vpop.f32.mrb[0].mxu0
      %v4402 = vadd.f32 %v4325, %v4401
      %v4403 = vpop.f32.mrb[0].mxu0
      %4404 = vdwg.mxu0
      %4405 = vmatprep.subr.mxu0 0.0
      %v4406 = vand.u32 %v3995, 4294901760
      %4407 = vmatpush1.msra.mxu0 %v4406
      %4408 = vmatprep.subr.mxu0 0.0
      %v4409 = vand.u32 %v4017, 4294901760
      %4410 = vmatpush1.msra.mxu0 %v4409
      %4411 = vmatprep.subr.mxu0 0.0
      %4412 = vmatpush1.msra.mxu0 0.0
      %4413 = vmatprep.subr.mxu0 0.0
      %4414 = vmatpush1.msra.mxu0 0.0
      %4415 = vmatprep.subr.mxu0 0.0
      %4416 = vmatpush1.msra.mxu0 0.0
      %4417 = vmatprep.subr.mxu0 0.0
      %4418 = vmatpush1.msra.mxu0 0.0
      %4419 = vmatprep.subr.mxu0 0.0
      %4420 = vmatpush1.msra.mxu0 0.0
      %4421 = vmatprep.subr.mxu0 0.0
      %4422 = vmatpush1.msra.mxu0 0.0
      %4423 = vmatprep.subr.mxu0 0.0
      %4424 = vmatpush1.msra.mxu0 0.0
      %4425 = vmatprep.subr.mxu0 0.0
      %4426 = vmatpush1.msra.mxu0 0.0
      %4427 = vmatprep.subr.mxu0 0.0
      %4428 = vmatpush1.msra.mxu0 0.0
      %4429 = vmatprep.subr.mxu0 0.0
      %4430 = vmatpush1.msra.mxu0 0.0
      %4431 = vmatprep.subr.mxu0 0.0
      %4432 = vmatpush1.msra.mxu0 0.0
      %4433 = vmatprep.subr.mxu0 0.0
      %4434 = vmatpush1.msra.mxu0 0.0
      %4435 = vmatprep.subr.mxu0 0.0
      %4436 = vmatpush1.msra.mxu0 0.0
      %4437 = vmatprep.subr.mxu0 0.0
      %4438 = vmatpush1.msra.mxu0 0.0
      %4439 = vmatprep.subr.mxu0 0.0
      %4440 = vmatpush1.msra.mxu0 0.0
      %4441 = vmatprep.subr.mxu0 0.0
      %4442 = vmatpush1.msra.mxu0 0.0
      %4443 = vmatprep.subr.mxu0 0.0
      %4444 = vmatpush1.msra.mxu0 0.0
      %4445 = vmatprep.subr.mxu0 0.0
      %4446 = vmatpush1.msra.mxu0 0.0
      %4447 = vmatprep.subr.mxu0 0.0
      %4448 = vmatpush1.msra.mxu0 0.0
      %4449 = vmatprep.subr.mxu0 0.0
      %4450 = vmatpush1.msra.mxu0 0.0
      %4451 = vmatprep.subr.mxu0 0.0
      %4452 = vmatpush1.msra.mxu0 0.0
      %4453 = vmatprep.subr.mxu0 0.0
      %4454 = vmatpush1.msra.mxu0 0.0
      %4455 = vmatprep.subr.mxu0 0.0
      %4456 = vmatpush1.msra.mxu0 0.0
      %4457 = vmatprep.subr.mxu0 0.0
      %4458 = vmatpush1.msra.mxu0 0.0
      %4459 = vmatprep.subr.mxu0 0.0
      %4460 = vmatpush1.msra.mxu0 0.0
      %4461 = vmatprep.subr.mxu0 0.0
      %4462 = vmatpush1.msra.mxu0 0.0
      %4463 = vmatprep.subr.mxu0 0.0
      %4464 = vmatpush1.msra.mxu0 0.0
      %4465 = vmatprep.subr.mxu0 0.0
      %4466 = vmatpush1.msra.mxu0 0.0
      %4467 = vmatprep.subr.mxu0 0.0
      %4468 = vmatpush1.msra.mxu0 0.0
      %4469 = vmatprep.subr.mxu0 0.0
      %4470 = vmatpush1.msra.mxu0 0.0
      %4471 = vmatprep.mubr.f32.mxu0 0.0
      %v4472 = vand.u32 %v4014, 4294901760
      %4473 = vmatmul.mubr.f32.gmra.mrb[0].mxu0 %v4472
      %v4474 = vpop.f32.mrb[0].mxu0
      %v4475 = vadd.f32 %v4402, %v4474
      %v4476 = vpop.f32.mrb[0].mxu0
      %4477 = vdwg.mxu0
      %v4479 = vsel %vm1123, %v4012, 0
      %4481 = vmatprep.subr.mxu0 0.0
      %v4482 = vand.u32 %v4007, 4294901760
      %4483 = vmatpush1.msra.mxu0 %v4482
      %4484 = vmatprep.subr.mxu0 0.0
      %v4485 = vand.u32 %v4479, 4294901760
      %4486 = vmatpush1.msra.mxu0 %v4485
      %4487 = vmatprep.subr.mxu0 0.0
      %4488 = vmatpush1.msra.mxu0 0.0
      %4489 = vmatprep.subr.mxu0 0.0
      %4490 = vmatpush1.msra.mxu0 0.0
      %4491 = vmatprep.subr.mxu0 0.0
      %4492 = vmatpush1.msra.mxu0 0.0
      %4493 = vmatprep.subr.mxu0 0.0
      %4494 = vmatpush1.msra.mxu0 0.0
      %4495 = vmatprep.subr.mxu0 0.0
      %4496 = vmatpush1.msra.mxu0 0.0
      %4497 = vmatprep.subr.mxu0 0.0
      %4498 = vmatpush1.msra.mxu0 0.0
      %4499 = vmatprep.subr.mxu0 0.0
      %4500 = vmatpush1.msra.mxu0 0.0
      %4501 = vmatprep.subr.mxu0 0.0
      %4502 = vmatpush1.msra.mxu0 0.0
      %4503 = vmatprep.subr.mxu0 0.0
      %4504 = vmatpush1.msra.mxu0 0.0
      %4505 = vmatprep.subr.mxu0 0.0
      %4506 = vmatpush1.msra.mxu0 0.0
      %4507 = vmatprep.subr.mxu0 0.0
      %4508 = vmatpush1.msra.mxu0 0.0
      %4509 = vmatprep.subr.mxu0 0.0
      %4510 = vmatpush1.msra.mxu0 0.0
      %4511 = vmatprep.subr.mxu0 0.0
      %4512 = vmatpush1.msra.mxu0 0.0
      %4513 = vmatprep.subr.mxu0 0.0
      %4514 = vmatpush1.msra.mxu0 0.0
      %4515 = vmatprep.subr.mxu0 0.0
      %4516 = vmatpush1.msra.mxu0 0.0
      %4517 = vmatprep.subr.mxu0 0.0
      %4518 = vmatpush1.msra.mxu0 0.0
      %4519 = vmatprep.subr.mxu0 0.0
      %4520 = vmatpush1.msra.mxu0 0.0
      %4521 = vmatprep.subr.mxu0 0.0
      %4522 = vmatpush1.msra.mxu0 0.0
      %4523 = vmatprep.subr.mxu0 0.0
      %4524 = vmatpush1.msra.mxu0 0.0
      %4525 = vmatprep.subr.mxu0 0.0
      %4526 = vmatpush1.msra.mxu0 0.0
      %4527 = vmatprep.subr.mxu0 0.0
      %4528 = vmatpush1.msra.mxu0 0.0
      %4529 = vmatprep.subr.mxu0 0.0
      %4530 = vmatpush1.msra.mxu0 0.0
      %4531 = vmatprep.subr.mxu0 0.0
      %4532 = vmatpush1.msra.mxu0 0.0
      %4533 = vmatprep.subr.mxu0 0.0
      %4534 = vmatpush1.msra.mxu0 0.0
      %4535 = vmatprep.subr.mxu0 0.0
      %4536 = vmatpush1.msra.mxu0 0.0
      %4537 = vmatprep.subr.mxu0 0.0
      %4538 = vmatpush1.msra.mxu0 0.0
      %4539 = vmatprep.subr.mxu0 0.0
      %4540 = vmatpush1.msra.mxu0 0.0
      %4541 = vmatprep.subr.mxu0 0.0
      %4542 = vmatpush1.msra.mxu0 0.0
      %4543 = vmatprep.subr.mxu0 0.0
      %4544 = vmatpush1.msra.mxu0 0.0
      %4545 = vmatprep.subr.mxu0 0.0
      %4546 = vmatpush1.msra.mxu0 0.0
      %4547 = vmatprep.mubr.f32.mxu0 0.0
      %v4548 = vand.u32 %v4014, 4294901760
      %v4549 = vsub.f32 %v4014, %v4548
      %v4550 = vand.u32 %v4549, 4294901760
      %v4551 = vsub.f32 %v4549, %v4550
      %v4552 = vand.u32 %v4551, 4294901760
      %4553 = vmatmul.mubr.f32.gmra.mrb[0].mxu0 %v4552
      %v4554 = vpop.f32.mrb[0].mxu0
      %v4555 = vadd.f32 0.0, %v4554
      %v4556 = vpop.f32.mrb[0].mxu0
      %4557 = vdwg.mxu0
      %4558 = vmatprep.subr.mxu0 0.0
      %v4559 = vand.u32 %v4007, 4294901760
      %v4560 = vsub.f32 %v4007, %v4559
      %v4561 = vand.u32 %v4560, 4294901760
      %v4562 = vsub.f32 %v4560, %v4561
      %v4563 = vand.u32 %v4562, 4294901760
      %4564 = vmatpush1.msra.mxu0 %v4563
      %4565 = vmatprep.subr.mxu0 0.0
      %v4566 = vand.u32 %v4479, 4294901760
      %v4567 = vsub.f32 %v4479, %v4566
      %v4568 = vand.u32 %v4567, 4294901760
      %v4569 = vsub.f32 %v4567, %v4568
      %v4570 = vand.u32 %v4569, 4294901760
      %4571 = vmatpush1.msra.mxu0 %v4570
      %4572 = vmatprep.subr.mxu0 0.0
      %4573 = vmatpush1.msra.mxu0 0.0
      %4574 = vmatprep.subr.mxu0 0.0
      %4575 = vmatpush1.msra.mxu0 0.0
      %4576 = vmatprep.subr.mxu0 0.0
      %4577 = vmatpush1.msra.mxu0 0.0
      %4578 = vmatprep.subr.mxu0 0.0
      %4579 = vmatpush1.msra.mxu0 0.0
      %4580 = vmatprep.subr.mxu0 0.0
      %4581 = vmatpush1.msra.mxu0 0.0
      %4582 = vmatprep.subr.mxu0 0.0
      %4583 = vmatpush1.msra.mxu0 0.0
      %4584 = vmatprep.subr.mxu0 0.0
      %4585 = vmatpush1.msra.mxu0 0.0
      %4586 = vmatprep.subr.mxu0 0.0
      %4587 = vmatpush1.msra.mxu0 0.0
      %4588 = vmatprep.subr.mxu0 0.0
      %4589 = vmatpush1.msra.mxu0 0.0
      %4590 = vmatprep.subr.mxu0 0.0
      %4591 = vmatpush1.msra.mxu0 0.0
      %4592 = vmatprep.subr.mxu0 0.0
      %4593 = vmatpush1.msra.mxu0 0.0
      %4594 = vmatprep.subr.mxu0 0.0
      %4595 = vmatpush1.msra.mxu0 0.0
      %4596 = vmatprep.subr.mxu0 0.0
      %4597 = vmatpush1.msra.mxu0 0.0
      %4598 = vmatprep.subr.mxu0 0.0
      %4599 = vmatpush1.msra.mxu0 0.0
      %4600 = vmatprep.subr.mxu0 0.0
      %4601 = vmatpush1.msra.mxu0 0.0
      %4602 = vmatprep.subr.mxu0 0.0
      %4603 = vmatpush1.msra.mxu0 0.0
      %4604 = vmatprep.subr.mxu0 0.0
      %4605 = vmatpush1.msra.mxu0 0.0
      %4606 = vmatprep.subr.mxu0 0.0
      %4607 = vmatpush1.msra.mxu0 0.0
      %4608 = vmatprep.subr.mxu0 0.0
      %4609 = vmatpush1.msra.mxu0 0.0
      %4610 = vmatprep.subr.mxu0 0.0
      %4611 = vmatpush1.msra.mxu0 0.0
      %4612 = vmatprep.subr.mxu0 0.0
      %4613 = vmatpush1.msra.mxu0 0.0
      %4614 = vmatprep.subr.mxu0 0.0
      %4615 = vmatpush1.msra.mxu0 0.0
      %4616 = vmatprep.subr.mxu0 0.0
      %4617 = vmatpush1.msra.mxu0 0.0
      %4618 = vmatprep.subr.mxu0 0.0
      %4619 = vmatpush1.msra.mxu0 0.0
      %4620 = vmatprep.subr.mxu0 0.0
      %4621 = vmatpush1.msra.mxu0 0.0
      %4622 = vmatprep.subr.mxu0 0.0
      %4623 = vmatpush1.msra.mxu0 0.0
      %4624 = vmatprep.subr.mxu0 0.0
      %4625 = vmatpush1.msra.mxu0 0.0
      %4626 = vmatprep.subr.mxu0 0.0
      %4627 = vmatpush1.msra.mxu0 0.0
      %4628 = vmatprep.subr.mxu0 0.0
      %4629 = vmatpush1.msra.mxu0 0.0
      %4630 = vmatprep.subr.mxu0 0.0
      %4631 = vmatpush1.msra.mxu0 0.0
      %4632 = vmatprep.mubr.f32.mxu0 0.0
      %v4633 = vand.u32 %v4014, 4294901760
      %4634 = vmatmul.mubr.f32.gmra.mrb[0].mxu0 %v4633
      %v4635 = vpop.f32.mrb[0].mxu0
      %v4636 = vadd.f32 %v4555, %v4635
      %v4637 = vpop.f32.mrb[0].mxu0
      %4638 = vdwg.mxu0
      %4639 = vmatprep.subr.mxu0 0.0
      %v4640 = vand.u32 %v4007, 4294901760
      %v4641 = vsub.f32 %v4007, %v4640
      %4642 = vmatpush1.msra.mxu0 %v4641
      %4643 = vmatprep.subr.mxu0 0.0
      %v4644 = vand.u32 %v4479, 4294901760
      %v4645 = vsub.f32 %v4479, %v4644
      %4646 = vmatpush1.msra.mxu0 %v4645
      %4647 = vmatprep.subr.mxu0 0.0
      %4648 = vmatpush1.msra.mxu0 0.0
      %4649 = vmatprep.subr.mxu0 0.0
      %4650 = vmatpush1.msra.mxu0 0.0
      %4651 = vmatprep.subr.mxu0 0.0
      %4652 = vmatpush1.msra.mxu0 0.0
      %4653 = vmatprep.subr.mxu0 0.0
      %4654 = vmatpush1.msra.mxu0 0.0
      %4655 = vmatprep.subr.mxu0 0.0
      %4656 = vmatpush1.msra.mxu0 0.0
      %4657 = vmatprep.subr.mxu0 0.0
      %4658 = vmatpush1.msra.mxu0 0.0
      %4659 = vmatprep.subr.mxu0 0.0
      %4660 = vmatpush1.msra.mxu0 0.0
      %4661 = vmatprep.subr.mxu0 0.0
      %4662 = vmatpush1.msra.mxu0 0.0
      %4663 = vmatprep.subr.mxu0 0.0
      %4664 = vmatpush1.msra.mxu0 0.0
      %4665 = vmatprep.subr.mxu0 0.0
      %4666 = vmatpush1.msra.mxu0 0.0
      %4667 = vmatprep.subr.mxu0 0.0
      %4668 = vmatpush1.msra.mxu0 0.0
      %4669 = vmatprep.subr.mxu0 0.0
      %4670 = vmatpush1.msra.mxu0 0.0
      %4671 = vmatprep.subr.mxu0 0.0
      %4672 = vmatpush1.msra.mxu0 0.0
      %4673 = vmatprep.subr.mxu0 0.0
      %4674 = vmatpush1.msra.mxu0 0.0
      %4675 = vmatprep.subr.mxu0 0.0
      %4676 = vmatpush1.msra.mxu0 0.0
      %4677 = vmatprep.subr.mxu0 0.0
      %4678 = vmatpush1.msra.mxu0 0.0
      %4679 = vmatprep.subr.mxu0 0.0
      %4680 = vmatpush1.msra.mxu0 0.0
      %4681 = vmatprep.subr.mxu0 0.0
      %4682 = vmatpush1.msra.mxu0 0.0
      %4683 = vmatprep.subr.mxu0 0.0
      %4684 = vmatpush1.msra.mxu0 0.0
      %4685 = vmatprep.subr.mxu0 0.0
      %4686 = vmatpush1.msra.mxu0 0.0
      %4687 = vmatprep.subr.mxu0 0.0
      %4688 = vmatpush1.msra.mxu0 0.0
      %4689 = vmatprep.subr.mxu0 0.0
      %4690 = vmatpush1.msra.mxu0 0.0
      %4691 = vmatprep.subr.mxu0 0.0
      %4692 = vmatpush1.msra.mxu0 0.0
      %4693 = vmatprep.subr.mxu0 0.0
      %4694 = vmatpush1.msra.mxu0 0.0
      %4695 = vmatprep.subr.mxu0 0.0
      %4696 = vmatpush1.msra.mxu0 0.0
      %4697 = vmatprep.subr.mxu0 0.0
      %4698 = vmatpush1.msra.mxu0 0.0
      %4699 = vmatprep.subr.mxu0 0.0
      %4700 = vmatpush1.msra.mxu0 0.0
      %4701 = vmatprep.subr.mxu0 0.0
      %4702 = vmatpush1.msra.mxu0 0.0
      %4703 = vmatprep.subr.mxu0 0.0
      %4704 = vmatpush1.msra.mxu0 0.0
      %4705 = vmatprep.subr.mxu0 0.0
      %4706 = vmatpush1.msra.mxu0 0.0
      %4707 = vmatprep.mubr.f32.mxu0 0.0
      %v4708 = vand.u32 %v4014, 4294901760
      %v4709 = vsub.f32 %v4014, %v4708
      %4710 = vmatmul.mubr.f32.gmra.mrb[0].mxu0 %v4709
      %v4711 = vpop.f32.mrb[0].mxu0
      %v4712 = vadd.f32 %v4636, %v4711
      %v4713 = vpop.f32.mrb[0].mxu0
      %4714 = vdwg.mxu0
      %4715 = vmatprep.subr.mxu0 0.0
      %v4716 = vand.u32 %v4007, 4294901760
      %4717 = vmatpush1.msra.mxu0 %v4716
      %4718 = vmatprep.subr.mxu0 0.0
      %v4719 = vand.u32 %v4479, 4294901760
      %4720 = vmatpush1.msra.mxu0 %v4719
      %4721 = vmatprep.subr.mxu0 0.0
      %4722 = vmatpush1.msra.mxu0 0.0
      %4723 = vmatprep.subr.mxu0 0.0
      %4724 = vmatpush1.msra.mxu0 0.0
      %4725 = vmatprep.subr.mxu0 0.0
      %4726 = vmatpush1.msra.mxu0 0.0
      %4727 = vmatprep.subr.mxu0 0.0
      %4728 = vmatpush1.msra.mxu0 0.0
      %4729 = vmatprep.subr.mxu0 0.0
      %4730 = vmatpush1.msra.mxu0 0.0
      %4731 = vmatprep.subr.mxu0 0.0
      %4732 = vmatpush1.msra.mxu0 0.0
      %4733 = vmatprep.subr.mxu0 0.0
      %4734 = vmatpush1.msra.mxu0 0.0
      %4735 = vmatprep.subr.mxu0 0.0
      %4736 = vmatpush1.msra.mxu0 0.0
      %4737 = vmatprep.subr.mxu0 0.0
      %4738 = vmatpush1.msra.mxu0 0.0
      %4739 = vmatprep.subr.mxu0 0.0
      %4740 = vmatpush1.msra.mxu0 0.0
      %4741 = vmatprep.subr.mxu0 0.0
      %4742 = vmatpush1.msra.mxu0 0.0
      %4743 = vmatprep.subr.mxu0 0.0
      %4744 = vmatpush1.msra.mxu0 0.0
      %4745 = vmatprep.subr.mxu0 0.0
      %4746 = vmatpush1.msra.mxu0 0.0
      %4747 = vmatprep.subr.mxu0 0.0
      %4748 = vmatpush1.msra.mxu0 0.0
      %4749 = vmatprep.subr.mxu0 0.0
      %4750 = vmatpush1.msra.mxu0 0.0
      %4751 = vmatprep.subr.mxu0 0.0
      %4752 = vmatpush1.msra.mxu0 0.0
      %4753 = vmatprep.subr.mxu0 0.0
      %4754 = vmatpush1.msra.mxu0 0.0
      %4755 = vmatprep.subr.mxu0 0.0
      %4756 = vmatpush1.msra.mxu0 0.0
      %4757 = vmatprep.subr.mxu0 0.0
      %4758 = vmatpush1.msra.mxu0 0.0
      %4759 = vmatprep.subr.mxu0 0.0
      %4760 = vmatpush1.msra.mxu0 0.0
      %4761 = vmatprep.subr.mxu0 0.0
      %4762 = vmatpush1.msra.mxu0 0.0
      %4763 = vmatprep.subr.mxu0 0.0
      %4764 = vmatpush1.msra.mxu0 0.0
      %4765 = vmatprep.subr.mxu0 0.0
      %4766 = vmatpush1.msra.mxu0 0.0
      %4767 = vmatprep.subr.mxu0 0.0
      %4768 = vmatpush1.msra.mxu0 0.0
      %4769 = vmatprep.subr.mxu0 0.0
      %4770 = vmatpush1.msra.mxu0 0.0
      %4771 = vmatprep.subr.mxu0 0.0
      %4772 = vmatpush1.msra.mxu0 0.0
      %4773 = vmatprep.subr.mxu0 0.0
      %4774 = vmatpush1.msra.mxu0 0.0
      %4775 = vmatprep.subr.mxu0 0.0
      %4776 = vmatpush1.msra.mxu0 0.0
      %4777 = vmatprep.subr.mxu0 0.0
      %4778 = vmatpush1.msra.mxu0 0.0
      %4779 = vmatprep.subr.mxu0 0.0
      %4780 = vmatpush1.msra.mxu0 0.0
      %4781 = vmatprep.mubr.f32.mxu0 0.0
      %v4782 = vand.u32 %v4014, 4294901760
      %v4783 = vsub.f32 %v4014, %v4782
      %v4784 = vand.u32 %v4783, 4294901760
      %4785 = vmatmul.mubr.f32.gmra.mrb[0].mxu0 %v4784
      %v4786 = vpop.f32.mrb[0].mxu0
      %v4787 = vadd.f32 %v4712, %v4786
      %v4788 = vpop.f32.mrb[0].mxu0
      %4789 = vdwg.mxu0
      %4790 = vmatprep.subr.mxu0 0.0
      %v4791 = vand.u32 %v4007, 4294901760
      %v4792 = vsub.f32 %v4007, %v4791
      %v4793 = vand.u32 %v4792, 4294901760
      %4794 = vmatpush1.msra.mxu0 %v4793
      %4795 = vmatprep.subr.mxu0 0.0
      %v4796 = vand.u32 %v4479, 4294901760
      %v4797 = vsub.f32 %v4479, %v4796
      %v4798 = vand.u32 %v4797, 4294901760
      %4799 = vmatpush1.msra.mxu0 %v4798
      %4800 = vmatprep.subr.mxu0 0.0
      %4801 = vmatpush1.msra.mxu0 0.0
      %4802 = vmatprep.subr.mxu0 0.0
      %4803 = vmatpush1.msra.mxu0 0.0
      %4804 = vmatprep.subr.mxu0 0.0
      %4805 = vmatpush1.msra.mxu0 0.0
      %4806 = vmatprep.subr.mxu0 0.0
      %4807 = vmatpush1.msra.mxu0 0.0
      %4808 = vmatprep.subr.mxu0 0.0
      %4809 = vmatpush1.msra.mxu0 0.0
      %4810 = vmatprep.subr.mxu0 0.0
      %4811 = vmatpush1.msra.mxu0 0.0
      %4812 = vmatprep.subr.mxu0 0.0
      %4813 = vmatpush1.msra.mxu0 0.0
      %4814 = vmatprep.subr.mxu0 0.0
      %4815 = vmatpush1.msra.mxu0 0.0
      %4816 = vmatprep.subr.mxu0 0.0
      %4817 = vmatpush1.msra.mxu0 0.0
      %4818 = vmatprep.subr.mxu0 0.0
      %4819 = vmatpush1.msra.mxu0 0.0
      %4820 = vmatprep.subr.mxu0 0.0
      %4821 = vmatpush1.msra.mxu0 0.0
      %4822 = vmatprep.subr.mxu0 0.0
      %4823 = vmatpush1.msra.mxu0 0.0
      %4824 = vmatprep.subr.mxu0 0.0
      %4825 = vmatpush1.msra.mxu0 0.0
      %4826 = vmatprep.subr.mxu0 0.0
      %4827 = vmatpush1.msra.mxu0 0.0
      %4828 = vmatprep.subr.mxu0 0.0
      %4829 = vmatpush1.msra.mxu0 0.0
      %4830 = vmatprep.subr.mxu0 0.0
      %4831 = vmatpush1.msra.mxu0 0.0
      %4832 = vmatprep.subr.mxu0 0.0
      %4833 = vmatpush1.msra.mxu0 0.0
      %4834 = vmatprep.subr.mxu0 0.0
      %4835 = vmatpush1.msra.mxu0 0.0
      %4836 = vmatprep.subr.mxu0 0.0
      %4837 = vmatpush1.msra.mxu0 0.0
      %4838 = vmatprep.subr.mxu0 0.0
      %4839 = vmatpush1.msra.mxu0 0.0
      %4840 = vmatprep.subr.mxu0 0.0
      %4841 = vmatpush1.msra.mxu0 0.0
      %4842 = vmatprep.subr.mxu0 0.0
      %4843 = vmatpush1.msra.mxu0 0.0
      %4844 = vmatprep.subr.mxu0 0.0
      %4845 = vmatpush1.msra.mxu0 0.0
      %4846 = vmatprep.subr.mxu0 0.0
      %4847 = vmatpush1.msra.mxu0 0.0
      %4848 = vmatprep.subr.mxu0 0.0
      %4849 = vmatpush1.msra.mxu0 0.0
      %4850 = vmatprep.subr.mxu0 0.0
      %4851 = vmatpush1.msra.mxu0 0.0
      %4852 = vmatprep.subr.mxu0 0.0
      %4853 = vmatpush1.msra.mxu0 0.0
      %4854 = vmatprep.subr.mxu0 0.0
      %4855 = vmatpush1.msra.mxu0 0.0
      %4856 = vmatprep.subr.mxu0 0.0
      %4857 = vmatpush1.msra.mxu0 0.0
      %4858 = vmatprep.subr.mxu0 0.0
      %4859 = vmatpush1.msra.mxu0 0.0
      %4860 = vmatprep.mubr.f32.mxu0 0.0
      %v4861 = vand.u32 %v4014, 4294901760
      %4862 = vmatmul.mubr.f32.gmra.mrb[0].mxu0 %v4861
      %v4863 = vpop.f32.mrb[0].mxu0
      %v4864 = vadd.f32 %v4787, %v4863
      %v4865 = vpop.f32.mrb[0].mxu0
      %4866 = vdwg.mxu0
      %4867 = vmatprep.subr.mxu0 0.0
      %v4868 = vand.u32 %v4007, 4294901760
      %4869 = vmatpush1.msra.mxu0 %v4868
      %4870 = vmatprep.subr.mxu0 0.0
      %v4871 = vand.u32 %v4479, 4294901760
      %4872 = vmatpush1.msra.mxu0 %v4871
      %4873 = vmatprep.subr.mxu0 0.0
      %4874 = vmatpush1.msra.mxu0 0.0
      %4875 = vmatprep.subr.mxu0 0.0
      %4876 = vmatpush1.msra.mxu0 0.0
      %4877 = vmatprep.subr.mxu0 0.0
      %4878 = vmatpush1.msra.mxu0 0.0
      %4879 = vmatprep.subr.mxu0 0.0
      %4880 = vmatpush1.msra.mxu0 0.0
      %4881 = vmatprep.subr.mxu0 0.0
      %4882 = vmatpush1.msra.mxu0 0.0
      %4883 = vmatprep.subr.mxu0 0.0
      %4884 = vmatpush1.msra.mxu0 0.0
      %4885 = vmatprep.subr.mxu0 0.0
      %4886 = vmatpush1.msra.mxu0 0.0
      %4887 = vmatprep.subr.mxu0 0.0
      %4888 = vmatpush1.msra.mxu0 0.0
      %4889 = vmatprep.subr.mxu0 0.0
      %4890 = vmatpush1.msra.mxu0 0.0
      %4891 = vmatprep.subr.mxu0 0.0
      %4892 = vmatpush1.msra.mxu0 0.0
      %4893 = vmatprep.subr.mxu0 0.0
      %4894 = vmatpush1.msra.mxu0 0.0
      %4895 = vmatprep.subr.mxu0 0.0
      %4896 = vmatpush1.msra.mxu0 0.0
      %4897 = vmatprep.subr.mxu0 0.0
      %4898 = vmatpush1.msra.mxu0 0.0
      %4899 = vmatprep.subr.mxu0 0.0
      %4900 = vmatpush1.msra.mxu0 0.0
      %4901 = vmatprep.subr.mxu0 0.0
      %4902 = vmatpush1.msra.mxu0 0.0
      %4903 = vmatprep.subr.mxu0 0.0
      %4904 = vmatpush1.msra.mxu0 0.0
      %4905 = vmatprep.subr.mxu0 0.0
      %4906 = vmatpush1.msra.mxu0 0.0
      %4907 = vmatprep.subr.mxu0 0.0
      %4908 = vmatpush1.msra.mxu0 0.0
      %4909 = vmatprep.subr.mxu0 0.0
      %4910 = vmatpush1.msra.mxu0 0.0
      %4911 = vmatprep.subr.mxu0 0.0
      %4912 = vmatpush1.msra.mxu0 0.0
      %4913 = vmatprep.subr.mxu0 0.0
      %4914 = vmatpush1.msra.mxu0 0.0
      %4915 = vmatprep.subr.mxu0 0.0
      %4916 = vmatpush1.msra.mxu0 0.0
      %4917 = vmatprep.subr.mxu0 0.0
      %4918 = vmatpush1.msra.mxu0 0.0
      %4919 = vmatprep.subr.mxu0 0.0
      %4920 = vmatpush1.msra.mxu0 0.0
      %4921 = vmatprep.subr.mxu0 0.0
      %4922 = vmatpush1.msra.mxu0 0.0
      %4923 = vmatprep.subr.mxu0 0.0
      %4924 = vmatpush1.msra.mxu0 0.0
      %4925 = vmatprep.subr.mxu0 0.0
      %4926 = vmatpush1.msra.mxu0 0.0
      %4927 = vmatprep.subr.mxu0 0.0
      %4928 = vmatpush1.msra.mxu0 0.0
      %4929 = vmatprep.subr.mxu0 0.0
      %4930 = vmatpush1.msra.mxu0 0.0
      %4931 = vmatprep.subr.mxu0 0.0
      %4932 = vmatpush1.msra.mxu0 0.0
      %4933 = vmatprep.mubr.f32.mxu0 0.0
      %v4934 = vand.u32 %v4014, 4294901760
      %4935 = vmatmul.mubr.f32.gmra.mrb[0].mxu0 %v4934
      %v4936 = vpop.f32.mrb[0].mxu0
      %v4937 = vadd.f32 %v4864, %v4936
      %v4938 = vpop.f32.mrb[0].mxu0
      %4939 = vdwg.mxu0
      %v4941 = vsel %vm2069, %v3990, 0
      %v4944 = vsel %vm2069, %v3991, 0
      %v4947 = vsel %vm1123, %v4475, 0
      %4949 = vmatprep.subr.mxu0 0.0
      %v4950 = vand.u32 %v4947, 4294901760
      %4951 = vmatpush1.msra.mxu0 %v4950
      %4952 = vmatprep.subr.mxu0 0.0
      %4953 = vmatpush1.msra.mxu0 0.0
      %4954 = vmatprep.subr.mxu0 0.0
      %4955 = vmatpush1.msra.mxu0 0.0
      %4956 = vmatprep.subr.mxu0 0.0
      %4957 = vmatpush1.msra.mxu0 0.0
      %4958 = vmatprep.subr.mxu0 0.0
      %4959 = vmatpush1.msra.mxu0 0.0
      %4960 = vmatprep.subr.mxu0 0.0
      %4961 = vmatpush1.msra.mxu0 0.0
      %4962 = vmatprep.subr.mxu0 0.0
      %4963 = vmatpush1.msra.mxu0 0.0
      %4964 = vmatprep.subr.mxu0 0.0
      %4965 = vmatpush1.msra.mxu0 0.0
      %4966 = vmatprep.subr.mxu0 0.0
      %4967 = vmatpush1.msra.mxu0 0.0
      %4968 = vmatprep.subr.mxu0 0.0
      %4969 = vmatpush1.msra.mxu0 0.0
      %4970 = vmatprep.subr.mxu0 0.0
      %4971 = vmatpush1.msra.mxu0 0.0
      %4972 = vmatprep.subr.mxu0 0.0
      %4973 = vmatpush1.msra.mxu0 0.0
      %4974 = vmatprep.subr.mxu0 0.0
      %4975 = vmatpush1.msra.mxu0 0.0
      %4976 = vmatprep.subr.mxu0 0.0
      %4977 = vmatpush1.msra.mxu0 0.0
      %4978 = vmatprep.subr.mxu0 0.0
      %4979 = vmatpush1.msra.mxu0 0.0
      %4980 = vmatprep.subr.mxu0 0.0
      %4981 = vmatpush1.msra.mxu0 0.0
      %4982 = vmatprep.subr.mxu0 0.0
      %4983 = vmatpush1.msra.mxu0 0.0
      %4984 = vmatprep.subr.mxu0 0.0
      %4985 = vmatpush1.msra.mxu0 0.0
      %4986 = vmatprep.subr.mxu0 0.0
      %4987 = vmatpush1.msra.mxu0 0.0
      %4988 = vmatprep.subr.mxu0 0.0
      %4989 = vmatpush1.msra.mxu0 0.0
      %4990 = vmatprep.subr.mxu0 0.0
      %4991 = vmatpush1.msra.mxu0 0.0
      %4992 = vmatprep.subr.mxu0 0.0
      %4993 = vmatpush1.msra.mxu0 0.0
      %4994 = vmatprep.subr.mxu0 0.0
      %4995 = vmatpush1.msra.mxu0 0.0
      %4996 = vmatprep.subr.mxu0 0.0
      %4997 = vmatpush1.msra.mxu0 0.0
      %4998 = vmatprep.subr.mxu0 0.0
      %4999 = vmatpush1.msra.mxu0 0.0
      %5000 = vmatprep.subr.mxu0 0.0
      %5001 = vmatpush1.msra.mxu0 0.0
      %5002 = vmatprep.subr.mxu0 0.0
      %5003 = vmatpush1.msra.mxu0 0.0
      %5004 = vmatprep.subr.mxu0 0.0
      %5005 = vmatpush1.msra.mxu0 0.0
      %5006 = vmatprep.subr.mxu0 0.0
      %5007 = vmatpush1.msra.mxu0 0.0
      %5008 = vmatprep.subr.mxu0 0.0
      %5009 = vmatpush1.msra.mxu0 0.0
      %5010 = vmatprep.subr.mxu0 0.0
      %5011 = vmatpush1.msra.mxu0 0.0
      %5012 = vmatprep.subr.mxu0 0.0
      %5013 = vmatpush1.msra.mxu0 0.0
      %5014 = vmatprep.mubr.f32.mxu0 0.0
      %v5015 = vand.u32 %v4941, 4294901760
      %v5016 = vsub.f32 %v4941, %v5015
      %v5017 = vand.u32 %v5016, 4294901760
      %v5018 = vsub.f32 %v5016, %v5017
      %v5019 = vand.u32 %v5018, 4294901760
      %5020 = vmatmul.mubr.f32.gmra.mrb[0].mxu0 %v5019
      %v5021 = vpop.f32.mrb[0].mxu0
      %v5022 = vadd.f32 0.0, %v5021
      %v5023 = vpop.f32.mrb[0].mxu0
      %5024 = vmatprep.mubr.f32.mxu0 0.0
      %v5025 = vand.u32 %v4944, 4294901760
      %v5026 = vsub.f32 %v4944, %v5025
      %v5027 = vand.u32 %v5026, 4294901760
      %v5028 = vsub.f32 %v5026, %v5027
      %v5029 = vand.u32 %v5028, 4294901760
      %5030 = vmatmul.mubr.f32.gmra.mrb[0].mxu0 %v5029
      %v5031 = vpop.f32.mrb[0].mxu0
      %v5032 = vadd.f32 0.0, %v5031
      %v5033 = vpop.f32.mrb[0].mxu0
      %5034 = vdwg.mxu0
      %5035 = vmatprep.subr.mxu0 0.0
      %v5036 = vand.u32 %v4947, 4294901760
      %v5037 = vsub.f32 %v4947, %v5036
      %v5038 = vand.u32 %v5037, 4294901760
      %v5039 = vsub.f32 %v5037, %v5038
      %v5040 = vand.u32 %v5039, 4294901760
      %5041 = vmatpush1.msra.mxu0 %v5040
      %5042 = vmatprep.subr.mxu0 0.0
      %5043 = vmatpush1.msra.mxu0 0.0
      %5044 = vmatprep.subr.mxu0 0.0
      %5045 = vmatpush1.msra.mxu0 0.0
      %5046 = vmatprep.subr.mxu0 0.0
      %5047 = vmatpush1.msra.mxu0 0.0
      %5048 = vmatprep.subr.mxu0 0.0
      %5049 = vmatpush1.msra.mxu0 0.0
      %5050 = vmatprep.subr.mxu0 0.0
      %5051 = vmatpush1.msra.mxu0 0.0
      %5052 = vmatprep.subr.mxu0 0.0
      %5053 = vmatpush1.msra.mxu0 0.0
      %5054 = vmatprep.subr.mxu0 0.0
      %5055 = vmatpush1.msra.mxu0 0.0
      %5056 = vmatprep.subr.mxu0 0.0
      %5057 = vmatpush1.msra.mxu0 0.0
      %5058 = vmatprep.subr.mxu0 0.0
      %5059 = vmatpush1.msra.mxu0 0.0
      %5060 = vmatprep.subr.mxu0 0.0
      %5061 = vmatpush1.msra.mxu0 0.0
      %5062 = vmatprep.subr.mxu0 0.0
      %5063 = vmatpush1.msra.mxu0 0.0
      %5064 = vmatprep.subr.mxu0 0.0
      %5065 = vmatpush1.msra.mxu0 0.0
      %5066 = vmatprep.subr.mxu0 0.0
      %5067 = vmatpush1.msra.mxu0 0.0
      %5068 = vmatprep.subr.mxu0 0.0
      %5069 = vmatpush1.msra.mxu0 0.0
      %5070 = vmatprep.subr.mxu0 0.0
      %5071 = vmatpush1.msra.mxu0 0.0
      %5072 = vmatprep.subr.mxu0 0.0
      %5073 = vmatpush1.msra.mxu0 0.0
      %5074 = vmatprep.subr.mxu0 0.0
      %5075 = vmatpush1.msra.mxu0 0.0
      %5076 = vmatprep.subr.mxu0 0.0
      %5077 = vmatpush1.msra.mxu0 0.0
      %5078 = vmatprep.subr.mxu0 0.0
      %5079 = vmatpush1.msra.mxu0 0.0
      %5080 = vmatprep.subr.mxu0 0.0
      %5081 = vmatpush1.msra.mxu0 0.0
      %5082 = vmatprep.subr.mxu0 0.0
      %5083 = vmatpush1.msra.mxu0 0.0
      %5084 = vmatprep.subr.mxu0 0.0
      %5085 = vmatpush1.msra.mxu0 0.0
      %5086 = vmatprep.subr.mxu0 0.0
      %5087 = vmatpush1.msra.mxu0 0.0
      %5088 = vmatprep.subr.mxu0 0.0
      %5089 = vmatpush1.msra.mxu0 0.0
      %5090 = vmatprep.subr.mxu0 0.0
      %5091 = vmatpush1.msra.mxu0 0.0
      %5092 = vmatprep.subr.mxu0 0.0
      %5093 = vmatpush1.msra.mxu0 0.0
      %5094 = vmatprep.subr.mxu0 0.0
      %5095 = vmatpush1.msra.mxu0 0.0
      %5096 = vmatprep.subr.mxu0 0.0
      %5097 = vmatpush1.msra.mxu0 0.0
      %5098 = vmatprep.subr.mxu0 0.0
      %5099 = vmatpush1.msra.mxu0 0.0
      %5100 = vmatprep.subr.mxu0 0.0
      %5101 = vmatpush1.msra.mxu0 0.0
      %5102 = vmatprep.subr.mxu0 0.0
      %5103 = vmatpush1.msra.mxu0 0.0
      %5104 = vmatprep.mubr.f32.mxu0 0.0
      %v5105 = vand.u32 %v4941, 4294901760
      %5106 = vmatmul.mubr.f32.gmra.mrb[0].mxu0 %v5105
      %v5107 = vpop.f32.mrb[0].mxu0
      %v5108 = vadd.f32 %v5022, %v5107
      %v5109 = vpop.f32.mrb[0].mxu0
      %5110 = vmatprep.mubr.f32.mxu0 0.0
      %v5111 = vand.u32 %v4944, 4294901760
      %5112 = vmatmul.mubr.f32.gmra.mrb[0].mxu0 %v5111
      %v5113 = vpop.f32.mrb[0].mxu0
      %v5114 = vadd.f32 %v5032, %v5113
      %v5115 = vpop.f32.mrb[0].mxu0
      %5116 = vdwg.mxu0
      %5117 = vmatprep.subr.mxu0 0.0
      %v5118 = vand.u32 %v4947, 4294901760
      %v5119 = vsub.f32 %v4947, %v5118
      %5120 = vmatpush1.msra.mxu0 %v5119
      %5121 = vmatprep.subr.mxu0 0.0
      %5122 = vmatpush1.msra.mxu0 0.0
      %5123 = vmatprep.subr.mxu0 0.0
      %5124 = vmatpush1.msra.mxu0 0.0
      %5125 = vmatprep.subr.mxu0 0.0
      %5126 = vmatpush1.msra.mxu0 0.0
      %5127 = vmatprep.subr.mxu0 0.0
      %5128 = vmatpush1.msra.mxu0 0.0
      %5129 = vmatprep.subr.mxu0 0.0
      %5130 = vmatpush1.msra.mxu0 0.0
      %5131 = vmatprep.subr.mxu0 0.0
      %5132 = vmatpush1.msra.mxu0 0.0
      %5133 = vmatprep.subr.mxu0 0.0
      %5134 = vmatpush1.msra.mxu0 0.0
      %5135 = vmatprep.subr.mxu0 0.0
      %5136 = vmatpush1.msra.mxu0 0.0
      %5137 = vmatprep.subr.mxu0 0.0
      %5138 = vmatpush1.msra.mxu0 0.0
      %5139 = vmatprep.subr.mxu0 0.0
      %5140 = vmatpush1.msra.mxu0 0.0
      %5141 = vmatprep.subr.mxu0 0.0
      %5142 = vmatpush1.msra.mxu0 0.0
      %5143 = vmatprep.subr.mxu0 0.0
      %5144 = vmatpush1.msra.mxu0 0.0
      %5145 = vmatprep.subr.mxu0 0.0
      %5146 = vmatpush1.msra.mxu0 0.0
      %5147 = vmatprep.subr.mxu0 0.0
      %5148 = vmatpush1.msra.mxu0 0.0
      %5149 = vmatprep.subr.mxu0 0.0
      %5150 = vmatpush1.msra.mxu0 0.0
      %5151 = vmatprep.subr.mxu0 0.0
      %5152 = vmatpush1.msra.mxu0 0.0
      %5153 = vmatprep.subr.mxu0 0.0
      %5154 = vmatpush1.msra.mxu0 0.0
      %5155 = vmatprep.subr.mxu0 0.0
      %5156 = vmatpush1.msra.mxu0 0.0
      %5157 = vmatprep.subr.mxu0 0.0
      %5158 = vmatpush1.msra.mxu0 0.0
      %5159 = vmatprep.subr.mxu0 0.0
      %5160 = vmatpush1.msra.mxu0 0.0
      %5161 = vmatprep.subr.mxu0 0.0
      %5162 = vmatpush1.msra.mxu0 0.0
      %5163 = vmatprep.subr.mxu0 0.0
      %5164 = vmatpush1.msra.mxu0 0.0
      %5165 = vmatprep.subr.mxu0 0.0
      %5166 = vmatpush1.msra.mxu0 0.0
      %5167 = vmatprep.subr.mxu0 0.0
      %5168 = vmatpush1.msra.mxu0 0.0
      %5169 = vmatprep.subr.mxu0 0.0
      %5170 = vmatpush1.msra.mxu0 0.0
      %5171 = vmatprep.subr.mxu0 0.0
      %5172 = vmatpush1.msra.mxu0 0.0
      %5173 = vmatprep.subr.mxu0 0.0
      %5174 = vmatpush1.msra.mxu0 0.0
      %5175 = vmatprep.subr.mxu0 0.0
      %5176 = vmatpush1.msra.mxu0 0.0
      %5177 = vmatprep.subr.mxu0 0.0
      %5178 = vmatpush1.msra.mxu0 0.0
      %5179 = vmatprep.subr.mxu0 0.0
      %5180 = vmatpush1.msra.mxu0 0.0
      %5181 = vmatprep.subr.mxu0 0.0
      %5182 = vmatpush1.msra.mxu0 0.0
      %5183 = vmatprep.mubr.f32.mxu0 0.0
      %v5184 = vand.u32 %v4941, 4294901760
      %v5185 = vsub.f32 %v4941, %v5184
      %5186 = vmatmul.mubr.f32.gmra.mrb[0].mxu0 %v5185
      %v5187 = vpop.f32.mrb[0].mxu0
      %v5188 = vadd.f32 %v5108, %v5187
      %v5189 = vpop.f32.mrb[0].mxu0
      %5190 = vmatprep.mubr.f32.mxu0 0.0
      %v5191 = vand.u32 %v4944, 4294901760
      %v5192 = vsub.f32 %v4944, %v5191
      %5193 = vmatmul.mubr.f32.gmra.mrb[0].mxu0 %v5192
      %v5194 = vpop.f32.mrb[0].mxu0
      %v5195 = vadd.f32 %v5114, %v5194
      %v5196 = vpop.f32.mrb[0].mxu0
      %5197 = vdwg.mxu0
      %5198 = vmatprep.subr.mxu0 0.0
      %v5199 = vand.u32 %v4947, 4294901760
      %5200 = vmatpush1.msra.mxu0 %v5199
      %5201 = vmatprep.subr.mxu0 0.0
      %5202 = vmatpush1.msra.mxu0 0.0
      %5203 = vmatprep.subr.mxu0 0.0
      %5204 = vmatpush1.msra.mxu0 0.0
      %5205 = vmatprep.subr.mxu0 0.0
      %5206 = vmatpush1.msra.mxu0 0.0
      %5207 = vmatprep.subr.mxu0 0.0
      %5208 = vmatpush1.msra.mxu0 0.0
      %5209 = vmatprep.subr.mxu0 0.0
      %5210 = vmatpush1.msra.mxu0 0.0
      %5211 = vmatprep.subr.mxu0 0.0
      %5212 = vmatpush1.msra.mxu0 0.0
      %5213 = vmatprep.subr.mxu0 0.0
      %5214 = vmatpush1.msra.mxu0 0.0
      %5215 = vmatprep.subr.mxu0 0.0
      %5216 = vmatpush1.msra.mxu0 0.0
      %5217 = vmatprep.subr.mxu0 0.0
      %5218 = vmatpush1.msra.mxu0 0.0
      %5219 = vmatprep.subr.mxu0 0.0
      %5220 = vmatpush1.msra.mxu0 0.0
      %5221 = vmatprep.subr.mxu0 0.0
      %5222 = vmatpush1.msra.mxu0 0.0
      %5223 = vmatprep.subr.mxu0 0.0
      %5224 = vmatpush1.msra.mxu0 0.0
      %5225 = vmatprep.subr.mxu0 0.0
      %5226 = vmatpush1.msra.mxu0 0.0
      %5227 = vmatprep.subr.mxu0 0.0
      %5228 = vmatpush1.msra.mxu0 0.0
      %5229 = vmatprep.subr.mxu0 0.0
      %5230 = vmatpush1.msra.mxu0 0.0
      %5231 = vmatprep.subr.mxu0 0.0
      %5232 = vmatpush1.msra.mxu0 0.0
      %5233 = vmatprep.subr.mxu0 0.0
      %5234 = vmatpush1.msra.mxu0 0.0
      %5235 = vmatprep.subr.mxu0 0.0
      %5236 = vmatpush1.msra.mxu0 0.0
      %5237 = vmatprep.subr.mxu0 0.0
      %5238 = vmatpush1.msra.mxu0 0.0
      %5239 = vmatprep.subr.mxu0 0.0
      %5240 = vmatpush1.msra.mxu0 0.0
      %5241 = vmatprep.subr.mxu0 0.0
      %5242 = vmatpush1.msra.mxu0 0.0
      %5243 = vmatprep.subr.mxu0 0.0
      %5244 = vmatpush1.msra.mxu0 0.0
      %5245 = vmatprep.subr.mxu0 0.0
      %5246 = vmatpush1.msra.mxu0 0.0
      %5247 = vmatprep.subr.mxu0 0.0
      %5248 = vmatpush1.msra.mxu0 0.0
      %5249 = vmatprep.subr.mxu0 0.0
      %5250 = vmatpush1.msra.mxu0 0.0
      %5251 = vmatprep.subr.mxu0 0.0
      %5252 = vmatpush1.msra.mxu0 0.0
      %5253 = vmatprep.subr.mxu0 0.0
      %5254 = vmatpush1.msra.mxu0 0.0
      %5255 = vmatprep.subr.mxu0 0.0
      %5256 = vmatpush1.msra.mxu0 0.0
      %5257 = vmatprep.subr.mxu0 0.0
      %5258 = vmatpush1.msra.mxu0 0.0
      %5259 = vmatprep.subr.mxu0 0.0
      %5260 = vmatpush1.msra.mxu0 0.0
      %5261 = vmatprep.subr.mxu0 0.0
      %5262 = vmatpush1.msra.mxu0 0.0
      %5263 = vmatprep.mubr.f32.mxu0 0.0
      %v5264 = vand.u32 %v4941, 4294901760
      %v5265 = vsub.f32 %v4941, %v5264
      %v5266 = vand.u32 %v5265, 4294901760
      %5267 = vmatmul.mubr.f32.gmra.mrb[0].mxu0 %v5266
      %v5268 = vpop.f32.mrb[0].mxu0
      %v5269 = vadd.f32 %v5188, %v5268
      %v5270 = vpop.f32.mrb[0].mxu0
      %5271 = vmatprep.mubr.f32.mxu0 0.0
      %v5272 = vand.u32 %v4944, 4294901760
      %v5273 = vsub.f32 %v4944, %v5272
      %v5274 = vand.u32 %v5273, 4294901760
      %5275 = vmatmul.mubr.f32.gmra.mrb[0].mxu0 %v5274
      %v5276 = vpop.f32.mrb[0].mxu0
      %v5277 = vadd.f32 %v5195, %v5276
      %v5278 = vpop.f32.mrb[0].mxu0
      %5279 = vdwg.mxu0
      %5280 = vmatprep.subr.mxu0 0.0
      %v5281 = vand.u32 %v4947, 4294901760
      %v5282 = vsub.f32 %v4947, %v5281
      %v5283 = vand.u32 %v5282, 4294901760
      %5284 = vmatpush1.msra.mxu0 %v5283
      %5285 = vmatprep.subr.mxu0 0.0
      %5286 = vmatpush1.msra.mxu0 0.0
      %5287 = vmatprep.subr.mxu0 0.0
      %5288 = vmatpush1.msra.mxu0 0.0
      %5289 = vmatprep.subr.mxu0 0.0
      %5290 = vmatpush1.msra.mxu0 0.0
      %5291 = vmatprep.subr.mxu0 0.0
      %5292 = vmatpush1.msra.mxu0 0.0
      %5293 = vmatprep.subr.mxu0 0.0
      %5294 = vmatpush1.msra.mxu0 0.0
      %5295 = vmatprep.subr.mxu0 0.0
      %5296 = vmatpush1.msra.mxu0 0.0
      %5297 = vmatprep.subr.mxu0 0.0
      %5298 = vmatpush1.msra.mxu0 0.0
      %5299 = vmatprep.subr.mxu0 0.0
      %5300 = vmatpush1.msra.mxu0 0.0
      %5301 = vmatprep.subr.mxu0 0.0
      %5302 = vmatpush1.msra.mxu0 0.0
      %5303 = vmatprep.subr.mxu0 0.0
      %5304 = vmatpush1.msra.mxu0 0.0
      %5305 = vmatprep.subr.mxu0 0.0
      %5306 = vmatpush1.msra.mxu0 0.0
      %5307 = vmatprep.subr.mxu0 0.0
      %5308 = vmatpush1.msra.mxu0 0.0
      %5309 = vmatprep.subr.mxu0 0.0
      %5310 = vmatpush1.msra.mxu0 0.0
      %5311 = vmatprep.subr.mxu0 0.0
      %5312 = vmatpush1.msra.mxu0 0.0
      %5313 = vmatprep.subr.mxu0 0.0
      %5314 = vmatpush1.msra.mxu0 0.0
      %5315 = vmatprep.subr.mxu0 0.0
      %5316 = vmatpush1.msra.mxu0 0.0
      %5317 = vmatprep.subr.mxu0 0.0
      %5318 = vmatpush1.msra.mxu0 0.0
      %5319 = vmatprep.subr.mxu0 0.0
      %5320 = vmatpush1.msra.mxu0 0.0
      %5321 = vmatprep.subr.mxu0 0.0
      %5322 = vmatpush1.msra.mxu0 0.0
      %5323 = vmatprep.subr.mxu0 0.0
      %5324 = vmatpush1.msra.mxu0 0.0
      %5325 = vmatprep.subr.mxu0 0.0
      %5326 = vmatpush1.msra.mxu0 0.0
      %5327 = vmatprep.subr.mxu0 0.0
      %5328 = vmatpush1.msra.mxu0 0.0
      %5329 = vmatprep.subr.mxu0 0.0
      %5330 = vmatpush1.msra.mxu0 0.0
      %5331 = vmatprep.subr.mxu0 0.0
      %5332 = vmatpush1.msra.mxu0 0.0
      %5333 = vmatprep.subr.mxu0 0.0
      %5334 = vmatpush1.msra.mxu0 0.0
      %5335 = vmatprep.subr.mxu0 0.0
      %5336 = vmatpush1.msra.mxu0 0.0
      %5337 = vmatprep.subr.mxu0 0.0
      %5338 = vmatpush1.msra.mxu0 0.0
      %5339 = vmatprep.subr.mxu0 0.0
      %5340 = vmatpush1.msra.mxu0 0.0
      %5341 = vmatprep.subr.mxu0 0.0
      %5342 = vmatpush1.msra.mxu0 0.0
      %5343 = vmatprep.subr.mxu0 0.0
      %5344 = vmatpush1.msra.mxu0 0.0
      %5345 = vmatprep.subr.mxu0 0.0
      %5346 = vmatpush1.msra.mxu0 0.0
      %5347 = vmatprep.mubr.f32.mxu0 0.0
      %v5348 = vand.u32 %v4941, 4294901760
      %5349 = vmatmul.mubr.f32.gmra.mrb[0].mxu0 %v5348
      %v5350 = vpop.f32.mrb[0].mxu0
      %v5351 = vadd.f32 %v5269, %v5350
      %v5352 = vpop.f32.mrb[0].mxu0
      %5353 = vmatprep.mubr.f32.mxu0 0.0
      %v5354 = vand.u32 %v4944, 4294901760
      %5355 = vmatmul.mubr.f32.gmra.mrb[0].mxu0 %v5354
      %v5356 = vpop.f32.mrb[0].mxu0
      %v5357 = vadd.f32 %v5277, %v5356
      %v5358 = vpop.f32.mrb[0].mxu0
      %5359 = vdwg.mxu0
      %5360 = vmatprep.subr.mxu0 0.0
      %v5361 = vand.u32 %v4947, 4294901760
      %5362 = vmatpush1.msra.mxu0 %v5361
      %5363 = vmatprep.subr.mxu0 0.0
      %5364 = vmatpush1.msra.mxu0 0.0
      %5365 = vmatprep.subr.mxu0 0.0
      %5366 = vmatpush1.msra.mxu0 0.0
      %5367 = vmatprep.subr.mxu0 0.0
      %5368 = vmatpush1.msra.mxu0 0.0
      %5369 = vmatprep.subr.mxu0 0.0
      %5370 = vmatpush1.msra.mxu0 0.0
      %5371 = vmatprep.subr.mxu0 0.0
      %5372 = vmatpush1.msra.mxu0 0.0
      %5373 = vmatprep.subr.mxu0 0.0
      %5374 = vmatpush1.msra.mxu0 0.0
      %5375 = vmatprep.subr.mxu0 0.0
      %5376 = vmatpush1.msra.mxu0 0.0
      %5377 = vmatprep.subr.mxu0 0.0
      %5378 = vmatpush1.msra.mxu0 0.0
      %5379 = vmatprep.subr.mxu0 0.0
      %5380 = vmatpush1.msra.mxu0 0.0
      %5381 = vmatprep.subr.mxu0 0.0
      %5382 = vmatpush1.msra.mxu0 0.0
      %5383 = vmatprep.subr.mxu0 0.0
      %5384 = vmatpush1.msra.mxu0 0.0
      %5385 = vmatprep.subr.mxu0 0.0
      %5386 = vmatpush1.msra.mxu0 0.0
      %5387 = vmatprep.subr.mxu0 0.0
      %5388 = vmatpush1.msra.mxu0 0.0
      %5389 = vmatprep.subr.mxu0 0.0
      %5390 = vmatpush1.msra.mxu0 0.0
      %5391 = vmatprep.subr.mxu0 0.0
      %5392 = vmatpush1.msra.mxu0 0.0
      %5393 = vmatprep.subr.mxu0 0.0
      %5394 = vmatpush1.msra.mxu0 0.0
      %5395 = vmatprep.subr.mxu0 0.0
      %5396 = vmatpush1.msra.mxu0 0.0
      %5397 = vmatprep.subr.mxu0 0.0
      %5398 = vmatpush1.msra.mxu0 0.0
      %5399 = vmatprep.subr.mxu0 0.0
      %5400 = vmatpush1.msra.mxu0 0.0
      %5401 = vmatprep.subr.mxu0 0.0
      %5402 = vmatpush1.msra.mxu0 0.0
      %5403 = vmatprep.subr.mxu0 0.0
      %5404 = vmatpush1.msra.mxu0 0.0
      %5405 = vmatprep.subr.mxu0 0.0
      %5406 = vmatpush1.msra.mxu0 0.0
      %5407 = vmatprep.subr.mxu0 0.0
      %5408 = vmatpush1.msra.mxu0 0.0
      %5409 = vmatprep.subr.mxu0 0.0
      %5410 = vmatpush1.msra.mxu0 0.0
      %5411 = vmatprep.subr.mxu0 0.0
      %5412 = vmatpush1.msra.mxu0 0.0
      %5413 = vmatprep.subr.mxu0 0.0
      %5414 = vmatpush1.msra.mxu0 0.0
      %5415 = vmatprep.subr.mxu0 0.0
      %5416 = vmatpush1.msra.mxu0 0.0
      %5417 = vmatprep.subr.mxu0 0.0
      %5418 = vmatpush1.msra.mxu0 0.0
      %5419 = vmatprep.subr.mxu0 0.0
      %5420 = vmatpush1.msra.mxu0 0.0
      %5421 = vmatprep.subr.mxu0 0.0
      %5422 = vmatpush1.msra.mxu0 0.0
      %5423 = vmatprep.subr.mxu0 0.0
      %5424 = vmatpush1.msra.mxu0 0.0
      %5425 = vmatprep.mubr.f32.mxu0 0.0
      %v5426 = vand.u32 %v4941, 4294901760
      %5427 = vmatmul.mubr.f32.gmra.mrb[0].mxu0 %v5426
      %v5428 = vpop.f32.mrb[0].mxu0
      %v5429 = vadd.f32 %v5351, %v5428
      %v5430 = vpop.f32.mrb[0].mxu0
      %5431 = vmatprep.mubr.f32.mxu0 0.0
      %v5432 = vand.u32 %v4944, 4294901760
      %5433 = vmatmul.mubr.f32.gmra.mrb[0].mxu0 %v5432
      %v5434 = vpop.f32.mrb[0].mxu0
      %v5435 = vadd.f32 %v5357, %v5434
      %v5436 = vpop.f32.mrb[0].mxu0
      %5437 = vdwg.mxu0
      %v5438 = vmul.f32 %v5429, 0.0013020834
      %v5439 = vmul.f32 %v5435, 0.0013020834
      %v5441 = vsel %vm1123, %v4937, 0
      %5443 = vmatprep.subr.mxu0 0.0
      %v5444 = vand.u32 %v5441, 4294901760
      %5445 = vmatpush1.msra.mxu0 %v5444
      %5446 = vmatprep.subr.mxu0 0.0
      %5447 = vmatpush1.msra.mxu0 0.0
      %5448 = vmatprep.subr.mxu0 0.0
      %5449 = vmatpush1.msra.mxu0 0.0
      %5450 = vmatprep.subr.mxu0 0.0
      %5451 = vmatpush1.msra.mxu0 0.0
      %5452 = vmatprep.subr.mxu0 0.0
      %5453 = vmatpush1.msra.mxu0 0.0
      %5454 = vmatprep.subr.mxu0 0.0
      %5455 = vmatpush1.msra.mxu0 0.0
      %5456 = vmatprep.subr.mxu0 0.0
      %5457 = vmatpush1.msra.mxu0 0.0
      %5458 = vmatprep.subr.mxu0 0.0
      %5459 = vmatpush1.msra.mxu0 0.0
      %5460 = vmatprep.subr.mxu0 0.0
      %5461 = vmatpush1.msra.mxu0 0.0
      %5462 = vmatprep.subr.mxu0 0.0
      %5463 = vmatpush1.msra.mxu0 0.0
      %5464 = vmatprep.subr.mxu0 0.0
      %5465 = vmatpush1.msra.mxu0 0.0
      %5466 = vmatprep.subr.mxu0 0.0
      %5467 = vmatpush1.msra.mxu0 0.0
      %5468 = vmatprep.subr.mxu0 0.0
      %5469 = vmatpush1.msra.mxu0 0.0
      %5470 = vmatprep.subr.mxu0 0.0
      %5471 = vmatpush1.msra.mxu0 0.0
      %5472 = vmatprep.subr.mxu0 0.0
      %5473 = vmatpush1.msra.mxu0 0.0
      %5474 = vmatprep.subr.mxu0 0.0
      %5475 = vmatpush1.msra.mxu0 0.0
      %5476 = vmatprep.subr.mxu0 0.0
      %5477 = vmatpush1.msra.mxu0 0.0
      %5478 = vmatprep.subr.mxu0 0.0
      %5479 = vmatpush1.msra.mxu0 0.0
      %5480 = vmatprep.subr.mxu0 0.0
      %5481 = vmatpush1.msra.mxu0 0.0
      %5482 = vmatprep.subr.mxu0 0.0
      %5483 = vmatpush1.msra.mxu0 0.0
      %5484 = vmatprep.subr.mxu0 0.0
      %5485 = vmatpush1.msra.mxu0 0.0
      %5486 = vmatprep.subr.mxu0 0.0
      %5487 = vmatpush1.msra.mxu0 0.0
      %5488 = vmatprep.subr.mxu0 0.0
      %5489 = vmatpush1.msra.mxu0 0.0
      %5490 = vmatprep.subr.mxu0 0.0
      %5491 = vmatpush1.msra.mxu0 0.0
      %5492 = vmatprep.subr.mxu0 0.0
      %5493 = vmatpush1.msra.mxu0 0.0
      %5494 = vmatprep.subr.mxu0 0.0
      %5495 = vmatpush1.msra.mxu0 0.0
      %5496 = vmatprep.subr.mxu0 0.0
      %5497 = vmatpush1.msra.mxu0 0.0
      %5498 = vmatprep.subr.mxu0 0.0
      %5499 = vmatpush1.msra.mxu0 0.0
      %5500 = vmatprep.subr.mxu0 0.0
      %5501 = vmatpush1.msra.mxu0 0.0
      %5502 = vmatprep.subr.mxu0 0.0
      %5503 = vmatpush1.msra.mxu0 0.0
      %5504 = vmatprep.subr.mxu0 0.0
      %5505 = vmatpush1.msra.mxu0 0.0
      %5506 = vmatprep.subr.mxu0 0.0
      %5507 = vmatpush1.msra.mxu0 0.0
      %5508 = vmatprep.mubr.f32.mxu0 0.0
      %v5509 = vand.u32 %v4941, 4294901760
      %v5510 = vsub.f32 %v4941, %v5509
      %v5511 = vand.u32 %v5510, 4294901760
      %v5512 = vsub.f32 %v5510, %v5511
      %v5513 = vand.u32 %v5512, 4294901760
      %5514 = vmatmul.mubr.f32.gmra.mrb[0].mxu0 %v5513
      %v5515 = vpop.f32.mrb[0].mxu0
      %v5516 = vadd.f32 0.0, %v5515
      %v5517 = vpop.f32.mrb[0].mxu0
      %5518 = vmatprep.mubr.f32.mxu0 0.0
      %v5519 = vand.u32 %v4944, 4294901760
      %v5520 = vsub.f32 %v4944, %v5519
      %v5521 = vand.u32 %v5520, 4294901760
      %v5522 = vsub.f32 %v5520, %v5521
      %v5523 = vand.u32 %v5522, 4294901760
      %5524 = vmatmul.mubr.f32.gmra.mrb[0].mxu0 %v5523
      %v5525 = vpop.f32.mrb[0].mxu0
      %v5526 = vadd.f32 0.0, %v5525
      %v5527 = vpop.f32.mrb[0].mxu0
      %5528 = vdwg.mxu0
      %5529 = vmatprep.subr.mxu0 0.0
      %v5530 = vand.u32 %v5441, 4294901760
      %v5531 = vsub.f32 %v5441, %v5530
      %v5532 = vand.u32 %v5531, 4294901760
      %v5533 = vsub.f32 %v5531, %v5532
      %v5534 = vand.u32 %v5533, 4294901760
      %5535 = vmatpush1.msra.mxu0 %v5534
      %5536 = vmatprep.subr.mxu0 0.0
      %5537 = vmatpush1.msra.mxu0 0.0
      %5538 = vmatprep.subr.mxu0 0.0
      %5539 = vmatpush1.msra.mxu0 0.0
      %5540 = vmatprep.subr.mxu0 0.0
      %5541 = vmatpush1.msra.mxu0 0.0
      %5542 = vmatprep.subr.mxu0 0.0
      %5543 = vmatpush1.msra.mxu0 0.0
      %5544 = vmatprep.subr.mxu0 0.0
      %5545 = vmatpush1.msra.mxu0 0.0
      %5546 = vmatprep.subr.mxu0 0.0
      %5547 = vmatpush1.msra.mxu0 0.0
      %5548 = vmatprep.subr.mxu0 0.0
      %5549 = vmatpush1.msra.mxu0 0.0
      %5550 = vmatprep.subr.mxu0 0.0
      %5551 = vmatpush1.msra.mxu0 0.0
      %5552 = vmatprep.subr.mxu0 0.0
      %5553 = vmatpush1.msra.mxu0 0.0
      %5554 = vmatprep.subr.mxu0 0.0
      %5555 = vmatpush1.msra.mxu0 0.0
      %5556 = vmatprep.subr.mxu0 0.0
      %5557 = vmatpush1.msra.mxu0 0.0
      %5558 = vmatprep.subr.mxu0 0.0
      %5559 = vmatpush1.msra.mxu0 0.0
      %5560 = vmatprep.subr.mxu0 0.0
      %5561 = vmatpush1.msra.mxu0 0.0
      %5562 = vmatprep.subr.mxu0 0.0
      %5563 = vmatpush1.msra.mxu0 0.0
      %5564 = vmatprep.subr.mxu0 0.0
      %5565 = vmatpush1.msra.mxu0 0.0
      %5566 = vmatprep.subr.mxu0 0.0
      %5567 = vmatpush1.msra.mxu0 0.0
      %5568 = vmatprep.subr.mxu0 0.0
      %5569 = vmatpush1.msra.mxu0 0.0
      %5570 = vmatprep.subr.mxu0 0.0
      %5571 = vmatpush1.msra.mxu0 0.0
      %5572 = vmatprep.subr.mxu0 0.0
      %5573 = vmatpush1.msra.mxu0 0.0
      %5574 = vmatprep.subr.mxu0 0.0
      %5575 = vmatpush1.msra.mxu0 0.0
      %5576 = vmatprep.subr.mxu0 0.0
      %5577 = vmatpush1.msra.mxu0 0.0
      %5578 = vmatprep.subr.mxu0 0.0
      %5579 = vmatpush1.msra.mxu0 0.0
      %5580 = vmatprep.subr.mxu0 0.0
      %5581 = vmatpush1.msra.mxu0 0.0
      %5582 = vmatprep.subr.mxu0 0.0
      %5583 = vmatpush1.msra.mxu0 0.0
      %5584 = vmatprep.subr.mxu0 0.0
      %5585 = vmatpush1.msra.mxu0 0.0
      %5586 = vmatprep.subr.mxu0 0.0
      %5587 = vmatpush1.msra.mxu0 0.0
      %5588 = vmatprep.subr.mxu0 0.0
      %5589 = vmatpush1.msra.mxu0 0.0
      %5590 = vmatprep.subr.mxu0 0.0
      %5591 = vmatpush1.msra.mxu0 0.0
      %5592 = vmatprep.subr.mxu0 0.0
      %5593 = vmatpush1.msra.mxu0 0.0
      %5594 = vmatprep.subr.mxu0 0.0
      %5595 = vmatpush1.msra.mxu0 0.0
      %5596 = vmatprep.subr.mxu0 0.0
      %5597 = vmatpush1.msra.mxu0 0.0
      %5598 = vmatprep.mubr.f32.mxu0 0.0
      %v5599 = vand.u32 %v4941, 4294901760
      %5600 = vmatmul.mubr.f32.gmra.mrb[0].mxu0 %v5599
      %v5601 = vpop.f32.mrb[0].mxu0
      %v5602 = vadd.f32 %v5516, %v5601
      %v5603 = vpop.f32.mrb[0].mxu0
      %5604 = vmatprep.mubr.f32.mxu0 0.0
      %v5605 = vand.u32 %v4944, 4294901760
      %5606 = vmatmul.mubr.f32.gmra.mrb[0].mxu0 %v5605
      %v5607 = vpop.f32.mrb[0].mxu0
      %v5608 = vadd.f32 %v5526, %v5607
      %v5609 = vpop.f32.mrb[0].mxu0
      %5610 = vdwg.mxu0
      %5611 = vmatprep.subr.mxu0 0.0
      %v5612 = vand.u32 %v5441, 4294901760
      %v5613 = vsub.f32 %v5441, %v5612
      %5614 = vmatpush1.msra.mxu0 %v5613
      %5615 = vmatprep.subr.mxu0 0.0
      %5616 = vmatpush1.msra.mxu0 0.0
      %5617 = vmatprep.subr.mxu0 0.0
      %5618 = vmatpush1.msra.mxu0 0.0
      %5619 = vmatprep.subr.mxu0 0.0
      %5620 = vmatpush1.msra.mxu0 0.0
      %5621 = vmatprep.subr.mxu0 0.0
      %5622 = vmatpush1.msra.mxu0 0.0
      %5623 = vmatprep.subr.mxu0 0.0
      %5624 = vmatpush1.msra.mxu0 0.0
      %5625 = vmatprep.subr.mxu0 0.0
      %5626 = vmatpush1.msra.mxu0 0.0
      %5627 = vmatprep.subr.mxu0 0.0
      %5628 = vmatpush1.msra.mxu0 0.0
      %5629 = vmatprep.subr.mxu0 0.0
      %5630 = vmatpush1.msra.mxu0 0.0
      %5631 = vmatprep.subr.mxu0 0.0
      %5632 = vmatpush1.msra.mxu0 0.0
      %5633 = vmatprep.subr.mxu0 0.0
      %5634 = vmatpush1.msra.mxu0 0.0
      %5635 = vmatprep.subr.mxu0 0.0
      %5636 = vmatpush1.msra.mxu0 0.0
      %5637 = vmatprep.subr.mxu0 0.0
      %5638 = vmatpush1.msra.mxu0 0.0
      %5639 = vmatprep.subr.mxu0 0.0
      %5640 = vmatpush1.msra.mxu0 0.0
      %5641 = vmatprep.subr.mxu0 0.0
      %5642 = vmatpush1.msra.mxu0 0.0
      %5643 = vmatprep.subr.mxu0 0.0
      %5644 = vmatpush1.msra.mxu0 0.0
      %5645 = vmatprep.subr.mxu0 0.0
      %5646 = vmatpush1.msra.mxu0 0.0
      %5647 = vmatprep.subr.mxu0 0.0
      %5648 = vmatpush1.msra.mxu0 0.0
      %5649 = vmatprep.subr.mxu0 0.0
      %5650 = vmatpush1.msra.mxu0 0.0
      %5651 = vmatprep.subr.mxu0 0.0
      %5652 = vmatpush1.msra.mxu0 0.0
      %5653 = vmatprep.subr.mxu0 0.0
      %5654 = vmatpush1.msra.mxu0 0.0
      %5655 = vmatprep.subr.mxu0 0.0
      %5656 = vmatpush1.msra.mxu0 0.0
      %5657 = vmatprep.subr.mxu0 0.0
      %5658 = vmatpush1.msra.mxu0 0.0
      %5659 = vmatprep.subr.mxu0 0.0
      %5660 = vmatpush1.msra.mxu0 0.0
      %5661 = vmatprep.subr.mxu0 0.0
      %5662 = vmatpush1.msra.mxu0 0.0
      %5663 = vmatprep.subr.mxu0 0.0
      %5664 = vmatpush1.msra.mxu0 0.0
      %5665 = vmatprep.subr.mxu0 0.0
      %5666 = vmatpush1.msra.mxu0 0.0
      %5667 = vmatprep.subr.mxu0 0.0
      %5668 = vmatpush1.msra.mxu0 0.0
      %5669 = vmatprep.subr.mxu0 0.0
      %5670 = vmatpush1.msra.mxu0 0.0
      %5671 = vmatprep.subr.mxu0 0.0
      %5672 = vmatpush1.msra.mxu0 0.0
      %5673 = vmatprep.subr.mxu0 0.0
      %5674 = vmatpush1.msra.mxu0 0.0
      %5675 = vmatprep.subr.mxu0 0.0
      %5676 = vmatpush1.msra.mxu0 0.0
      %5677 = vmatprep.mubr.f32.mxu0 0.0
      %v5678 = vand.u32 %v4941, 4294901760
      %v5679 = vsub.f32 %v4941, %v5678
      %5680 = vmatmul.mubr.f32.gmra.mrb[0].mxu0 %v5679
      %v5681 = vpop.f32.mrb[0].mxu0
      %v5682 = vadd.f32 %v5602, %v5681
      %v5683 = vpop.f32.mrb[0].mxu0
      %5684 = vmatprep.mubr.f32.mxu0 0.0
      %v5685 = vand.u32 %v4944, 4294901760
      %v5686 = vsub.f32 %v4944, %v5685
      %5687 = vmatmul.mubr.f32.gmra.mrb[0].mxu0 %v5686
      %v5688 = vpop.f32.mrb[0].mxu0
      %v5689 = vadd.f32 %v5608, %v5688
      %v5690 = vpop.f32.mrb[0].mxu0
      %5691 = vdwg.mxu0
      %5692 = vmatprep.subr.mxu0 0.0
      %v5693 = vand.u32 %v5441, 4294901760
      %5694 = vmatpush1.msra.mxu0 %v5693
      %5695 = vmatprep.subr.mxu0 0.0
      %5696 = vmatpush1.msra.mxu0 0.0
      %5697 = vmatprep.subr.mxu0 0.0
      %5698 = vmatpush1.msra.mxu0 0.0
      %5699 = vmatprep.subr.mxu0 0.0
      %5700 = vmatpush1.msra.mxu0 0.0
      %5701 = vmatprep.subr.mxu0 0.0
      %5702 = vmatpush1.msra.mxu0 0.0
      %5703 = vmatprep.subr.mxu0 0.0
      %5704 = vmatpush1.msra.mxu0 0.0
      %5705 = vmatprep.subr.mxu0 0.0
      %5706 = vmatpush1.msra.mxu0 0.0
      %5707 = vmatprep.subr.mxu0 0.0
      %5708 = vmatpush1.msra.mxu0 0.0
      %5709 = vmatprep.subr.mxu0 0.0
      %5710 = vmatpush1.msra.mxu0 0.0
      %5711 = vmatprep.subr.mxu0 0.0
      %5712 = vmatpush1.msra.mxu0 0.0
      %5713 = vmatprep.subr.mxu0 0.0
      %5714 = vmatpush1.msra.mxu0 0.0
      %5715 = vmatprep.subr.mxu0 0.0
      %5716 = vmatpush1.msra.mxu0 0.0
      %5717 = vmatprep.subr.mxu0 0.0
      %5718 = vmatpush1.msra.mxu0 0.0
      %5719 = vmatprep.subr.mxu0 0.0
      %5720 = vmatpush1.msra.mxu0 0.0
      %5721 = vmatprep.subr.mxu0 0.0
      %5722 = vmatpush1.msra.mxu0 0.0
      %5723 = vmatprep.subr.mxu0 0.0
      %5724 = vmatpush1.msra.mxu0 0.0
      %5725 = vmatprep.subr.mxu0 0.0
      %5726 = vmatpush1.msra.mxu0 0.0
      %5727 = vmatprep.subr.mxu0 0.0
      %5728 = vmatpush1.msra.mxu0 0.0
      %5729 = vmatprep.subr.mxu0 0.0
      %5730 = vmatpush1.msra.mxu0 0.0
      %5731 = vmatprep.subr.mxu0 0.0
      %5732 = vmatpush1.msra.mxu0 0.0
      %5733 = vmatprep.subr.mxu0 0.0
      %5734 = vmatpush1.msra.mxu0 0.0
      %5735 = vmatprep.subr.mxu0 0.0
      %5736 = vmatpush1.msra.mxu0 0.0
      %5737 = vmatprep.subr.mxu0 0.0
      %5738 = vmatpush1.msra.mxu0 0.0
      %5739 = vmatprep.subr.mxu0 0.0
      %5740 = vmatpush1.msra.mxu0 0.0
      %5741 = vmatprep.subr.mxu0 0.0
      %5742 = vmatpush1.msra.mxu0 0.0
      %5743 = vmatprep.subr.mxu0 0.0
      %5744 = vmatpush1.msra.mxu0 0.0
      %5745 = vmatprep.subr.mxu0 0.0
      %5746 = vmatpush1.msra.mxu0 0.0
      %5747 = vmatprep.subr.mxu0 0.0
      %5748 = vmatpush1.msra.mxu0 0.0
      %5749 = vmatprep.subr.mxu0 0.0
      %5750 = vmatpush1.msra.mxu0 0.0
      %5751 = vmatprep.subr.mxu0 0.0
      %5752 = vmatpush1.msra.mxu0 0.0
      %5753 = vmatprep.subr.mxu0 0.0
      %5754 = vmatpush1.msra.mxu0 0.0
      %5755 = vmatprep.subr.mxu0 0.0
      %5756 = vmatpush1.msra.mxu0 0.0
      %5757 = vmatprep.mubr.f32.mxu0 0.0
      %v5758 = vand.u32 %v4941, 4294901760
      %v5759 = vsub.f32 %v4941, %v5758
      %v5760 = vand.u32 %v5759, 4294901760
      %5761 = vmatmul.mubr.f32.gmra.mrb[0].mxu0 %v5760
      %v5762 = vpop.f32.mrb[0].mxu0
      %v5763 = vadd.f32 %v5682, %v5762
      %v5764 = vpop.f32.mrb[0].mxu0
      %5765 = vmatprep.mubr.f32.mxu0 0.0
      %v5766 = vand.u32 %v4944, 4294901760
      %v5767 = vsub.f32 %v4944, %v5766
      %v5768 = vand.u32 %v5767, 4294901760
      %5769 = vmatmul.mubr.f32.gmra.mrb[0].mxu0 %v5768
      %v5770 = vpop.f32.mrb[0].mxu0
      %v5771 = vadd.f32 %v5689, %v5770
      %v5772 = vpop.f32.mrb[0].mxu0
      %5773 = vdwg.mxu0
      %5774 = vmatprep.subr.mxu0 0.0
      %v5775 = vand.u32 %v5441, 4294901760
      %v5776 = vsub.f32 %v5441, %v5775
      %v5777 = vand.u32 %v5776, 4294901760
      %5778 = vmatpush1.msra.mxu0 %v5777
      %5779 = vmatprep.subr.mxu0 0.0
      %5780 = vmatpush1.msra.mxu0 0.0
      %5781 = vmatprep.subr.mxu0 0.0
      %5782 = vmatpush1.msra.mxu0 0.0
      %5783 = vmatprep.subr.mxu0 0.0
      %5784 = vmatpush1.msra.mxu0 0.0
      %5785 = vmatprep.subr.mxu0 0.0
      %5786 = vmatpush1.msra.mxu0 0.0
      %5787 = vmatprep.subr.mxu0 0.0
      %5788 = vmatpush1.msra.mxu0 0.0
      %5789 = vmatprep.subr.mxu0 0.0
      %5790 = vmatpush1.msra.mxu0 0.0
      %5791 = vmatprep.subr.mxu0 0.0
      %5792 = vmatpush1.msra.mxu0 0.0
      %5793 = vmatprep.subr.mxu0 0.0
      %5794 = vmatpush1.msra.mxu0 0.0
      %5795 = vmatprep.subr.mxu0 0.0
      %5796 = vmatpush1.msra.mxu0 0.0
      %5797 = vmatprep.subr.mxu0 0.0
      %5798 = vmatpush1.msra.mxu0 0.0
      %5799 = vmatprep.subr.mxu0 0.0
      %5800 = vmatpush1.msra.mxu0 0.0
      %5801 = vmatprep.subr.mxu0 0.0
      %5802 = vmatpush1.msra.mxu0 0.0
      %5803 = vmatprep.subr.mxu0 0.0
      %5804 = vmatpush1.msra.mxu0 0.0
      %5805 = vmatprep.subr.mxu0 0.0
      %5806 = vmatpush1.msra.mxu0 0.0
      %5807 = vmatprep.subr.mxu0 0.0
      %5808 = vmatpush1.msra.mxu0 0.0
      %5809 = vmatprep.subr.mxu0 0.0
      %5810 = vmatpush1.msra.mxu0 0.0
      %5811 = vmatprep.subr.mxu0 0.0
      %5812 = vmatpush1.msra.mxu0 0.0
      %5813 = vmatprep.subr.mxu0 0.0
      %5814 = vmatpush1.msra.mxu0 0.0
      %5815 = vmatprep.subr.mxu0 0.0
      %5816 = vmatpush1.msra.mxu0 0.0
      %5817 = vmatprep.subr.mxu0 0.0
      %5818 = vmatpush1.msra.mxu0 0.0
      %5819 = vmatprep.subr.mxu0 0.0
      %5820 = vmatpush1.msra.mxu0 0.0
      %5821 = vmatprep.subr.mxu0 0.0
      %5822 = vmatpush1.msra.mxu0 0.0
      %5823 = vmatprep.subr.mxu0 0.0
      %5824 = vmatpush1.msra.mxu0 0.0
      %5825 = vmatprep.subr.mxu0 0.0
      %5826 = vmatpush1.msra.mxu0 0.0
      %5827 = vmatprep.subr.mxu0 0.0
      %5828 = vmatpush1.msra.mxu0 0.0
      %5829 = vmatprep.subr.mxu0 0.0
      %5830 = vmatpush1.msra.mxu0 0.0
      %5831 = vmatprep.subr.mxu0 0.0
      %5832 = vmatpush1.msra.mxu0 0.0
      %5833 = vmatprep.subr.mxu0 0.0
      %5834 = vmatpush1.msra.mxu0 0.0
      %5835 = vmatprep.subr.mxu0 0.0
      %5836 = vmatpush1.msra.mxu0 0.0
      %5837 = vmatprep.subr.mxu0 0.0
      %5838 = vmatpush1.msra.mxu0 0.0
      %5839 = vmatprep.subr.mxu0 0.0
      %5840 = vmatpush1.msra.mxu0 0.0
      %5841 = vmatprep.mubr.f32.mxu0 0.0
      %v5842 = vand.u32 %v4941, 4294901760
      %5843 = vmatmul.mubr.f32.gmra.mrb[0].mxu0 %v5842
      %v5844 = vpop.f32.mrb[0].mxu0
      %v5845 = vadd.f32 %v5763, %v5844
      %v5846 = vpop.f32.mrb[0].mxu0
      %5847 = vmatprep.mubr.f32.mxu0 0.0
      %v5848 = vand.u32 %v4944, 4294901760
      %5849 = vmatmul.mubr.f32.gmra.mrb[0].mxu0 %v5848
      %v5850 = vpop.f32.mrb[0].mxu0
      %v5851 = vadd.f32 %v5771, %v5850
      %v5852 = vpop.f32.mrb[0].mxu0
      %5853 = vdwg.mxu0
      %5854 = vmatprep.subr.mxu0 0.0
      %v5855 = vand.u32 %v5441, 4294901760
      %5856 = vmatpush1.msra.mxu0 %v5855
      %5857 = vmatprep.subr.mxu0 0.0
      %5858 = vmatpush1.msra.mxu0 0.0
      %5859 = vmatprep.subr.mxu0 0.0
      %5860 = vmatpush1.msra.mxu0 0.0
      %5861 = vmatprep.subr.mxu0 0.0
      %5862 = vmatpush1.msra.mxu0 0.0
      %5863 = vmatprep.subr.mxu0 0.0
      %5864 = vmatpush1.msra.mxu0 0.0
      %5865 = vmatprep.subr.mxu0 0.0
      %5866 = vmatpush1.msra.mxu0 0.0
      %5867 = vmatprep.subr.mxu0 0.0
      %5868 = vmatpush1.msra.mxu0 0.0
      %5869 = vmatprep.subr.mxu0 0.0
      %5870 = vmatpush1.msra.mxu0 0.0
      %5871 = vmatprep.subr.mxu0 0.0
      %5872 = vmatpush1.msra.mxu0 0.0
      %5873 = vmatprep.subr.mxu0 0.0
      %5874 = vmatpush1.msra.mxu0 0.0
      %5875 = vmatprep.subr.mxu0 0.0
      %5876 = vmatpush1.msra.mxu0 0.0
      %5877 = vmatprep.subr.mxu0 0.0
      %5878 = vmatpush1.msra.mxu0 0.0
      %5879 = vmatprep.subr.mxu0 0.0
      %5880 = vmatpush1.msra.mxu0 0.0
      %5881 = vmatprep.subr.mxu0 0.0
      %5882 = vmatpush1.msra.mxu0 0.0
      %5883 = vmatprep.subr.mxu0 0.0
      %5884 = vmatpush1.msra.mxu0 0.0
      %5885 = vmatprep.subr.mxu0 0.0
      %5886 = vmatpush1.msra.mxu0 0.0
      %5887 = vmatprep.subr.mxu0 0.0
      %5888 = vmatpush1.msra.mxu0 0.0
      %5889 = vmatprep.subr.mxu0 0.0
      %5890 = vmatpush1.msra.mxu0 0.0
      %5891 = vmatprep.subr.mxu0 0.0
      %5892 = vmatpush1.msra.mxu0 0.0
      %5893 = vmatprep.subr.mxu0 0.0
      %5894 = vmatpush1.msra.mxu0 0.0
      %5895 = vmatprep.subr.mxu0 0.0
      %5896 = vmatpush1.msra.mxu0 0.0
      %5897 = vmatprep.subr.mxu0 0.0
      %5898 = vmatpush1.msra.mxu0 0.0
      %5899 = vmatprep.subr.mxu0 0.0
      %5900 = vmatpush1.msra.mxu0 0.0
      %5901 = vmatprep.subr.mxu0 0.0
      %5902 = vmatpush1.msra.mxu0 0.0
      %5903 = vmatprep.subr.mxu0 0.0
      %5904 = vmatpush1.msra.mxu0 0.0
      %5905 = vmatprep.subr.mxu0 0.0
      %5906 = vmatpush1.msra.mxu0 0.0
      %5907 = vmatprep.subr.mxu0 0.0
      %5908 = vmatpush1.msra.mxu0 0.0
      %5909 = vmatprep.subr.mxu0 0.0
      %5910 = vmatpush1.msra.mxu0 0.0
      %5911 = vmatprep.subr.mxu0 0.0
      %5912 = vmatpush1.msra.mxu0 0.0
      %5913 = vmatprep.subr.mxu0 0.0
      %5914 = vmatpush1.msra.mxu0 0.0
      %5915 = vmatprep.subr.mxu0 0.0
      %5916 = vmatpush1.msra.mxu0 0.0
      %5917 = vmatprep.subr.mxu0 0.0
      %5918 = vmatpush1.msra.mxu0 0.0
      %5919 = vmatprep.mubr.f32.mxu0 0.0
      %v5920 = vand.u32 %v4941, 4294901760
      %5921 = vmatmul.mubr.f32.gmra.mrb[0].mxu0 %v5920
      %v5922 = vpop.f32.mrb[0].mxu0
      %v5923 = vadd.f32 %v5845, %v5922
      %v5924 = vpop.f32.mrb[0].mxu0
      %5925 = vmatprep.mubr.f32.mxu0 0.0
      %v5926 = vand.u32 %v4944, 4294901760
      %5927 = vmatmul.mubr.f32.gmra.mrb[0].mxu0 %v5926
      %v5928 = vpop.f32.mrb[0].mxu0
      %v5929 = vadd.f32 %v5851, %v5928
      %v5930 = vpop.f32.mrb[0].mxu0
      %5931 = vdwg.mxu0
      %v5932 = vmul.f32 %v5923, 0.0013020834
      %v5933 = vmul.f32 %v5929, 0.0013020834
      %v5934 = vmul.f32 %v5438, %v5438
      %v5935 = vmul.f32 %v5439, %v5439
      %v5936 = vsub.f32 %v5932, %v5934
      %v5937 = vsub.f32 %v5933, %v5935
      %v5938 = vmax.f32 %v5936, 0.0
      %v5939 = vmax.f32 %v5937, 0.0
      %5941 = vset.pattern.permute.xlu0 0
      %5942 = vperm.xlu0 %5941, %v5438
      %v5943 = vpop.permute.xlu0 %5942
      %5946 = vset.pattern.permute.xlu0 0
      %5947 = vperm.xlu0 %5946, %v5439
      %v5948 = vpop.permute.xlu0 %5947
      %v5950 = vsub.f32 %v3975, %v5943
      %v5951 = vsub.f32 %v3977, %v5943
      %v5952 = vsub.f32 %v3982, %v5948
      %v5953 = vsub.f32 %v3984, %v5948
      %v5954 = vadd.f32 %v5938, 1e-05
      %v5955 = vadd.f32 %v5939, 1e-05
      %v5956 = vrsqrt.pop %v5954
      %v5957 = vrsqrt.pop %v5955
      %5959 = vset.pattern.permute.xlu0 0
      %5960 = vperm.xlu0 %5959, %v5956
      %v5961 = vpop.permute.xlu0 %5960
      %5964 = vset.pattern.permute.xlu0 0
      %5965 = vperm.xlu0 %5964, %v5957
      %v5966 = vpop.permute.xlu0 %5965
      %v5968 = vmul.f32 %v5950, %v5961
      %v5969 = vmul.f32 %v5951, %v5961
      %v5970 = vmul.f32 %v5952, %v5966
      %v5971 = vmul.f32 %v5953, %v5966
      %5973 = vset.pattern.permute.xlu0 0
      %5974 = vperm.xlu0 %5973, %v3986
      %v5975 = vpop.permute.xlu0 %5974
      %5978 = vset.pattern.permute.xlu0 0
      %5979 = vperm.xlu0 %5978, %v3987
      %v5980 = vpop.permute.xlu0 %5979
      %v5982 = vmul.f32 %v5968, %v5975
      %v5983 = vmul.f32 %v5969, %v5975
      %v5984 = vmul.f32 %v5970, %v5980
      %v5985 = vmul.f32 %v5971, %v5980
      %5987 = vset.pattern.permute.xlu0 0
      %5988 = vperm.xlu0 %5987, %v3988
      %v5989 = vpop.permute.xlu0 %5988
      %5992 = vset.pattern.permute.xlu0 0
      %5993 = vperm.xlu0 %5992, %v3989
      %v5994 = vpop.permute.xlu0 %5993
      %v5996 = vadd.f32 %v5982, %v5989
      %v5997 = vadd.f32 %v5983, %v5989
      %v5998 = vadd.f32 %v5984, %v5994
      %v5999 = vadd.f32 %v5985, %v5994
      %v6000 = vadd.f32 %v5996, 3.0
      %v6001 = vadd.f32 %v5997, 3.0
      %v6002 = vadd.f32 %v5998, 3.0
      %v6003 = vadd.f32 %v5999, 3.0
      %v6004 = vmax.f32 %v6000, 0.0
      %v6005 = vmax.f32 %v6001, 0.0
      %v6006 = vmax.f32 %v6002, 0.0
      %v6007 = vmax.f32 %v6003, 0.0
      %v6008 = vmin.f32 %v6004, 6.0
      %v6009 = vmin.f32 %v6005, 6.0
      %v6010 = vmin.f32 %v6006, 6.0
      %v6011 = vmin.f32 %v6007, 6.0
      %v6012 = vmul.f32 %v5996, %v6008
      %v6013 = vmul.f32 %v5997, %v6009
      %v6014 = vmul.f32 %v5998, %v6010
      %v6015 = vmul.f32 %v5999, %v6011
      %v6016 = vmul.f32 %v6012, 0.16666667
      %v6017 = vmul.f32 %v6013, 0.16666667
      %v6018 = vmul.f32 %v6014, 0.16666667
      %v6019 = vmul.f32 %v6015, 0.16666667
      %v6020 = vmax.f32 %v5996, 0.0
      %v6021 = vmax.f32 %v5997, 0.0
      %v6022 = vmax.f32 %v5998, 0.0
      %v6023 = vmax.f32 %v5999, 0.0
      %v6024 = vmin.f32 %v6020, 6.0
      %v6025 = vmin.f32 %v6021, 6.0
      %v6026 = vmin.f32 %v6022, 6.0
      %v6027 = vmin.f32 %v6023, 6.0
      %v6028 = vmin.f32 %v5996, 0.0
      %v6029 = vmin.f32 %v5997, 0.0
      %v6030 = vmin.f32 %v5998, 0.0
      %v6031 = vmin.f32 %v5999, 0.0
      %v6032 = vmul.f32 %v6028, 0.01
      %v6033 = vmul.f32 %v6029, 0.01
      %v6034 = vmul.f32 %v6030, 0.01
      %v6035 = vmul.f32 %v6031, 0.01
      %v6036 = vadd.f32 %v6024, %v6032
      %v6037 = vadd.f32 %v6025, %v6033
      %v6038 = vadd.f32 %v6026, %v6034
      %v6039 = vadd.f32 %v6027, %v6035
      %vm6040 = vcmp.ge.f32.partialorder %v5996, -3.0
      %vm6041 = vcmp.ge.f32.partialorder %v5997, -3.0
      %vm6042 = vcmp.ge.f32.partialorder %v5998, -3.0
      %vm6043 = vcmp.ge.f32.partialorder %v5999, -3.0
      %vm6044 = vcmp.le.f32.partialorder %v5996, 3.0
      %vm6045 = vcmp.le.f32.partialorder %v5997, 3.0
      %vm6046 = vcmp.le.f32.partialorder %v5998, 3.0
      %vm6047 = vcmp.le.f32.partialorder %v5999, 3.0
      %vm6048 = vmand %vm6040, %vm6044
      %vm6049 = vmand %vm6041, %vm6045
      %vm6050 = vmand %vm6042, %vm6046
      %vm6051 = vmand %vm6043, %vm6047
      %v6052 = vsel %vm6048, %v6016, %v6036
      %v6053 = vsel %vm6049, %v6017, %v6037
      %v6054 = vsel %vm6050, %v6018, %v6038
      %v6055 = vsel %vm6051, %v6019, %v6039
      %v6056 = vadd.f32 %v6052, %v6053
      %6057 = vadd.xlane.f32.xlu0 %v6056
      %v6058 = vpop.xlane.xlu0 %6057
      %v6059 = vsel %vm1123, %v6054, 0.0
      %v6060 = vsel %vm1123, %v6055, 0.0
      %v6061 = vadd.f32 %v6059, %v6060
      %6062 = vadd.xlane.f32.xlu0 %v6061
      %v6063 = vpop.xlane.xlu0 %6062
      %v6064 = vmul.f32 %v6058, 0.00390625
      %v6065 = vmul.f32 %v6063, 0.00390625
      %v6066 = vld [vmem:[%s15] sm:$0xf]
      %v6068 = vsel %vm1141, %v6066, 0
      %v6071 = vsel %vm1123, %v6065, 0
      %6073 = vmatprep.subr.mxu0 0.0
      %v6074 = vand.u32 %v6064, 4294901760
      %6075 = vmatpush1.msra.mxu0 %v6074
      %6076 = vmatprep.subr.mxu0 0.0
      %v6077 = vand.u32 %v6071, 4294901760
      %6078 = vmatpush1.msra.mxu0 %v6077
      %6079 = vmatprep.subr.mxu0 0.0
      %6080 = vmatpush1.msra.mxu0 0.0
      %6081 = vmatprep.subr.mxu0 0.0
      %6082 = vmatpush1.msra.mxu0 0.0
      %6083 = vmatprep.subr.mxu0 0.0
      %6084 = vmatpush1.msra.mxu0 0.0
      %6085 = vmatprep.subr.mxu0 0.0
      %6086 = vmatpush1.msra.mxu0 0.0
      %6087 = vmatprep.subr.mxu0 0.0
      %6088 = vmatpush1.msra.mxu0 0.0
      %6089 = vmatprep.subr.mxu0 0.0
      %6090 = vmatpush1.msra.mxu0 0.0
      %6091 = vmatprep.subr.mxu0 0.0
      %6092 = vmatpush1.msra.mxu0 0.0
      %6093 = vmatprep.subr.mxu0 0.0
      %6094 = vmatpush1.msra.mxu0 0.0
      %6095 = vmatprep.subr.mxu0 0.0
      %6096 = vmatpush1.msra.mxu0 0.0
      %6097 = vmatprep.subr.mxu0 0.0
      %6098 = vmatpush1.msra.mxu0 0.0
      %6099 = vmatprep.subr.mxu0 0.0
      %6100 = vmatpush1.msra.mxu0 0.0
      %6101 = vmatprep.subr.mxu0 0.0
      %6102 = vmatpush1.msra.mxu0 0.0
      %6103 = vmatprep.subr.mxu0 0.0
      %6104 = vmatpush1.msra.mxu0 0.0
      %6105 = vmatprep.subr.mxu0 0.0
      %6106 = vmatpush1.msra.mxu0 0.0
      %6107 = vmatprep.subr.mxu0 0.0
      %6108 = vmatpush1.msra.mxu0 0.0
      %6109 = vmatprep.subr.mxu0 0.0
      %6110 = vmatpush1.msra.mxu0 0.0
      %6111 = vmatprep.subr.mxu0 0.0
      %6112 = vmatpush1.msra.mxu0 0.0
      %6113 = vmatprep.subr.mxu0 0.0
      %6114 = vmatpush1.msra.mxu0 0.0
      %6115 = vmatprep.subr.mxu0 0.0
      %6116 = vmatpush1.msra.mxu0 0.0
      %6117 = vmatprep.subr.mxu0 0.0
      %6118 = vmatpush1.msra.mxu0 0.0
      %6119 = vmatprep.subr.mxu0 0.0
      %6120 = vmatpush1.msra.mxu0 0.0
      %6121 = vmatprep.subr.mxu0 0.0
      %6122 = vmatpush1.msra.mxu0 0.0
      %6123 = vmatprep.subr.mxu0 0.0
      %6124 = vmatpush1.msra.mxu0 0.0
      %6125 = vmatprep.subr.mxu0 0.0
      %6126 = vmatpush1.msra.mxu0 0.0
      %6127 = vmatprep.subr.mxu0 0.0
      %6128 = vmatpush1.msra.mxu0 0.0
      %6129 = vmatprep.subr.mxu0 0.0
      %6130 = vmatpush1.msra.mxu0 0.0
      %6131 = vmatprep.subr.mxu0 0.0
      %6132 = vmatpush1.msra.mxu0 0.0
      %6133 = vmatprep.subr.mxu0 0.0
      %6134 = vmatpush1.msra.mxu0 0.0
      %6135 = vmatprep.subr.mxu0 0.0
      %6136 = vmatpush1.msra.mxu0 0.0
      %6137 = vmatprep.subr.mxu0 0.0
      %6138 = vmatpush1.msra.mxu0 0.0
      %6139 = vmatprep.mubr.f32.mxu0 0.0
      %v6140 = vand.u32 %v6068, 4294901760
      %v6141 = vsub.f32 %v6068, %v6140
      %v6142 = vand.u32 %v6141, 4294901760
      %v6143 = vsub.f32 %v6141, %v6142
      %v6144 = vand.u32 %v6143, 4294901760
      %6145 = vmatmul.mubr.f32.gmra.mrb[0].mxu0 %v6144
      %v6146 = vpop.f32.mrb[0].mxu0
      %v6147 = vadd.f32 0.0, %v6146
      %v6148 = vpop.f32.mrb[0].mxu0
      %6149 = vdwg.mxu0
      %6150 = vmatprep.subr.mxu0 0.0
      %v6151 = vand.u32 %v6064, 4294901760
      %v6152 = vsub.f32 %v6064, %v6151
      %v6153 = vand.u32 %v6152, 4294901760
      %v6154 = vsub.f32 %v6152, %v6153
      %v6155 = vand.u32 %v6154, 4294901760
      %6156 = vmatpush1.msra.mxu0 %v6155
      %6157 = vmatprep.subr.mxu0 0.0
      %v6158 = vand.u32 %v6071, 4294901760
      %v6159 = vsub.f32 %v6071, %v6158
      %v6160 = vand.u32 %v6159, 4294901760
      %v6161 = vsub.f32 %v6159, %v6160
      %v6162 = vand.u32 %v6161, 4294901760
      %6163 = vmatpush1.msra.mxu0 %v6162
      %6164 = vmatprep.subr.mxu0 0.0
      %6165 = vmatpush1.msra.mxu0 0.0
      %6166 = vmatprep.subr.mxu0 0.0
      %6167 = vmatpush1.msra.mxu0 0.0
      %6168 = vmatprep.subr.mxu0 0.0
      %6169 = vmatpush1.msra.mxu0 0.0
      %6170 = vmatprep.subr.mxu0 0.0
      %6171 = vmatpush1.msra.mxu0 0.0
      %6172 = vmatprep.subr.mxu0 0.0
      %6173 = vmatpush1.msra.mxu0 0.0
      %6174 = vmatprep.subr.mxu0 0.0
      %6175 = vmatpush1.msra.mxu0 0.0
      %6176 = vmatprep.subr.mxu0 0.0
      %6177 = vmatpush1.msra.mxu0 0.0
      %6178 = vmatprep.subr.mxu0 0.0
      %6179 = vmatpush1.msra.mxu0 0.0
      %6180 = vmatprep.subr.mxu0 0.0
      %6181 = vmatpush1.msra.mxu0 0.0
      %6182 = vmatprep.subr.mxu0 0.0
      %6183 = vmatpush1.msra.mxu0 0.0
      %6184 = vmatprep.subr.mxu0 0.0
      %6185 = vmatpush1.msra.mxu0 0.0
      %6186 = vmatprep.subr.mxu0 0.0
      %6187 = vmatpush1.msra.mxu0 0.0
      %6188 = vmatprep.subr.mxu0 0.0
      %6189 = vmatpush1.msra.mxu0 0.0
      %6190 = vmatprep.subr.mxu0 0.0
      %6191 = vmatpush1.msra.mxu0 0.0
      %6192 = vmatprep.subr.mxu0 0.0
      %6193 = vmatpush1.msra.mxu0 0.0
      %6194 = vmatprep.subr.mxu0 0.0
      %6195 = vmatpush1.msra.mxu0 0.0
      %6196 = vmatprep.subr.mxu0 0.0
      %6197 = vmatpush1.msra.mxu0 0.0
      %6198 = vmatprep.subr.mxu0 0.0
      %6199 = vmatpush1.msra.mxu0 0.0
      %6200 = vmatprep.subr.mxu0 0.0
      %6201 = vmatpush1.msra.mxu0 0.0
      %6202 = vmatprep.subr.mxu0 0.0
      %6203 = vmatpush1.msra.mxu0 0.0
      %6204 = vmatprep.subr.mxu0 0.0
      %6205 = vmatpush1.msra.mxu0 0.0
      %6206 = vmatprep.subr.mxu0 0.0
      %6207 = vmatpush1.msra.mxu0 0.0
      %6208 = vmatprep.subr.mxu0 0.0
      %6209 = vmatpush1.msra.mxu0 0.0
      %6210 = vmatprep.subr.mxu0 0.0
      %6211 = vmatpush1.msra.mxu0 0.0
      %6212 = vmatprep.subr.mxu0 0.0
      %6213 = vmatpush1.msra.mxu0 0.0
      %6214 = vmatprep.subr.mxu0 0.0
      %6215 = vmatpush1.msra.mxu0 0.0
      %6216 = vmatprep.subr.mxu0 0.0
      %6217 = vmatpush1.msra.mxu0 0.0
      %6218 = vmatprep.subr.mxu0 0.0
      %6219 = vmatpush1.msra.mxu0 0.0
      %6220 = vmatprep.subr.mxu0 0.0
      %6221 = vmatpush1.msra.mxu0 0.0
      %6222 = vmatprep.subr.mxu0 0.0
      %6223 = vmatpush1.msra.mxu0 0.0
      %6224 = vmatprep.mubr.f32.mxu0 0.0
      %v6225 = vand.u32 %v6068, 4294901760
      %6226 = vmatmul.mubr.f32.gmra.mrb[0].mxu0 %v6225
      %v6227 = vpop.f32.mrb[0].mxu0
      %v6228 = vadd.f32 %v6147, %v6227
      %v6229 = vpop.f32.mrb[0].mxu0
      %6230 = vdwg.mxu0
      %6231 = vmatprep.subr.mxu0 0.0
      %v6232 = vand.u32 %v6064, 4294901760
      %v6233 = vsub.f32 %v6064, %v6232
      %6234 = vmatpush1.msra.mxu0 %v6233
      %6235 = vmatprep.subr.mxu0 0.0
      %v6236 = vand.u32 %v6071, 4294901760
      %v6237 = vsub.f32 %v6071, %v6236
      %6238 = vmatpush1.msra.mxu0 %v6237
      %6239 = vmatprep.subr.mxu0 0.0
      %6240 = vmatpush1.msra.mxu0 0.0
      %6241 = vmatprep.subr.mxu0 0.0
      %6242 = vmatpush1.msra.mxu0 0.0
      %6243 = vmatprep.subr.mxu0 0.0
      %6244 = vmatpush1.msra.mxu0 0.0
      %6245 = vmatprep.subr.mxu0 0.0
      %6246 = vmatpush1.msra.mxu0 0.0
      %6247 = vmatprep.subr.mxu0 0.0
      %6248 = vmatpush1.msra.mxu0 0.0
      %6249 = vmatprep.subr.mxu0 0.0
      %6250 = vmatpush1.msra.mxu0 0.0
      %6251 = vmatprep.subr.mxu0 0.0
      %6252 = vmatpush1.msra.mxu0 0.0
      %6253 = vmatprep.subr.mxu0 0.0
      %6254 = vmatpush1.msra.mxu0 0.0
      %6255 = vmatprep.subr.mxu0 0.0
      %6256 = vmatpush1.msra.mxu0 0.0
      %6257 = vmatprep.subr.mxu0 0.0
      %6258 = vmatpush1.msra.mxu0 0.0
      %6259 = vmatprep.subr.mxu0 0.0
      %6260 = vmatpush1.msra.mxu0 0.0
      %6261 = vmatprep.subr.mxu0 0.0
      %6262 = vmatpush1.msra.mxu0 0.0
      %6263 = vmatprep.subr.mxu0 0.0
      %6264 = vmatpush1.msra.mxu0 0.0
      %6265 = vmatprep.subr.mxu0 0.0
      %6266 = vmatpush1.msra.mxu0 0.0
      %6267 = vmatprep.subr.mxu0 0.0
      %6268 = vmatpush1.msra.mxu0 0.0
      %6269 = vmatprep.subr.mxu0 0.0
      %6270 = vmatpush1.msra.mxu0 0.0
      %6271 = vmatprep.subr.mxu0 0.0
      %6272 = vmatpush1.msra.mxu0 0.0
      %6273 = vmatprep.subr.mxu0 0.0
      %6274 = vmatpush1.msra.mxu0 0.0
      %6275 = vmatprep.subr.mxu0 0.0
      %6276 = vmatpush1.msra.mxu0 0.0
      %6277 = vmatprep.subr.mxu0 0.0
      %6278 = vmatpush1.msra.mxu0 0.0
      %6279 = vmatprep.subr.mxu0 0.0
      %6280 = vmatpush1.msra.mxu0 0.0
      %6281 = vmatprep.subr.mxu0 0.0
      %6282 = vmatpush1.msra.mxu0 0.0
      %6283 = vmatprep.subr.mxu0 0.0
      %6284 = vmatpush1.msra.mxu0 0.0
      %6285 = vmatprep.subr.mxu0 0.0
      %6286 = vmatpush1.msra.mxu0 0.0
      %6287 = vmatprep.subr.mxu0 0.0
      %6288 = vmatpush1.msra.mxu0 0.0
      %6289 = vmatprep.subr.mxu0 0.0
      %6290 = vmatpush1.msra.mxu0 0.0
      %6291 = vmatprep.subr.mxu0 0.0
      %6292 = vmatpush1.msra.mxu0 0.0
      %6293 = vmatprep.subr.mxu0 0.0
      %6294 = vmatpush1.msra.mxu0 0.0
      %6295 = vmatprep.subr.mxu0 0.0
      %6296 = vmatpush1.msra.mxu0 0.0
      %6297 = vmatprep.subr.mxu0 0.0
      %6298 = vmatpush1.msra.mxu0 0.0
      %6299 = vmatprep.mubr.f32.mxu0 0.0
      %v6300 = vand.u32 %v6068, 4294901760
      %v6301 = vsub.f32 %v6068, %v6300
      %6302 = vmatmul.mubr.f32.gmra.mrb[0].mxu0 %v6301
      %v6303 = vpop.f32.mrb[0].mxu0
      %v6304 = vadd.f32 %v6228, %v6303
      %v6305 = vpop.f32.mrb[0].mxu0
      %6306 = vdwg.mxu0
      %6307 = vmatprep.subr.mxu0 0.0
      %v6308 = vand.u32 %v6064, 4294901760
      %6309 = vmatpush1.msra.mxu0 %v6308
      %6310 = vmatprep.subr.mxu0 0.0
      %v6311 = vand.u32 %v6071, 4294901760
      %6312 = vmatpush1.msra.mxu0 %v6311
      %6313 = vmatprep.subr.mxu0 0.0
      %6314 = vmatpush1.msra.mxu0 0.0
      %6315 = vmatprep.subr.mxu0 0.0
      %6316 = vmatpush1.msra.mxu0 0.0
      %6317 = vmatprep.subr.mxu0 0.0
      %6318 = vmatpush1.msra.mxu0 0.0
      %6319 = vmatprep.subr.mxu0 0.0
      %6320 = vmatpush1.msra.mxu0 0.0
      %6321 = vmatprep.subr.mxu0 0.0
      %6322 = vmatpush1.msra.mxu0 0.0
      %6323 = vmatprep.subr.mxu0 0.0
      %6324 = vmatpush1.msra.mxu0 0.0
      %6325 = vmatprep.subr.mxu0 0.0
      %6326 = vmatpush1.msra.mxu0 0.0
      %6327 = vmatprep.subr.mxu0 0.0
      %6328 = vmatpush1.msra.mxu0 0.0
      %6329 = vmatprep.subr.mxu0 0.0
      %6330 = vmatpush1.msra.mxu0 0.0
      %6331 = vmatprep.subr.mxu0 0.0
      %6332 = vmatpush1.msra.mxu0 0.0
      %6333 = vmatprep.subr.mxu0 0.0
      %6334 = vmatpush1.msra.mxu0 0.0
      %6335 = vmatprep.subr.mxu0 0.0
      %6336 = vmatpush1.msra.mxu0 0.0
      %6337 = vmatprep.subr.mxu0 0.0
      %6338 = vmatpush1.msra.mxu0 0.0
      %6339 = vmatprep.subr.mxu0 0.0
      %6340 = vmatpush1.msra.mxu0 0.0
      %6341 = vmatprep.subr.mxu0 0.0
      %6342 = vmatpush1.msra.mxu0 0.0
      %6343 = vmatprep.subr.mxu0 0.0
      %6344 = vmatpush1.msra.mxu0 0.0
      %6345 = vmatprep.subr.mxu0 0.0
      %6346 = vmatpush1.msra.mxu0 0.0
      %6347 = vmatprep.subr.mxu0 0.0
      %6348 = vmatpush1.msra.mxu0 0.0
      %6349 = vmatprep.subr.mxu0 0.0
      %6350 = vmatpush1.msra.mxu0 0.0
      %6351 = vmatprep.subr.mxu0 0.0
      %6352 = vmatpush1.msra.mxu0 0.0
      %6353 = vmatprep.subr.mxu0 0.0
      %6354 = vmatpush1.msra.mxu0 0.0
      %6355 = vmatprep.subr.mxu0 0.0
      %6356 = vmatpush1.msra.mxu0 0.0
      %6357 = vmatprep.subr.mxu0 0.0
      %6358 = vmatpush1.msra.mxu0 0.0
      %6359 = vmatprep.subr.mxu0 0.0
      %6360 = vmatpush1.msra.mxu0 0.0
      %6361 = vmatprep.subr.mxu0 0.0
      %6362 = vmatpush1.msra.mxu0 0.0
      %6363 = vmatprep.subr.mxu0 0.0
      %6364 = vmatpush1.msra.mxu0 0.0
      %6365 = vmatprep.subr.mxu0 0.0
      %6366 = vmatpush1.msra.mxu0 0.0
      %6367 = vmatprep.subr.mxu0 0.0
      %6368 = vmatpush1.msra.mxu0 0.0
      %6369 = vmatprep.subr.mxu0 0.0
      %6370 = vmatpush1.msra.mxu0 0.0
      %6371 = vmatprep.subr.mxu0 0.0
      %6372 = vmatpush1.msra.mxu0 0.0
      %6373 = vmatprep.mubr.f32.mxu0 0.0
      %v6374 = vand.u32 %v6068, 4294901760
      %v6375 = vsub.f32 %v6068, %v6374
      %v6376 = vand.u32 %v6375, 4294901760
      %6377 = vmatmul.mubr.f32.gmra.mrb[0].mxu0 %v6376
      %v6378 = vpop.f32.mrb[0].mxu0
      %v6379 = vadd.f32 %v6304, %v6378
      %v6380 = vpop.f32.mrb[0].mxu0
      %6381 = vdwg.mxu0
      %6382 = vmatprep.subr.mxu0 0.0
      %v6383 = vand.u32 %v6064, 4294901760
      %v6384 = vsub.f32 %v6064, %v6383
      %v6385 = vand.u32 %v6384, 4294901760
      %6386 = vmatpush1.msra.mxu0 %v6385
      %6387 = vmatprep.subr.mxu0 0.0
      %v6388 = vand.u32 %v6071, 4294901760
      %v6389 = vsub.f32 %v6071, %v6388
      %v6390 = vand.u32 %v6389, 4294901760
      %6391 = vmatpush1.msra.mxu0 %v6390
      %6392 = vmatprep.subr.mxu0 0.0
      %6393 = vmatpush1.msra.mxu0 0.0
      %6394 = vmatprep.subr.mxu0 0.0
      %6395 = vmatpush1.msra.mxu0 0.0
      %6396 = vmatprep.subr.mxu0 0.0
      %6397 = vmatpush1.msra.mxu0 0.0
      %6398 = vmatprep.subr.mxu0 0.0
      %6399 = vmatpush1.msra.mxu0 0.0
      %6400 = vmatprep.subr.mxu0 0.0
      %6401 = vmatpush1.msra.mxu0 0.0
      %6402 = vmatprep.subr.mxu0 0.0
      %6403 = vmatpush1.msra.mxu0 0.0
      %6404 = vmatprep.subr.mxu0 0.0
      %6405 = vmatpush1.msra.mxu0 0.0
      %6406 = vmatprep.subr.mxu0 0.0
      %6407 = vmatpush1.msra.mxu0 0.0
      %6408 = vmatprep.subr.mxu0 0.0
      %6409 = vmatpush1.msra.mxu0 0.0
      %6410 = vmatprep.subr.mxu0 0.0
      %6411 = vmatpush1.msra.mxu0 0.0
      %6412 = vmatprep.subr.mxu0 0.0
      %6413 = vmatpush1.msra.mxu0 0.0
      %6414 = vmatprep.subr.mxu0 0.0
      %6415 = vmatpush1.msra.mxu0 0.0
      %6416 = vmatprep.subr.mxu0 0.0
      %6417 = vmatpush1.msra.mxu0 0.0
      %6418 = vmatprep.subr.mxu0 0.0
      %6419 = vmatpush1.msra.mxu0 0.0
      %6420 = vmatprep.subr.mxu0 0.0
      %6421 = vmatpush1.msra.mxu0 0.0
      %6422 = vmatprep.subr.mxu0 0.0
      %6423 = vmatpush1.msra.mxu0 0.0
      %6424 = vmatprep.subr.mxu0 0.0
      %6425 = vmatpush1.msra.mxu0 0.0
      %6426 = vmatprep.subr.mxu0 0.0
      %6427 = vmatpush1.msra.mxu0 0.0
      %6428 = vmatprep.subr.mxu0 0.0
      %6429 = vmatpush1.msra.mxu0 0.0
      %6430 = vmatprep.subr.mxu0 0.0
      %6431 = vmatpush1.msra.mxu0 0.0
      %6432 = vmatprep.subr.mxu0 0.0
      %6433 = vmatpush1.msra.mxu0 0.0
      %6434 = vmatprep.subr.mxu0 0.0
      %6435 = vmatpush1.msra.mxu0 0.0
      %6436 = vmatprep.subr.mxu0 0.0
      %6437 = vmatpush1.msra.mxu0 0.0
      %6438 = vmatprep.subr.mxu0 0.0
      %6439 = vmatpush1.msra.mxu0 0.0
      %6440 = vmatprep.subr.mxu0 0.0
      %6441 = vmatpush1.msra.mxu0 0.0
      %6442 = vmatprep.subr.mxu0 0.0
      %6443 = vmatpush1.msra.mxu0 0.0
      %6444 = vmatprep.subr.mxu0 0.0
      %6445 = vmatpush1.msra.mxu0 0.0
      %6446 = vmatprep.subr.mxu0 0.0
      %6447 = vmatpush1.msra.mxu0 0.0
      %6448 = vmatprep.subr.mxu0 0.0
      %6449 = vmatpush1.msra.mxu0 0.0
      %6450 = vmatprep.subr.mxu0 0.0
      %6451 = vmatpush1.msra.mxu0 0.0
      %6452 = vmatprep.mubr.f32.mxu0 0.0
      %v6453 = vand.u32 %v6068, 4294901760
      %6454 = vmatmul.mubr.f32.gmra.mrb[0].mxu0 %v6453
      %v6455 = vpop.f32.mrb[0].mxu0
      %v6456 = vadd.f32 %v6379, %v6455
      %v6457 = vpop.f32.mrb[0].mxu0
      %6458 = vdwg.mxu0
      %6459 = vmatprep.subr.mxu0 0.0
      %v6460 = vand.u32 %v6064, 4294901760
      %6461 = vmatpush1.msra.mxu0 %v6460
      %6462 = vmatprep.subr.mxu0 0.0
      %v6463 = vand.u32 %v6071, 4294901760
      %6464 = vmatpush1.msra.mxu0 %v6463
      %6465 = vmatprep.subr.mxu0 0.0
      %6466 = vmatpush1.msra.mxu0 0.0
      %6467 = vmatprep.subr.mxu0 0.0
      %6468 = vmatpush1.msra.mxu0 0.0
      %6469 = vmatprep.subr.mxu0 0.0
      %6470 = vmatpush1.msra.mxu0 0.0
      %6471 = vmatprep.subr.mxu0 0.0
      %6472 = vmatpush1.msra.mxu0 0.0
      %6473 = vmatprep.subr.mxu0 0.0
      %6474 = vmatpush1.msra.mxu0 0.0
      %6475 = vmatprep.subr.mxu0 0.0
      %6476 = vmatpush1.msra.mxu0 0.0
      %6477 = vmatprep.subr.mxu0 0.0
      %6478 = vmatpush1.msra.mxu0 0.0
      %6479 = vmatprep.subr.mxu0 0.0
      %6480 = vmatpush1.msra.mxu0 0.0
      %6481 = vmatprep.subr.mxu0 0.0
      %6482 = vmatpush1.msra.mxu0 0.0
      %6483 = vmatprep.subr.mxu0 0.0
      %6484 = vmatpush1.msra.mxu0 0.0
      %6485 = vmatprep.subr.mxu0 0.0
      %6486 = vmatpush1.msra.mxu0 0.0
      %6487 = vmatprep.subr.mxu0 0.0
      %6488 = vmatpush1.msra.mxu0 0.0
      %6489 = vmatprep.subr.mxu0 0.0
      %6490 = vmatpush1.msra.mxu0 0.0
      %6491 = vmatprep.subr.mxu0 0.0
      %6492 = vmatpush1.msra.mxu0 0.0
      %6493 = vmatprep.subr.mxu0 0.0
      %6494 = vmatpush1.msra.mxu0 0.0
      %6495 = vmatprep.subr.mxu0 0.0
      %6496 = vmatpush1.msra.mxu0 0.0
      %6497 = vmatprep.subr.mxu0 0.0
      %6498 = vmatpush1.msra.mxu0 0.0
      %6499 = vmatprep.subr.mxu0 0.0
      %6500 = vmatpush1.msra.mxu0 0.0
      %6501 = vmatprep.subr.mxu0 0.0
      %6502 = vmatpush1.msra.mxu0 0.0
      %6503 = vmatprep.subr.mxu0 0.0
      %6504 = vmatpush1.msra.mxu0 0.0
      %6505 = vmatprep.subr.mxu0 0.0
      %6506 = vmatpush1.msra.mxu0 0.0
      %6507 = vmatprep.subr.mxu0 0.0
      %6508 = vmatpush1.msra.mxu0 0.0
      %6509 = vmatprep.subr.mxu0 0.0
      %6510 = vmatpush1.msra.mxu0 0.0
      %6511 = vmatprep.subr.mxu0 0.0
      %6512 = vmatpush1.msra.mxu0 0.0
      %6513 = vmatprep.subr.mxu0 0.0
      %6514 = vmatpush1.msra.mxu0 0.0
      %6515 = vmatprep.subr.mxu0 0.0
      %6516 = vmatpush1.msra.mxu0 0.0
      %6517 = vmatprep.subr.mxu0 0.0
      %6518 = vmatpush1.msra.mxu0 0.0
      %6519 = vmatprep.subr.mxu0 0.0
      %6520 = vmatpush1.msra.mxu0 0.0
      %6521 = vmatprep.subr.mxu0 0.0
      %6522 = vmatpush1.msra.mxu0 0.0
      %6523 = vmatprep.subr.mxu0 0.0
      %6524 = vmatpush1.msra.mxu0 0.0
      %6525 = vmatprep.mubr.f32.mxu0 0.0
      %v6526 = vand.u32 %v6068, 4294901760
      %6527 = vmatmul.mubr.f32.gmra.mrb[0].mxu0 %v6526
      %v6528 = vpop.f32.mrb[0].mxu0
      %v6529 = vadd.f32 %v6456, %v6528
      %v6530 = vpop.f32.mrb[0].mxu0
      %6531 = vdwg.mxu0
      %v6532 = vmax.f32 %v6529, 0.0
      %v6533 = vld [vmem:[%s16] sm:$0xff]
      %v6534 = vld [vmem:[%s16 + $0x8] sm:$0xf]
      %v6536 = vsel %vm2069, %v6533, 0
      %v6539 = vsel %vm2069, %v6534, 0
      %v6542 = vsel %vm1123, %v6532, 0
      %6544 = vmatprep.subr.mxu0 0.0
      %v6545 = vand.u32 %v6542, 4294901760
      %6546 = vmatpush1.msra.mxu0 %v6545
      %6547 = vmatprep.subr.mxu0 0.0
      %6548 = vmatpush1.msra.mxu0 0.0
      %6549 = vmatprep.subr.mxu0 0.0
      %6550 = vmatpush1.msra.mxu0 0.0
      %6551 = vmatprep.subr.mxu0 0.0
      %6552 = vmatpush1.msra.mxu0 0.0
      %6553 = vmatprep.subr.mxu0 0.0
      %6554 = vmatpush1.msra.mxu0 0.0
      %6555 = vmatprep.subr.mxu0 0.0
      %6556 = vmatpush1.msra.mxu0 0.0
      %6557 = vmatprep.subr.mxu0 0.0
      %6558 = vmatpush1.msra.mxu0 0.0
      %6559 = vmatprep.subr.mxu0 0.0
      %6560 = vmatpush1.msra.mxu0 0.0
      %6561 = vmatprep.subr.mxu0 0.0
      %6562 = vmatpush1.msra.mxu0 0.0
      %6563 = vmatprep.subr.mxu0 0.0
      %6564 = vmatpush1.msra.mxu0 0.0
      %6565 = vmatprep.subr.mxu0 0.0
      %6566 = vmatpush1.msra.mxu0 0.0
      %6567 = vmatprep.subr.mxu0 0.0
      %6568 = vmatpush1.msra.mxu0 0.0
      %6569 = vmatprep.subr.mxu0 0.0
      %6570 = vmatpush1.msra.mxu0 0.0
      %6571 = vmatprep.subr.mxu0 0.0
      %6572 = vmatpush1.msra.mxu0 0.0
      %6573 = vmatprep.subr.mxu0 0.0
      %6574 = vmatpush1.msra.mxu0 0.0
      %6575 = vmatprep.subr.mxu0 0.0
      %6576 = vmatpush1.msra.mxu0 0.0
      %6577 = vmatprep.subr.mxu0 0.0
      %6578 = vmatpush1.msra.mxu0 0.0
      %6579 = vmatprep.subr.mxu0 0.0
      %6580 = vmatpush1.msra.mxu0 0.0
      %6581 = vmatprep.subr.mxu0 0.0
      %6582 = vmatpush1.msra.mxu0 0.0
      %6583 = vmatprep.subr.mxu0 0.0
      %6584 = vmatpush1.msra.mxu0 0.0
      %6585 = vmatprep.subr.mxu0 0.0
      %6586 = vmatpush1.msra.mxu0 0.0
      %6587 = vmatprep.subr.mxu0 0.0
      %6588 = vmatpush1.msra.mxu0 0.0
      %6589 = vmatprep.subr.mxu0 0.0
      %6590 = vmatpush1.msra.mxu0 0.0
      %6591 = vmatprep.subr.mxu0 0.0
      %6592 = vmatpush1.msra.mxu0 0.0
      %6593 = vmatprep.subr.mxu0 0.0
      %6594 = vmatpush1.msra.mxu0 0.0
      %6595 = vmatprep.subr.mxu0 0.0
      %6596 = vmatpush1.msra.mxu0 0.0
      %6597 = vmatprep.subr.mxu0 0.0
      %6598 = vmatpush1.msra.mxu0 0.0
      %6599 = vmatprep.subr.mxu0 0.0
      %6600 = vmatpush1.msra.mxu0 0.0
      %6601 = vmatprep.subr.mxu0 0.0
      %6602 = vmatpush1.msra.mxu0 0.0
      %6603 = vmatprep.subr.mxu0 0.0
      %6604 = vmatpush1.msra.mxu0 0.0
      %6605 = vmatprep.subr.mxu0 0.0
      %6606 = vmatpush1.msra.mxu0 0.0
      %6607 = vmatprep.subr.mxu0 0.0
      %6608 = vmatpush1.msra.mxu0 0.0
      %6609 = vmatprep.mubr.f32.mxu0 0.0
      %v6610 = vand.u32 %v6536, 4294901760
      %v6611 = vsub.f32 %v6536, %v6610
      %v6612 = vand.u32 %v6611, 4294901760
      %v6613 = vsub.f32 %v6611, %v6612
      %v6614 = vand.u32 %v6613, 4294901760
      %6615 = vmatmul.mubr.f32.gmra.mrb[0].mxu0 %v6614
      %v6616 = vpop.f32.mrb[0].mxu0
      %v6617 = vadd.f32 0.0, %v6616
      %v6618 = vpop.f32.mrb[0].mxu0
      %6619 = vmatprep.mubr.f32.mxu0 0.0
      %v6620 = vand.u32 %v6539, 4294901760
      %v6621 = vsub.f32 %v6539, %v6620
      %v6622 = vand.u32 %v6621, 4294901760
      %v6623 = vsub.f32 %v6621, %v6622
      %v6624 = vand.u32 %v6623, 4294901760
      %6625 = vmatmul.mubr.f32.gmra.mrb[0].mxu0 %v6624
      %v6626 = vpop.f32.mrb[0].mxu0
      %v6627 = vadd.f32 0.0, %v6626
      %v6628 = vpop.f32.mrb[0].mxu0
      %6629 = vdwg.mxu0
      %6630 = vmatprep.subr.mxu0 0.0
      %v6631 = vand.u32 %v6542, 4294901760
      %v6632 = vsub.f32 %v6542, %v6631
      %v6633 = vand.u32 %v6632, 4294901760
      %v6634 = vsub.f32 %v6632, %v6633
      %v6635 = vand.u32 %v6634, 4294901760
      %6636 = vmatpush1.msra.mxu0 %v6635
      %6637 = vmatprep.subr.mxu0 0.0
      %6638 = vmatpush1.msra.mxu0 0.0
      %6639 = vmatprep.subr.mxu0 0.0
      %6640 = vmatpush1.msra.mxu0 0.0
      %6641 = vmatprep.subr.mxu0 0.0
      %6642 = vmatpush1.msra.mxu0 0.0
      %6643 = vmatprep.subr.mxu0 0.0
      %6644 = vmatpush1.msra.mxu0 0.0
      %6645 = vmatprep.subr.mxu0 0.0
      %6646 = vmatpush1.msra.mxu0 0.0
      %6647 = vmatprep.subr.mxu0 0.0
      %6648 = vmatpush1.msra.mxu0 0.0
      %6649 = vmatprep.subr.mxu0 0.0
      %6650 = vmatpush1.msra.mxu0 0.0
      %6651 = vmatprep.subr.mxu0 0.0
      %6652 = vmatpush1.msra.mxu0 0.0
      %6653 = vmatprep.subr.mxu0 0.0
      %6654 = vmatpush1.msra.mxu0 0.0
      %6655 = vmatprep.subr.mxu0 0.0
      %6656 = vmatpush1.msra.mxu0 0.0
      %6657 = vmatprep.subr.mxu0 0.0
      %6658 = vmatpush1.msra.mxu0 0.0
      %6659 = vmatprep.subr.mxu0 0.0
      %6660 = vmatpush1.msra.mxu0 0.0
      %6661 = vmatprep.subr.mxu0 0.0
      %6662 = vmatpush1.msra.mxu0 0.0
      %6663 = vmatprep.subr.mxu0 0.0
      %6664 = vmatpush1.msra.mxu0 0.0
      %6665 = vmatprep.subr.mxu0 0.0
      %6666 = vmatpush1.msra.mxu0 0.0
      %6667 = vmatprep.subr.mxu0 0.0
      %6668 = vmatpush1.msra.mxu0 0.0
      %6669 = vmatprep.subr.mxu0 0.0
      %6670 = vmatpush1.msra.mxu0 0.0
      %6671 = vmatprep.subr.mxu0 0.0
      %6672 = vmatpush1.msra.mxu0 0.0
      %6673 = vmatprep.subr.mxu0 0.0
      %6674 = vmatpush1.msra.mxu0 0.0
      %6675 = vmatprep.subr.mxu0 0.0
      %6676 = vmatpush1.msra.mxu0 0.0
      %6677 = vmatprep.subr.mxu0 0.0
      %6678 = vmatpush1.msra.mxu0 0.0
      %6679 = vmatprep.subr.mxu0 0.0
      %6680 = vmatpush1.msra.mxu0 0.0
      %6681 = vmatprep.subr.mxu0 0.0
      %6682 = vmatpush1.msra.mxu0 0.0
      %6683 = vmatprep.subr.mxu0 0.0
      %6684 = vmatpush1.msra.mxu0 0.0
      %6685 = vmatprep.subr.mxu0 0.0
      %6686 = vmatpush1.msra.mxu0 0.0
      %6687 = vmatprep.subr.mxu0 0.0
      %6688 = vmatpush1.msra.mxu0 0.0
      %6689 = vmatprep.subr.mxu0 0.0
      %6690 = vmatpush1.msra.mxu0 0.0
      %6691 = vmatprep.subr.mxu0 0.0
      %6692 = vmatpush1.msra.mxu0 0.0
      %6693 = vmatprep.subr.mxu0 0.0
      %6694 = vmatpush1.msra.mxu0 0.0
      %6695 = vmatprep.subr.mxu0 0.0
      %6696 = vmatpush1.msra.mxu0 0.0
      %6697 = vmatprep.subr.mxu0 0.0
      %6698 = vmatpush1.msra.mxu0 0.0
      %6699 = vmatprep.mubr.f32.mxu0 0.0
      %v6700 = vand.u32 %v6536, 4294901760
      %6701 = vmatmul.mubr.f32.gmra.mrb[0].mxu0 %v6700
      %v6702 = vpop.f32.mrb[0].mxu0
      %v6703 = vadd.f32 %v6617, %v6702
      %v6704 = vpop.f32.mrb[0].mxu0
      %6705 = vmatprep.mubr.f32.mxu0 0.0
      %v6706 = vand.u32 %v6539, 4294901760
      %6707 = vmatmul.mubr.f32.gmra.mrb[0].mxu0 %v6706
      %v6708 = vpop.f32.mrb[0].mxu0
      %v6709 = vadd.f32 %v6627, %v6708
      %v6710 = vpop.f32.mrb[0].mxu0
      %6711 = vdwg.mxu0
      %6712 = vmatprep.subr.mxu0 0.0
      %v6713 = vand.u32 %v6542, 4294901760
      %v6714 = vsub.f32 %v6542, %v6713
      %6715 = vmatpush1.msra.mxu0 %v6714
      %6716 = vmatprep.subr.mxu0 0.0
      %6717 = vmatpush1.msra.mxu0 0.0
      %6718 = vmatprep.subr.mxu0 0.0
      %6719 = vmatpush1.msra.mxu0 0.0
      %6720 = vmatprep.subr.mxu0 0.0
      %6721 = vmatpush1.msra.mxu0 0.0
      %6722 = vmatprep.subr.mxu0 0.0
      %6723 = vmatpush1.msra.mxu0 0.0
      %6724 = vmatprep.subr.mxu0 0.0
      %6725 = vmatpush1.msra.mxu0 0.0
      %6726 = vmatprep.subr.mxu0 0.0
      %6727 = vmatpush1.msra.mxu0 0.0
      %6728 = vmatprep.subr.mxu0 0.0
      %6729 = vmatpush1.msra.mxu0 0.0
      %6730 = vmatprep.subr.mxu0 0.0
      %6731 = vmatpush1.msra.mxu0 0.0
      %6732 = vmatprep.subr.mxu0 0.0
      %6733 = vmatpush1.msra.mxu0 0.0
      %6734 = vmatprep.subr.mxu0 0.0
      %6735 = vmatpush1.msra.mxu0 0.0
      %6736 = vmatprep.subr.mxu0 0.0
      %6737 = vmatpush1.msra.mxu0 0.0
      %6738 = vmatprep.subr.mxu0 0.0
      %6739 = vmatpush1.msra.mxu0 0.0
      %6740 = vmatprep.subr.mxu0 0.0
      %6741 = vmatpush1.msra.mxu0 0.0
      %6742 = vmatprep.subr.mxu0 0.0
      %6743 = vmatpush1.msra.mxu0 0.0
      %6744 = vmatprep.subr.mxu0 0.0
      %6745 = vmatpush1.msra.mxu0 0.0
      %6746 = vmatprep.subr.mxu0 0.0
      %6747 = vmatpush1.msra.mxu0 0.0
      %6748 = vmatprep.subr.mxu0 0.0
      %6749 = vmatpush1.msra.mxu0 0.0
      %6750 = vmatprep.subr.mxu0 0.0
      %6751 = vmatpush1.msra.mxu0 0.0
      %6752 = vmatprep.subr.mxu0 0.0
      %6753 = vmatpush1.msra.mxu0 0.0
      %6754 = vmatprep.subr.mxu0 0.0
      %6755 = vmatpush1.msra.mxu0 0.0
      %6756 = vmatprep.subr.mxu0 0.0
      %6757 = vmatpush1.msra.mxu0 0.0
      %6758 = vmatprep.subr.mxu0 0.0
      %6759 = vmatpush1.msra.mxu0 0.0
      %6760 = vmatprep.subr.mxu0 0.0
      %6761 = vmatpush1.msra.mxu0 0.0
      %6762 = vmatprep.subr.mxu0 0.0
      %6763 = vmatpush1.msra.mxu0 0.0
      %6764 = vmatprep.subr.mxu0 0.0
      %6765 = vmatpush1.msra.mxu0 0.0
      %6766 = vmatprep.subr.mxu0 0.0
      %6767 = vmatpush1.msra.mxu0 0.0
      %6768 = vmatprep.subr.mxu0 0.0
      %6769 = vmatpush1.msra.mxu0 0.0
      %6770 = vmatprep.subr.mxu0 0.0
      %6771 = vmatpush1.msra.mxu0 0.0
      %6772 = vmatprep.subr.mxu0 0.0
      %6773 = vmatpush1.msra.mxu0 0.0
      %6774 = vmatprep.subr.mxu0 0.0
      %6775 = vmatpush1.msra.mxu0 0.0
      %6776 = vmatprep.subr.mxu0 0.0
      %6777 = vmatpush1.msra.mxu0 0.0
      %6778 = vmatprep.mubr.f32.mxu0 0.0
      %v6779 = vand.u32 %v6536, 4294901760
      %v6780 = vsub.f32 %v6536, %v6779
      %6781 = vmatmul.mubr.f32.gmra.mrb[0].mxu0 %v6780
      %v6782 = vpop.f32.mrb[0].mxu0
      %v6783 = vadd.f32 %v6703, %v6782
      %v6784 = vpop.f32.mrb[0].mxu0
      %6785 = vmatprep.mubr.f32.mxu0 0.0
      %v6786 = vand.u32 %v6539, 4294901760
      %v6787 = vsub.f32 %v6539, %v6786
      %6788 = vmatmul.mubr.f32.gmra.mrb[0].mxu0 %v6787
      %v6789 = vpop.f32.mrb[0].mxu0
      %v6790 = vadd.f32 %v6709, %v6789
      %v6791 = vpop.f32.mrb[0].mxu0
      %6792 = vdwg.mxu0
      %6793 = vmatprep.subr.mxu0 0.0
      %v6794 = vand.u32 %v6542, 4294901760
      %6795 = vmatpush1.msra.mxu0 %v6794
      %6796 = vmatprep.subr.mxu0 0.0
      %6797 = vmatpush1.msra.mxu0 0.0
      %6798 = vmatprep.subr.mxu0 0.0
      %6799 = vmatpush1.msra.mxu0 0.0
      %6800 = vmatprep.subr.mxu0 0.0
      %6801 = vmatpush1.msra.mxu0 0.0
      %6802 = vmatprep.subr.mxu0 0.0
      %6803 = vmatpush1.msra.mxu0 0.0
      %6804 = vmatprep.subr.mxu0 0.0
      %6805 = vmatpush1.msra.mxu0 0.0
      %6806 = vmatprep.subr.mxu0 0.0
      %6807 = vmatpush1.msra.mxu0 0.0
      %6808 = vmatprep.subr.mxu0 0.0
      %6809 = vmatpush1.msra.mxu0 0.0
      %6810 = vmatprep.subr.mxu0 0.0
      %6811 = vmatpush1.msra.mxu0 0.0
      %6812 = vmatprep.subr.mxu0 0.0
      %6813 = vmatpush1.msra.mxu0 0.0
      %6814 = vmatprep.subr.mxu0 0.0
      %6815 = vmatpush1.msra.mxu0 0.0
      %6816 = vmatprep.subr.mxu0 0.0
      %6817 = vmatpush1.msra.mxu0 0.0
      %6818 = vmatprep.subr.mxu0 0.0
      %6819 = vmatpush1.msra.mxu0 0.0
      %6820 = vmatprep.subr.mxu0 0.0
      %6821 = vmatpush1.msra.mxu0 0.0
      %6822 = vmatprep.subr.mxu0 0.0
      %6823 = vmatpush1.msra.mxu0 0.0
      %6824 = vmatprep.subr.mxu0 0.0
      %6825 = vmatpush1.msra.mxu0 0.0
      %6826 = vmatprep.subr.mxu0 0.0
      %6827 = vmatpush1.msra.mxu0 0.0
      %6828 = vmatprep.subr.mxu0 0.0
      %6829 = vmatpush1.msra.mxu0 0.0
      %6830 = vmatprep.subr.mxu0 0.0
      %6831 = vmatpush1.msra.mxu0 0.0
      %6832 = vmatprep.subr.mxu0 0.0
      %6833 = vmatpush1.msra.mxu0 0.0
      %6834 = vmatprep.subr.mxu0 0.0
      %6835 = vmatpush1.msra.mxu0 0.0
      %6836 = vmatprep.subr.mxu0 0.0
      %6837 = vmatpush1.msra.mxu0 0.0
      %6838 = vmatprep.subr.mxu0 0.0
      %6839 = vmatpush1.msra.mxu0 0.0
      %6840 = vmatprep.subr.mxu0 0.0
      %6841 = vmatpush1.msra.mxu0 0.0
      %6842 = vmatprep.subr.mxu0 0.0
      %6843 = vmatpush1.msra.mxu0 0.0
      %6844 = vmatprep.subr.mxu0 0.0
      %6845 = vmatpush1.msra.mxu0 0.0
      %6846 = vmatprep.subr.mxu0 0.0
      %6847 = vmatpush1.msra.mxu0 0.0
      %6848 = vmatprep.subr.mxu0 0.0
      %6849 = vmatpush1.msra.mxu0 0.0
      %6850 = vmatprep.subr.mxu0 0.0
      %6851 = vmatpush1.msra.mxu0 0.0
      %6852 = vmatprep.subr.mxu0 0.0
      %6853 = vmatpush1.msra.mxu0 0.0
      %6854 = vmatprep.subr.mxu0 0.0
      %6855 = vmatpush1.msra.mxu0 0.0
      %6856 = vmatprep.subr.mxu0 0.0
      %6857 = vmatpush1.msra.mxu0 0.0
      %6858 = vmatprep.mubr.f32.mxu0 0.0
      %v6859 = vand.u32 %v6536, 4294901760
      %v6860 = vsub.f32 %v6536, %v6859
      %v6861 = vand.u32 %v6860, 4294901760
      %6862 = vmatmul.mubr.f32.gmra.mrb[0].mxu0 %v6861
      %v6863 = vpop.f32.mrb[0].mxu0
      %v6864 = vadd.f32 %v6783, %v6863
      %v6865 = vpop.f32.mrb[0].mxu0
      %6866 = vmatprep.mubr.f32.mxu0 0.0
      %v6867 = vand.u32 %v6539, 4294901760
      %v6868 = vsub.f32 %v6539, %v6867
      %v6869 = vand.u32 %v6868, 4294901760
      %6870 = vmatmul.mubr.f32.gmra.mrb[0].mxu0 %v6869
      %v6871 = vpop.f32.mrb[0].mxu0
      %v6872 = vadd.f32 %v6790, %v6871
      %v6873 = vpop.f32.mrb[0].mxu0
      %6874 = vdwg.mxu0
      %6875 = vmatprep.subr.mxu0 0.0
      %v6876 = vand.u32 %v6542, 4294901760
      %v6877 = vsub.f32 %v6542, %v6876
      %v6878 = vand.u32 %v6877, 4294901760
      %6879 = vmatpush1.msra.mxu0 %v6878
      %6880 = vmatprep.subr.mxu0 0.0
      %6881 = vmatpush1.msra.mxu0 0.0
      %6882 = vmatprep.subr.mxu0 0.0
      %6883 = vmatpush1.msra.mxu0 0.0
      %6884 = vmatprep.subr.mxu0 0.0
      %6885 = vmatpush1.msra.mxu0 0.0
      %6886 = vmatprep.subr.mxu0 0.0
      %6887 = vmatpush1.msra.mxu0 0.0
      %6888 = vmatprep.subr.mxu0 0.0
      %6889 = vmatpush1.msra.mxu0 0.0
      %6890 = vmatprep.subr.mxu0 0.0
      %6891 = vmatpush1.msra.mxu0 0.0
      %6892 = vmatprep.subr.mxu0 0.0
      %6893 = vmatpush1.msra.mxu0 0.0
      %6894 = vmatprep.subr.mxu0 0.0
      %6895 = vmatpush1.msra.mxu0 0.0
      %6896 = vmatprep.subr.mxu0 0.0
      %6897 = vmatpush1.msra.mxu0 0.0
      %6898 = vmatprep.subr.mxu0 0.0
      %6899 = vmatpush1.msra.mxu0 0.0
      %6900 = vmatprep.subr.mxu0 0.0
      %6901 = vmatpush1.msra.mxu0 0.0
      %6902 = vmatprep.subr.mxu0 0.0
      %6903 = vmatpush1.msra.mxu0 0.0
      %6904 = vmatprep.subr.mxu0 0.0
      %6905 = vmatpush1.msra.mxu0 0.0
      %6906 = vmatprep.subr.mxu0 0.0
      %6907 = vmatpush1.msra.mxu0 0.0
      %6908 = vmatprep.subr.mxu0 0.0
      %6909 = vmatpush1.msra.mxu0 0.0
      %6910 = vmatprep.subr.mxu0 0.0
      %6911 = vmatpush1.msra.mxu0 0.0
      %6912 = vmatprep.subr.mxu0 0.0
      %6913 = vmatpush1.msra.mxu0 0.0
      %6914 = vmatprep.subr.mxu0 0.0
      %6915 = vmatpush1.msra.mxu0 0.0
      %6916 = vmatprep.subr.mxu0 0.0
      %6917 = vmatpush1.msra.mxu0 0.0
      %6918 = vmatprep.subr.mxu0 0.0
      %6919 = vmatpush1.msra.mxu0 0.0
      %6920 = vmatprep.subr.mxu0 0.0
      %6921 = vmatpush1.msra.mxu0 0.0
      %6922 = vmatprep.subr.mxu0 0.0
      %6923 = vmatpush1.msra.mxu0 0.0
      %6924 = vmatprep.subr.mxu0 0.0
      %6925 = vmatpush1.msra.mxu0 0.0
      %6926 = vmatprep.subr.mxu0 0.0
      %6927 = vmatpush1.msra.mxu0 0.0
      %6928 = vmatprep.subr.mxu0 0.0
      %6929 = vmatpush1.msra.mxu0 0.0
      %6930 = vmatprep.subr.mxu0 0.0
      %6931 = vmatpush1.msra.mxu0 0.0
      %6932 = vmatprep.subr.mxu0 0.0
      %6933 = vmatpush1.msra.mxu0 0.0
      %6934 = vmatprep.subr.mxu0 0.0
      %6935 = vmatpush1.msra.mxu0 0.0
      %6936 = vmatprep.subr.mxu0 0.0
      %6937 = vmatpush1.msra.mxu0 0.0
      %6938 = vmatprep.subr.mxu0 0.0
      %6939 = vmatpush1.msra.mxu0 0.0
      %6940 = vmatprep.subr.mxu0 0.0
      %6941 = vmatpush1.msra.mxu0 0.0
      %6942 = vmatprep.mubr.f32.mxu0 0.0
      %v6943 = vand.u32 %v6536, 4294901760
      %6944 = vmatmul.mubr.f32.gmra.mrb[0].mxu0 %v6943
      %v6945 = vpop.f32.mrb[0].mxu0
      %v6946 = vadd.f32 %v6864, %v6945
      %v6947 = vpop.f32.mrb[0].mxu0
      %6948 = vmatprep.mubr.f32.mxu0 0.0
      %v6949 = vand.u32 %v6539, 4294901760
      %6950 = vmatmul.mubr.f32.gmra.mrb[0].mxu0 %v6949
      %v6951 = vpop.f32.mrb[0].mxu0
      %v6952 = vadd.f32 %v6872, %v6951
      %v6953 = vpop.f32.mrb[0].mxu0
      %6954 = vdwg.mxu0
      %6955 = vmatprep.subr.mxu0 0.0
      %v6956 = vand.u32 %v6542, 4294901760
      %6957 = vmatpush1.msra.mxu0 %v6956
      %6958 = vmatprep.subr.mxu0 0.0
      %6959 = vmatpush1.msra.mxu0 0.0
      %6960 = vmatprep.subr.mxu0 0.0
      %6961 = vmatpush1.msra.mxu0 0.0
      %6962 = vmatprep.subr.mxu0 0.0
      %6963 = vmatpush1.msra.mxu0 0.0
      %6964 = vmatprep.subr.mxu0 0.0
      %6965 = vmatpush1.msra.mxu0 0.0
      %6966 = vmatprep.subr.mxu0 0.0
      %6967 = vmatpush1.msra.mxu0 0.0
      %6968 = vmatprep.subr.mxu0 0.0
      %6969 = vmatpush1.msra.mxu0 0.0
      %6970 = vmatprep.subr.mxu0 0.0
      %6971 = vmatpush1.msra.mxu0 0.0
      %6972 = vmatprep.subr.mxu0 0.0
      %6973 = vmatpush1.msra.mxu0 0.0
      %6974 = vmatprep.subr.mxu0 0.0
      %6975 = vmatpush1.msra.mxu0 0.0
      %6976 = vmatprep.subr.mxu0 0.0
      %6977 = vmatpush1.msra.mxu0 0.0
      %6978 = vmatprep.subr.mxu0 0.0
      %6979 = vmatpush1.msra.mxu0 0.0
      %6980 = vmatprep.subr.mxu0 0.0
      %6981 = vmatpush1.msra.mxu0 0.0
      %6982 = vmatprep.subr.mxu0 0.0
      %6983 = vmatpush1.msra.mxu0 0.0
      %6984 = vmatprep.subr.mxu0 0.0
      %6985 = vmatpush1.msra.mxu0 0.0
      %6986 = vmatprep.subr.mxu0 0.0
      %6987 = vmatpush1.msra.mxu0 0.0
      %6988 = vmatprep.subr.mxu0 0.0
      %6989 = vmatpush1.msra.mxu0 0.0
      %6990 = vmatprep.subr.mxu0 0.0
      %6991 = vmatpush1.msra.mxu0 0.0
      %6992 = vmatprep.subr.mxu0 0.0
      %6993 = vmatpush1.msra.mxu0 0.0
      %6994 = vmatprep.subr.mxu0 0.0
      %6995 = vmatpush1.msra.mxu0 0.0
      %6996 = vmatprep.subr.mxu0 0.0
      %6997 = vmatpush1.msra.mxu0 0.0
      %6998 = vmatprep.subr.mxu0 0.0
      %6999 = vmatpush1.msra.mxu0 0.0
      %7000 = vmatprep.subr.mxu0 0.0
      %7001 = vmatpush1.msra.mxu0 0.0
      %7002 = vmatprep.subr.mxu0 0.0
      %7003 = vmatpush1.msra.mxu0 0.0
      %7004 = vmatprep.subr.mxu0 0.0
      %7005 = vmatpush1.msra.mxu0 0.0
      %7006 = vmatprep.subr.mxu0 0.0
      %7007 = vmatpush1.msra.mxu0 0.0
      %7008 = vmatprep.subr.mxu0 0.0
      %7009 = vmatpush1.msra.mxu0 0.0
      %7010 = vmatprep.subr.mxu0 0.0
      %7011 = vmatpush1.msra.mxu0 0.0
      %7012 = vmatprep.subr.mxu0 0.0
      %7013 = vmatpush1.msra.mxu0 0.0
      %7014 = vmatprep.subr.mxu0 0.0
      %7015 = vmatpush1.msra.mxu0 0.0
      %7016 = vmatprep.subr.mxu0 0.0
      %7017 = vmatpush1.msra.mxu0 0.0
      %7018 = vmatprep.subr.mxu0 0.0
      %7019 = vmatpush1.msra.mxu0 0.0
      %7020 = vmatprep.mubr.f32.mxu0 0.0
      %v7021 = vand.u32 %v6536, 4294901760
      %7022 = vmatmul.mubr.f32.gmra.mrb[0].mxu0 %v7021
      %v7023 = vpop.f32.mrb[0].mxu0
      %v7024 = vadd.f32 %v6946, %v7023
      %v7025 = vpop.f32.mrb[0].mxu0
      %7026 = vmatprep.mubr.f32.mxu0 0.0
      %v7027 = vand.u32 %v6539, 4294901760
      %7028 = vmatmul.mubr.f32.gmra.mrb[0].mxu0 %v7027
      %v7029 = vpop.f32.mrb[0].mxu0
      %v7030 = vadd.f32 %v6952, %v7029
      %v7031 = vpop.f32.mrb[0].mxu0
      %7032 = vdwg.mxu0
      %v7033 = vmul.f32 %v7024, 0.16666667
      %v7034 = vmul.f32 %v7030, 0.16666667
      %v7035 = vadd.f32 %v7033, 0.5
      %v7036 = vadd.f32 %v7034, 0.5
      %v7037 = vmax.f32 %v7035, 0.0
      %v7038 = vmax.f32 %v7036, 0.0
      %v7039 = vmin.f32 %v7037, 1.0
      %v7040 = vmin.f32 %v7038, 1.0
      %v7041 = vld [vmem:[%s17] sm:$0x1]
      %v7043 = vsel %vm1141, %v7041, 0
      %v7046 = vsel %vm1123, %v6054, 0
      %v7049 = vsel %vm1123, %v6055, 0
      %v7051 = vand.u32 %v6053, 4294901760
      %7052 = vmatprep.subr.mxu0 %v7051
      %v7053 = vand.u32 %v6052, 4294901760
      %7054 = vmatpush1.msra.mxu0 %v7053
      %v7055 = vand.u32 %v7049, 4294901760
      %7056 = vmatprep.subr.mxu0 %v7055
      %v7057 = vand.u32 %v7046, 4294901760
      %7058 = vmatpush1.msra.mxu0 %v7057
      %7059 = vmatprep.subr.mxu0 0.0
      %7060 = vmatpush1.msra.mxu0 0.0
      %7061 = vmatprep.subr.mxu0 0.0
      %7062 = vmatpush1.msra.mxu0 0.0
      %7063 = vmatprep.subr.mxu0 0.0
      %7064 = vmatpush1.msra.mxu0 0.0
      %7065 = vmatprep.subr.mxu0 0.0
      %7066 = vmatpush1.msra.mxu0 0.0
      %7067 = vmatprep.subr.mxu0 0.0
      %7068 = vmatpush1.msra.mxu0 0.0
      %7069 = vmatprep.subr.mxu0 0.0
      %7070 = vmatpush1.msra.mxu0 0.0
      %7071 = vmatprep.subr.mxu0 0.0
      %7072 = vmatpush1.msra.mxu0 0.0
      %7073 = vmatprep.subr.mxu0 0.0
      %7074 = vmatpush1.msra.mxu0 0.0
      %7075 = vmatprep.subr.mxu0 0.0
      %7076 = vmatpush1.msra.mxu0 0.0
      %7077 = vmatprep.subr.mxu0 0.0
      %7078 = vmatpush1.msra.mxu0 0.0
      %7079 = vmatprep.subr.mxu0 0.0
      %7080 = vmatpush1.msra.mxu0 0.0
      %7081 = vmatprep.subr.mxu0 0.0
      %7082 = vmatpush1.msra.mxu0 0.0
      %7083 = vmatprep.subr.mxu0 0.0
      %7084 = vmatpush1.msra.mxu0 0.0
      %7085 = vmatprep.subr.mxu0 0.0
      %7086 = vmatpush1.msra.mxu0 0.0
      %7087 = vmatprep.subr.mxu0 0.0
      %7088 = vmatpush1.msra.mxu0 0.0
      %7089 = vmatprep.subr.mxu0 0.0
      %7090 = vmatpush1.msra.mxu0 0.0
      %7091 = vmatprep.subr.mxu0 0.0
      %7092 = vmatpush1.msra.mxu0 0.0
      %7093 = vmatprep.subr.mxu0 0.0
      %7094 = vmatpush1.msra.mxu0 0.0
      %7095 = vmatprep.subr.mxu0 0.0
      %7096 = vmatpush1.msra.mxu0 0.0
      %7097 = vmatprep.subr.mxu0 0.0
      %7098 = vmatpush1.msra.mxu0 0.0
      %7099 = vmatprep.subr.mxu0 0.0
      %7100 = vmatpush1.msra.mxu0 0.0
      %7101 = vmatprep.subr.mxu0 0.0
      %7102 = vmatpush1.msra.mxu0 0.0
      %7103 = vmatprep.subr.mxu0 0.0
      %7104 = vmatpush1.msra.mxu0 0.0
      %7105 = vmatprep.subr.mxu0 0.0
      %7106 = vmatpush1.msra.mxu0 0.0
      %7107 = vmatprep.subr.mxu0 0.0
      %7108 = vmatpush1.msra.mxu0 0.0
      %7109 = vmatprep.subr.mxu0 0.0
      %7110 = vmatpush1.msra.mxu0 0.0
      %7111 = vmatprep.subr.mxu0 0.0
      %7112 = vmatpush1.msra.mxu0 0.0
      %7113 = vmatprep.subr.mxu0 0.0
      %7114 = vmatpush1.msra.mxu0 0.0
      %7115 = vmatprep.subr.mxu0 0.0
      %7116 = vmatpush1.msra.mxu0 0.0
      %7117 = vmatprep.subr.mxu0 0.0
      %7118 = vmatpush1.msra.mxu0 0.0
      %7119 = vmatprep.mubr.f32.mxu0 0.0
      %v7120 = vand.u32 %v7043, 4294901760
      %v7121 = vsub.f32 %v7043, %v7120
      %v7122 = vand.u32 %v7121, 4294901760
      %v7123 = vsub.f32 %v7121, %v7122
      %v7124 = vand.u32 %v7123, 4294901760
      %7125 = vmatmul.mubr.f32.gmra.mrb[0].mxu0 %v7124
      %v7126 = vpop.f32.mrb[0].mxu0
      %v7127 = vadd.f32 0.0, %v7126
      %v7128 = vpop.f32.mrb[0].mxu0
      %v7129 = vadd.f32 0.0, %v7128
      %7130 = vdwg.mxu0
      %v7131 = vand.u32 %v6053, 4294901760
      %v7132 = vsub.f32 %v6053, %v7131
      %v7133 = vand.u32 %v7132, 4294901760
      %v7134 = vsub.f32 %v7132, %v7133
      %v7135 = vand.u32 %v7134, 4294901760
      %7136 = vmatprep.subr.mxu0 %v7135
      %v7137 = vand.u32 %v6052, 4294901760
      %v7138 = vsub.f32 %v6052, %v7137
      %v7139 = vand.u32 %v7138, 4294901760
      %v7140 = vsub.f32 %v7138, %v7139
      %v7141 = vand.u32 %v7140, 4294901760
      %7142 = vmatpush1.msra.mxu0 %v7141
      %v7143 = vand.u32 %v7049, 4294901760
      %v7144 = vsub.f32 %v7049, %v7143
      %v7145 = vand.u32 %v7144, 4294901760
      %v7146 = vsub.f32 %v7144, %v7145
      %v7147 = vand.u32 %v7146, 4294901760
      %7148 = vmatprep.subr.mxu0 %v7147
      %v7149 = vand.u32 %v7046, 4294901760
      %v7150 = vsub.f32 %v7046, %v7149
      %v7151 = vand.u32 %v7150, 4294901760
      %v7152 = vsub.f32 %v7150, %v7151
      %v7153 = vand.u32 %v7152, 4294901760
      %7154 = vmatpush1.msra.mxu0 %v7153
      %7155 = vmatprep.subr.mxu0 0.0
      %7156 = vmatpush1.msra.mxu0 0.0
      %7157 = vmatprep.subr.mxu0 0.0
      %7158 = vmatpush1.msra.mxu0 0.0
      %7159 = vmatprep.subr.mxu0 0.0
      %7160 = vmatpush1.msra.mxu0 0.0
      %7161 = vmatprep.subr.mxu0 0.0
      %7162 = vmatpush1.msra.mxu0 0.0
      %7163 = vmatprep.subr.mxu0 0.0
      %7164 = vmatpush1.msra.mxu0 0.0
      %7165 = vmatprep.subr.mxu0 0.0
      %7166 = vmatpush1.msra.mxu0 0.0
      %7167 = vmatprep.subr.mxu0 0.0
      %7168 = vmatpush1.msra.mxu0 0.0
      %7169 = vmatprep.subr.mxu0 0.0
      %7170 = vmatpush1.msra.mxu0 0.0
      %7171 = vmatprep.subr.mxu0 0.0
      %7172 = vmatpush1.msra.mxu0 0.0
      %7173 = vmatprep.subr.mxu0 0.0
      %7174 = vmatpush1.msra.mxu0 0.0
      %7175 = vmatprep.subr.mxu0 0.0
      %7176 = vmatpush1.msra.mxu0 0.0
      %7177 = vmatprep.subr.mxu0 0.0
      %7178 = vmatpush1.msra.mxu0 0.0
      %7179 = vmatprep.subr.mxu0 0.0
      %7180 = vmatpush1.msra.mxu0 0.0
      %7181 = vmatprep.subr.mxu0 0.0
      %7182 = vmatpush1.msra.mxu0 0.0
      %7183 = vmatprep.subr.mxu0 0.0
      %7184 = vmatpush1.msra.mxu0 0.0
      %7185 = vmatprep.subr.mxu0 0.0
      %7186 = vmatpush1.msra.mxu0 0.0
      %7187 = vmatprep.subr.mxu0 0.0
      %7188 = vmatpush1.msra.mxu0 0.0
      %7189 = vmatprep.subr.mxu0 0.0
      %7190 = vmatpush1.msra.mxu0 0.0
      %7191 = vmatprep.subr.mxu0 0.0
      %7192 = vmatpush1.msra.mxu0 0.0
      %7193 = vmatprep.subr.mxu0 0.0
      %7194 = vmatpush1.msra.mxu0 0.0
      %7195 = vmatprep.subr.mxu0 0.0
      %7196 = vmatpush1.msra.mxu0 0.0
      %7197 = vmatprep.subr.mxu0 0.0
      %7198 = vmatpush1.msra.mxu0 0.0
      %7199 = vmatprep.subr.mxu0 0.0
      %7200 = vmatpush1.msra.mxu0 0.0
      %7201 = vmatprep.subr.mxu0 0.0
      %7202 = vmatpush1.msra.mxu0 0.0
      %7203 = vmatprep.subr.mxu0 0.0
      %7204 = vmatpush1.msra.mxu0 0.0
      %7205 = vmatprep.subr.mxu0 0.0
      %7206 = vmatpush1.msra.mxu0 0.0
      %7207 = vmatprep.subr.mxu0 0.0
      %7208 = vmatpush1.msra.mxu0 0.0
      %7209 = vmatprep.subr.mxu0 0.0
      %7210 = vmatpush1.msra.mxu0 0.0
      %7211 = vmatprep.subr.mxu0 0.0
      %7212 = vmatpush1.msra.mxu0 0.0
      %7213 = vmatprep.subr.mxu0 0.0
      %7214 = vmatpush1.msra.mxu0 0.0
      %7215 = vmatprep.mubr.f32.mxu0 0.0
      %v7216 = vand.u32 %v7043, 4294901760
      %7217 = vmatmul.mubr.f32.gmra.mrb[0].mxu0 %v7216
      %v7218 = vpop.f32.mrb[0].mxu0
      %v7219 = vadd.f32 %v7127, %v7218
      %v7220 = vpop.f32.mrb[0].mxu0
      %v7221 = vadd.f32 %v7129, %v7220
      %7222 = vdwg.mxu0
      %v7223 = vand.u32 %v6053, 4294901760
      %v7224 = vsub.f32 %v6053, %v7223
      %7225 = vmatprep.subr.mxu0 %v7224
      %v7226 = vand.u32 %v6052, 4294901760
      %v7227 = vsub.f32 %v6052, %v7226
      %7228 = vmatpush1.msra.mxu0 %v7227
      %v7229 = vand.u32 %v7049, 4294901760
      %v7230 = vsub.f32 %v7049, %v7229
      %7231 = vmatprep.subr.mxu0 %v7230
      %v7232 = vand.u32 %v7046, 4294901760
      %v7233 = vsub.f32 %v7046, %v7232
      %7234 = vmatpush1.msra.mxu0 %v7233
      %7235 = vmatprep.subr.mxu0 0.0
      %7236 = vmatpush1.msra.mxu0 0.0
      %7237 = vmatprep.subr.mxu0 0.0
      %7238 = vmatpush1.msra.mxu0 0.0
      %7239 = vmatprep.subr.mxu0 0.0
      %7240 = vmatpush1.msra.mxu0 0.0
      %7241 = vmatprep.subr.mxu0 0.0
      %7242 = vmatpush1.msra.mxu0 0.0
      %7243 = vmatprep.subr.mxu0 0.0
      %7244 = vmatpush1.msra.mxu0 0.0
      %7245 = vmatprep.subr.mxu0 0.0
      %7246 = vmatpush1.msra.mxu0 0.0
      %7247 = vmatprep.subr.mxu0 0.0
      %7248 = vmatpush1.msra.mxu0 0.0
      %7249 = vmatprep.subr.mxu0 0.0
      %7250 = vmatpush1.msra.mxu0 0.0
      %7251 = vmatprep.subr.mxu0 0.0
      %7252 = vmatpush1.msra.mxu0 0.0
      %7253 = vmatprep.subr.mxu0 0.0
      %7254 = vmatpush1.msra.mxu0 0.0
      %7255 = vmatprep.subr.mxu0 0.0
      %7256 = vmatpush1.msra.mxu0 0.0
      %7257 = vmatprep.subr.mxu0 0.0
      %7258 = vmatpush1.msra.mxu0 0.0
      %7259 = vmatprep.subr.mxu0 0.0
      %7260 = vmatpush1.msra.mxu0 0.0
      %7261 = vmatprep.subr.mxu0 0.0
      %7262 = vmatpush1.msra.mxu0 0.0
      %7263 = vmatprep.subr.mxu0 0.0
      %7264 = vmatpush1.msra.mxu0 0.0
      %7265 = vmatprep.subr.mxu0 0.0
      %7266 = vmatpush1.msra.mxu0 0.0
      %7267 = vmatprep.subr.mxu0 0.0
      %7268 = vmatpush1.msra.mxu0 0.0
      %7269 = vmatprep.subr.mxu0 0.0
      %7270 = vmatpush1.msra.mxu0 0.0
      %7271 = vmatprep.subr.mxu0 0.0
      %7272 = vmatpush1.msra.mxu0 0.0
      %7273 = vmatprep.subr.mxu0 0.0
      %7274 = vmatpush1.msra.mxu0 0.0
      %7275 = vmatprep.subr.mxu0 0.0
      %7276 = vmatpush1.msra.mxu0 0.0
      %7277 = vmatprep.subr.mxu0 0.0
      %7278 = vmatpush1.msra.mxu0 0.0
      %7279 = vmatprep.subr.mxu0 0.0
      %7280 = vmatpush1.msra.mxu0 0.0
      %7281 = vmatprep.subr.mxu0 0.0
      %7282 = vmatpush1.msra.mxu0 0.0
      %7283 = vmatprep.subr.mxu0 0.0
      %7284 = vmatpush1.msra.mxu0 0.0
      %7285 = vmatprep.subr.mxu0 0.0
      %7286 = vmatpush1.msra.mxu0 0.0
      %7287 = vmatprep.subr.mxu0 0.0
      %7288 = vmatpush1.msra.mxu0 0.0
      %7289 = vmatprep.subr.mxu0 0.0
      %7290 = vmatpush1.msra.mxu0 0.0
      %7291 = vmatprep.subr.mxu0 0.0
      %7292 = vmatpush1.msra.mxu0 0.0
      %7293 = vmatprep.subr.mxu0 0.0
      %7294 = vmatpush1.msra.mxu0 0.0
      %7295 = vmatprep.mubr.f32.mxu0 0.0
      %v7296 = vand.u32 %v7043, 4294901760
      %v7297 = vsub.f32 %v7043, %v7296
      %7298 = vmatmul.mubr.f32.gmra.mrb[0].mxu0 %v7297
      %v7299 = vpop.f32.mrb[0].mxu0
      %v7300 = vadd.f32 %v7219, %v7299
      %v7301 = vpop.f32.mrb[0].mxu0
      %v7302 = vadd.f32 %v7221, %v7301
      %7303 = vdwg.mxu0
      %v7304 = vand.u32 %v6053, 4294901760
      %7305 = vmatprep.subr.mxu0 %v7304
      %v7306 = vand.u32 %v6052, 4294901760
      %7307 = vmatpush1.msra.mxu0 %v7306
      %v7308 = vand.u32 %v7049, 4294901760
      %7309 = vmatprep.subr.mxu0 %v7308
      %v7310 = vand.u32 %v7046, 4294901760
      %7311 = vmatpush1.msra.mxu0 %v7310
      %7312 = vmatprep.subr.mxu0 0.0
      %7313 = vmatpush1.msra.mxu0 0.0
      %7314 = vmatprep.subr.mxu0 0.0
      %7315 = vmatpush1.msra.mxu0 0.0
      %7316 = vmatprep.subr.mxu0 0.0
      %7317 = vmatpush1.msra.mxu0 0.0
      %7318 = vmatprep.subr.mxu0 0.0
      %7319 = vmatpush1.msra.mxu0 0.0
      %7320 = vmatprep.subr.mxu0 0.0
      %7321 = vmatpush1.msra.mxu0 0.0
      %7322 = vmatprep.subr.mxu0 0.0
      %7323 = vmatpush1.msra.mxu0 0.0
      %7324 = vmatprep.subr.mxu0 0.0
      %7325 = vmatpush1.msra.mxu0 0.0
      %7326 = vmatprep.subr.mxu0 0.0
      %7327 = vmatpush1.msra.mxu0 0.0
      %7328 = vmatprep.subr.mxu0 0.0
      %7329 = vmatpush1.msra.mxu0 0.0
      %7330 = vmatprep.subr.mxu0 0.0
      %7331 = vmatpush1.msra.mxu0 0.0
      %7332 = vmatprep.subr.mxu0 0.0
      %7333 = vmatpush1.msra.mxu0 0.0
      %7334 = vmatprep.subr.mxu0 0.0
      %7335 = vmatpush1.msra.mxu0 0.0
      %7336 = vmatprep.subr.mxu0 0.0
      %7337 = vmatpush1.msra.mxu0 0.0
      %7338 = vmatprep.subr.mxu0 0.0
      %7339 = vmatpush1.msra.mxu0 0.0
      %7340 = vmatprep.subr.mxu0 0.0
      %7341 = vmatpush1.msra.mxu0 0.0
      %7342 = vmatprep.subr.mxu0 0.0
      %7343 = vmatpush1.msra.mxu0 0.0
      %7344 = vmatprep.subr.mxu0 0.0
      %7345 = vmatpush1.msra.mxu0 0.0
      %7346 = vmatprep.subr.mxu0 0.0
      %7347 = vmatpush1.msra.mxu0 0.0
      %7348 = vmatprep.subr.mxu0 0.0
      %7349 = vmatpush1.msra.mxu0 0.0
      %7350 = vmatprep.subr.mxu0 0.0
      %7351 = vmatpush1.msra.mxu0 0.0
      %7352 = vmatprep.subr.mxu0 0.0
      %7353 = vmatpush1.msra.mxu0 0.0
      %7354 = vmatprep.subr.mxu0 0.0
      %7355 = vmatpush1.msra.mxu0 0.0
      %7356 = vmatprep.subr.mxu0 0.0
      %7357 = vmatpush1.msra.mxu0 0.0
      %7358 = vmatprep.subr.mxu0 0.0
      %7359 = vmatpush1.msra.mxu0 0.0
      %7360 = vmatprep.subr.mxu0 0.0
      %7361 = vmatpush1.msra.mxu0 0.0
      %7362 = vmatprep.subr.mxu0 0.0
      %7363 = vmatpush1.msra.mxu0 0.0
      %7364 = vmatprep.subr.mxu0 0.0
      %7365 = vmatpush1.msra.mxu0 0.0
      %7366 = vmatprep.subr.mxu0 0.0
      %7367 = vmatpush1.msra.mxu0 0.0
      %7368 = vmatprep.subr.mxu0 0.0
      %7369 = vmatpush1.msra.mxu0 0.0
      %7370 = vmatprep.subr.mxu0 0.0
      %7371 = vmatpush1.msra.mxu0 0.0
      %7372 = vmatprep.mubr.f32.mxu0 0.0
      %v7373 = vand.u32 %v7043, 4294901760
      %v7374 = vsub.f32 %v7043, %v7373
      %v7375 = vand.u32 %v7374, 4294901760
      %7376 = vmatmul.mubr.f32.gmra.mrb[0].mxu0 %v7375
      %v7377 = vpop.f32.mrb[0].mxu0
      %v7378 = vadd.f32 %v7300, %v7377
      %v7379 = vpop.f32.mrb[0].mxu0
      %v7380 = vadd.f32 %v7302, %v7379
      %7381 = vdwg.mxu0
      %v7382 = vand.u32 %v6053, 4294901760
      %v7383 = vsub.f32 %v6053, %v7382
      %v7384 = vand.u32 %v7383, 4294901760
      %7385 = vmatprep.subr.mxu0 %v7384
      %v7386 = vand.u32 %v6052, 4294901760
      %v7387 = vsub.f32 %v6052, %v7386
      %v7388 = vand.u32 %v7387, 4294901760
      %7389 = vmatpush1.msra.mxu0 %v7388
      %v7390 = vand.u32 %v7049, 4294901760
      %v7391 = vsub.f32 %v7049, %v7390
      %v7392 = vand.u32 %v7391, 4294901760
      %7393 = vmatprep.subr.mxu0 %v7392
      %v7394 = vand.u32 %v7046, 4294901760
      %v7395 = vsub.f32 %v7046, %v7394
      %v7396 = vand.u32 %v7395, 4294901760
      %7397 = vmatpush1.msra.mxu0 %v7396
      %7398 = vmatprep.subr.mxu0 0.0
      %7399 = vmatpush1.msra.mxu0 0.0
      %7400 = vmatprep.subr.mxu0 0.0
      %7401 = vmatpush1.msra.mxu0 0.0
      %7402 = vmatprep.subr.mxu0 0.0
      %7403 = vmatpush1.msra.mxu0 0.0
      %7404 = vmatprep.subr.mxu0 0.0
      %7405 = vmatpush1.msra.mxu0 0.0
      %7406 = vmatprep.subr.mxu0 0.0
      %7407 = vmatpush1.msra.mxu0 0.0
      %7408 = vmatprep.subr.mxu0 0.0
      %7409 = vmatpush1.msra.mxu0 0.0
      %7410 = vmatprep.subr.mxu0 0.0
      %7411 = vmatpush1.msra.mxu0 0.0
      %7412 = vmatprep.subr.mxu0 0.0
      %7413 = vmatpush1.msra.mxu0 0.0
      %7414 = vmatprep.subr.mxu0 0.0
      %7415 = vmatpush1.msra.mxu0 0.0
      %7416 = vmatprep.subr.mxu0 0.0
      %7417 = vmatpush1.msra.mxu0 0.0
      %7418 = vmatprep.subr.mxu0 0.0
      %7419 = vmatpush1.msra.mxu0 0.0
      %7420 = vmatprep.subr.mxu0 0.0
      %7421 = vmatpush1.msra.mxu0 0.0
      %7422 = vmatprep.subr.mxu0 0.0
      %7423 = vmatpush1.msra.mxu0 0.0
      %7424 = vmatprep.subr.mxu0 0.0
      %7425 = vmatpush1.msra.mxu0 0.0
      %7426 = vmatprep.subr.mxu0 0.0
      %7427 = vmatpush1.msra.mxu0 0.0
      %7428 = vmatprep.subr.mxu0 0.0
      %7429 = vmatpush1.msra.mxu0 0.0
      %7430 = vmatprep.subr.mxu0 0.0
      %7431 = vmatpush1.msra.mxu0 0.0
      %7432 = vmatprep.subr.mxu0 0.0
      %7433 = vmatpush1.msra.mxu0 0.0
      %7434 = vmatprep.subr.mxu0 0.0
      %7435 = vmatpush1.msra.mxu0 0.0
      %7436 = vmatprep.subr.mxu0 0.0
      %7437 = vmatpush1.msra.mxu0 0.0
      %7438 = vmatprep.subr.mxu0 0.0
      %7439 = vmatpush1.msra.mxu0 0.0
      %7440 = vmatprep.subr.mxu0 0.0
      %7441 = vmatpush1.msra.mxu0 0.0
      %7442 = vmatprep.subr.mxu0 0.0
      %7443 = vmatpush1.msra.mxu0 0.0
      %7444 = vmatprep.subr.mxu0 0.0
      %7445 = vmatpush1.msra.mxu0 0.0
      %7446 = vmatprep.subr.mxu0 0.0
      %7447 = vmatpush1.msra.mxu0 0.0
      %7448 = vmatprep.subr.mxu0 0.0
      %7449 = vmatpush1.msra.mxu0 0.0
      %7450 = vmatprep.subr.mxu0 0.0
      %7451 = vmatpush1.msra.mxu0 0.0
      %7452 = vmatprep.subr.mxu0 0.0
      %7453 = vmatpush1.msra.mxu0 0.0
      %7454 = vmatprep.subr.mxu0 0.0
      %7455 = vmatpush1.msra.mxu0 0.0
      %7456 = vmatprep.subr.mxu0 0.0
      %7457 = vmatpush1.msra.mxu0 0.0
      %7458 = vmatprep.mubr.f32.mxu0 0.0
      %v7459 = vand.u32 %v7043, 4294901760
      %7460 = vmatmul.mubr.f32.gmra.mrb[0].mxu0 %v7459
      %v7461 = vpop.f32.mrb[0].mxu0
      %v7462 = vadd.f32 %v7378, %v7461
      %v7463 = vpop.f32.mrb[0].mxu0
      %v7464 = vadd.f32 %v7380, %v7463
      %7465 = vdwg.mxu0
      %v7466 = vand.u32 %v6053, 4294901760
      %7467 = vmatprep.subr.mxu0 %v7466
      %v7468 = vand.u32 %v6052, 4294901760
      %7469 = vmatpush1.msra.mxu0 %v7468
      %v7470 = vand.u32 %v7049, 4294901760
      %7471 = vmatprep.subr.mxu0 %v7470
      %v7472 = vand.u32 %v7046, 4294901760
      %7473 = vmatpush1.msra.mxu0 %v7472
      %7474 = vmatprep.subr.mxu0 0.0
      %7475 = vmatpush1.msra.mxu0 0.0
      %7476 = vmatprep.subr.mxu0 0.0
      %7477 = vmatpush1.msra.mxu0 0.0
      %7478 = vmatprep.subr.mxu0 0.0
      %7479 = vmatpush1.msra.mxu0 0.0
      %7480 = vmatprep.subr.mxu0 0.0
      %7481 = vmatpush1.msra.mxu0 0.0
      %7482 = vmatprep.subr.mxu0 0.0
      %7483 = vmatpush1.msra.mxu0 0.0
      %7484 = vmatprep.subr.mxu0 0.0
      %7485 = vmatpush1.msra.mxu0 0.0
      %7486 = vmatprep.subr.mxu0 0.0
      %7487 = vmatpush1.msra.mxu0 0.0
      %7488 = vmatprep.subr.mxu0 0.0
      %7489 = vmatpush1.msra.mxu0 0.0
      %7490 = vmatprep.subr.mxu0 0.0
      %7491 = vmatpush1.msra.mxu0 0.0
      %7492 = vmatprep.subr.mxu0 0.0
      %7493 = vmatpush1.msra.mxu0 0.0
      %7494 = vmatprep.subr.mxu0 0.0
      %7495 = vmatpush1.msra.mxu0 0.0
      %7496 = vmatprep.subr.mxu0 0.0
      %7497 = vmatpush1.msra.mxu0 0.0
      %7498 = vmatprep.subr.mxu0 0.0
      %7499 = vmatpush1.msra.mxu0 0.0
      %7500 = vmatprep.subr.mxu0 0.0
      %7501 = vmatpush1.msra.mxu0 0.0
      %7502 = vmatprep.subr.mxu0 0.0
      %7503 = vmatpush1.msra.mxu0 0.0
      %7504 = vmatprep.subr.mxu0 0.0
      %7505 = vmatpush1.msra.mxu0 0.0
      %7506 = vmatprep.subr.mxu0 0.0
      %7507 = vmatpush1.msra.mxu0 0.0
      %7508 = vmatprep.subr.mxu0 0.0
      %7509 = vmatpush1.msra.mxu0 0.0
      %7510 = vmatprep.subr.mxu0 0.0
      %7511 = vmatpush1.msra.mxu0 0.0
      %7512 = vmatprep.subr.mxu0 0.0
      %7513 = vmatpush1.msra.mxu0 0.0
      %7514 = vmatprep.subr.mxu0 0.0
      %7515 = vmatpush1.msra.mxu0 0.0
      %7516 = vmatprep.subr.mxu0 0.0
      %7517 = vmatpush1.msra.mxu0 0.0
      %7518 = vmatprep.subr.mxu0 0.0
      %7519 = vmatpush1.msra.mxu0 0.0
      %7520 = vmatprep.subr.mxu0 0.0
      %7521 = vmatpush1.msra.mxu0 0.0
      %7522 = vmatprep.subr.mxu0 0.0
      %7523 = vmatpush1.msra.mxu0 0.0
      %7524 = vmatprep.subr.mxu0 0.0
      %7525 = vmatpush1.msra.mxu0 0.0
      %7526 = vmatprep.subr.mxu0 0.0
      %7527 = vmatpush1.msra.mxu0 0.0
      %7528 = vmatprep.subr.mxu0 0.0
      %7529 = vmatpush1.msra.mxu0 0.0
      %7530 = vmatprep.subr.mxu0 0.0
      %7531 = vmatpush1.msra.mxu0 0.0
      %7532 = vmatprep.subr.mxu0 0.0
      %7533 = vmatpush1.msra.mxu0 0.0
      %7534 = vmatprep.mubr.f32.mxu0 0.0
      %v7535 = vand.u32 %v7043, 4294901760
      %7536 = vmatmul.mubr.f32.gmra.mrb[0].mxu0 %v7535
      %v7537 = vpop.f32.mrb[0].mxu0
      %v7538 = vadd.f32 %v7462, %v7537
      %v7539 = vpop.f32.mrb[0].mxu0
      %v7540 = vadd.f32 %v7464, %v7539
      %7541 = vdwg.mxu0
      %v7542 = vsub.f32 0.0, %v7538
      %v7543 = vsub.f32 0.0, %v7540
      %v7544 = vmul.f32 %v7542, 1.442695
      %v7545 = vpow.pop %v7544
      %v7546 = vmul.f32 %v7543, 1.442695
      %v7547 = vpow.pop %v7546
      %v7548 = vadd.f32 %v7545, 1.0
      %v7549 = vadd.f32 %v7547, 1.0
      %v7550 = vrcp.pop %v7548
      %v7551 = vmul.f32 1.0, %v7550
      %v7552 = vrcp.pop %v7549
      %v7553 = vmul.f32 1.0, %v7552
      %7555 = vset.pattern.permute.xlu0 0
      %7556 = vperm.xlu0 %7555, %v7039
      %v7557 = vpop.permute.xlu0 %7556
      %7560 = vset.pattern.permute.xlu0 0
      %7561 = vperm.xlu0 %7560, %v7040
      %v7562 = vpop.permute.xlu0 %7561
      %v7564 = vlaneseq
      %v7565 = vshrl.u32 %v7564, 7
      %v7566 = vsub.s32 0, %v7565
      %v7567 = vrot.slane %v7551, %v7566
      %v7568 = vlaneseq
      %v7569 = vshrl.u32 %v7568, 7
      %v7570 = vsub.s32 0, %v7569
      %v7571 = vrot.slane %v7553, %v7570
      %v7572 = vadd.f32 %v7557, %v7567
      %v7573 = vadd.f32 %v7557, %v7571
      %v7574 = vadd.f32 %v7562, %v7567
      %v7575 = vadd.f32 %v7562, %v7571
      %v7576 = vmul.f32 %v6052, %v7572
      %v7577 = vmul.f32 %v6053, %v7573
      %v7578 = vmul.f32 %v6054, %v7574
      %v7579 = vmul.f32 %v6055, %v7575
      %7580 = vst [vmem:[%s575] sm:$0xff] %v7576
      %7581 = vst [vmem:[%s575 + $0x8] sm:$0xff] %v7577
      %7582 = vst [vmem:[%s575 + $0x10] sm:$0xf] %v7578
      %7583 = vst [vmem:[%s575 + $0x18] sm:$0xf] %v7579
      %p7584 = scmp.lt.s32.totalorder %s29, 1
      %s7585 = scalar_select %p7584, %s29, 1
      %s7586 = smul.addr %s7585, 4
      %s7587 = smul.addr %s7586, 8
      %s7588 = scalar_lea.vmem %s18, %s7587
      // Predicated region
      $region93: #{dilated_downsample_up_forward.1} parent=91 // pred_check
        %p7589 = pneg %p430
      $region94: #{dilated_downsample_up_forward.1} parent=91 // pred_check_branch
        %7591 = sbr.rel (%p7589) target = $region96
      $region95: #{dilated_downsample_up_forward.1} parent=91 // pred_region
        _
      $region96: #{dilated_downsample_up_forward.1} parent=91 // pred_fallthru
        _
    $region92: #{dilated_downsample_up_forward.1} parent=5 // pred_fallthru
      _
    %p7592 = scmp.le.s32.totalorder 2, %s24
    // Predicated region
    $region97: #{dilated_downsample_up_forward.1} parent=5 // pred_check
      %p7593 = pneg %p7592
    $region98: #{dilated_downsample_up_forward.1} parent=5 // pred_check_branch
      %7595 = sbr.rel (%p7593) target = $region100
    $region99: #{dilated_downsample_up_forward.1} parent=5 // pred_region
      %s7596 = ssub.s32 %s24, 2
      // Predicated region
      $region101: #{dilated_downsample_up_forward.1} parent=99 // pred_check
        %p7597 = pneg %p436
      $region102: #{dilated_downsample_up_forward.1} parent=99 // pred_check_branch
        %7599 = sbr.rel (%p7597) target = $region104
      $region103: #{dilated_downsample_up_forward.1} parent=99 // pred_region
        %p7600 = scmp.lt.s32.totalorder %s30, 1
        %s7601 = scalar_select %p7600, %s30, 1
        %s7602 = smul.addr %s7601, 4
        %s7603 = smul.addr %s7602, 8
        %s7604 = scalar_lea.vmem %s18, %s7603
      $region104: #{dilated_downsample_up_forward.1} parent=99 // pred_fallthru
        _
    $region100: #{dilated_downsample_up_forward.1} parent=5 // pred_fallthru
      _
  $region6: #{dilated_downsample_up_forward.1} parent=0 // loop_footer
    %s28 = sadd.s32 1, %s24
  $region7: #{dilated_downsample_up_forward.1} parent=0 // loop_footer_branch
    %23 = sbr.rel target = $region3
  $region8: #{dilated_downsample_up_forward.1} parent=0 // loop_exit
    _

</llo_original>
